<compile_context>
chip_gen: v7x
topology: tpu7x:2x2x1
jax: 0.10.0
libtpu: 0.0.40
codegen_flags: <defaults>
</compile_context>

<pallas_src>
import functools

import numpy as np

import jax
import jax.numpy as jnp
from jax.experimental import pallas as pl
from jax.experimental.pallas import tpu as pltpu


def _shift_rows(a, delta, npix):
    """dst[:, p, :] = a[:, p + delta, :]; zero fill where p + delta is out of range."""
    if delta == 0:
        return a
    bt, _, c = a.shape
    if delta > 0:
        z = jnp.zeros((bt, delta, c), a.dtype)
        return jnp.concatenate([a[:, delta:, :], z], axis=1)
    z = jnp.zeros((bt, -delta, c), a.dtype)
    return jnp.concatenate([z, a[:, :npix + delta, :]], axis=1)


def _global_encoder_kernel(x_ref, m_ref, w1_ref, b1_ref, w2_ref, b2_ref,
                           w3_ref, b3_ref, out_ref, patch2_ref,
                           *, BT, H, W, C_IN, C1, C2):
    """One grid step = BT images.

    x_ref     : (BT, H*W, C_IN) f32   pixel-row-major input
    m_ref     : (9, H*W, 1)    f32    per-tap 0/1 validity masks (dest pixel)
    w1_ref    : (9*C_IN, C1)   f32    conv1 weights, rows = tap*C_IN + cin
    b1_ref    : (1, C1)        f32
    w2_ref    : (9*C1, C2)     bf16   conv2 weights, rows = tap*C1 + cin
    b2_ref    : (1, C2)        f32
    w3_ref    : (C2, LAT_PAD)  bf16   fc weight (already W^T, lane-padded)
    b3_ref    : (1, LAT_PAD)   f32
    out_ref   : (BT, LAT_PAD)  f32
    patch2_ref: VMEM (BT, H*W, 9*C1) bf16 scratch - staged conv2 im2col patches
    """
    NPIX = H * W
    M = BT * NPIX

    x = x_ref[...]                                          # (BT, NPIX, C_IN)
    w1 = w1_ref[...]                                        # (9*C_IN, C1)

    # ---- Conv1 (3x3, pad=1) as 9*C_IN VPU broadcast-FMAs --------------------
    # (K=9*C_IN is tiny: an MXU matmul would be badly underfilled and the
    #  im2col patch lane-sparse; the FMA form is a handful of vmul/vadd.)
    h1 = jnp.zeros((BT, NPIX, C1), jnp.float32)
    for tap in range(9):
        dy, dx = divmod(tap, 3)
        delta = (dy - 1) * W + (dx - 1)
        mask = m_ref[tap]                                   # (NPIX, 1)
        xs = _shift_rows(x, delta, NPIX) * mask             # (BT, NPIX, C_IN)
        for c in range(C_IN):
            r = tap * C_IN + c
            h1 = h1 + xs[:, :, c:c + 1] * w1[r:r + 1, :]    # broadcast FMA
    h1 = jnp.maximum(h1 + b1_ref[...], 0.0)                 # (BT, NPIX, C1)

    # ---- Conv2 (3x3, pad=1): K-fused im2col via sublane row-shifts ----------
    # Stage the (M, 9*C1) patch matrix tap-by-tap into the bf16 VMEM scratch
    # (only one tap live at a time -> no spilled concat), then one MXU matmul.
    for tap in range(9):
        dy, dx = divmod(tap, 3)
        delta = (dy - 1) * W + (dx - 1)
        mask = m_ref[tap]                                   # (NPIX, 1)
        col = (_shift_rows(h1, delta, NPIX) * mask).astype(jnp.bfloat16)
        patch2_ref[:, :, tap * C1:(tap + 1) * C1] = col

    patch2 = patch2_ref[...].reshape(M, 9 * C1)             # (M, 288) bf16
    h2 = jnp.dot(patch2, w2_ref[...], preferred_element_type=jnp.float32)
    h2 = jnp.maximum(h2 + b2_ref[...], 0.0)                 # (M, C2) f32

    # ---- AdaptiveAvgPool2d((1,1)) per image + Linear(C2 -> latent) ----------
    pooled = jnp.mean(h2.reshape(BT, NPIX, C2), axis=1)     # (BT, C2) f32
    out_ref[...] = (jnp.dot(pooled.astype(jnp.bfloat16), w3_ref[...],
                            preferred_element_type=jnp.float32)
                    + b3_ref[...])


def global_encoder_pallas(x_nchw, params, *, block_batch=32):
    """x_nchw: (B, C_in, H, W) float32.  Returns (B, latent_dim) float32."""
    w1, b1, w2, b2, w3, b3 = params
    B, C_IN, H, W = x_nchw.shape
    C1 = w1.shape[-1]
    C2 = w2.shape[-1]
    LATENT = w3.shape[-1]
    NPIX = H * W
    LAT_PAD = ((LATENT + 127) // 128) * 128                 # lane-dense output

    # Batch tile: no B//2 cap - small batches run as a single big step
    # (extra steps are pure overhead on 1-TC chips); large batches get
    # multiple "parallel" steps for v7x megacore. block_batch is a multiple
    # of 8 so the output block stays (8,128)-legal when bt < padded_b.
    bt = min(block_batch, B)
    padded_b = ((B + bt - 1) // bt) * bt
    grid = padded_b // bt

    # NCHW -> (B, H*W, C_IN) pixel-row-major (pixels on sublanes, channels on
    # lanes); pad batch to a multiple of bt (garbage rows sliced off below).
    x_rows = jnp.transpose(x_nchw, (0, 2, 3, 1)).reshape(B, NPIX, C_IN)
    x_rows = jnp.pad(x_rows, ((0, padded_b - B), (0, 0), (0, 0)))

    # Static per-tap validity masks: destination pixel (y, x) is valid for tap
    # (dy, dx) iff source (y+dy-1, x+dx-1) lies inside the image.
    yy, xx = np.meshgrid(np.arange(H), np.arange(W), indexing="ij")
    masks_np = np.zeros((9, NPIX, 1), np.float32)
    for tap in range(9):
        dy, dx = divmod(tap, 3)
        ys, xs = yy + dy - 1, xx + dx - 1
        valid = (ys >= 0) & (ys < H) & (xs >= 0) & (xs < W)
        masks_np[tap, :, 0] = valid.reshape(-1)
    masks = jnp.asarray(masks_np)

    # Weights: 2-D, rows tap-major then cin. MXU operands in bf16 (native on
    # v5e/v6e/v7x); accumulation stays f32 via preferred_element_type.
    w1_2d = w1.reshape(9 * C_IN, C1).astype(jnp.float32)
    w2_2d = w2.reshape(9 * C1, C2).astype(jnp.bfloat16)
    w3_p = jnp.zeros((C2, LAT_PAD), jnp.bfloat16).at[:, :LATENT].set(
        w3.astype(jnp.bfloat16))
    b1_2d = b1.reshape(1, C1).astype(jnp.float32)
    b2_2d = b2.reshape(1, C2).astype(jnp.float32)
    b3_p = jnp.zeros((1, LAT_PAD), jnp.float32).at[0, :LATENT].set(
        b3.astype(jnp.float32))

    kernel = functools.partial(_global_encoder_kernel, BT=bt, H=H, W=W,
                               C_IN=C_IN, C1=C1, C2=C2)

    out = pl.pallas_call(
        kernel,
        out_shape=jax.ShapeDtypeStruct((padded_b, LAT_PAD), jnp.float32),
        grid_spec=pltpu.PrefetchScalarGridSpec(
            num_scalar_prefetch=0,
            grid=(grid,),
            in_specs=[
                pl.BlockSpec((bt, NPIX, C_IN), lambda g: (g, 0, 0)),
                pl.BlockSpec((9, NPIX, 1), lambda g: (0, 0, 0)),
                pl.BlockSpec((9 * C_IN, C1), lambda g: (0, 0)),
                pl.BlockSpec((1, C1), lambda g: (0, 0)),
                pl.BlockSpec((9 * C1, C2), lambda g: (0, 0)),
                pl.BlockSpec((1, C2), lambda g: (0, 0)),
                pl.BlockSpec((C2, LAT_PAD), lambda g: (0, 0)),
                pl.BlockSpec((1, LAT_PAD), lambda g: (0, 0)),
            ],
            out_specs=pl.BlockSpec((bt, LAT_PAD), lambda g: (g, 0)),
            scratch_shapes=[
                pltpu.VMEM((bt, NPIX, 9 * C1), jnp.bfloat16)],
        ),
        compiler_params=pltpu.CompilerParams(
            dimension_semantics=("parallel",),
            # Headroom for larger batch tiles; stays within v7x's 64 MiB VMEM.
            vmem_limit_bytes=48 * 1024 * 1024),
    )(x_rows, masks, w1_2d, b1_2d, w2_2d, b2_2d, w3_p, b3_p)
    return out[:B, :LATENT]


def init_params(key, in_channels=1, latent_dim=64):
    """Deterministic synthetic parameters (shapes mirror the nn.Module)."""
    k1, k2, k3, k4, k5, k6 = jax.random.split(key, 6)
    C1, C2 = 32, 64
    # conv weights stored tap-major: (3*3, Cin, Cout), tap = dy*3 + dx
    w1 = jax.random.normal(k1, (9, in_channels, C1), jnp.float32) * 0.1
    b1 = jax.random.normal(k2, (C1,), jnp.float32) * 0.1
    w2 = jax.random.normal(k3, (9, C1, C2), jnp.float32) * 0.05
    b2 = jax.random.normal(k4, (C2,), jnp.float32) * 0.1
    # linear: stored as (in=64, out=latent_dim), i.e. already W^T
    w3 = jax.random.normal(k5, (C2, latent_dim), jnp.float32) * 0.1
    b3 = jax.random.normal(k6, (latent_dim,), jnp.float32) * 0.1
    return (w1, b1, w2, b2, w3, b3)


def global_encoder_ref(x_nchw, params):
    """Pure-JAX reference (same math, using lax conv) for verification."""
    w1, b1, w2, b2, w3, b3 = params
    C_IN = x_nchw.shape[1]
    C1 = w1.shape[-1]
    x = jnp.transpose(x_nchw, (0, 2, 3, 1))  # NHWC
    w1_hwio = w1.reshape(3, 3, C_IN, C1)
    w2_hwio = w2.reshape(3, 3, C1, w2.shape[-1])
    dn = ("NHWC", "HWIO", "NHWC")
    h = jax.lax.conv_general_dilated(x, w1_hwio, (1, 1), "SAME",
                                     dimension_numbers=dn) + b1
    h = jnp.maximum(h, 0.0)
    h = jax.lax.conv_general_dilated(h, w2_hwio, (1, 1), "SAME",
                                     dimension_numbers=dn) + b2
    h = jnp.maximum(h, 0.0)
    feat = jnp.mean(h, axis=(1, 2))  # global avg pool -> (B, 64)
    return feat @ w3 + b3


if __name__ == "__main__":
    key = jax.random.PRNGKey(0)
    kx, kp = jax.random.split(key)

    B, C_IN, H, W = 2, 1, 16, 16
    LATENT = 64

    x = jax.random.normal(kx, (B, C_IN, H, W), jnp.float32)
    params = init_params(kp, in_channels=C_IN, latent_dim=LATENT)

    out = global_encoder_pallas(x, params)
    out = jax.block_until_ready(out)

    ref = jax.block_until_ready(global_encoder_ref(x, params))
    assert out.shape == (B, LATENT)
    # bf16 MXU operands with f32 accumulation -> relaxed tolerance vs f32 ref.
    if not jnp.allclose(out, ref, atol=2e-2, rtol=2e-2):
        raise AssertionError("Pallas output mismatch vs JAX reference")

    print("KERNEL_OK")
</pallas_src>

<mosaic_0001>
module attributes {stable_mosaic.version = 11 : i64} {
  func.func @_global_encoder_kernel(%arg0: i32, %arg1: memref<2x256x1xf32, #tpu.memory_space<vmem>>, %arg2: memref<9x256x1xf32, #tpu.memory_space<vmem>>, %arg3: memref<9x32xf32, #tpu.memory_space<vmem>>, %arg4: memref<1x32xf32, #tpu.memory_space<vmem>>, %arg5: memref<288x64xbf16, #tpu.memory_space<vmem>>, %arg6: memref<1x64xf32, #tpu.memory_space<vmem>>, %arg7: memref<64x128xbf16, #tpu.memory_space<vmem>>, %arg8: memref<1x128xf32, #tpu.memory_space<vmem>>, %arg9: memref<2x128xf32, #tpu.memory_space<vmem>>, %arg10: memref<2x256x288xbf16, #tpu.memory_space<vmem>>) attributes {dimension_semantics = [#tpu.dimension_semantics<parallel>], iteration_bounds = array<i64: 1>, scalar_prefetch = 0 : i64, scratch_operands = 1 : i64, tpu.core_type = #tpu.core_type<tc>, window_params = [{transform_indices = @transform_0, window_bounds = array<i64: 2, 256, 1>}, {pipeline_mode = #tpu.pipeline_mode<synchronous>, transform_indices = @transform_1, window_bounds = array<i64: 9, 256, 1>}, {pipeline_mode = #tpu.pipeline_mode<synchronous>, transform_indices = @transform_2, window_bounds = array<i64: 9, 32>}, {pipeline_mode = #tpu.pipeline_mode<synchronous>, transform_indices = @transform_3, window_bounds = array<i64: 1, 32>}, {pipeline_mode = #tpu.pipeline_mode<synchronous>, transform_indices = @transform_4, window_bounds = array<i64: 288, 64>}, {pipeline_mode = #tpu.pipeline_mode<synchronous>, transform_indices = @transform_5, window_bounds = array<i64: 1, 64>}, {pipeline_mode = #tpu.pipeline_mode<synchronous>, transform_indices = @transform_6, window_bounds = array<i64: 64, 128>}, {pipeline_mode = #tpu.pipeline_mode<synchronous>, transform_indices = @transform_7, window_bounds = array<i64: 1, 128>}, {transform_indices = @transform_8, window_bounds = array<i64: 2, 128>}]} {
    %c0 = arith.constant 0 : index
    %c0_0 = arith.constant 0 : index
    %c0_1 = arith.constant 0 : index
    %0 = vector.load %arg1[%c0, %c0_0, %c0_1] : memref<2x256x1xf32, #tpu.memory_space<vmem>>, vector<2x256x1xf32>
    %c0_2 = arith.constant 0 : index
    %c0_3 = arith.constant 0 : index
    %1 = vector.load %arg3[%c0_2, %c0_3] : memref<9x32xf32, #tpu.memory_space<vmem>>, vector<9x32xf32>
    %cst = arith.constant 0.000000e+00 : f32
    %2 = vector.broadcast %cst : f32 to vector<2x256x32xf32>
    %c0_4 = arith.constant 0 : index
    %c0_5 = arith.constant 0 : index
    %c0_6 = arith.constant 0 : index
    %3 = vector.load %arg2[%c0_4, %c0_5, %c0_6] : memref<9x256x1xf32, #tpu.memory_space<vmem>>, vector<1x256x1xf32>
    %4 = vector.shape_cast %3 : vector<1x256x1xf32> to vector<256x1xf32>
    %cst_7 = arith.constant 0.000000e+00 : f32
    %5 = vector.broadcast %cst_7 : f32 to vector<2x17x1xf32>
    %6 = vector.extract_strided_slice %0 {offsets = [0, 0, 0], sizes = [2, 239, 1], strides = [1, 1, 1]} : vector<2x256x1xf32> to vector<2x239x1xf32>
    %7 = tpu.concatenate %5, %6 in 1 : vector<2x17x1xf32>, vector<2x239x1xf32> -> vector<2x256x1xf32>
    %8 = vector.shape_cast %4 : vector<256x1xf32> to vector<1x256x1xf32>
    %9 = vector.broadcast %8 : vector<1x256x1xf32> to vector<2x256x1xf32>
    %10 = arith.mulf %7, %9 : vector<2x256x1xf32>
    %11 = vector.extract_strided_slice %1 {offsets = [0, 0], sizes = [1, 32], strides = [1, 1]} : vector<9x32xf32> to vector<1x32xf32>
    %12 = vector.shape_cast %11 : vector<1x32xf32> to vector<1x1x32xf32>
    %13 = vector.broadcast %10 : vector<2x256x1xf32> to vector<2x256x32xf32>
    %14 = vector.broadcast %12 : vector<1x1x32xf32> to vector<2x256x32xf32>
    %15 = arith.mulf %13, %14 : vector<2x256x32xf32>
    %16 = arith.addf %2, %15 : vector<2x256x32xf32>
    %c1 = arith.constant 1 : index
    %c0_8 = arith.constant 0 : index
    %c0_9 = arith.constant 0 : index
    %17 = vector.load %arg2[%c1, %c0_8, %c0_9] : memref<9x256x1xf32, #tpu.memory_space<vmem>>, vector<1x256x1xf32>
    %18 = vector.shape_cast %17 : vector<1x256x1xf32> to vector<256x1xf32>
    %cst_10 = arith.constant 0.000000e+00 : f32
    %19 = vector.broadcast %cst_10 : f32 to vector<2x16x1xf32>
    %20 = vector.extract_strided_slice %0 {offsets = [0, 0, 0], sizes = [2, 240, 1], strides = [1, 1, 1]} : vector<2x256x1xf32> to vector<2x240x1xf32>
    %21 = tpu.concatenate %19, %20 in 1 : vector<2x16x1xf32>, vector<2x240x1xf32> -> vector<2x256x1xf32>
    %22 = vector.shape_cast %18 : vector<256x1xf32> to vector<1x256x1xf32>
    %23 = vector.broadcast %22 : vector<1x256x1xf32> to vector<2x256x1xf32>
    %24 = arith.mulf %21, %23 : vector<2x256x1xf32>
    %25 = vector.extract_strided_slice %1 {offsets = [1, 0], sizes = [1, 32], strides = [1, 1]} : vector<9x32xf32> to vector<1x32xf32>
    %26 = vector.shape_cast %25 : vector<1x32xf32> to vector<1x1x32xf32>
    %27 = vector.broadcast %24 : vector<2x256x1xf32> to vector<2x256x32xf32>
    %28 = vector.broadcast %26 : vector<1x1x32xf32> to vector<2x256x32xf32>
    %29 = arith.mulf %27, %28 : vector<2x256x32xf32>
    %30 = arith.addf %16, %29 : vector<2x256x32xf32>
    %c2 = arith.constant 2 : index
    %c0_11 = arith.constant 0 : index
    %c0_12 = arith.constant 0 : index
    %31 = vector.load %arg2[%c2, %c0_11, %c0_12] : memref<9x256x1xf32, #tpu.memory_space<vmem>>, vector<1x256x1xf32>
    %32 = vector.shape_cast %31 : vector<1x256x1xf32> to vector<256x1xf32>
    %cst_13 = arith.constant 0.000000e+00 : f32
    %33 = vector.broadcast %cst_13 : f32 to vector<2x15x1xf32>
    %34 = vector.extract_strided_slice %0 {offsets = [0, 0, 0], sizes = [2, 241, 1], strides = [1, 1, 1]} : vector<2x256x1xf32> to vector<2x241x1xf32>
    %35 = tpu.concatenate %33, %34 in 1 : vector<2x15x1xf32>, vector<2x241x1xf32> -> vector<2x256x1xf32>
    %36 = vector.shape_cast %32 : vector<256x1xf32> to vector<1x256x1xf32>
    %37 = vector.broadcast %36 : vector<1x256x1xf32> to vector<2x256x1xf32>
    %38 = arith.mulf %35, %37 : vector<2x256x1xf32>
    %39 = vector.extract_strided_slice %1 {offsets = [2, 0], sizes = [1, 32], strides = [1, 1]} : vector<9x32xf32> to vector<1x32xf32>
    %40 = vector.shape_cast %39 : vector<1x32xf32> to vector<1x1x32xf32>
    %41 = vector.broadcast %38 : vector<2x256x1xf32> to vector<2x256x32xf32>
    %42 = vector.broadcast %40 : vector<1x1x32xf32> to vector<2x256x32xf32>
    %43 = arith.mulf %41, %42 : vector<2x256x32xf32>
    %44 = arith.addf %30, %43 : vector<2x256x32xf32>
    %c3 = arith.constant 3 : index
    %c0_14 = arith.constant 0 : index
    %c0_15 = arith.constant 0 : index
    %45 = vector.load %arg2[%c3, %c0_14, %c0_15] : memref<9x256x1xf32, #tpu.memory_space<vmem>>, vector<1x256x1xf32>
    %46 = vector.shape_cast %45 : vector<1x256x1xf32> to vector<256x1xf32>
    %cst_16 = arith.constant 0.000000e+00 : f32
    %47 = vector.broadcast %cst_16 : f32 to vector<2x1x1xf32>
    %48 = vector.extract_strided_slice %0 {offsets = [0, 0, 0], sizes = [2, 255, 1], strides = [1, 1, 1]} : vector<2x256x1xf32> to vector<2x255x1xf32>
    %49 = tpu.concatenate %47, %48 in 1 : vector<2x1x1xf32>, vector<2x255x1xf32> -> vector<2x256x1xf32>
    %50 = vector.shape_cast %46 : vector<256x1xf32> to vector<1x256x1xf32>
    %51 = vector.broadcast %50 : vector<1x256x1xf32> to vector<2x256x1xf32>
    %52 = arith.mulf %49, %51 : vector<2x256x1xf32>
    %53 = vector.extract_strided_slice %1 {offsets = [3, 0], sizes = [1, 32], strides = [1, 1]} : vector<9x32xf32> to vector<1x32xf32>
    %54 = vector.shape_cast %53 : vector<1x32xf32> to vector<1x1x32xf32>
    %55 = vector.broadcast %52 : vector<2x256x1xf32> to vector<2x256x32xf32>
    %56 = vector.broadcast %54 : vector<1x1x32xf32> to vector<2x256x32xf32>
    %57 = arith.mulf %55, %56 : vector<2x256x32xf32>
    %58 = arith.addf %44, %57 : vector<2x256x32xf32>
    %c4 = arith.constant 4 : index
    %c0_17 = arith.constant 0 : index
    %c0_18 = arith.constant 0 : index
    %59 = vector.load %arg2[%c4, %c0_17, %c0_18] : memref<9x256x1xf32, #tpu.memory_space<vmem>>, vector<1x256x1xf32>
    %60 = vector.shape_cast %59 : vector<1x256x1xf32> to vector<256x1xf32>
    %61 = vector.shape_cast %60 : vector<256x1xf32> to vector<1x256x1xf32>
    %62 = vector.broadcast %61 : vector<1x256x1xf32> to vector<2x256x1xf32>
    %63 = arith.mulf %0, %62 : vector<2x256x1xf32>
    %64 = vector.extract_strided_slice %1 {offsets = [4, 0], sizes = [1, 32], strides = [1, 1]} : vector<9x32xf32> to vector<1x32xf32>
    %65 = vector.shape_cast %64 : vector<1x32xf32> to vector<1x1x32xf32>
    %66 = vector.broadcast %63 : vector<2x256x1xf32> to vector<2x256x32xf32>
    %67 = vector.broadcast %65 : vector<1x1x32xf32> to vector<2x256x32xf32>
    %68 = arith.mulf %66, %67 : vector<2x256x32xf32>
    %69 = arith.addf %58, %68 : vector<2x256x32xf32>
    %c5 = arith.constant 5 : index
    %c0_19 = arith.constant 0 : index
    %c0_20 = arith.constant 0 : index
    %70 = vector.load %arg2[%c5, %c0_19, %c0_20] : memref<9x256x1xf32, #tpu.memory_space<vmem>>, vector<1x256x1xf32>
    %71 = vector.shape_cast %70 : vector<1x256x1xf32> to vector<256x1xf32>
    %cst_21 = arith.constant 0.000000e+00 : f32
    %72 = vector.broadcast %cst_21 : f32 to vector<2x1x1xf32>
    %73 = vector.extract_strided_slice %0 {offsets = [0, 1, 0], sizes = [2, 255, 1], strides = [1, 1, 1]} : vector<2x256x1xf32> to vector<2x255x1xf32>
    %74 = tpu.concatenate %73, %72 in 1 : vector<2x255x1xf32>, vector<2x1x1xf32> -> vector<2x256x1xf32>
    %75 = vector.shape_cast %71 : vector<256x1xf32> to vector<1x256x1xf32>
    %76 = vector.broadcast %75 : vector<1x256x1xf32> to vector<2x256x1xf32>
    %77 = arith.mulf %74, %76 : vector<2x256x1xf32>
    %78 = vector.extract_strided_slice %1 {offsets = [5, 0], sizes = [1, 32], strides = [1, 1]} : vector<9x32xf32> to vector<1x32xf32>
    %79 = vector.shape_cast %78 : vector<1x32xf32> to vector<1x1x32xf32>
    %80 = vector.broadcast %77 : vector<2x256x1xf32> to vector<2x256x32xf32>
    %81 = vector.broadcast %79 : vector<1x1x32xf32> to vector<2x256x32xf32>
    %82 = arith.mulf %80, %81 : vector<2x256x32xf32>
    %83 = arith.addf %69, %82 : vector<2x256x32xf32>
    %c6 = arith.constant 6 : index
    %c0_22 = arith.constant 0 : index
    %c0_23 = arith.constant 0 : index
    %84 = vector.load %arg2[%c6, %c0_22, %c0_23] : memref<9x256x1xf32, #tpu.memory_space<vmem>>, vector<1x256x1xf32>
    %85 = vector.shape_cast %84 : vector<1x256x1xf32> to vector<256x1xf32>
    %cst_24 = arith.constant 0.000000e+00 : f32
    %86 = vector.broadcast %cst_24 : f32 to vector<2x15x1xf32>
    %87 = vector.extract_strided_slice %0 {offsets = [0, 15, 0], sizes = [2, 241, 1], strides = [1, 1, 1]} : vector<2x256x1xf32> to vector<2x241x1xf32>
    %88 = tpu.concatenate %87, %86 in 1 : vector<2x241x1xf32>, vector<2x15x1xf32> -> vector<2x256x1xf32>
    %89 = vector.shape_cast %85 : vector<256x1xf32> to vector<1x256x1xf32>
    %90 = vector.broadcast %89 : vector<1x256x1xf32> to vector<2x256x1xf32>
    %91 = arith.mulf %88, %90 : vector<2x256x1xf32>
    %92 = vector.extract_strided_slice %1 {offsets = [6, 0], sizes = [1, 32], strides = [1, 1]} : vector<9x32xf32> to vector<1x32xf32>
    %93 = vector.shape_cast %92 : vector<1x32xf32> to vector<1x1x32xf32>
    %94 = vector.broadcast %91 : vector<2x256x1xf32> to vector<2x256x32xf32>
    %95 = vector.broadcast %93 : vector<1x1x32xf32> to vector<2x256x32xf32>
    %96 = arith.mulf %94, %95 : vector<2x256x32xf32>
    %97 = arith.addf %83, %96 : vector<2x256x32xf32>
    %c7 = arith.constant 7 : index
    %c0_25 = arith.constant 0 : index
    %c0_26 = arith.constant 0 : index
    %98 = vector.load %arg2[%c7, %c0_25, %c0_26] : memref<9x256x1xf32, #tpu.memory_space<vmem>>, vector<1x256x1xf32>
    %99 = vector.shape_cast %98 : vector<1x256x1xf32> to vector<256x1xf32>
    %cst_27 = arith.constant 0.000000e+00 : f32
    %100 = vector.broadcast %cst_27 : f32 to vector<2x16x1xf32>
    %101 = vector.extract_strided_slice %0 {offsets = [0, 16, 0], sizes = [2, 240, 1], strides = [1, 1, 1]} : vector<2x256x1xf32> to vector<2x240x1xf32>
    %102 = tpu.concatenate %101, %100 in 1 : vector<2x240x1xf32>, vector<2x16x1xf32> -> vector<2x256x1xf32>
    %103 = vector.shape_cast %99 : vector<256x1xf32> to vector<1x256x1xf32>
    %104 = vector.broadcast %103 : vector<1x256x1xf32> to vector<2x256x1xf32>
    %105 = arith.mulf %102, %104 : vector<2x256x1xf32>
    %106 = vector.extract_strided_slice %1 {offsets = [7, 0], sizes = [1, 32], strides = [1, 1]} : vector<9x32xf32> to vector<1x32xf32>
    %107 = vector.shape_cast %106 : vector<1x32xf32> to vector<1x1x32xf32>
    %108 = vector.broadcast %105 : vector<2x256x1xf32> to vector<2x256x32xf32>
    %109 = vector.broadcast %107 : vector<1x1x32xf32> to vector<2x256x32xf32>
    %110 = arith.mulf %108, %109 : vector<2x256x32xf32>
    %111 = arith.addf %97, %110 : vector<2x256x32xf32>
    %c8 = arith.constant 8 : index
    %c0_28 = arith.constant 0 : index
    %c0_29 = arith.constant 0 : index
    %112 = vector.load %arg2[%c8, %c0_28, %c0_29] : memref<9x256x1xf32, #tpu.memory_space<vmem>>, vector<1x256x1xf32>
    %113 = vector.shape_cast %112 : vector<1x256x1xf32> to vector<256x1xf32>
    %cst_30 = arith.constant 0.000000e+00 : f32
    %114 = vector.broadcast %cst_30 : f32 to vector<2x17x1xf32>
    %115 = vector.extract_strided_slice %0 {offsets = [0, 17, 0], sizes = [2, 239, 1], strides = [1, 1, 1]} : vector<2x256x1xf32> to vector<2x239x1xf32>
    %116 = tpu.concatenate %115, %114 in 1 : vector<2x239x1xf32>, vector<2x17x1xf32> -> vector<2x256x1xf32>
    %117 = vector.shape_cast %113 : vector<256x1xf32> to vector<1x256x1xf32>
    %118 = vector.broadcast %117 : vector<1x256x1xf32> to vector<2x256x1xf32>
    %119 = arith.mulf %116, %118 : vector<2x256x1xf32>
    %120 = vector.extract_strided_slice %1 {offsets = [8, 0], sizes = [1, 32], strides = [1, 1]} : vector<9x32xf32> to vector<1x32xf32>
    %121 = vector.shape_cast %120 : vector<1x32xf32> to vector<1x1x32xf32>
    %122 = vector.broadcast %119 : vector<2x256x1xf32> to vector<2x256x32xf32>
    %123 = vector.broadcast %121 : vector<1x1x32xf32> to vector<2x256x32xf32>
    %124 = arith.mulf %122, %123 : vector<2x256x32xf32>
    %125 = arith.addf %111, %124 : vector<2x256x32xf32>
    %c0_31 = arith.constant 0 : index
    %c0_32 = arith.constant 0 : index
    %126 = vector.load %arg4[%c0_31, %c0_32] : memref<1x32xf32, #tpu.memory_space<vmem>>, vector<1x32xf32>
    %127 = vector.shape_cast %126 : vector<1x32xf32> to vector<1x1x32xf32>
    %128 = vector.broadcast %127 : vector<1x1x32xf32> to vector<2x256x32xf32>
    %129 = arith.addf %125, %128 : vector<2x256x32xf32>
    %cst_33 = arith.constant 0.000000e+00 : f32
    %130 = vector.broadcast %cst_33 : f32 to vector<2x256x32xf32>
    %131 = arith.maximumf %129, %130 : vector<2x256x32xf32>
    %c0_34 = arith.constant 0 : index
    %c0_35 = arith.constant 0 : index
    %c0_36 = arith.constant 0 : index
    %132 = vector.load %arg2[%c0_34, %c0_35, %c0_36] : memref<9x256x1xf32, #tpu.memory_space<vmem>>, vector<1x256x1xf32>
    %133 = vector.shape_cast %132 : vector<1x256x1xf32> to vector<256x1xf32>
    %cst_37 = arith.constant 0.000000e+00 : f32
    %134 = vector.broadcast %cst_37 : f32 to vector<2x17x32xf32>
    %135 = vector.extract_strided_slice %131 {offsets = [0, 0, 0], sizes = [2, 239, 32], strides = [1, 1, 1]} : vector<2x256x32xf32> to vector<2x239x32xf32>
    %136 = tpu.concatenate %134, %135 in 1 : vector<2x17x32xf32>, vector<2x239x32xf32> -> vector<2x256x32xf32>
    %137 = vector.shape_cast %133 : vector<256x1xf32> to vector<1x256x1xf32>
    %138 = vector.broadcast %137 : vector<1x256x1xf32> to vector<2x256x32xf32>
    %139 = arith.mulf %136, %138 : vector<2x256x32xf32>
    %140 = arith.truncf %139 : vector<2x256x32xf32> to vector<2x256x32xbf16>
    %c0_38 = arith.constant 0 : index
    %c0_39 = arith.constant 0 : index
    %c0_40 = arith.constant 0 : index
    %141 = vector.load %arg10[%c0_38, %c0_39, %c0_40] : memref<2x256x288xbf16, #tpu.memory_space<vmem>>, vector<2x256x32xbf16>
    tpu.vector_store %arg10[%c0_38, %c0_39, %c0_40], %140 {strides = array<i32>} : memref<2x256x288xbf16, #tpu.memory_space<vmem>>, vector<2x256x32xbf16>,
    %c1_41 = arith.constant 1 : index
    %c0_42 = arith.constant 0 : index
    %c0_43 = arith.constant 0 : index
    %142 = vector.load %arg2[%c1_41, %c0_42, %c0_43] : memref<9x256x1xf32, #tpu.memory_space<vmem>>, vector<1x256x1xf32>
    %143 = vector.shape_cast %142 : vector<1x256x1xf32> to vector<256x1xf32>
    %cst_44 = arith.constant 0.000000e+00 : f32
    %144 = vector.broadcast %cst_44 : f32 to vector<2x16x32xf32>
    %145 = vector.extract_strided_slice %131 {offsets = [0, 0, 0], sizes = [2, 240, 32], strides = [1, 1, 1]} : vector<2x256x32xf32> to vector<2x240x32xf32>
    %146 = tpu.concatenate %144, %145 in 1 : vector<2x16x32xf32>, vector<2x240x32xf32> -> vector<2x256x32xf32>
    %147 = vector.shape_cast %143 : vector<256x1xf32> to vector<1x256x1xf32>
    %148 = vector.broadcast %147 : vector<1x256x1xf32> to vector<2x256x32xf32>
    %149 = arith.mulf %146, %148 : vector<2x256x32xf32>
    %150 = arith.truncf %149 : vector<2x256x32xf32> to vector<2x256x32xbf16>
    %c0_45 = arith.constant 0 : index
    %c0_46 = arith.constant 0 : index
    %c32 = arith.constant 32 : index
    %151 = vector.load %arg10[%c0_45, %c0_46, %c32] : memref<2x256x288xbf16, #tpu.memory_space<vmem>>, vector<2x256x32xbf16>
    tpu.vector_store %arg10[%c0_45, %c0_46, %c32], %150 {strides = array<i32>} : memref<2x256x288xbf16, #tpu.memory_space<vmem>>, vector<2x256x32xbf16>,
    %c2_47 = arith.constant 2 : index
    %c0_48 = arith.constant 0 : index
    %c0_49 = arith.constant 0 : index
    %152 = vector.load %arg2[%c2_47, %c0_48, %c0_49] : memref<9x256x1xf32, #tpu.memory_space<vmem>>, vector<1x256x1xf32>
    %153 = vector.shape_cast %152 : vector<1x256x1xf32> to vector<256x1xf32>
    %cst_50 = arith.constant 0.000000e+00 : f32
    %154 = vector.broadcast %cst_50 : f32 to vector<2x15x32xf32>
    %155 = vector.extract_strided_slice %131 {offsets = [0, 0, 0], sizes = [2, 241, 32], strides = [1, 1, 1]} : vector<2x256x32xf32> to vector<2x241x32xf32>
    %156 = tpu.concatenate %154, %155 in 1 : vector<2x15x32xf32>, vector<2x241x32xf32> -> vector<2x256x32xf32>
    %157 = vector.shape_cast %153 : vector<256x1xf32> to vector<1x256x1xf32>
    %158 = vector.broadcast %157 : vector<1x256x1xf32> to vector<2x256x32xf32>
    %159 = arith.mulf %156, %158 : vector<2x256x32xf32>
    %160 = arith.truncf %159 : vector<2x256x32xf32> to vector<2x256x32xbf16>
    %c0_51 = arith.constant 0 : index
    %c0_52 = arith.constant 0 : index
    %c64 = arith.constant 64 : index
    %161 = vector.load %arg10[%c0_51, %c0_52, %c64] : memref<2x256x288xbf16, #tpu.memory_space<vmem>>, vector<2x256x32xbf16>
    tpu.vector_store %arg10[%c0_51, %c0_52, %c64], %160 {strides = array<i32>} : memref<2x256x288xbf16, #tpu.memory_space<vmem>>, vector<2x256x32xbf16>,
    %c3_53 = arith.constant 3 : index
    %c0_54 = arith.constant 0 : index
    %c0_55 = arith.constant 0 : index
    %162 = vector.load %arg2[%c3_53, %c0_54, %c0_55] : memref<9x256x1xf32, #tpu.memory_space<vmem>>, vector<1x256x1xf32>
    %163 = vector.shape_cast %162 : vector<1x256x1xf32> to vector<256x1xf32>
    %cst_56 = arith.constant 0.000000e+00 : f32
    %164 = vector.broadcast %cst_56 : f32 to vector<2x1x32xf32>
    %165 = vector.extract_strided_slice %131 {offsets = [0, 0, 0], sizes = [2, 255, 32], strides = [1, 1, 1]} : vector<2x256x32xf32> to vector<2x255x32xf32>
    %166 = tpu.concatenate %164, %165 in 1 : vector<2x1x32xf32>, vector<2x255x32xf32> -> vector<2x256x32xf32>
    %167 = vector.shape_cast %163 : vector<256x1xf32> to vector<1x256x1xf32>
    %168 = vector.broadcast %167 : vector<1x256x1xf32> to vector<2x256x32xf32>
    %169 = arith.mulf %166, %168 : vector<2x256x32xf32>
    %170 = arith.truncf %169 : vector<2x256x32xf32> to vector<2x256x32xbf16>
    %c0_57 = arith.constant 0 : index
    %c0_58 = arith.constant 0 : index
    %c96 = arith.constant 96 : index
    %171 = vector.load %arg10[%c0_57, %c0_58, %c96] : memref<2x256x288xbf16, #tpu.memory_space<vmem>>, vector<2x256x32xbf16>
    tpu.vector_store %arg10[%c0_57, %c0_58, %c96], %170 {strides = array<i32>} : memref<2x256x288xbf16, #tpu.memory_space<vmem>>, vector<2x256x32xbf16>,
    %c4_59 = arith.constant 4 : index
    %c0_60 = arith.constant 0 : index
    %c0_61 = arith.constant 0 : index
    %172 = vector.load %arg2[%c4_59, %c0_60, %c0_61] : memref<9x256x1xf32, #tpu.memory_space<vmem>>, vector<1x256x1xf32>
    %173 = vector.shape_cast %172 : vector<1x256x1xf32> to vector<256x1xf32>
    %174 = vector.shape_cast %173 : vector<256x1xf32> to vector<1x256x1xf32>
    %175 = vector.broadcast %174 : vector<1x256x1xf32> to vector<2x256x32xf32>
    %176 = arith.mulf %131, %175 : vector<2x256x32xf32>
    %177 = arith.truncf %176 : vector<2x256x32xf32> to vector<2x256x32xbf16>
    %c0_62 = arith.constant 0 : index
    %c0_63 = arith.constant 0 : index
    %c128 = arith.constant 128 : index
    %178 = vector.load %arg10[%c0_62, %c0_63, %c128] : memref<2x256x288xbf16, #tpu.memory_space<vmem>>, vector<2x256x32xbf16>
    tpu.vector_store %arg10[%c0_62, %c0_63, %c128], %177 {strides = array<i32>} : memref<2x256x288xbf16, #tpu.memory_space<vmem>>, vector<2x256x32xbf16>,
    %c5_64 = arith.constant 5 : index
    %c0_65 = arith.constant 0 : index
    %c0_66 = arith.constant 0 : index
    %179 = vector.load %arg2[%c5_64, %c0_65, %c0_66] : memref<9x256x1xf32, #tpu.memory_space<vmem>>, vector<1x256x1xf32>
    %180 = vector.shape_cast %179 : vector<1x256x1xf32> to vector<256x1xf32>
    %cst_67 = arith.constant 0.000000e+00 : f32
    %181 = vector.broadcast %cst_67 : f32 to vector<2x1x32xf32>
    %182 = vector.extract_strided_slice %131 {offsets = [0, 1, 0], sizes = [2, 255, 32], strides = [1, 1, 1]} : vector<2x256x32xf32> to vector<2x255x32xf32>
    %183 = tpu.concatenate %182, %181 in 1 : vector<2x255x32xf32>, vector<2x1x32xf32> -> vector<2x256x32xf32>
    %184 = vector.shape_cast %180 : vector<256x1xf32> to vector<1x256x1xf32>
    %185 = vector.broadcast %184 : vector<1x256x1xf32> to vector<2x256x32xf32>
    %186 = arith.mulf %183, %185 : vector<2x256x32xf32>
    %187 = arith.truncf %186 : vector<2x256x32xf32> to vector<2x256x32xbf16>
    %c0_68 = arith.constant 0 : index
    %c0_69 = arith.constant 0 : index
    %c160 = arith.constant 160 : index
    %188 = vector.load %arg10[%c0_68, %c0_69, %c160] : memref<2x256x288xbf16, #tpu.memory_space<vmem>>, vector<2x256x32xbf16>
    tpu.vector_store %arg10[%c0_68, %c0_69, %c160], %187 {strides = array<i32>} : memref<2x256x288xbf16, #tpu.memory_space<vmem>>, vector<2x256x32xbf16>,
    %c6_70 = arith.constant 6 : index
    %c0_71 = arith.constant 0 : index
    %c0_72 = arith.constant 0 : index
    %189 = vector.load %arg2[%c6_70, %c0_71, %c0_72] : memref<9x256x1xf32, #tpu.memory_space<vmem>>, vector<1x256x1xf32>
    %190 = vector.shape_cast %189 : vector<1x256x1xf32> to vector<256x1xf32>
    %cst_73 = arith.constant 0.000000e+00 : f32
    %191 = vector.broadcast %cst_73 : f32 to vector<2x15x32xf32>
    %192 = vector.extract_strided_slice %131 {offsets = [0, 15, 0], sizes = [2, 241, 32], strides = [1, 1, 1]} : vector<2x256x32xf32> to vector<2x241x32xf32>
    %193 = tpu.concatenate %192, %191 in 1 : vector<2x241x32xf32>, vector<2x15x32xf32> -> vector<2x256x32xf32>
    %194 = vector.shape_cast %190 : vector<256x1xf32> to vector<1x256x1xf32>
    %195 = vector.broadcast %194 : vector<1x256x1xf32> to vector<2x256x32xf32>
    %196 = arith.mulf %193, %195 : vector<2x256x32xf32>
    %197 = arith.truncf %196 : vector<2x256x32xf32> to vector<2x256x32xbf16>
    %c0_74 = arith.constant 0 : index
    %c0_75 = arith.constant 0 : index
    %c192 = arith.constant 192 : index
    %198 = vector.load %arg10[%c0_74, %c0_75, %c192] : memref<2x256x288xbf16, #tpu.memory_space<vmem>>, vector<2x256x32xbf16>
    tpu.vector_store %arg10[%c0_74, %c0_75, %c192], %197 {strides = array<i32>} : memref<2x256x288xbf16, #tpu.memory_space<vmem>>, vector<2x256x32xbf16>,
    %c7_76 = arith.constant 7 : index
    %c0_77 = arith.constant 0 : index
    %c0_78 = arith.constant 0 : index
    %199 = vector.load %arg2[%c7_76, %c0_77, %c0_78] : memref<9x256x1xf32, #tpu.memory_space<vmem>>, vector<1x256x1xf32>
    %200 = vector.shape_cast %199 : vector<1x256x1xf32> to vector<256x1xf32>
    %cst_79 = arith.constant 0.000000e+00 : f32
    %201 = vector.broadcast %cst_79 : f32 to vector<2x16x32xf32>
    %202 = vector.extract_strided_slice %131 {offsets = [0, 16, 0], sizes = [2, 240, 32], strides = [1, 1, 1]} : vector<2x256x32xf32> to vector<2x240x32xf32>
    %203 = tpu.concatenate %202, %201 in 1 : vector<2x240x32xf32>, vector<2x16x32xf32> -> vector<2x256x32xf32>
    %204 = vector.shape_cast %200 : vector<256x1xf32> to vector<1x256x1xf32>
    %205 = vector.broadcast %204 : vector<1x256x1xf32> to vector<2x256x32xf32>
    %206 = arith.mulf %203, %205 : vector<2x256x32xf32>
    %207 = arith.truncf %206 : vector<2x256x32xf32> to vector<2x256x32xbf16>
    %c0_80 = arith.constant 0 : index
    %c0_81 = arith.constant 0 : index
    %c224 = arith.constant 224 : index
    %208 = vector.load %arg10[%c0_80, %c0_81, %c224] : memref<2x256x288xbf16, #tpu.memory_space<vmem>>, vector<2x256x32xbf16>
    tpu.vector_store %arg10[%c0_80, %c0_81, %c224], %207 {strides = array<i32>} : memref<2x256x288xbf16, #tpu.memory_space<vmem>>, vector<2x256x32xbf16>,
    %c8_82 = arith.constant 8 : index
    %c0_83 = arith.constant 0 : index
    %c0_84 = arith.constant 0 : index
    %209 = vector.load %arg2[%c8_82, %c0_83, %c0_84] : memref<9x256x1xf32, #tpu.memory_space<vmem>>, vector<1x256x1xf32>
    %210 = vector.shape_cast %209 : vector<1x256x1xf32> to vector<256x1xf32>
    %cst_85 = arith.constant 0.000000e+00 : f32
    %211 = vector.broadcast %cst_85 : f32 to vector<2x17x32xf32>
    %212 = vector.extract_strided_slice %131 {offsets = [0, 17, 0], sizes = [2, 239, 32], strides = [1, 1, 1]} : vector<2x256x32xf32> to vector<2x239x32xf32>
    %213 = tpu.concatenate %212, %211 in 1 : vector<2x239x32xf32>, vector<2x17x32xf32> -> vector<2x256x32xf32>
    %214 = vector.shape_cast %210 : vector<256x1xf32> to vector<1x256x1xf32>
    %215 = vector.broadcast %214 : vector<1x256x1xf32> to vector<2x256x32xf32>
    %216 = arith.mulf %213, %215 : vector<2x256x32xf32>
    %217 = arith.truncf %216 : vector<2x256x32xf32> to vector<2x256x32xbf16>
    %c0_86 = arith.constant 0 : index
    %c0_87 = arith.constant 0 : index
    %c256 = arith.constant 256 : index
    %218 = vector.load %arg10[%c0_86, %c0_87, %c256] : memref<2x256x288xbf16, #tpu.memory_space<vmem>>, vector<2x256x32xbf16>
    tpu.vector_store %arg10[%c0_86, %c0_87, %c256], %217 {strides = array<i32>} : memref<2x256x288xbf16, #tpu.memory_space<vmem>>, vector<2x256x32xbf16>,
    %c0_88 = arith.constant 0 : index
    %c0_89 = arith.constant 0 : index
    %c0_90 = arith.constant 0 : index
    %219 = vector.load %arg10[%c0_88, %c0_89, %c0_90] : memref<2x256x288xbf16, #tpu.memory_space<vmem>>, vector<2x256x288xbf16>
    %220 = vector.shape_cast %219 : vector<2x256x288xbf16> to vector<512x288xbf16>
    %c0_91 = arith.constant 0 : index
    %c0_92 = arith.constant 0 : index
    %221 = vector.load %arg5[%c0_91, %c0_92] : memref<288x64xbf16, #tpu.memory_space<vmem>>, vector<288x64xbf16>
    %cst_93 = arith.constant dense<0.000000e+00> : vector<512x64xf32>
    %222 = tpu.matmul %220, %221, %cst_93 {dimension_numbers = #tpu.dot_dimension_numbers<[1], [0], [0], [1], [0, 0, 1, 1], [], []>} : vector<512x288xbf16>, vector<288x64xbf16>, vector<512x64xf32> -> vector<512x64xf32>
    %c0_94 = arith.constant 0 : index
    %c0_95 = arith.constant 0 : index
    %223 = vector.load %arg6[%c0_94, %c0_95] : memref<1x64xf32, #tpu.memory_space<vmem>>, vector<1x64xf32>
    %224 = vector.broadcast %223 : vector<1x64xf32> to vector<512x64xf32>
    %225 = arith.addf %222, %224 : vector<512x64xf32>
    %cst_96 = arith.constant 0.000000e+00 : f32
    %226 = vector.broadcast %cst_96 : f32 to vector<512x64xf32>
    %227 = arith.maximumf %225, %226 : vector<512x64xf32>
    %228 = vector.shape_cast %227 : vector<512x64xf32> to vector<2x256x64xf32>
    %cst_97 = arith.constant dense<0.000000e+00> : vector<2x64xf32>
    %229 = vector.multi_reduction <add>, %228, %cst_97 [1] : vector<2x256x64xf32> to vector<2x64xf32>
    %cst_98 = arith.constant 2.560000e+02 : f32
    %230 = vector.broadcast %cst_98 : f32 to vector<2x64xf32>
    %231 = arith.divf %229, %230 : vector<2x64xf32>
    %232 = arith.truncf %231 : vector<2x64xf32> to vector<2x64xbf16>
    %c0_99 = arith.constant 0 : index
    %c0_100 = arith.constant 0 : index
    %233 = vector.load %arg7[%c0_99, %c0_100] : memref<64x128xbf16, #tpu.memory_space<vmem>>, vector<64x128xbf16>
    %cst_101 = arith.constant dense<0.000000e+00> : vector<2x128xf32>
    %234 = tpu.matmul %232, %233, %cst_101 {dimension_numbers = #tpu.dot_dimension_numbers<[1], [0], [0], [1], [0, 0, 1, 1], [], []>} : vector<2x64xbf16>, vector<64x128xbf16>, vector<2x128xf32> -> vector<2x128xf32>
    %c0_102 = arith.constant 0 : index
    %c0_103 = arith.constant 0 : index
    %235 = vector.load %arg8[%c0_102, %c0_103] : memref<1x128xf32, #tpu.memory_space<vmem>>, vector<1x128xf32>
    %236 = vector.broadcast %235 : vector<1x128xf32> to vector<2x128xf32>
    %237 = arith.addf %234, %236 : vector<2x128xf32>
    %c0_104 = arith.constant 0 : index
    %c0_105 = arith.constant 0 : index
    %238 = vector.load %arg9[%c0_104, %c0_105] : memref<2x128xf32, #tpu.memory_space<vmem>>, vector<2x128xf32>
    tpu.vector_store %arg9[%c0_104, %c0_105], %237 {strides = array<i32>} : memref<2x128xf32, #tpu.memory_space<vmem>>, vector<2x128xf32>,
    return
  }
  func.func @transform_0(%arg0: i32) -> (i32, i32, i32) {
    %c0_i32 = arith.constant 0 : i32
    %c0_i32_0 = arith.constant 0 : i32
    %c0_i32_1 = arith.constant 0 : i32
    return %arg0, %c0_i32, %c0_i32_0 : i32, i32, i32
  }
  func.func @transform_1(%arg0: i32) -> (i32, i32, i32) {
    %c0_i32 = arith.constant 0 : i32
    %c0_i32_0 = arith.constant 0 : i32
    %c0_i32_1 = arith.constant 0 : i32
    %c0_i32_2 = arith.constant 0 : i32
    return %c0_i32, %c0_i32_0, %c0_i32_1 : i32, i32, i32
  }
  func.func @transform_2(%arg0: i32) -> (i32, i32) {
    %c0_i32 = arith.constant 0 : i32
    %c0_i32_0 = arith.constant 0 : i32
    %c0_i32_1 = arith.constant 0 : i32
    return %c0_i32, %c0_i32_0 : i32, i32
  }
  func.func @transform_3(%arg0: i32) -> (i32, i32) {
    %c0_i32 = arith.constant 0 : i32
    %c0_i32_0 = arith.constant 0 : i32
    %c0_i32_1 = arith.constant 0 : i32
    return %c0_i32, %c0_i32_0 : i32, i32
  }
  func.func @transform_4(%arg0: i32) -> (i32, i32) {
    %c0_i32 = arith.constant 0 : i32
    %c0_i32_0 = arith.constant 0 : i32
    %c0_i32_1 = arith.constant 0 : i32
    return %c0_i32, %c0_i32_0 : i32, i32
  }
  func.func @transform_5(%arg0: i32) -> (i32, i32) {
    %c0_i32 = arith.constant 0 : i32
    %c0_i32_0 = arith.constant 0 : i32
    %c0_i32_1 = arith.constant 0 : i32
    return %c0_i32, %c0_i32_0 : i32, i32
  }
  func.func @transform_6(%arg0: i32) -> (i32, i32) {
    %c0_i32 = arith.constant 0 : i32
    %c0_i32_0 = arith.constant 0 : i32
    %c0_i32_1 = arith.constant 0 : i32
    return %c0_i32, %c0_i32_0 : i32, i32
  }
  func.func @transform_7(%arg0: i32) -> (i32, i32) {
    %c0_i32 = arith.constant 0 : i32
    %c0_i32_0 = arith.constant 0 : i32
    %c0_i32_1 = arith.constant 0 : i32
    return %c0_i32, %c0_i32_0 : i32, i32
  }
  func.func @transform_8(%arg0: i32) -> (i32, i32) {
    %c0_i32 = arith.constant 0 : i32
    %c0_i32_0 = arith.constant 0 : i32
    return %arg0, %c0_i32 : i32, i32
  }
}

</mosaic_0001>

<llo_original>
// kernel: tpu_custom_call.1
$region0: #{tpu_custom_call.1}
  #allocation0 [shape = 'u32[]', space=smem, size = 0x4, offset = 0x4, fixed_abs, tag = 'smem constant byte address 0x4 - core index']
  #allocation1 [shape = 'u32[144,128]{1,0:T(1,128)}', space=vmem, size = 0x12000, scoped, tag = 'internal scratch']
  #allocation2 [shape = 'bf16[2,256,288]{2,1,0:T(16,128)(2,1)}', space=vmem, size = 0x60000, scoped, tag = 'scratch operand']
  %s0 = inlined_call_operand.vmem [shape: f32[2,256,1], index: 0, kind: input, shape index: {}]
  %s1 = inlined_call_operand.vmem [shape: f32[9,256,1], index: 1, kind: input, shape index: {}]
  %s2 = inlined_call_operand.vmem [shape: f32[9,32], index: 2, kind: input, shape index: {}]
  %s3 = inlined_call_operand.vmem [shape: f32[1,32], index: 3, kind: input, shape index: {}]
  %s4 = inlined_call_operand.vmem [shape: bf16[288,64], index: 4, kind: input, shape index: {}]
  %s5 = inlined_call_operand.vmem [shape: f32[1,64], index: 5, kind: input, shape index: {}]
  %s6 = inlined_call_operand.vmem [shape: bf16[64,128], index: 6, kind: input, shape index: {}]
  %s7 = inlined_call_operand.vmem [shape: f32[1,128], index: 7, kind: input, shape index: {}]
  %s8 = inlined_call_operand.hbm [shape: f32[2,128], index: 8, kind: output, shape index: {}]
  %s9 = sld [smem:[#allocation0]]
  $region42: #{tpu_custom_call.1} parent=0
    _
  %s11 = ssub.s32 1, %s9
  %s12 = scalar_select 0, %s11, %s9
  $region1: #{tpu_custom_call.1} parent=0
    #allocation3 [shape = 'u8[1024]{0}', space=vmem, size = 0x400, scoped, tag = 'output window, operand 0, single buffered']
    #allocation4 [shape = 's32[1]{0}', space=sflag, size = 0x4, scoped, tag = 'scoped memory for tpu_custom_call.1']
    %13 = vsyncpa [#allocation4], 0
    // Predicated region
    $region2: #{tpu_custom_call.1} parent=1 // pred_check
      _
    $region3: #{tpu_custom_call.1} parent=1 // pred_check_branch
      %15 = sbr.rel (0) target = $region5
    $region4: #{tpu_custom_call.1} parent=1 // pred_region
      _
    $region5: #{tpu_custom_call.1} parent=1 // pred_fallthru
      _
    // Predicated region
    $region6: #{tpu_custom_call.1} parent=1 // pred_check
      _
    $region7: #{tpu_custom_call.1} parent=1 // pred_check_branch
      %17 = sbr.rel (0) target = $region9
    $region8: #{tpu_custom_call.1} parent=1 // pred_region
      _
    $region9: #{tpu_custom_call.1} parent=1 // pred_fallthru
      _
    // Predicated region
    $region10: #{tpu_custom_call.1} parent=1 // pred_check
      _
    $region11: #{tpu_custom_call.1} parent=1 // pred_check_branch
      %19 = sbr.rel (0) target = $region13
    $region12: #{tpu_custom_call.1} parent=1 // pred_region
      _
    $region13: #{tpu_custom_call.1} parent=1 // pred_fallthru
      _
    // Predicated region
    $region14: #{tpu_custom_call.1} parent=1 // pred_check
      _
    $region15: #{tpu_custom_call.1} parent=1 // pred_check_branch
      %21 = sbr.rel (0) target = $region17
    $region16: #{tpu_custom_call.1} parent=1 // pred_region
      _
    $region17: #{tpu_custom_call.1} parent=1 // pred_fallthru
      _
    // Predicated region
    $region18: #{tpu_custom_call.1} parent=1 // pred_check
      _
    $region19: #{tpu_custom_call.1} parent=1 // pred_check_branch
      %23 = sbr.rel (0) target = $region21
    $region20: #{tpu_custom_call.1} parent=1 // pred_region
      _
    $region21: #{tpu_custom_call.1} parent=1 // pred_fallthru
      _
    // Predicated region
    $region22: #{tpu_custom_call.1} parent=1 // pred_check
      _
    $region23: #{tpu_custom_call.1} parent=1 // pred_check_branch
      %25 = sbr.rel (0) target = $region25
    $region24: #{tpu_custom_call.1} parent=1 // pred_region
      _
    $region25: #{tpu_custom_call.1} parent=1 // pred_fallthru
      _
    // Predicated region
    $region26: #{tpu_custom_call.1} parent=1 // pred_check
      _
    $region27: #{tpu_custom_call.1} parent=1 // pred_check_branch
      %27 = sbr.rel (0) target = $region29
    $region28: #{tpu_custom_call.1} parent=1 // pred_region
      _
    $region29: #{tpu_custom_call.1} parent=1 // pred_fallthru
      _
    // Predicated region
    $region30: #{tpu_custom_call.1} parent=1 // pred_check
      _
    $region31: #{tpu_custom_call.1} parent=1 // pred_check_branch
      %29 = sbr.rel (0) target = $region33
    $region32: #{tpu_custom_call.1} parent=1 // pred_region
      _
    $region33: #{tpu_custom_call.1} parent=1 // pred_fallthru
      _
    %v31 = vld [vmem:[%s0] sm:$0xff]
    %v32 = vld [vmem:[%s0 + $0x8] sm:$0xff]
    %v33 = vld [vmem:[%s0 + $0x10] sm:$0xff]
    %v34 = vld [vmem:[%s0 + $0x18] sm:$0xff]
    %v35 = vld [vmem:[%s0 + $0x20] sm:$0xff]
    %v36 = vld [vmem:[%s0 + $0x28] sm:$0xff]
    %v37 = vld [vmem:[%s0 + $0x30] sm:$0xff]
    %v38 = vld [vmem:[%s0 + $0x38] sm:$0xff]
    %v39 = vld [vmem:[%s0 + $0x40] sm:$0xff]
    %v40 = vld [vmem:[%s0 + $0x48] sm:$0xff]
    %v41 = vld [vmem:[%s0 + $0x50] sm:$0xff]
    %v42 = vld [vmem:[%s0 + $0x58] sm:$0xff]
    %v43 = vld [vmem:[%s0 + $0x60] sm:$0xff]
    %v44 = vld [vmem:[%s0 + $0x68] sm:$0xff]
    %v45 = vld [vmem:[%s0 + $0x70] sm:$0xff]
    %v46 = vld [vmem:[%s0 + $0x78] sm:$0xff]
    %v47 = vld [vmem:[%s0 + $0x80] sm:$0xff]
    %v48 = vld [vmem:[%s0 + $0x88] sm:$0xff]
    %v49 = vld [vmem:[%s0 + $0x90] sm:$0xff]
    %v50 = vld [vmem:[%s0 + $0x98] sm:$0xff]
    %v51 = vld [vmem:[%s0 + $0xa0] sm:$0xff]
    %v52 = vld [vmem:[%s0 + $0xa8] sm:$0xff]
    %v53 = vld [vmem:[%s0 + $0xb0] sm:$0xff]
    %v54 = vld [vmem:[%s0 + $0xb8] sm:$0xff]
    %v55 = vld [vmem:[%s0 + $0xc0] sm:$0xff]
    %v56 = vld [vmem:[%s0 + $0xc8] sm:$0xff]
    %v57 = vld [vmem:[%s0 + $0xd0] sm:$0xff]
    %v58 = vld [vmem:[%s0 + $0xd8] sm:$0xff]
    %v59 = vld [vmem:[%s0 + $0xe0] sm:$0xff]
    %v60 = vld [vmem:[%s0 + $0xe8] sm:$0xff]
    %v61 = vld [vmem:[%s0 + $0xf0] sm:$0xff]
    %v62 = vld [vmem:[%s0 + $0xf8] sm:$0xff]
    %v63 = vld [vmem:[%s0 + $0x100] sm:$0xff]
    %v64 = vld [vmem:[%s0 + $0x108] sm:$0xff]
    %v65 = vld [vmem:[%s0 + $0x110] sm:$0xff]
    %v66 = vld [vmem:[%s0 + $0x118] sm:$0xff]
    %v67 = vld [vmem:[%s0 + $0x120] sm:$0xff]
    %v68 = vld [vmem:[%s0 + $0x128] sm:$0xff]
    %v69 = vld [vmem:[%s0 + $0x130] sm:$0xff]
    %v70 = vld [vmem:[%s0 + $0x138] sm:$0xff]
    %v71 = vld [vmem:[%s0 + $0x140] sm:$0xff]
    %v72 = vld [vmem:[%s0 + $0x148] sm:$0xff]
    %v73 = vld [vmem:[%s0 + $0x150] sm:$0xff]
    %v74 = vld [vmem:[%s0 + $0x158] sm:$0xff]
    %v75 = vld [vmem:[%s0 + $0x160] sm:$0xff]
    %v76 = vld [vmem:[%s0 + $0x168] sm:$0xff]
    %v77 = vld [vmem:[%s0 + $0x170] sm:$0xff]
    %v78 = vld [vmem:[%s0 + $0x178] sm:$0xff]
    %v79 = vld [vmem:[%s0 + $0x180] sm:$0xff]
    %v80 = vld [vmem:[%s0 + $0x188] sm:$0xff]
    %v81 = vld [vmem:[%s0 + $0x190] sm:$0xff]
    %v82 = vld [vmem:[%s0 + $0x198] sm:$0xff]
    %v83 = vld [vmem:[%s0 + $0x1a0] sm:$0xff]
    %v84 = vld [vmem:[%s0 + $0x1a8] sm:$0xff]
    %v85 = vld [vmem:[%s0 + $0x1b0] sm:$0xff]
    %v86 = vld [vmem:[%s0 + $0x1b8] sm:$0xff]
    %v87 = vld [vmem:[%s0 + $0x1c0] sm:$0xff]
    %v88 = vld [vmem:[%s0 + $0x1c8] sm:$0xff]
    %v89 = vld [vmem:[%s0 + $0x1d0] sm:$0xff]
    %v90 = vld [vmem:[%s0 + $0x1d8] sm:$0xff]
    %v91 = vld [vmem:[%s0 + $0x1e0] sm:$0xff]
    %v92 = vld [vmem:[%s0 + $0x1e8] sm:$0xff]
    %v93 = vld [vmem:[%s0 + $0x1f0] sm:$0xff]
    %v94 = vld [vmem:[%s0 + $0x1f8] sm:$0xff]
    %v95 = vld [vmem:[%s2] sm:$0xff]
    %v96 = vld [vmem:[%s2 + $0x8] sm:$0x1]
    %v97 = vld [vmem:[%s1] sm:$0xff]
    %v98 = vld [vmem:[%s1 + $0x8] sm:$0xff]
    %v99 = vld [vmem:[%s1 + $0x10] sm:$0xff]
    %v100 = vld [vmem:[%s1 + $0x18] sm:$0xff]
    %v101 = vld [vmem:[%s1 + $0x20] sm:$0xff]
    %v102 = vld [vmem:[%s1 + $0x28] sm:$0xff]
    %v103 = vld [vmem:[%s1 + $0x30] sm:$0xff]
    %v104 = vld [vmem:[%s1 + $0x38] sm:$0xff]
    %v105 = vld [vmem:[%s1 + $0x40] sm:$0xff]
    %v106 = vld [vmem:[%s1 + $0x48] sm:$0xff]
    %v107 = vld [vmem:[%s1 + $0x50] sm:$0xff]
    %v108 = vld [vmem:[%s1 + $0x58] sm:$0xff]
    %v109 = vld [vmem:[%s1 + $0x60] sm:$0xff]
    %v110 = vld [vmem:[%s1 + $0x68] sm:$0xff]
    %v111 = vld [vmem:[%s1 + $0x70] sm:$0xff]
    %v112 = vld [vmem:[%s1 + $0x78] sm:$0xff]
    %v113 = vld [vmem:[%s1 + $0x80] sm:$0xff]
    %v114 = vld [vmem:[%s1 + $0x88] sm:$0xff]
    %v115 = vld [vmem:[%s1 + $0x90] sm:$0xff]
    %v116 = vld [vmem:[%s1 + $0x98] sm:$0xff]
    %v117 = vld [vmem:[%s1 + $0xa0] sm:$0xff]
    %v118 = vld [vmem:[%s1 + $0xa8] sm:$0xff]
    %v119 = vld [vmem:[%s1 + $0xb0] sm:$0xff]
    %v120 = vld [vmem:[%s1 + $0xb8] sm:$0xff]
    %v121 = vld [vmem:[%s1 + $0xc0] sm:$0xff]
    %v122 = vld [vmem:[%s1 + $0xc8] sm:$0xff]
    %v123 = vld [vmem:[%s1 + $0xd0] sm:$0xff]
    %v124 = vld [vmem:[%s1 + $0xd8] sm:$0xff]
    %v125 = vld [vmem:[%s1 + $0xe0] sm:$0xff]
    %v126 = vld [vmem:[%s1 + $0xe8] sm:$0xff]
    %v127 = vld [vmem:[%s1 + $0xf0] sm:$0xff]
    %v128 = vld [vmem:[%s1 + $0xf8] sm:$0xff]
    %vm189 = vcmask 1040384
    %v190 = vrot.slane %v31, 7
    %v191 = vrot.slane %v32, 7
    %v192 = vsel %vm189, %v190, %v191
    %v193 = vrot.slane %v33, 7
    %v194 = vsel %vm189, %v191, %v193
    %v195 = vrot.slane %v34, 7
    %v196 = vsel %vm189, %v193, %v195
    %v197 = vrot.slane %v35, 7
    %v198 = vsel %vm189, %v195, %v197
    %v199 = vrot.slane %v36, 7
    %v200 = vsel %vm189, %v197, %v199
    %v201 = vrot.slane %v37, 7
    %v202 = vsel %vm189, %v199, %v201
    %v203 = vrot.slane %v38, 7
    %v204 = vsel %vm189, %v201, %v203
    %v205 = vrot.slane %v39, 7
    %v206 = vsel %vm189, %v203, %v205
    %v207 = vrot.slane %v40, 7
    %v208 = vsel %vm189, %v205, %v207
    %v209 = vrot.slane %v41, 7
    %v210 = vsel %vm189, %v207, %v209
    %v211 = vrot.slane %v42, 7
    %v212 = vsel %vm189, %v209, %v211
    %v213 = vrot.slane %v43, 7
    %v214 = vsel %vm189, %v211, %v213
    %v215 = vrot.slane %v44, 7
    %v216 = vsel %vm189, %v213, %v215
    %v217 = vrot.slane %v45, 7
    %v218 = vsel %vm189, %v215, %v217
    %v219 = vrot.slane %v46, 7
    %v220 = vsel %vm189, %v217, %v219
    %v221 = vrot.slane %v47, 7
    %v222 = vsel %vm189, %v219, %v221
    %v223 = vrot.slane %v48, 7
    %v224 = vsel %vm189, %v221, %v223
    %v225 = vrot.slane %v49, 7
    %v226 = vsel %vm189, %v223, %v225
    %v227 = vrot.slane %v50, 7
    %v228 = vsel %vm189, %v225, %v227
    %v229 = vrot.slane %v51, 7
    %v230 = vsel %vm189, %v227, %v229
    %v231 = vrot.slane %v52, 7
    %v232 = vsel %vm189, %v229, %v231
    %v233 = vrot.slane %v53, 7
    %v234 = vsel %vm189, %v231, %v233
    %v235 = vrot.slane %v54, 7
    %v236 = vsel %vm189, %v233, %v235
    %v237 = vrot.slane %v55, 7
    %v238 = vsel %vm189, %v235, %v237
    %v239 = vrot.slane %v56, 7
    %v240 = vsel %vm189, %v237, %v239
    %v241 = vrot.slane %v57, 7
    %v242 = vsel %vm189, %v239, %v241
    %v243 = vrot.slane %v58, 7
    %v244 = vsel %vm189, %v241, %v243
    %v245 = vrot.slane %v59, 7
    %v246 = vsel %vm189, %v243, %v245
    %v247 = vrot.slane %v60, 7
    %v248 = vsel %vm189, %v245, %v247
    %v249 = vrot.slane %v63, 7
    %v250 = vrot.slane %v64, 7
    %v251 = vsel %vm189, %v249, %v250
    %v252 = vrot.slane %v65, 7
    %v253 = vsel %vm189, %v250, %v252
    %v254 = vrot.slane %v66, 7
    %v255 = vsel %vm189, %v252, %v254
    %v256 = vrot.slane %v67, 7
    %v257 = vsel %vm189, %v254, %v256
    %v258 = vrot.slane %v68, 7
    %v259 = vsel %vm189, %v256, %v258
    %v260 = vrot.slane %v69, 7
    %v261 = vsel %vm189, %v258, %v260
    %v262 = vrot.slane %v70, 7
    %v263 = vsel %vm189, %v260, %v262
    %v264 = vrot.slane %v71, 7
    %v265 = vsel %vm189, %v262, %v264
    %v266 = vrot.slane %v72, 7
    %v267 = vsel %vm189, %v264, %v266
    %v268 = vrot.slane %v73, 7
    %v269 = vsel %vm189, %v266, %v268
    %v270 = vrot.slane %v74, 7
    %v271 = vsel %vm189, %v268, %v270
    %v272 = vrot.slane %v75, 7
    %v273 = vsel %vm189, %v270, %v272
    %v274 = vrot.slane %v76, 7
    %v275 = vsel %vm189, %v272, %v274
    %v276 = vrot.slane %v77, 7
    %v277 = vsel %vm189, %v274, %v276
    %v278 = vrot.slane %v78, 7
    %v279 = vsel %vm189, %v276, %v278
    %v280 = vrot.slane %v79, 7
    %v281 = vsel %vm189, %v278, %v280
    %v282 = vrot.slane %v80, 7
    %v283 = vsel %vm189, %v280, %v282
    %v284 = vrot.slane %v81, 7
    %v285 = vsel %vm189, %v282, %v284
    %v286 = vrot.slane %v82, 7
    %v287 = vsel %vm189, %v284, %v286
    %v288 = vrot.slane %v83, 7
    %v289 = vsel %vm189, %v286, %v288
    %v290 = vrot.slane %v84, 7
    %v291 = vsel %vm189, %v288, %v290
    %v292 = vrot.slane %v85, 7
    %v293 = vsel %vm189, %v290, %v292
    %v294 = vrot.slane %v86, 7
    %v295 = vsel %vm189, %v292, %v294
    %v296 = vrot.slane %v87, 7
    %v297 = vsel %vm189, %v294, %v296
    %v298 = vrot.slane %v88, 7
    %v299 = vsel %vm189, %v296, %v298
    %v300 = vrot.slane %v89, 7
    %v301 = vsel %vm189, %v298, %v300
    %v302 = vrot.slane %v90, 7
    %v303 = vsel %vm189, %v300, %v302
    %v304 = vrot.slane %v91, 7
    %v305 = vsel %vm189, %v302, %v304
    %v306 = vrot.slane %v92, 7
    %v307 = vsel %vm189, %v304, %v306
    %v368 = vsel %vm189, 0.0, %v190
    %v369 = vsel %vm189, 0.0, %v249
    %v370 = vmul.f32 %v97, 0.0
    %v371 = vmul.f32 %v98, 0.0
    %v372 = vmul.f32 %v368, %v99
    %v373 = vmul.f32 %v192, %v100
    %v374 = vmul.f32 %v194, %v101
    %v375 = vmul.f32 %v196, %v102
    %v376 = vmul.f32 %v198, %v103
    %v377 = vmul.f32 %v200, %v104
    %v378 = vmul.f32 %v202, %v105
    %v379 = vmul.f32 %v204, %v106
    %v380 = vmul.f32 %v206, %v107
    %v381 = vmul.f32 %v208, %v108
    %v382 = vmul.f32 %v210, %v109
    %v383 = vmul.f32 %v212, %v110
    %v384 = vmul.f32 %v214, %v111
    %v385 = vmul.f32 %v216, %v112
    %v386 = vmul.f32 %v218, %v113
    %v387 = vmul.f32 %v220, %v114
    %v388 = vmul.f32 %v222, %v115
    %v389 = vmul.f32 %v224, %v116
    %v390 = vmul.f32 %v226, %v117
    %v391 = vmul.f32 %v228, %v118
    %v392 = vmul.f32 %v230, %v119
    %v393 = vmul.f32 %v232, %v120
    %v394 = vmul.f32 %v234, %v121
    %v395 = vmul.f32 %v236, %v122
    %v396 = vmul.f32 %v238, %v123
    %v397 = vmul.f32 %v240, %v124
    %v398 = vmul.f32 %v242, %v125
    %v399 = vmul.f32 %v244, %v126
    %v400 = vmul.f32 %v246, %v127
    %v401 = vmul.f32 %v248, %v128
    %v402 = vmul.f32 %v369, %v99
    %v403 = vmul.f32 %v251, %v100
    %v404 = vmul.f32 %v253, %v101
    %v405 = vmul.f32 %v255, %v102
    %v406 = vmul.f32 %v257, %v103
    %v407 = vmul.f32 %v259, %v104
    %v408 = vmul.f32 %v261, %v105
    %v409 = vmul.f32 %v263, %v106
    %v410 = vmul.f32 %v265, %v107
    %v411 = vmul.f32 %v267, %v108
    %v412 = vmul.f32 %v269, %v109
    %v413 = vmul.f32 %v271, %v110
    %v414 = vmul.f32 %v273, %v111
    %v415 = vmul.f32 %v275, %v112
    %v416 = vmul.f32 %v277, %v113
    %v417 = vmul.f32 %v279, %v114
    %v418 = vmul.f32 %v281, %v115
    %v419 = vmul.f32 %v283, %v116
    %v420 = vmul.f32 %v285, %v117
    %v421 = vmul.f32 %v287, %v118
    %v422 = vmul.f32 %v289, %v119
    %v423 = vmul.f32 %v291, %v120
    %v424 = vmul.f32 %v293, %v121
    %v425 = vmul.f32 %v295, %v122
    %v426 = vmul.f32 %v297, %v123
    %v427 = vmul.f32 %v299, %v124
    %v428 = vmul.f32 %v301, %v125
    %v429 = vmul.f32 %v303, %v126
    %v430 = vmul.f32 %v305, %v127
    %v431 = vmul.f32 %v307, %v128
    %433 = vset.pattern.permute.xlu0 0
    %434 = vperm.xlu0 %433, %v370
    %v435 = vpop.permute.xlu0 %434
    %438 = vset.pattern.permute.xlu0 0
    %439 = vperm.xlu0 %438, %v371
    %v440 = vpop.permute.xlu0 %439
    %443 = vset.pattern.permute.xlu0 0
    %444 = vperm.xlu0 %443, %v372
    %v445 = vpop.permute.xlu0 %444
    %448 = vset.pattern.permute.xlu0 0
    %449 = vperm.xlu0 %448, %v373
    %v450 = vpop.permute.xlu0 %449
    %453 = vset.pattern.permute.xlu0 0
    %454 = vperm.xlu0 %453, %v374
    %v455 = vpop.permute.xlu0 %454
    %458 = vset.pattern.permute.xlu0 0
    %459 = vperm.xlu0 %458, %v375
    %v460 = vpop.permute.xlu0 %459
    %463 = vset.pattern.permute.xlu0 0
    %464 = vperm.xlu0 %463, %v376
    %v465 = vpop.permute.xlu0 %464
    %468 = vset.pattern.permute.xlu0 0
    %469 = vperm.xlu0 %468, %v377
    %v470 = vpop.permute.xlu0 %469
    %473 = vset.pattern.permute.xlu0 0
    %474 = vperm.xlu0 %473, %v378
    %v475 = vpop.permute.xlu0 %474
    %478 = vset.pattern.permute.xlu0 0
    %479 = vperm.xlu0 %478, %v379
    %v480 = vpop.permute.xlu0 %479
    %483 = vset.pattern.permute.xlu0 0
    %484 = vperm.xlu0 %483, %v380
    %v485 = vpop.permute.xlu0 %484
    %488 = vset.pattern.permute.xlu0 0
    %489 = vperm.xlu0 %488, %v381
    %v490 = vpop.permute.xlu0 %489
    %493 = vset.pattern.permute.xlu0 0
    %494 = vperm.xlu0 %493, %v382
    %v495 = vpop.permute.xlu0 %494
    %498 = vset.pattern.permute.xlu0 0
    %499 = vperm.xlu0 %498, %v383
    %v500 = vpop.permute.xlu0 %499
    %503 = vset.pattern.permute.xlu0 0
    %504 = vperm.xlu0 %503, %v384
    %v505 = vpop.permute.xlu0 %504
    %508 = vset.pattern.permute.xlu0 0
    %509 = vperm.xlu0 %508, %v385
    %v510 = vpop.permute.xlu0 %509
    %513 = vset.pattern.permute.xlu0 0
    %514 = vperm.xlu0 %513, %v386
    %v515 = vpop.permute.xlu0 %514
    %518 = vset.pattern.permute.xlu0 0
    %519 = vperm.xlu0 %518, %v387
    %v520 = vpop.permute.xlu0 %519
    %523 = vset.pattern.permute.xlu0 0
    %524 = vperm.xlu0 %523, %v388
    %v525 = vpop.permute.xlu0 %524
    %528 = vset.pattern.permute.xlu0 0
    %529 = vperm.xlu0 %528, %v389
    %v530 = vpop.permute.xlu0 %529
    %533 = vset.pattern.permute.xlu0 0
    %534 = vperm.xlu0 %533, %v390
    %v535 = vpop.permute.xlu0 %534
    %538 = vset.pattern.permute.xlu0 0
    %539 = vperm.xlu0 %538, %v391
    %v540 = vpop.permute.xlu0 %539
    %543 = vset.pattern.permute.xlu0 0
    %544 = vperm.xlu0 %543, %v392
    %v545 = vpop.permute.xlu0 %544
    %548 = vset.pattern.permute.xlu0 0
    %549 = vperm.xlu0 %548, %v393
    %v550 = vpop.permute.xlu0 %549
    %553 = vset.pattern.permute.xlu0 0
    %554 = vperm.xlu0 %553, %v394
    %v555 = vpop.permute.xlu0 %554
    %558 = vset.pattern.permute.xlu0 0
    %559 = vperm.xlu0 %558, %v395
    %v560 = vpop.permute.xlu0 %559
    %563 = vset.pattern.permute.xlu0 0
    %564 = vperm.xlu0 %563, %v396
    %v565 = vpop.permute.xlu0 %564
    %568 = vset.pattern.permute.xlu0 0
    %569 = vperm.xlu0 %568, %v397
    %v570 = vpop.permute.xlu0 %569
    %573 = vset.pattern.permute.xlu0 0
    %574 = vperm.xlu0 %573, %v398
    %v575 = vpop.permute.xlu0 %574
    %578 = vset.pattern.permute.xlu0 0
    %579 = vperm.xlu0 %578, %v399
    %v580 = vpop.permute.xlu0 %579
    %583 = vset.pattern.permute.xlu0 0
    %584 = vperm.xlu0 %583, %v400
    %v585 = vpop.permute.xlu0 %584
    %588 = vset.pattern.permute.xlu0 0
    %589 = vperm.xlu0 %588, %v401
    %v590 = vpop.permute.xlu0 %589
    %593 = vset.pattern.permute.xlu0 0
    %594 = vperm.xlu0 %593, %v402
    %v595 = vpop.permute.xlu0 %594
    %598 = vset.pattern.permute.xlu0 0
    %599 = vperm.xlu0 %598, %v403
    %v600 = vpop.permute.xlu0 %599
    %603 = vset.pattern.permute.xlu0 0
    %604 = vperm.xlu0 %603, %v404
    %v605 = vpop.permute.xlu0 %604
    %608 = vset.pattern.permute.xlu0 0
    %609 = vperm.xlu0 %608, %v405
    %v610 = vpop.permute.xlu0 %609
    %613 = vset.pattern.permute.xlu0 0
    %614 = vperm.xlu0 %613, %v406
    %v615 = vpop.permute.xlu0 %614
    %618 = vset.pattern.permute.xlu0 0
    %619 = vperm.xlu0 %618, %v407
    %v620 = vpop.permute.xlu0 %619
    %623 = vset.pattern.permute.xlu0 0
    %624 = vperm.xlu0 %623, %v408
    %v625 = vpop.permute.xlu0 %624
    %628 = vset.pattern.permute.xlu0 0
    %629 = vperm.xlu0 %628, %v409
    %v630 = vpop.permute.xlu0 %629
    %633 = vset.pattern.permute.xlu0 0
    %634 = vperm.xlu0 %633, %v410
    %v635 = vpop.permute.xlu0 %634
    %638 = vset.pattern.permute.xlu0 0
    %639 = vperm.xlu0 %638, %v411
    %v640 = vpop.permute.xlu0 %639
    %643 = vset.pattern.permute.xlu0 0
    %644 = vperm.xlu0 %643, %v412
    %v645 = vpop.permute.xlu0 %644
    %648 = vset.pattern.permute.xlu0 0
    %649 = vperm.xlu0 %648, %v413
    %v650 = vpop.permute.xlu0 %649
    %653 = vset.pattern.permute.xlu0 0
    %654 = vperm.xlu0 %653, %v414
    %v655 = vpop.permute.xlu0 %654
    %658 = vset.pattern.permute.xlu0 0
    %659 = vperm.xlu0 %658, %v415
    %v660 = vpop.permute.xlu0 %659
    %663 = vset.pattern.permute.xlu0 0
    %664 = vperm.xlu0 %663, %v416
    %v665 = vpop.permute.xlu0 %664
    %668 = vset.pattern.permute.xlu0 0
    %669 = vperm.xlu0 %668, %v417
    %v670 = vpop.permute.xlu0 %669
    %673 = vset.pattern.permute.xlu0 0
    %674 = vperm.xlu0 %673, %v418
    %v675 = vpop.permute.xlu0 %674
    %678 = vset.pattern.permute.xlu0 0
    %679 = vperm.xlu0 %678, %v419
    %v680 = vpop.permute.xlu0 %679
    %683 = vset.pattern.permute.xlu0 0
    %684 = vperm.xlu0 %683, %v420
    %v685 = vpop.permute.xlu0 %684
    %688 = vset.pattern.permute.xlu0 0
    %689 = vperm.xlu0 %688, %v421
    %v690 = vpop.permute.xlu0 %689
    %693 = vset.pattern.permute.xlu0 0
    %694 = vperm.xlu0 %693, %v422
    %v695 = vpop.permute.xlu0 %694
    %698 = vset.pattern.permute.xlu0 0
    %699 = vperm.xlu0 %698, %v423
    %v700 = vpop.permute.xlu0 %699
    %703 = vset.pattern.permute.xlu0 0
    %704 = vperm.xlu0 %703, %v424
    %v705 = vpop.permute.xlu0 %704
    %708 = vset.pattern.permute.xlu0 0
    %709 = vperm.xlu0 %708, %v425
    %v710 = vpop.permute.xlu0 %709
    %713 = vset.pattern.permute.xlu0 0
    %714 = vperm.xlu0 %713, %v426
    %v715 = vpop.permute.xlu0 %714
    %718 = vset.pattern.permute.xlu0 0
    %719 = vperm.xlu0 %718, %v427
    %v720 = vpop.permute.xlu0 %719
    %723 = vset.pattern.permute.xlu0 0
    %724 = vperm.xlu0 %723, %v428
    %v725 = vpop.permute.xlu0 %724
    %728 = vset.pattern.permute.xlu0 0
    %729 = vperm.xlu0 %728, %v429
    %v730 = vpop.permute.xlu0 %729
    %733 = vset.pattern.permute.xlu0 0
    %734 = vperm.xlu0 %733, %v430
    %v735 = vpop.permute.xlu0 %734
    %738 = vset.pattern.permute.xlu0 0
    %739 = vperm.xlu0 %738, %v431
    %v740 = vpop.permute.xlu0 %739
    %v742 = vlaneseq
    %v743 = vshrl.u32 %v742, 7
    %v744 = vsub.s32 0, %v743
    %v745 = vrot.slane %v95, %v744
    %v746 = vmul.f32 %v435, %v745
    %v747 = vmul.f32 %v440, %v745
    %v748 = vmul.f32 %v445, %v745
    %v749 = vmul.f32 %v450, %v745
    %v750 = vmul.f32 %v455, %v745
    %v751 = vmul.f32 %v460, %v745
    %v752 = vmul.f32 %v465, %v745
    %v753 = vmul.f32 %v470, %v745
    %v754 = vmul.f32 %v475, %v745
    %v755 = vmul.f32 %v480, %v745
    %v756 = vmul.f32 %v485, %v745
    %v757 = vmul.f32 %v490, %v745
    %v758 = vmul.f32 %v495, %v745
    %v759 = vmul.f32 %v500, %v745
    %v760 = vmul.f32 %v505, %v745
    %v761 = vmul.f32 %v510, %v745
    %v762 = vmul.f32 %v515, %v745
    %v763 = vmul.f32 %v520, %v745
    %v764 = vmul.f32 %v525, %v745
    %v765 = vmul.f32 %v530, %v745
    %v766 = vmul.f32 %v535, %v745
    %v767 = vmul.f32 %v540, %v745
    %v768 = vmul.f32 %v545, %v745
    %v769 = vmul.f32 %v550, %v745
    %v770 = vmul.f32 %v555, %v745
    %v771 = vmul.f32 %v560, %v745
    %v772 = vmul.f32 %v565, %v745
    %v773 = vmul.f32 %v570, %v745
    %v774 = vmul.f32 %v575, %v745
    %v775 = vmul.f32 %v580, %v745
    %v776 = vmul.f32 %v585, %v745
    %v777 = vmul.f32 %v590, %v745
    %v778 = vmul.f32 %v595, %v745
    %v779 = vmul.f32 %v600, %v745
    %v780 = vmul.f32 %v605, %v745
    %v781 = vmul.f32 %v610, %v745
    %v782 = vmul.f32 %v615, %v745
    %v783 = vmul.f32 %v620, %v745
    %v784 = vmul.f32 %v625, %v745
    %v785 = vmul.f32 %v630, %v745
    %v786 = vmul.f32 %v635, %v745
    %v787 = vmul.f32 %v640, %v745
    %v788 = vmul.f32 %v645, %v745
    %v789 = vmul.f32 %v650, %v745
    %v790 = vmul.f32 %v655, %v745
    %v791 = vmul.f32 %v660, %v745
    %v792 = vmul.f32 %v665, %v745
    %v793 = vmul.f32 %v670, %v745
    %v794 = vmul.f32 %v675, %v745
    %v795 = vmul.f32 %v680, %v745
    %v796 = vmul.f32 %v685, %v745
    %v797 = vmul.f32 %v690, %v745
    %v798 = vmul.f32 %v695, %v745
    %v799 = vmul.f32 %v700, %v745
    %v800 = vmul.f32 %v705, %v745
    %v801 = vmul.f32 %v710, %v745
    %v802 = vmul.f32 %v715, %v745
    %v803 = vmul.f32 %v720, %v745
    %v804 = vmul.f32 %v725, %v745
    %v805 = vmul.f32 %v730, %v745
    %v806 = vmul.f32 %v735, %v745
    %v807 = vmul.f32 %v740, %v745
    %v808 = vadd.f32 %v746, 0.0
    %v809 = vadd.f32 %v747, 0.0
    %v810 = vadd.f32 %v748, 0.0
    %v811 = vadd.f32 %v749, 0.0
    %v812 = vadd.f32 %v750, 0.0
    %v813 = vadd.f32 %v751, 0.0
    %v814 = vadd.f32 %v752, 0.0
    %v815 = vadd.f32 %v753, 0.0
    %v816 = vadd.f32 %v754, 0.0
    %v817 = vadd.f32 %v755, 0.0
    %v818 = vadd.f32 %v756, 0.0
    %v819 = vadd.f32 %v757, 0.0
    %v820 = vadd.f32 %v758, 0.0
    %v821 = vadd.f32 %v759, 0.0
    %v822 = vadd.f32 %v760, 0.0
    %v823 = vadd.f32 %v761, 0.0
    %v824 = vadd.f32 %v762, 0.0
    %v825 = vadd.f32 %v763, 0.0
    %v826 = vadd.f32 %v764, 0.0
    %v827 = vadd.f32 %v765, 0.0
    %v828 = vadd.f32 %v766, 0.0
    %v829 = vadd.f32 %v767, 0.0
    %v830 = vadd.f32 %v768, 0.0
    %v831 = vadd.f32 %v769, 0.0
    %v832 = vadd.f32 %v770, 0.0
    %v833 = vadd.f32 %v771, 0.0
    %v834 = vadd.f32 %v772, 0.0
    %v835 = vadd.f32 %v773, 0.0
    %v836 = vadd.f32 %v774, 0.0
    %v837 = vadd.f32 %v775, 0.0
    %v838 = vadd.f32 %v776, 0.0
    %v839 = vadd.f32 %v777, 0.0
    %v840 = vadd.f32 %v778, 0.0
    %v841 = vadd.f32 %v779, 0.0
    %v842 = vadd.f32 %v780, 0.0
    %v843 = vadd.f32 %v781, 0.0
    %v844 = vadd.f32 %v782, 0.0
    %v845 = vadd.f32 %v783, 0.0
    %v846 = vadd.f32 %v784, 0.0
    %v847 = vadd.f32 %v785, 0.0
    %v848 = vadd.f32 %v786, 0.0
    %v849 = vadd.f32 %v787, 0.0
    %v850 = vadd.f32 %v788, 0.0
    %v851 = vadd.f32 %v789, 0.0
    %v852 = vadd.f32 %v790, 0.0
    %v853 = vadd.f32 %v791, 0.0
    %v854 = vadd.f32 %v792, 0.0
    %v855 = vadd.f32 %v793, 0.0
    %v856 = vadd.f32 %v794, 0.0
    %v857 = vadd.f32 %v795, 0.0
    %v858 = vadd.f32 %v796, 0.0
    %v859 = vadd.f32 %v797, 0.0
    %v860 = vadd.f32 %v798, 0.0
    %v861 = vadd.f32 %v799, 0.0
    %v862 = vadd.f32 %v800, 0.0
    %v863 = vadd.f32 %v801, 0.0
    %v864 = vadd.f32 %v802, 0.0
    %v865 = vadd.f32 %v803, 0.0
    %v866 = vadd.f32 %v804, 0.0
    %v867 = vadd.f32 %v805, 0.0
    %v868 = vadd.f32 %v806, 0.0
    %v869 = vadd.f32 %v807, 0.0
    %s870 = scalar_lea.vmem %s1, 256
    %v871 = vld [vmem:[%s870] sm:$0xff]
    %v872 = vld [vmem:[%s870 + $0x8] sm:$0xff]
    %v873 = vld [vmem:[%s870 + $0x10] sm:$0xff]
    %v874 = vld [vmem:[%s870 + $0x18] sm:$0xff]
    %v875 = vld [vmem:[%s870 + $0x20] sm:$0xff]
    %v876 = vld [vmem:[%s870 + $0x28] sm:$0xff]
    %v877 = vld [vmem:[%s870 + $0x30] sm:$0xff]
    %v878 = vld [vmem:[%s870 + $0x38] sm:$0xff]
    %v879 = vld [vmem:[%s870 + $0x40] sm:$0xff]
    %v880 = vld [vmem:[%s870 + $0x48] sm:$0xff]
    %v881 = vld [vmem:[%s870 + $0x50] sm:$0xff]
    %v882 = vld [vmem:[%s870 + $0x58] sm:$0xff]
    %v883 = vld [vmem:[%s870 + $0x60] sm:$0xff]
    %v884 = vld [vmem:[%s870 + $0x68] sm:$0xff]
    %v885 = vld [vmem:[%s870 + $0x70] sm:$0xff]
    %v886 = vld [vmem:[%s870 + $0x78] sm:$0xff]
    %v887 = vld [vmem:[%s870 + $0x80] sm:$0xff]
    %v888 = vld [vmem:[%s870 + $0x88] sm:$0xff]
    %v889 = vld [vmem:[%s870 + $0x90] sm:$0xff]
    %v890 = vld [vmem:[%s870 + $0x98] sm:$0xff]
    %v891 = vld [vmem:[%s870 + $0xa0] sm:$0xff]
    %v892 = vld [vmem:[%s870 + $0xa8] sm:$0xff]
    %v893 = vld [vmem:[%s870 + $0xb0] sm:$0xff]
    %v894 = vld [vmem:[%s870 + $0xb8] sm:$0xff]
    %v895 = vld [vmem:[%s870 + $0xc0] sm:$0xff]
    %v896 = vld [vmem:[%s870 + $0xc8] sm:$0xff]
    %v897 = vld [vmem:[%s870 + $0xd0] sm:$0xff]
    %v898 = vld [vmem:[%s870 + $0xd8] sm:$0xff]
    %v899 = vld [vmem:[%s870 + $0xe0] sm:$0xff]
    %v900 = vld [vmem:[%s870 + $0xe8] sm:$0xff]
    %v901 = vld [vmem:[%s870 + $0xf0] sm:$0xff]
    %v902 = vld [vmem:[%s870 + $0xf8] sm:$0xff]
    %v903 = vmul.f32 %v871, 0.0
    %v904 = vmul.f32 %v872, 0.0
    %v905 = vmul.f32 %v31, %v873
    %v906 = vmul.f32 %v32, %v874
    %v907 = vmul.f32 %v33, %v875
    %v908 = vmul.f32 %v34, %v876
    %v909 = vmul.f32 %v35, %v877
    %v910 = vmul.f32 %v36, %v878
    %v911 = vmul.f32 %v37, %v879
    %v912 = vmul.f32 %v38, %v880
    %v913 = vmul.f32 %v39, %v881
    %v914 = vmul.f32 %v40, %v882
    %v915 = vmul.f32 %v41, %v883
    %v916 = vmul.f32 %v42, %v884
    %v917 = vmul.f32 %v43, %v885
    %v918 = vmul.f32 %v44, %v886
    %v919 = vmul.f32 %v45, %v887
    %v920 = vmul.f32 %v46, %v888
    %v921 = vmul.f32 %v47, %v889
    %v922 = vmul.f32 %v48, %v890
    %v923 = vmul.f32 %v49, %v891
    %v924 = vmul.f32 %v50, %v892
    %v925 = vmul.f32 %v51, %v893
    %v926 = vmul.f32 %v52, %v894
    %v927 = vmul.f32 %v53, %v895
    %v928 = vmul.f32 %v54, %v896
    %v929 = vmul.f32 %v55, %v897
    %v930 = vmul.f32 %v56, %v898
    %v931 = vmul.f32 %v57, %v899
    %v932 = vmul.f32 %v58, %v900
    %v933 = vmul.f32 %v59, %v901
    %v934 = vmul.f32 %v60, %v902
    %v935 = vmul.f32 %v63, %v873
    %v936 = vmul.f32 %v64, %v874
    %v937 = vmul.f32 %v65, %v875
    %v938 = vmul.f32 %v66, %v876
    %v939 = vmul.f32 %v67, %v877
    %v940 = vmul.f32 %v68, %v878
    %v941 = vmul.f32 %v69, %v879
    %v942 = vmul.f32 %v70, %v880
    %v943 = vmul.f32 %v71, %v881
    %v944 = vmul.f32 %v72, %v882
    %v945 = vmul.f32 %v73, %v883
    %v946 = vmul.f32 %v74, %v884
    %v947 = vmul.f32 %v75, %v885
    %v948 = vmul.f32 %v76, %v886
    %v949 = vmul.f32 %v77, %v887
    %v950 = vmul.f32 %v78, %v888
    %v951 = vmul.f32 %v79, %v889
    %v952 = vmul.f32 %v80, %v890
    %v953 = vmul.f32 %v81, %v891
    %v954 = vmul.f32 %v82, %v892
    %v955 = vmul.f32 %v83, %v893
    %v956 = vmul.f32 %v84, %v894
    %v957 = vmul.f32 %v85, %v895
    %v958 = vmul.f32 %v86, %v896
    %v959 = vmul.f32 %v87, %v897
    %v960 = vmul.f32 %v88, %v898
    %v961 = vmul.f32 %v89, %v899
    %v962 = vmul.f32 %v90, %v900
    %v963 = vmul.f32 %v91, %v901
    %v964 = vmul.f32 %v92, %v902
    %966 = vset.pattern.permute.xlu0 0
    %967 = vperm.xlu0 %966, %v903
    %v968 = vpop.permute.xlu0 %967
    %971 = vset.pattern.permute.xlu0 0
    %972 = vperm.xlu0 %971, %v904
    %v973 = vpop.permute.xlu0 %972
    %976 = vset.pattern.permute.xlu0 0
    %977 = vperm.xlu0 %976, %v905
    %v978 = vpop.permute.xlu0 %977
    %981 = vset.pattern.permute.xlu0 0
    %982 = vperm.xlu0 %981, %v906
    %v983 = vpop.permute.xlu0 %982
    %986 = vset.pattern.permute.xlu0 0
    %987 = vperm.xlu0 %986, %v907
    %v988 = vpop.permute.xlu0 %987
    %991 = vset.pattern.permute.xlu0 0
    %992 = vperm.xlu0 %991, %v908
    %v993 = vpop.permute.xlu0 %992
    %996 = vset.pattern.permute.xlu0 0
    %997 = vperm.xlu0 %996, %v909
    %v998 = vpop.permute.xlu0 %997
    %1001 = vset.pattern.permute.xlu0 0
    %1002 = vperm.xlu0 %1001, %v910
    %v1003 = vpop.permute.xlu0 %1002
    %1006 = vset.pattern.permute.xlu0 0
    %1007 = vperm.xlu0 %1006, %v911
    %v1008 = vpop.permute.xlu0 %1007
    %1011 = vset.pattern.permute.xlu0 0
    %1012 = vperm.xlu0 %1011, %v912
    %v1013 = vpop.permute.xlu0 %1012
    %1016 = vset.pattern.permute.xlu0 0
    %1017 = vperm.xlu0 %1016, %v913
    %v1018 = vpop.permute.xlu0 %1017
    %1021 = vset.pattern.permute.xlu0 0
    %1022 = vperm.xlu0 %1021, %v914
    %v1023 = vpop.permute.xlu0 %1022
    %1026 = vset.pattern.permute.xlu0 0
    %1027 = vperm.xlu0 %1026, %v915
    %v1028 = vpop.permute.xlu0 %1027
    %1031 = vset.pattern.permute.xlu0 0
    %1032 = vperm.xlu0 %1031, %v916
    %v1033 = vpop.permute.xlu0 %1032
    %1036 = vset.pattern.permute.xlu0 0
    %1037 = vperm.xlu0 %1036, %v917
    %v1038 = vpop.permute.xlu0 %1037
    %1041 = vset.pattern.permute.xlu0 0
    %1042 = vperm.xlu0 %1041, %v918
    %v1043 = vpop.permute.xlu0 %1042
    %1046 = vset.pattern.permute.xlu0 0
    %1047 = vperm.xlu0 %1046, %v919
    %v1048 = vpop.permute.xlu0 %1047
    %1051 = vset.pattern.permute.xlu0 0
    %1052 = vperm.xlu0 %1051, %v920
    %v1053 = vpop.permute.xlu0 %1052
    %1056 = vset.pattern.permute.xlu0 0
    %1057 = vperm.xlu0 %1056, %v921
    %v1058 = vpop.permute.xlu0 %1057
    %1061 = vset.pattern.permute.xlu0 0
    %1062 = vperm.xlu0 %1061, %v922
    %v1063 = vpop.permute.xlu0 %1062
    %1066 = vset.pattern.permute.xlu0 0
    %1067 = vperm.xlu0 %1066, %v923
    %v1068 = vpop.permute.xlu0 %1067
    %1071 = vset.pattern.permute.xlu0 0
    %1072 = vperm.xlu0 %1071, %v924
    %v1073 = vpop.permute.xlu0 %1072
    %1076 = vset.pattern.permute.xlu0 0
    %1077 = vperm.xlu0 %1076, %v925
    %v1078 = vpop.permute.xlu0 %1077
    %1081 = vset.pattern.permute.xlu0 0
    %1082 = vperm.xlu0 %1081, %v926
    %v1083 = vpop.permute.xlu0 %1082
    %1086 = vset.pattern.permute.xlu0 0
    %1087 = vperm.xlu0 %1086, %v927
    %v1088 = vpop.permute.xlu0 %1087
    %1091 = vset.pattern.permute.xlu0 0
    %1092 = vperm.xlu0 %1091, %v928
    %v1093 = vpop.permute.xlu0 %1092
    %1096 = vset.pattern.permute.xlu0 0
    %1097 = vperm.xlu0 %1096, %v929
    %v1098 = vpop.permute.xlu0 %1097
    %1101 = vset.pattern.permute.xlu0 0
    %1102 = vperm.xlu0 %1101, %v930
    %v1103 = vpop.permute.xlu0 %1102
    %1106 = vset.pattern.permute.xlu0 0
    %1107 = vperm.xlu0 %1106, %v931
    %v1108 = vpop.permute.xlu0 %1107
    %1111 = vset.pattern.permute.xlu0 0
    %1112 = vperm.xlu0 %1111, %v932
    %v1113 = vpop.permute.xlu0 %1112
    %1116 = vset.pattern.permute.xlu0 0
    %1117 = vperm.xlu0 %1116, %v933
    %v1118 = vpop.permute.xlu0 %1117
    %1121 = vset.pattern.permute.xlu0 0
    %1122 = vperm.xlu0 %1121, %v934
    %v1123 = vpop.permute.xlu0 %1122
    %1126 = vset.pattern.permute.xlu0 0
    %1127 = vperm.xlu0 %1126, %v935
    %v1128 = vpop.permute.xlu0 %1127
    %1131 = vset.pattern.permute.xlu0 0
    %1132 = vperm.xlu0 %1131, %v936
    %v1133 = vpop.permute.xlu0 %1132
    %1136 = vset.pattern.permute.xlu0 0
    %1137 = vperm.xlu0 %1136, %v937
    %v1138 = vpop.permute.xlu0 %1137
    %1141 = vset.pattern.permute.xlu0 0
    %1142 = vperm.xlu0 %1141, %v938
    %v1143 = vpop.permute.xlu0 %1142
    %1146 = vset.pattern.permute.xlu0 0
    %1147 = vperm.xlu0 %1146, %v939
    %v1148 = vpop.permute.xlu0 %1147
    %1151 = vset.pattern.permute.xlu0 0
    %1152 = vperm.xlu0 %1151, %v940
    %v1153 = vpop.permute.xlu0 %1152
    %1156 = vset.pattern.permute.xlu0 0
    %1157 = vperm.xlu0 %1156, %v941
    %v1158 = vpop.permute.xlu0 %1157
    %1161 = vset.pattern.permute.xlu0 0
    %1162 = vperm.xlu0 %1161, %v942
    %v1163 = vpop.permute.xlu0 %1162
    %1166 = vset.pattern.permute.xlu0 0
    %1167 = vperm.xlu0 %1166, %v943
    %v1168 = vpop.permute.xlu0 %1167
    %1171 = vset.pattern.permute.xlu0 0
    %1172 = vperm.xlu0 %1171, %v944
    %v1173 = vpop.permute.xlu0 %1172
    %1176 = vset.pattern.permute.xlu0 0
    %1177 = vperm.xlu0 %1176, %v945
    %v1178 = vpop.permute.xlu0 %1177
    %1181 = vset.pattern.permute.xlu0 0
    %1182 = vperm.xlu0 %1181, %v946
    %v1183 = vpop.permute.xlu0 %1182
    %1186 = vset.pattern.permute.xlu0 0
    %1187 = vperm.xlu0 %1186, %v947
    %v1188 = vpop.permute.xlu0 %1187
    %1191 = vset.pattern.permute.xlu0 0
    %1192 = vperm.xlu0 %1191, %v948
    %v1193 = vpop.permute.xlu0 %1192
    %1196 = vset.pattern.permute.xlu0 0
    %1197 = vperm.xlu0 %1196, %v949
    %v1198 = vpop.permute.xlu0 %1197
    %1201 = vset.pattern.permute.xlu0 0
    %1202 = vperm.xlu0 %1201, %v950
    %v1203 = vpop.permute.xlu0 %1202
    %1206 = vset.pattern.permute.xlu0 0
    %1207 = vperm.xlu0 %1206, %v951
    %v1208 = vpop.permute.xlu0 %1207
    %1211 = vset.pattern.permute.xlu0 0
    %1212 = vperm.xlu0 %1211, %v952
    %v1213 = vpop.permute.xlu0 %1212
    %1216 = vset.pattern.permute.xlu0 0
    %1217 = vperm.xlu0 %1216, %v953
    %v1218 = vpop.permute.xlu0 %1217
    %1221 = vset.pattern.permute.xlu0 0
    %1222 = vperm.xlu0 %1221, %v954
    %v1223 = vpop.permute.xlu0 %1222
    %1226 = vset.pattern.permute.xlu0 0
    %1227 = vperm.xlu0 %1226, %v955
    %v1228 = vpop.permute.xlu0 %1227
    %1231 = vset.pattern.permute.xlu0 0
    %1232 = vperm.xlu0 %1231, %v956
    %v1233 = vpop.permute.xlu0 %1232
    %1236 = vset.pattern.permute.xlu0 0
    %1237 = vperm.xlu0 %1236, %v957
    %v1238 = vpop.permute.xlu0 %1237
    %1241 = vset.pattern.permute.xlu0 0
    %1242 = vperm.xlu0 %1241, %v958
    %v1243 = vpop.permute.xlu0 %1242
    %1246 = vset.pattern.permute.xlu0 0
    %1247 = vperm.xlu0 %1246, %v959
    %v1248 = vpop.permute.xlu0 %1247
    %1251 = vset.pattern.permute.xlu0 0
    %1252 = vperm.xlu0 %1251, %v960
    %v1253 = vpop.permute.xlu0 %1252
    %1256 = vset.pattern.permute.xlu0 0
    %1257 = vperm.xlu0 %1256, %v961
    %v1258 = vpop.permute.xlu0 %1257
    %1261 = vset.pattern.permute.xlu0 0
    %1262 = vperm.xlu0 %1261, %v962
    %v1263 = vpop.permute.xlu0 %1262
    %1266 = vset.pattern.permute.xlu0 0
    %1267 = vperm.xlu0 %1266, %v963
    %v1268 = vpop.permute.xlu0 %1267
    %1271 = vset.pattern.permute.xlu0 0
    %1272 = vperm.xlu0 %1271, %v964
    %v1273 = vpop.permute.xlu0 %1272
    %v1275 = vlaneseq
    %v1276 = vshrl.u32 %v1275, 7
    %v1277 = vsub.s32 1, %v1276
    %v1278 = vrot.slane %v95, %v1277
    %v1279 = vmul.f32 %v968, %v1278
    %v1280 = vmul.f32 %v973, %v1278
    %v1281 = vmul.f32 %v978, %v1278
    %v1282 = vmul.f32 %v983, %v1278
    %v1283 = vmul.f32 %v988, %v1278
    %v1284 = vmul.f32 %v993, %v1278
    %v1285 = vmul.f32 %v998, %v1278
    %v1286 = vmul.f32 %v1003, %v1278
    %v1287 = vmul.f32 %v1008, %v1278
    %v1288 = vmul.f32 %v1013, %v1278
    %v1289 = vmul.f32 %v1018, %v1278
    %v1290 = vmul.f32 %v1023, %v1278
    %v1291 = vmul.f32 %v1028, %v1278
    %v1292 = vmul.f32 %v1033, %v1278
    %v1293 = vmul.f32 %v1038, %v1278
    %v1294 = vmul.f32 %v1043, %v1278
    %v1295 = vmul.f32 %v1048, %v1278
    %v1296 = vmul.f32 %v1053, %v1278
    %v1297 = vmul.f32 %v1058, %v1278
    %v1298 = vmul.f32 %v1063, %v1278
    %v1299 = vmul.f32 %v1068, %v1278
    %v1300 = vmul.f32 %v1073, %v1278
    %v1301 = vmul.f32 %v1078, %v1278
    %v1302 = vmul.f32 %v1083, %v1278
    %v1303 = vmul.f32 %v1088, %v1278
    %v1304 = vmul.f32 %v1093, %v1278
    %v1305 = vmul.f32 %v1098, %v1278
    %v1306 = vmul.f32 %v1103, %v1278
    %v1307 = vmul.f32 %v1108, %v1278
    %v1308 = vmul.f32 %v1113, %v1278
    %v1309 = vmul.f32 %v1118, %v1278
    %v1310 = vmul.f32 %v1123, %v1278
    %v1311 = vmul.f32 %v1128, %v1278
    %v1312 = vmul.f32 %v1133, %v1278
    %v1313 = vmul.f32 %v1138, %v1278
    %v1314 = vmul.f32 %v1143, %v1278
    %v1315 = vmul.f32 %v1148, %v1278
    %v1316 = vmul.f32 %v1153, %v1278
    %v1317 = vmul.f32 %v1158, %v1278
    %v1318 = vmul.f32 %v1163, %v1278
    %v1319 = vmul.f32 %v1168, %v1278
    %v1320 = vmul.f32 %v1173, %v1278
    %v1321 = vmul.f32 %v1178, %v1278
    %v1322 = vmul.f32 %v1183, %v1278
    %v1323 = vmul.f32 %v1188, %v1278
    %v1324 = vmul.f32 %v1193, %v1278
    %v1325 = vmul.f32 %v1198, %v1278
    %v1326 = vmul.f32 %v1203, %v1278
    %v1327 = vmul.f32 %v1208, %v1278
    %v1328 = vmul.f32 %v1213, %v1278
    %v1329 = vmul.f32 %v1218, %v1278
    %v1330 = vmul.f32 %v1223, %v1278
    %v1331 = vmul.f32 %v1228, %v1278
    %v1332 = vmul.f32 %v1233, %v1278
    %v1333 = vmul.f32 %v1238, %v1278
    %v1334 = vmul.f32 %v1243, %v1278
    %v1335 = vmul.f32 %v1248, %v1278
    %v1336 = vmul.f32 %v1253, %v1278
    %v1337 = vmul.f32 %v1258, %v1278
    %v1338 = vmul.f32 %v1263, %v1278
    %v1339 = vmul.f32 %v1268, %v1278
    %v1340 = vmul.f32 %v1273, %v1278
    %v1341 = vadd.f32 %v808, %v1279
    %v1342 = vadd.f32 %v809, %v1280
    %v1343 = vadd.f32 %v810, %v1281
    %v1344 = vadd.f32 %v811, %v1282
    %v1345 = vadd.f32 %v812, %v1283
    %v1346 = vadd.f32 %v813, %v1284
    %v1347 = vadd.f32 %v814, %v1285
    %v1348 = vadd.f32 %v815, %v1286
    %v1349 = vadd.f32 %v816, %v1287
    %v1350 = vadd.f32 %v817, %v1288
    %v1351 = vadd.f32 %v818, %v1289
    %v1352 = vadd.f32 %v819, %v1290
    %v1353 = vadd.f32 %v820, %v1291
    %v1354 = vadd.f32 %v821, %v1292
    %v1355 = vadd.f32 %v822, %v1293
    %v1356 = vadd.f32 %v823, %v1294
    %v1357 = vadd.f32 %v824, %v1295
    %v1358 = vadd.f32 %v825, %v1296
    %v1359 = vadd.f32 %v826, %v1297
    %v1360 = vadd.f32 %v827, %v1298
    %v1361 = vadd.f32 %v828, %v1299
    %v1362 = vadd.f32 %v829, %v1300
    %v1363 = vadd.f32 %v830, %v1301
    %v1364 = vadd.f32 %v831, %v1302
    %v1365 = vadd.f32 %v832, %v1303
    %v1366 = vadd.f32 %v833, %v1304
    %v1367 = vadd.f32 %v834, %v1305
    %v1368 = vadd.f32 %v835, %v1306
    %v1369 = vadd.f32 %v836, %v1307
    %v1370 = vadd.f32 %v837, %v1308
    %v1371 = vadd.f32 %v838, %v1309
    %v1372 = vadd.f32 %v839, %v1310
    %v1373 = vadd.f32 %v840, %v1311
    %v1374 = vadd.f32 %v841, %v1312
    %v1375 = vadd.f32 %v842, %v1313
    %v1376 = vadd.f32 %v843, %v1314
    %v1377 = vadd.f32 %v844, %v1315
    %v1378 = vadd.f32 %v845, %v1316
    %v1379 = vadd.f32 %v846, %v1317
    %v1380 = vadd.f32 %v847, %v1318
    %v1381 = vadd.f32 %v848, %v1319
    %v1382 = vadd.f32 %v849, %v1320
    %v1383 = vadd.f32 %v850, %v1321
    %v1384 = vadd.f32 %v851, %v1322
    %v1385 = vadd.f32 %v852, %v1323
    %v1386 = vadd.f32 %v853, %v1324
    %v1387 = vadd.f32 %v854, %v1325
    %v1388 = vadd.f32 %v855, %v1326
    %v1389 = vadd.f32 %v856, %v1327
    %v1390 = vadd.f32 %v857, %v1328
    %v1391 = vadd.f32 %v858, %v1329
    %v1392 = vadd.f32 %v859, %v1330
    %v1393 = vadd.f32 %v860, %v1331
    %v1394 = vadd.f32 %v861, %v1332
    %v1395 = vadd.f32 %v862, %v1333
    %v1396 = vadd.f32 %v863, %v1334
    %v1397 = vadd.f32 %v864, %v1335
    %v1398 = vadd.f32 %v865, %v1336
    %v1399 = vadd.f32 %v866, %v1337
    %v1400 = vadd.f32 %v867, %v1338
    %v1401 = vadd.f32 %v868, %v1339
    %v1402 = vadd.f32 %v869, %v1340
    %s1403 = scalar_lea.vmem %s1, 512
    %v1404 = vld [vmem:[%s1403] sm:$0xff]
    %v1405 = vld [vmem:[%s1403 + $0x8] sm:$0xff]
    %v1406 = vld [vmem:[%s1403 + $0x10] sm:$0xff]
    %v1407 = vld [vmem:[%s1403 + $0x18] sm:$0xff]
    %v1408 = vld [vmem:[%s1403 + $0x20] sm:$0xff]
    %v1409 = vld [vmem:[%s1403 + $0x28] sm:$0xff]
    %v1410 = vld [vmem:[%s1403 + $0x30] sm:$0xff]
    %v1411 = vld [vmem:[%s1403 + $0x38] sm:$0xff]
    %v1412 = vld [vmem:[%s1403 + $0x40] sm:$0xff]
    %v1413 = vld [vmem:[%s1403 + $0x48] sm:$0xff]
    %v1414 = vld [vmem:[%s1403 + $0x50] sm:$0xff]
    %v1415 = vld [vmem:[%s1403 + $0x58] sm:$0xff]
    %v1416 = vld [vmem:[%s1403 + $0x60] sm:$0xff]
    %v1417 = vld [vmem:[%s1403 + $0x68] sm:$0xff]
    %v1418 = vld [vmem:[%s1403 + $0x70] sm:$0xff]
    %v1419 = vld [vmem:[%s1403 + $0x78] sm:$0xff]
    %v1420 = vld [vmem:[%s1403 + $0x80] sm:$0xff]
    %v1421 = vld [vmem:[%s1403 + $0x88] sm:$0xff]
    %v1422 = vld [vmem:[%s1403 + $0x90] sm:$0xff]
    %v1423 = vld [vmem:[%s1403 + $0x98] sm:$0xff]
    %v1424 = vld [vmem:[%s1403 + $0xa0] sm:$0xff]
    %v1425 = vld [vmem:[%s1403 + $0xa8] sm:$0xff]
    %v1426 = vld [vmem:[%s1403 + $0xb0] sm:$0xff]
    %v1427 = vld [vmem:[%s1403 + $0xb8] sm:$0xff]
    %v1428 = vld [vmem:[%s1403 + $0xc0] sm:$0xff]
    %v1429 = vld [vmem:[%s1403 + $0xc8] sm:$0xff]
    %v1430 = vld [vmem:[%s1403 + $0xd0] sm:$0xff]
    %v1431 = vld [vmem:[%s1403 + $0xd8] sm:$0xff]
    %v1432 = vld [vmem:[%s1403 + $0xe0] sm:$0xff]
    %v1433 = vld [vmem:[%s1403 + $0xe8] sm:$0xff]
    %v1434 = vld [vmem:[%s1403 + $0xf0] sm:$0xff]
    %v1435 = vld [vmem:[%s1403 + $0xf8] sm:$0xff]
    %vm1438 = vcmask 1046528
    %v1439 = vrot.slane %v31, 1
    %v1440 = vrot.slane %v32, 1
    %v1441 = vsel %vm1438, %v1439, %v1440
    %v1442 = vrot.slane %v33, 1
    %v1443 = vsel %vm1438, %v1440, %v1442
    %v1444 = vrot.slane %v34, 1
    %v1445 = vsel %vm1438, %v1442, %v1444
    %v1446 = vrot.slane %v35, 1
    %v1447 = vsel %vm1438, %v1444, %v1446
    %v1448 = vrot.slane %v36, 1
    %v1449 = vsel %vm1438, %v1446, %v1448
    %v1450 = vrot.slane %v37, 1
    %v1451 = vsel %vm1438, %v1448, %v1450
    %v1452 = vrot.slane %v38, 1
    %v1453 = vsel %vm1438, %v1450, %v1452
    %v1454 = vrot.slane %v39, 1
    %v1455 = vsel %vm1438, %v1452, %v1454
    %v1456 = vrot.slane %v40, 1
    %v1457 = vsel %vm1438, %v1454, %v1456
    %v1458 = vrot.slane %v41, 1
    %v1459 = vsel %vm1438, %v1456, %v1458
    %v1460 = vrot.slane %v42, 1
    %v1461 = vsel %vm1438, %v1458, %v1460
    %v1462 = vrot.slane %v43, 1
    %v1463 = vsel %vm1438, %v1460, %v1462
    %v1464 = vrot.slane %v44, 1
    %v1465 = vsel %vm1438, %v1462, %v1464
    %v1466 = vrot.slane %v45, 1
    %v1467 = vsel %vm1438, %v1464, %v1466
    %v1468 = vrot.slane %v46, 1
    %v1469 = vsel %vm1438, %v1466, %v1468
    %v1470 = vrot.slane %v47, 1
    %v1471 = vsel %vm1438, %v1468, %v1470
    %v1472 = vrot.slane %v48, 1
    %v1473 = vsel %vm1438, %v1470, %v1472
    %v1474 = vrot.slane %v49, 1
    %v1475 = vsel %vm1438, %v1472, %v1474
    %v1476 = vrot.slane %v50, 1
    %v1477 = vsel %vm1438, %v1474, %v1476
    %v1478 = vrot.slane %v51, 1
    %v1479 = vsel %vm1438, %v1476, %v1478
    %v1480 = vrot.slane %v52, 1
    %v1481 = vsel %vm1438, %v1478, %v1480
    %v1482 = vrot.slane %v53, 1
    %v1483 = vsel %vm1438, %v1480, %v1482
    %v1484 = vrot.slane %v54, 1
    %v1485 = vsel %vm1438, %v1482, %v1484
    %v1486 = vrot.slane %v55, 1
    %v1487 = vsel %vm1438, %v1484, %v1486
    %v1488 = vrot.slane %v56, 1
    %v1489 = vsel %vm1438, %v1486, %v1488
    %v1490 = vrot.slane %v57, 1
    %v1491 = vsel %vm1438, %v1488, %v1490
    %v1492 = vrot.slane %v58, 1
    %v1493 = vsel %vm1438, %v1490, %v1492
    %v1494 = vrot.slane %v59, 1
    %v1495 = vsel %vm1438, %v1492, %v1494
    %v1496 = vrot.slane %v60, 1
    %v1497 = vsel %vm1438, %v1494, %v1496
    %v1498 = vrot.slane %v61, 1
    %v1499 = vsel %vm1438, %v1496, %v1498
    %v1500 = vrot.slane %v63, 1
    %v1501 = vrot.slane %v64, 1
    %v1502 = vsel %vm1438, %v1500, %v1501
    %v1503 = vrot.slane %v65, 1
    %v1504 = vsel %vm1438, %v1501, %v1503
    %v1505 = vrot.slane %v66, 1
    %v1506 = vsel %vm1438, %v1503, %v1505
    %v1507 = vrot.slane %v67, 1
    %v1508 = vsel %vm1438, %v1505, %v1507
    %v1509 = vrot.slane %v68, 1
    %v1510 = vsel %vm1438, %v1507, %v1509
    %v1511 = vrot.slane %v69, 1
    %v1512 = vsel %vm1438, %v1509, %v1511
    %v1513 = vrot.slane %v70, 1
    %v1514 = vsel %vm1438, %v1511, %v1513
    %v1515 = vrot.slane %v71, 1
    %v1516 = vsel %vm1438, %v1513, %v1515
    %v1517 = vrot.slane %v72, 1
    %v1518 = vsel %vm1438, %v1515, %v1517
    %v1519 = vrot.slane %v73, 1
    %v1520 = vsel %vm1438, %v1517, %v1519
    %v1521 = vrot.slane %v74, 1
    %v1522 = vsel %vm1438, %v1519, %v1521
    %v1523 = vrot.slane %v75, 1
    %v1524 = vsel %vm1438, %v1521, %v1523
    %v1525 = vrot.slane %v76, 1
    %v1526 = vsel %vm1438, %v1523, %v1525
    %v1527 = vrot.slane %v77, 1
    %v1528 = vsel %vm1438, %v1525, %v1527
    %v1529 = vrot.slane %v78, 1
    %v1530 = vsel %vm1438, %v1527, %v1529
    %v1531 = vrot.slane %v79, 1
    %v1532 = vsel %vm1438, %v1529, %v1531
    %v1533 = vrot.slane %v80, 1
    %v1534 = vsel %vm1438, %v1531, %v1533
    %v1535 = vrot.slane %v81, 1
    %v1536 = vsel %vm1438, %v1533, %v1535
    %v1537 = vrot.slane %v82, 1
    %v1538 = vsel %vm1438, %v1535, %v1537
    %v1539 = vrot.slane %v83, 1
    %v1540 = vsel %vm1438, %v1537, %v1539
    %v1541 = vrot.slane %v84, 1
    %v1542 = vsel %vm1438, %v1539, %v1541
    %v1543 = vrot.slane %v85, 1
    %v1544 = vsel %vm1438, %v1541, %v1543
    %v1545 = vrot.slane %v86, 1
    %v1546 = vsel %vm1438, %v1543, %v1545
    %v1547 = vrot.slane %v87, 1
    %v1548 = vsel %vm1438, %v1545, %v1547
    %v1549 = vrot.slane %v88, 1
    %v1550 = vsel %vm1438, %v1547, %v1549
    %v1551 = vrot.slane %v89, 1
    %v1552 = vsel %vm1438, %v1549, %v1551
    %v1553 = vrot.slane %v90, 1
    %v1554 = vsel %vm1438, %v1551, %v1553
    %v1555 = vrot.slane %v91, 1
    %v1556 = vsel %vm1438, %v1553, %v1555
    %v1557 = vrot.slane %v92, 1
    %v1558 = vsel %vm1438, %v1555, %v1557
    %v1559 = vrot.slane %v93, 1
    %v1560 = vsel %vm1438, %v1557, %v1559
    %v1623 = vsel %vm1438, 0.0, %v1439
    %v1624 = vsel %vm1438, 0.0, %v1500
    %v1625 = vmul.f32 %v1404, 0.0
    %v1626 = vmul.f32 %v1623, %v1405
    %v1627 = vmul.f32 %v1441, %v1406
    %v1628 = vmul.f32 %v1443, %v1407
    %v1629 = vmul.f32 %v1445, %v1408
    %v1630 = vmul.f32 %v1447, %v1409
    %v1631 = vmul.f32 %v1449, %v1410
    %v1632 = vmul.f32 %v1451, %v1411
    %v1633 = vmul.f32 %v1453, %v1412
    %v1634 = vmul.f32 %v1455, %v1413
    %v1635 = vmul.f32 %v1457, %v1414
    %v1636 = vmul.f32 %v1459, %v1415
    %v1637 = vmul.f32 %v1461, %v1416
    %v1638 = vmul.f32 %v1463, %v1417
    %v1639 = vmul.f32 %v1465, %v1418
    %v1640 = vmul.f32 %v1467, %v1419
    %v1641 = vmul.f32 %v1469, %v1420
    %v1642 = vmul.f32 %v1471, %v1421
    %v1643 = vmul.f32 %v1473, %v1422
    %v1644 = vmul.f32 %v1475, %v1423
    %v1645 = vmul.f32 %v1477, %v1424
    %v1646 = vmul.f32 %v1479, %v1425
    %v1647 = vmul.f32 %v1481, %v1426
    %v1648 = vmul.f32 %v1483, %v1427
    %v1649 = vmul.f32 %v1485, %v1428
    %v1650 = vmul.f32 %v1487, %v1429
    %v1651 = vmul.f32 %v1489, %v1430
    %v1652 = vmul.f32 %v1491, %v1431
    %v1653 = vmul.f32 %v1493, %v1432
    %v1654 = vmul.f32 %v1495, %v1433
    %v1655 = vmul.f32 %v1497, %v1434
    %v1656 = vmul.f32 %v1499, %v1435
    %v1657 = vmul.f32 %v1624, %v1405
    %v1658 = vmul.f32 %v1502, %v1406
    %v1659 = vmul.f32 %v1504, %v1407
    %v1660 = vmul.f32 %v1506, %v1408
    %v1661 = vmul.f32 %v1508, %v1409
    %v1662 = vmul.f32 %v1510, %v1410
    %v1663 = vmul.f32 %v1512, %v1411
    %v1664 = vmul.f32 %v1514, %v1412
    %v1665 = vmul.f32 %v1516, %v1413
    %v1666 = vmul.f32 %v1518, %v1414
    %v1667 = vmul.f32 %v1520, %v1415
    %v1668 = vmul.f32 %v1522, %v1416
    %v1669 = vmul.f32 %v1524, %v1417
    %v1670 = vmul.f32 %v1526, %v1418
    %v1671 = vmul.f32 %v1528, %v1419
    %v1672 = vmul.f32 %v1530, %v1420
    %v1673 = vmul.f32 %v1532, %v1421
    %v1674 = vmul.f32 %v1534, %v1422
    %v1675 = vmul.f32 %v1536, %v1423
    %v1676 = vmul.f32 %v1538, %v1424
    %v1677 = vmul.f32 %v1540, %v1425
    %v1678 = vmul.f32 %v1542, %v1426
    %v1679 = vmul.f32 %v1544, %v1427
    %v1680 = vmul.f32 %v1546, %v1428
    %v1681 = vmul.f32 %v1548, %v1429
    %v1682 = vmul.f32 %v1550, %v1430
    %v1683 = vmul.f32 %v1552, %v1431
    %v1684 = vmul.f32 %v1554, %v1432
    %v1685 = vmul.f32 %v1556, %v1433
    %v1686 = vmul.f32 %v1558, %v1434
    %v1687 = vmul.f32 %v1560, %v1435
    %1689 = vset.pattern.permute.xlu0 0
    %1690 = vperm.xlu0 %1689, %v1625
    %v1691 = vpop.permute.xlu0 %1690
    %1694 = vset.pattern.permute.xlu0 0
    %1695 = vperm.xlu0 %1694, %v1626
    %v1696 = vpop.permute.xlu0 %1695
    %1699 = vset.pattern.permute.xlu0 0
    %1700 = vperm.xlu0 %1699, %v1627
    %v1701 = vpop.permute.xlu0 %1700
    %1704 = vset.pattern.permute.xlu0 0
    %1705 = vperm.xlu0 %1704, %v1628
    %v1706 = vpop.permute.xlu0 %1705
    %1709 = vset.pattern.permute.xlu0 0
    %1710 = vperm.xlu0 %1709, %v1629
    %v1711 = vpop.permute.xlu0 %1710
    %1714 = vset.pattern.permute.xlu0 0
    %1715 = vperm.xlu0 %1714, %v1630
    %v1716 = vpop.permute.xlu0 %1715
    %1719 = vset.pattern.permute.xlu0 0
    %1720 = vperm.xlu0 %1719, %v1631
    %v1721 = vpop.permute.xlu0 %1720
    %1724 = vset.pattern.permute.xlu0 0
    %1725 = vperm.xlu0 %1724, %v1632
    %v1726 = vpop.permute.xlu0 %1725
    %1729 = vset.pattern.permute.xlu0 0
    %1730 = vperm.xlu0 %1729, %v1633
    %v1731 = vpop.permute.xlu0 %1730
    %1734 = vset.pattern.permute.xlu0 0
    %1735 = vperm.xlu0 %1734, %v1634
    %v1736 = vpop.permute.xlu0 %1735
    %1739 = vset.pattern.permute.xlu0 0
    %1740 = vperm.xlu0 %1739, %v1635
    %v1741 = vpop.permute.xlu0 %1740
    %1744 = vset.pattern.permute.xlu0 0
    %1745 = vperm.xlu0 %1744, %v1636
    %v1746 = vpop.permute.xlu0 %1745
    %1749 = vset.pattern.permute.xlu0 0
    %1750 = vperm.xlu0 %1749, %v1637
    %v1751 = vpop.permute.xlu0 %1750
    %1754 = vset.pattern.permute.xlu0 0
    %1755 = vperm.xlu0 %1754, %v1638
    %v1756 = vpop.permute.xlu0 %1755
    %1759 = vset.pattern.permute.xlu0 0
    %1760 = vperm.xlu0 %1759, %v1639
    %v1761 = vpop.permute.xlu0 %1760
    %1764 = vset.pattern.permute.xlu0 0
    %1765 = vperm.xlu0 %1764, %v1640
    %v1766 = vpop.permute.xlu0 %1765
    %1769 = vset.pattern.permute.xlu0 0
    %1770 = vperm.xlu0 %1769, %v1641
    %v1771 = vpop.permute.xlu0 %1770
    %1774 = vset.pattern.permute.xlu0 0
    %1775 = vperm.xlu0 %1774, %v1642
    %v1776 = vpop.permute.xlu0 %1775
    %1779 = vset.pattern.permute.xlu0 0
    %1780 = vperm.xlu0 %1779, %v1643
    %v1781 = vpop.permute.xlu0 %1780
    %1784 = vset.pattern.permute.xlu0 0
    %1785 = vperm.xlu0 %1784, %v1644
    %v1786 = vpop.permute.xlu0 %1785
    %1789 = vset.pattern.permute.xlu0 0
    %1790 = vperm.xlu0 %1789, %v1645
    %v1791 = vpop.permute.xlu0 %1790
    %1794 = vset.pattern.permute.xlu0 0
    %1795 = vperm.xlu0 %1794, %v1646
    %v1796 = vpop.permute.xlu0 %1795
    %1799 = vset.pattern.permute.xlu0 0
    %1800 = vperm.xlu0 %1799, %v1647
    %v1801 = vpop.permute.xlu0 %1800
    %1804 = vset.pattern.permute.xlu0 0
    %1805 = vperm.xlu0 %1804, %v1648
    %v1806 = vpop.permute.xlu0 %1805
    %1809 = vset.pattern.permute.xlu0 0
    %1810 = vperm.xlu0 %1809, %v1649
    %v1811 = vpop.permute.xlu0 %1810
    %1814 = vset.pattern.permute.xlu0 0
    %1815 = vperm.xlu0 %1814, %v1650
    %v1816 = vpop.permute.xlu0 %1815
    %1819 = vset.pattern.permute.xlu0 0
    %1820 = vperm.xlu0 %1819, %v1651
    %v1821 = vpop.permute.xlu0 %1820
    %1824 = vset.pattern.permute.xlu0 0
    %1825 = vperm.xlu0 %1824, %v1652
    %v1826 = vpop.permute.xlu0 %1825
    %1829 = vset.pattern.permute.xlu0 0
    %1830 = vperm.xlu0 %1829, %v1653
    %v1831 = vpop.permute.xlu0 %1830
    %1834 = vset.pattern.permute.xlu0 0
    %1835 = vperm.xlu0 %1834, %v1654
    %v1836 = vpop.permute.xlu0 %1835
    %1839 = vset.pattern.permute.xlu0 0
    %1840 = vperm.xlu0 %1839, %v1655
    %v1841 = vpop.permute.xlu0 %1840
    %1844 = vset.pattern.permute.xlu0 0
    %1845 = vperm.xlu0 %1844, %v1656
    %v1846 = vpop.permute.xlu0 %1845
    %1849 = vset.pattern.permute.xlu0 0
    %1850 = vperm.xlu0 %1849, %v1657
    %v1851 = vpop.permute.xlu0 %1850
    %1854 = vset.pattern.permute.xlu0 0
    %1855 = vperm.xlu0 %1854, %v1658
    %v1856 = vpop.permute.xlu0 %1855
    %1859 = vset.pattern.permute.xlu0 0
    %1860 = vperm.xlu0 %1859, %v1659
    %v1861 = vpop.permute.xlu0 %1860
    %1864 = vset.pattern.permute.xlu0 0
    %1865 = vperm.xlu0 %1864, %v1660
    %v1866 = vpop.permute.xlu0 %1865
    %1869 = vset.pattern.permute.xlu0 0
    %1870 = vperm.xlu0 %1869, %v1661
    %v1871 = vpop.permute.xlu0 %1870
    %1874 = vset.pattern.permute.xlu0 0
    %1875 = vperm.xlu0 %1874, %v1662
    %v1876 = vpop.permute.xlu0 %1875
    %1879 = vset.pattern.permute.xlu0 0
    %1880 = vperm.xlu0 %1879, %v1663
    %v1881 = vpop.permute.xlu0 %1880
    %1884 = vset.pattern.permute.xlu0 0
    %1885 = vperm.xlu0 %1884, %v1664
    %v1886 = vpop.permute.xlu0 %1885
    %1889 = vset.pattern.permute.xlu0 0
    %1890 = vperm.xlu0 %1889, %v1665
    %v1891 = vpop.permute.xlu0 %1890
    %1894 = vset.pattern.permute.xlu0 0
    %1895 = vperm.xlu0 %1894, %v1666
    %v1896 = vpop.permute.xlu0 %1895
    %1899 = vset.pattern.permute.xlu0 0
    %1900 = vperm.xlu0 %1899, %v1667
    %v1901 = vpop.permute.xlu0 %1900
    %1904 = vset.pattern.permute.xlu0 0
    %1905 = vperm.xlu0 %1904, %v1668
    %v1906 = vpop.permute.xlu0 %1905
    %1909 = vset.pattern.permute.xlu0 0
    %1910 = vperm.xlu0 %1909, %v1669
    %v1911 = vpop.permute.xlu0 %1910
    %1914 = vset.pattern.permute.xlu0 0
    %1915 = vperm.xlu0 %1914, %v1670
    %v1916 = vpop.permute.xlu0 %1915
    %1919 = vset.pattern.permute.xlu0 0
    %1920 = vperm.xlu0 %1919, %v1671
    %v1921 = vpop.permute.xlu0 %1920
    %1924 = vset.pattern.permute.xlu0 0
    %1925 = vperm.xlu0 %1924, %v1672
    %v1926 = vpop.permute.xlu0 %1925
    %1929 = vset.pattern.permute.xlu0 0
    %1930 = vperm.xlu0 %1929, %v1673
    %v1931 = vpop.permute.xlu0 %1930
    %1934 = vset.pattern.permute.xlu0 0
    %1935 = vperm.xlu0 %1934, %v1674
    %v1936 = vpop.permute.xlu0 %1935
    %1939 = vset.pattern.permute.xlu0 0
    %1940 = vperm.xlu0 %1939, %v1675
    %v1941 = vpop.permute.xlu0 %1940
    %1944 = vset.pattern.permute.xlu0 0
    %1945 = vperm.xlu0 %1944, %v1676
    %v1946 = vpop.permute.xlu0 %1945
    %1949 = vset.pattern.permute.xlu0 0
    %1950 = vperm.xlu0 %1949, %v1677
    %v1951 = vpop.permute.xlu0 %1950
    %1954 = vset.pattern.permute.xlu0 0
    %1955 = vperm.xlu0 %1954, %v1678
    %v1956 = vpop.permute.xlu0 %1955
    %1959 = vset.pattern.permute.xlu0 0
    %1960 = vperm.xlu0 %1959, %v1679
    %v1961 = vpop.permute.xlu0 %1960
    %1964 = vset.pattern.permute.xlu0 0
    %1965 = vperm.xlu0 %1964, %v1680
    %v1966 = vpop.permute.xlu0 %1965
    %1969 = vset.pattern.permute.xlu0 0
    %1970 = vperm.xlu0 %1969, %v1681
    %v1971 = vpop.permute.xlu0 %1970
    %1974 = vset.pattern.permute.xlu0 0
    %1975 = vperm.xlu0 %1974, %v1682
    %v1976 = vpop.permute.xlu0 %1975
    %1979 = vset.pattern.permute.xlu0 0
    %1980 = vperm.xlu0 %1979, %v1683
    %v1981 = vpop.permute.xlu0 %1980
    %1984 = vset.pattern.permute.xlu0 0
    %1985 = vperm.xlu0 %1984, %v1684
    %v1986 = vpop.permute.xlu0 %1985
    %1989 = vset.pattern.permute.xlu0 0
    %1990 = vperm.xlu0 %1989, %v1685
    %v1991 = vpop.permute.xlu0 %1990
    %1994 = vset.pattern.permute.xlu0 0
    %1995 = vperm.xlu0 %1994, %v1686
    %v1996 = vpop.permute.xlu0 %1995
    %1999 = vset.pattern.permute.xlu0 0
    %2000 = vperm.xlu0 %1999, %v1687
    %v2001 = vpop.permute.xlu0 %2000
    %v2003 = vlaneseq
    %v2004 = vshrl.u32 %v2003, 7
    %v2005 = vsub.s32 2, %v2004
    %v2006 = vrot.slane %v95, %v2005
    %v2007 = vmul.f32 %v1691, %v2006
    %v2008 = vmul.f32 %v1696, %v2006
    %v2009 = vmul.f32 %v1701, %v2006
    %v2010 = vmul.f32 %v1706, %v2006
    %v2011 = vmul.f32 %v1711, %v2006
    %v2012 = vmul.f32 %v1716, %v2006
    %v2013 = vmul.f32 %v1721, %v2006
    %v2014 = vmul.f32 %v1726, %v2006
    %v2015 = vmul.f32 %v1731, %v2006
    %v2016 = vmul.f32 %v1736, %v2006
    %v2017 = vmul.f32 %v1741, %v2006
    %v2018 = vmul.f32 %v1746, %v2006
    %v2019 = vmul.f32 %v1751, %v2006
    %v2020 = vmul.f32 %v1756, %v2006
    %v2021 = vmul.f32 %v1761, %v2006
    %v2022 = vmul.f32 %v1766, %v2006
    %v2023 = vmul.f32 %v1771, %v2006
    %v2024 = vmul.f32 %v1776, %v2006
    %v2025 = vmul.f32 %v1781, %v2006
    %v2026 = vmul.f32 %v1786, %v2006
    %v2027 = vmul.f32 %v1791, %v2006
    %v2028 = vmul.f32 %v1796, %v2006
    %v2029 = vmul.f32 %v1801, %v2006
    %v2030 = vmul.f32 %v1806, %v2006
    %v2031 = vmul.f32 %v1811, %v2006
    %v2032 = vmul.f32 %v1816, %v2006
    %v2033 = vmul.f32 %v1821, %v2006
    %v2034 = vmul.f32 %v1826, %v2006
    %v2035 = vmul.f32 %v1831, %v2006
    %v2036 = vmul.f32 %v1836, %v2006
    %v2037 = vmul.f32 %v1841, %v2006
    %v2038 = vmul.f32 %v1846, %v2006
    %v2039 = vmul.f32 %v1851, %v2006
    %v2040 = vmul.f32 %v1856, %v2006
    %v2041 = vmul.f32 %v1861, %v2006
    %v2042 = vmul.f32 %v1866, %v2006
    %v2043 = vmul.f32 %v1871, %v2006
    %v2044 = vmul.f32 %v1876, %v2006
    %v2045 = vmul.f32 %v1881, %v2006
    %v2046 = vmul.f32 %v1886, %v2006
    %v2047 = vmul.f32 %v1891, %v2006
    %v2048 = vmul.f32 %v1896, %v2006
    %v2049 = vmul.f32 %v1901, %v2006
    %v2050 = vmul.f32 %v1906, %v2006
    %v2051 = vmul.f32 %v1911, %v2006
    %v2052 = vmul.f32 %v1916, %v2006
    %v2053 = vmul.f32 %v1921, %v2006
    %v2054 = vmul.f32 %v1926, %v2006
    %v2055 = vmul.f32 %v1931, %v2006
    %v2056 = vmul.f32 %v1936, %v2006
    %v2057 = vmul.f32 %v1941, %v2006
    %v2058 = vmul.f32 %v1946, %v2006
    %v2059 = vmul.f32 %v1951, %v2006
    %v2060 = vmul.f32 %v1956, %v2006
    %v2061 = vmul.f32 %v1961, %v2006
    %v2062 = vmul.f32 %v1966, %v2006
    %v2063 = vmul.f32 %v1971, %v2006
    %v2064 = vmul.f32 %v1976, %v2006
    %v2065 = vmul.f32 %v1981, %v2006
    %v2066 = vmul.f32 %v1986, %v2006
    %v2067 = vmul.f32 %v1991, %v2006
    %v2068 = vmul.f32 %v1996, %v2006
    %v2069 = vmul.f32 %v2001, %v2006
    %v2070 = vadd.f32 %v1341, %v2007
    %v2071 = vadd.f32 %v1342, %v2008
    %v2072 = vadd.f32 %v1343, %v2009
    %v2073 = vadd.f32 %v1344, %v2010
    %v2074 = vadd.f32 %v1345, %v2011
    %v2075 = vadd.f32 %v1346, %v2012
    %v2076 = vadd.f32 %v1347, %v2013
    %v2077 = vadd.f32 %v1348, %v2014
    %v2078 = vadd.f32 %v1349, %v2015
    %v2079 = vadd.f32 %v1350, %v2016
    %v2080 = vadd.f32 %v1351, %v2017
    %v2081 = vadd.f32 %v1352, %v2018
    %v2082 = vadd.f32 %v1353, %v2019
    %v2083 = vadd.f32 %v1354, %v2020
    %v2084 = vadd.f32 %v1355, %v2021
    %v2085 = vadd.f32 %v1356, %v2022
    %v2086 = vadd.f32 %v1357, %v2023
    %v2087 = vadd.f32 %v1358, %v2024
    %v2088 = vadd.f32 %v1359, %v2025
    %v2089 = vadd.f32 %v1360, %v2026
    %v2090 = vadd.f32 %v1361, %v2027
    %v2091 = vadd.f32 %v1362, %v2028
    %v2092 = vadd.f32 %v1363, %v2029
    %v2093 = vadd.f32 %v1364, %v2030
    %v2094 = vadd.f32 %v1365, %v2031
    %v2095 = vadd.f32 %v1366, %v2032
    %v2096 = vadd.f32 %v1367, %v2033
    %v2097 = vadd.f32 %v1368, %v2034
    %v2098 = vadd.f32 %v1369, %v2035
    %v2099 = vadd.f32 %v1370, %v2036
    %v2100 = vadd.f32 %v1371, %v2037
    %v2101 = vadd.f32 %v1372, %v2038
    %v2102 = vadd.f32 %v1342, %v2039
    %v2103 = vadd.f32 %v1373, %v2040
    %v2104 = vadd.f32 %v1374, %v2041
    %v2105 = vadd.f32 %v1375, %v2042
    %v2106 = vadd.f32 %v1376, %v2043
    %v2107 = vadd.f32 %v1377, %v2044
    %v2108 = vadd.f32 %v1378, %v2045
    %v2109 = vadd.f32 %v1379, %v2046
    %v2110 = vadd.f32 %v1380, %v2047
    %v2111 = vadd.f32 %v1381, %v2048
    %v2112 = vadd.f32 %v1382, %v2049
    %v2113 = vadd.f32 %v1383, %v2050
    %v2114 = vadd.f32 %v1384, %v2051
    %v2115 = vadd.f32 %v1385, %v2052
    %v2116 = vadd.f32 %v1386, %v2053
    %v2117 = vadd.f32 %v1387, %v2054
    %v2118 = vadd.f32 %v1388, %v2055
    %v2119 = vadd.f32 %v1389, %v2056
    %v2120 = vadd.f32 %v1390, %v2057
    %v2121 = vadd.f32 %v1391, %v2058
    %v2122 = vadd.f32 %v1392, %v2059
    %v2123 = vadd.f32 %v1393, %v2060
    %v2124 = vadd.f32 %v1394, %v2061
    %v2125 = vadd.f32 %v1395, %v2062
    %v2126 = vadd.f32 %v1396, %v2063
    %v2127 = vadd.f32 %v1397, %v2064
    %v2128 = vadd.f32 %v1398, %v2065
    %v2129 = vadd.f32 %v1399, %v2066
    %v2130 = vadd.f32 %v1400, %v2067
    %v2131 = vadd.f32 %v1401, %v2068
    %v2132 = vadd.f32 %v1402, %v2069
    %s2133 = scalar_lea.vmem %s1, 768
    %v2134 = vld [vmem:[%s2133] sm:$0xff]
    %v2135 = vld [vmem:[%s2133 + $0x8] sm:$0xff]
    %v2136 = vld [vmem:[%s2133 + $0x10] sm:$0xff]
    %v2137 = vld [vmem:[%s2133 + $0x18] sm:$0xff]
    %v2138 = vld [vmem:[%s2133 + $0x20] sm:$0xff]
    %v2139 = vld [vmem:[%s2133 + $0x28] sm:$0xff]
    %v2140 = vld [vmem:[%s2133 + $0x30] sm:$0xff]
    %v2141 = vld [vmem:[%s2133 + $0x38] sm:$0xff]
    %v2142 = vld [vmem:[%s2133 + $0x40] sm:$0xff]
    %v2143 = vld [vmem:[%s2133 + $0x48] sm:$0xff]
    %v2144 = vld [vmem:[%s2133 + $0x50] sm:$0xff]
    %v2145 = vld [vmem:[%s2133 + $0x58] sm:$0xff]
    %v2146 = vld [vmem:[%s2133 + $0x60] sm:$0xff]
    %v2147 = vld [vmem:[%s2133 + $0x68] sm:$0xff]
    %v2148 = vld [vmem:[%s2133 + $0x70] sm:$0xff]
    %v2149 = vld [vmem:[%s2133 + $0x78] sm:$0xff]
    %v2150 = vld [vmem:[%s2133 + $0x80] sm:$0xff]
    %v2151 = vld [vmem:[%s2133 + $0x88] sm:$0xff]
    %v2152 = vld [vmem:[%s2133 + $0x90] sm:$0xff]
    %v2153 = vld [vmem:[%s2133 + $0x98] sm:$0xff]
    %v2154 = vld [vmem:[%s2133 + $0xa0] sm:$0xff]
    %v2155 = vld [vmem:[%s2133 + $0xa8] sm:$0xff]
    %v2156 = vld [vmem:[%s2133 + $0xb0] sm:$0xff]
    %v2157 = vld [vmem:[%s2133 + $0xb8] sm:$0xff]
    %v2158 = vld [vmem:[%s2133 + $0xc0] sm:$0xff]
    %v2159 = vld [vmem:[%s2133 + $0xc8] sm:$0xff]
    %v2160 = vld [vmem:[%s2133 + $0xd0] sm:$0xff]
    %v2161 = vld [vmem:[%s2133 + $0xd8] sm:$0xff]
    %v2162 = vld [vmem:[%s2133 + $0xe0] sm:$0xff]
    %v2163 = vld [vmem:[%s2133 + $0xe8] sm:$0xff]
    %v2164 = vld [vmem:[%s2133 + $0xf0] sm:$0xff]
    %v2165 = vld [vmem:[%s2133 + $0xf8] sm:$0xff]
    %v2168 = vrot.slane %v61, 7
    %v2169 = vsel %vm189, %v247, %v2168
    %v2170 = vrot.slane %v62, 7
    %v2171 = vsel %vm189, %v2168, %v2170
    %v2172 = vrot.slane %v93, 7
    %v2173 = vsel %vm189, %v306, %v2172
    %v2174 = vrot.slane %v94, 7
    %v2175 = vsel %vm189, %v2172, %v2174
    %v2180 = vmul.f32 %v368, %v2134
    %v2181 = vmul.f32 %v192, %v2135
    %v2182 = vmul.f32 %v194, %v2136
    %v2183 = vmul.f32 %v196, %v2137
    %v2184 = vmul.f32 %v198, %v2138
    %v2185 = vmul.f32 %v200, %v2139
    %v2186 = vmul.f32 %v202, %v2140
    %v2187 = vmul.f32 %v204, %v2141
    %v2188 = vmul.f32 %v206, %v2142
    %v2189 = vmul.f32 %v208, %v2143
    %v2190 = vmul.f32 %v210, %v2144
    %v2191 = vmul.f32 %v212, %v2145
    %v2192 = vmul.f32 %v214, %v2146
    %v2193 = vmul.f32 %v216, %v2147
    %v2194 = vmul.f32 %v218, %v2148
    %v2195 = vmul.f32 %v220, %v2149
    %v2196 = vmul.f32 %v222, %v2150
    %v2197 = vmul.f32 %v224, %v2151
    %v2198 = vmul.f32 %v226, %v2152
    %v2199 = vmul.f32 %v228, %v2153
    %v2200 = vmul.f32 %v230, %v2154
    %v2201 = vmul.f32 %v232, %v2155
    %v2202 = vmul.f32 %v234, %v2156
    %v2203 = vmul.f32 %v236, %v2157
    %v2204 = vmul.f32 %v238, %v2158
    %v2205 = vmul.f32 %v240, %v2159
    %v2206 = vmul.f32 %v242, %v2160
    %v2207 = vmul.f32 %v244, %v2161
    %v2208 = vmul.f32 %v246, %v2162
    %v2209 = vmul.f32 %v248, %v2163
    %v2210 = vmul.f32 %v2169, %v2164
    %v2211 = vmul.f32 %v2171, %v2165
    %v2212 = vmul.f32 %v369, %v2134
    %v2213 = vmul.f32 %v251, %v2135
    %v2214 = vmul.f32 %v253, %v2136
    %v2215 = vmul.f32 %v255, %v2137
    %v2216 = vmul.f32 %v257, %v2138
    %v2217 = vmul.f32 %v259, %v2139
    %v2218 = vmul.f32 %v261, %v2140
    %v2219 = vmul.f32 %v263, %v2141
    %v2220 = vmul.f32 %v265, %v2142
    %v2221 = vmul.f32 %v267, %v2143
    %v2222 = vmul.f32 %v269, %v2144
    %v2223 = vmul.f32 %v271, %v2145
    %v2224 = vmul.f32 %v273, %v2146
    %v2225 = vmul.f32 %v275, %v2147
    %v2226 = vmul.f32 %v277, %v2148
    %v2227 = vmul.f32 %v279, %v2149
    %v2228 = vmul.f32 %v281, %v2150
    %v2229 = vmul.f32 %v283, %v2151
    %v2230 = vmul.f32 %v285, %v2152
    %v2231 = vmul.f32 %v287, %v2153
    %v2232 = vmul.f32 %v289, %v2154
    %v2233 = vmul.f32 %v291, %v2155
    %v2234 = vmul.f32 %v293, %v2156
    %v2235 = vmul.f32 %v295, %v2157
    %v2236 = vmul.f32 %v297, %v2158
    %v2237 = vmul.f32 %v299, %v2159
    %v2238 = vmul.f32 %v301, %v2160
    %v2239 = vmul.f32 %v303, %v2161
    %v2240 = vmul.f32 %v305, %v2162
    %v2241 = vmul.f32 %v307, %v2163
    %v2242 = vmul.f32 %v2173, %v2164
    %v2243 = vmul.f32 %v2175, %v2165
    %2245 = vset.pattern.permute.xlu0 0
    %2246 = vperm.xlu0 %2245, %v2180
    %v2247 = vpop.permute.xlu0 %2246
    %2250 = vset.pattern.permute.xlu0 0
    %2251 = vperm.xlu0 %2250, %v2181
    %v2252 = vpop.permute.xlu0 %2251
    %2255 = vset.pattern.permute.xlu0 0
    %2256 = vperm.xlu0 %2255, %v2182
    %v2257 = vpop.permute.xlu0 %2256
    %2260 = vset.pattern.permute.xlu0 0
    %2261 = vperm.xlu0 %2260, %v2183
    %v2262 = vpop.permute.xlu0 %2261
    %2265 = vset.pattern.permute.xlu0 0
    %2266 = vperm.xlu0 %2265, %v2184
    %v2267 = vpop.permute.xlu0 %2266
    %2270 = vset.pattern.permute.xlu0 0
    %2271 = vperm.xlu0 %2270, %v2185
    %v2272 = vpop.permute.xlu0 %2271
    %2275 = vset.pattern.permute.xlu0 0
    %2276 = vperm.xlu0 %2275, %v2186
    %v2277 = vpop.permute.xlu0 %2276
    %2280 = vset.pattern.permute.xlu0 0
    %2281 = vperm.xlu0 %2280, %v2187
    %v2282 = vpop.permute.xlu0 %2281
    %2285 = vset.pattern.permute.xlu0 0
    %2286 = vperm.xlu0 %2285, %v2188
    %v2287 = vpop.permute.xlu0 %2286
    %2290 = vset.pattern.permute.xlu0 0
    %2291 = vperm.xlu0 %2290, %v2189
    %v2292 = vpop.permute.xlu0 %2291
    %2295 = vset.pattern.permute.xlu0 0
    %2296 = vperm.xlu0 %2295, %v2190
    %v2297 = vpop.permute.xlu0 %2296
    %2300 = vset.pattern.permute.xlu0 0
    %2301 = vperm.xlu0 %2300, %v2191
    %v2302 = vpop.permute.xlu0 %2301
    %2305 = vset.pattern.permute.xlu0 0
    %2306 = vperm.xlu0 %2305, %v2192
    %v2307 = vpop.permute.xlu0 %2306
    %2310 = vset.pattern.permute.xlu0 0
    %2311 = vperm.xlu0 %2310, %v2193
    %v2312 = vpop.permute.xlu0 %2311
    %2315 = vset.pattern.permute.xlu0 0
    %2316 = vperm.xlu0 %2315, %v2194
    %v2317 = vpop.permute.xlu0 %2316
    %2320 = vset.pattern.permute.xlu0 0
    %2321 = vperm.xlu0 %2320, %v2195
    %v2322 = vpop.permute.xlu0 %2321
    %2325 = vset.pattern.permute.xlu0 0
    %2326 = vperm.xlu0 %2325, %v2196
    %v2327 = vpop.permute.xlu0 %2326
    %2330 = vset.pattern.permute.xlu0 0
    %2331 = vperm.xlu0 %2330, %v2197
    %v2332 = vpop.permute.xlu0 %2331
    %2335 = vset.pattern.permute.xlu0 0
    %2336 = vperm.xlu0 %2335, %v2198
    %v2337 = vpop.permute.xlu0 %2336
    %2340 = vset.pattern.permute.xlu0 0
    %2341 = vperm.xlu0 %2340, %v2199
    %v2342 = vpop.permute.xlu0 %2341
    %2345 = vset.pattern.permute.xlu0 0
    %2346 = vperm.xlu0 %2345, %v2200
    %v2347 = vpop.permute.xlu0 %2346
    %2350 = vset.pattern.permute.xlu0 0
    %2351 = vperm.xlu0 %2350, %v2201
    %v2352 = vpop.permute.xlu0 %2351
    %2355 = vset.pattern.permute.xlu0 0
    %2356 = vperm.xlu0 %2355, %v2202
    %v2357 = vpop.permute.xlu0 %2356
    %2360 = vset.pattern.permute.xlu0 0
    %2361 = vperm.xlu0 %2360, %v2203
    %v2362 = vpop.permute.xlu0 %2361
    %2365 = vset.pattern.permute.xlu0 0
    %2366 = vperm.xlu0 %2365, %v2204
    %v2367 = vpop.permute.xlu0 %2366
    %2370 = vset.pattern.permute.xlu0 0
    %2371 = vperm.xlu0 %2370, %v2205
    %v2372 = vpop.permute.xlu0 %2371
    %2375 = vset.pattern.permute.xlu0 0
    %2376 = vperm.xlu0 %2375, %v2206
    %v2377 = vpop.permute.xlu0 %2376
    %2380 = vset.pattern.permute.xlu0 0
    %2381 = vperm.xlu0 %2380, %v2207
    %v2382 = vpop.permute.xlu0 %2381
    %2385 = vset.pattern.permute.xlu0 0
    %2386 = vperm.xlu0 %2385, %v2208
    %v2387 = vpop.permute.xlu0 %2386
    %2390 = vset.pattern.permute.xlu0 0
    %2391 = vperm.xlu0 %2390, %v2209
    %v2392 = vpop.permute.xlu0 %2391
    %2395 = vset.pattern.permute.xlu0 0
    %2396 = vperm.xlu0 %2395, %v2210
    %v2397 = vpop.permute.xlu0 %2396
    %2400 = vset.pattern.permute.xlu0 0
    %2401 = vperm.xlu0 %2400, %v2211
    %v2402 = vpop.permute.xlu0 %2401
    %2405 = vset.pattern.permute.xlu0 0
    %2406 = vperm.xlu0 %2405, %v2212
    %v2407 = vpop.permute.xlu0 %2406
    %2410 = vset.pattern.permute.xlu0 0
    %2411 = vperm.xlu0 %2410, %v2213
    %v2412 = vpop.permute.xlu0 %2411
    %2415 = vset.pattern.permute.xlu0 0
    %2416 = vperm.xlu0 %2415, %v2214
    %v2417 = vpop.permute.xlu0 %2416
    %2420 = vset.pattern.permute.xlu0 0
    %2421 = vperm.xlu0 %2420, %v2215
    %v2422 = vpop.permute.xlu0 %2421
    %2425 = vset.pattern.permute.xlu0 0
    %2426 = vperm.xlu0 %2425, %v2216
    %v2427 = vpop.permute.xlu0 %2426
    %2430 = vset.pattern.permute.xlu0 0
    %2431 = vperm.xlu0 %2430, %v2217
    %v2432 = vpop.permute.xlu0 %2431
    %2435 = vset.pattern.permute.xlu0 0
    %2436 = vperm.xlu0 %2435, %v2218
    %v2437 = vpop.permute.xlu0 %2436
    %2440 = vset.pattern.permute.xlu0 0
    %2441 = vperm.xlu0 %2440, %v2219
    %v2442 = vpop.permute.xlu0 %2441
    %2445 = vset.pattern.permute.xlu0 0
    %2446 = vperm.xlu0 %2445, %v2220
    %v2447 = vpop.permute.xlu0 %2446
    %2450 = vset.pattern.permute.xlu0 0
    %2451 = vperm.xlu0 %2450, %v2221
    %v2452 = vpop.permute.xlu0 %2451
    %2455 = vset.pattern.permute.xlu0 0
    %2456 = vperm.xlu0 %2455, %v2222
    %v2457 = vpop.permute.xlu0 %2456
    %2460 = vset.pattern.permute.xlu0 0
    %2461 = vperm.xlu0 %2460, %v2223
    %v2462 = vpop.permute.xlu0 %2461
    %2465 = vset.pattern.permute.xlu0 0
    %2466 = vperm.xlu0 %2465, %v2224
    %v2467 = vpop.permute.xlu0 %2466
    %2470 = vset.pattern.permute.xlu0 0
    %2471 = vperm.xlu0 %2470, %v2225
    %v2472 = vpop.permute.xlu0 %2471
    %2475 = vset.pattern.permute.xlu0 0
    %2476 = vperm.xlu0 %2475, %v2226
    %v2477 = vpop.permute.xlu0 %2476
    %2480 = vset.pattern.permute.xlu0 0
    %2481 = vperm.xlu0 %2480, %v2227
    %v2482 = vpop.permute.xlu0 %2481
    %2485 = vset.pattern.permute.xlu0 0
    %2486 = vperm.xlu0 %2485, %v2228
    %v2487 = vpop.permute.xlu0 %2486
    %2490 = vset.pattern.permute.xlu0 0
    %2491 = vperm.xlu0 %2490, %v2229
    %v2492 = vpop.permute.xlu0 %2491
    %2495 = vset.pattern.permute.xlu0 0
    %2496 = vperm.xlu0 %2495, %v2230
    %v2497 = vpop.permute.xlu0 %2496
    %2500 = vset.pattern.permute.xlu0 0
    %2501 = vperm.xlu0 %2500, %v2231
    %v2502 = vpop.permute.xlu0 %2501
    %2505 = vset.pattern.permute.xlu0 0
    %2506 = vperm.xlu0 %2505, %v2232
    %v2507 = vpop.permute.xlu0 %2506
    %2510 = vset.pattern.permute.xlu0 0
    %2511 = vperm.xlu0 %2510, %v2233
    %v2512 = vpop.permute.xlu0 %2511
    %2515 = vset.pattern.permute.xlu0 0
    %2516 = vperm.xlu0 %2515, %v2234
    %v2517 = vpop.permute.xlu0 %2516
    %2520 = vset.pattern.permute.xlu0 0
    %2521 = vperm.xlu0 %2520, %v2235
    %v2522 = vpop.permute.xlu0 %2521
    %2525 = vset.pattern.permute.xlu0 0
    %2526 = vperm.xlu0 %2525, %v2236
    %v2527 = vpop.permute.xlu0 %2526
    %2530 = vset.pattern.permute.xlu0 0
    %2531 = vperm.xlu0 %2530, %v2237
    %v2532 = vpop.permute.xlu0 %2531
    %2535 = vset.pattern.permute.xlu0 0
    %2536 = vperm.xlu0 %2535, %v2238
    %v2537 = vpop.permute.xlu0 %2536
    %2540 = vset.pattern.permute.xlu0 0
    %2541 = vperm.xlu0 %2540, %v2239
    %v2542 = vpop.permute.xlu0 %2541
    %2545 = vset.pattern.permute.xlu0 0
    %2546 = vperm.xlu0 %2545, %v2240
    %v2547 = vpop.permute.xlu0 %2546
    %2550 = vset.pattern.permute.xlu0 0
    %2551 = vperm.xlu0 %2550, %v2241
    %v2552 = vpop.permute.xlu0 %2551
    %2555 = vset.pattern.permute.xlu0 0
    %2556 = vperm.xlu0 %2555, %v2242
    %v2557 = vpop.permute.xlu0 %2556
    %2560 = vset.pattern.permute.xlu0 0
    %2561 = vperm.xlu0 %2560, %v2243
    %v2562 = vpop.permute.xlu0 %2561
    %v2564 = vlaneseq
    %v2565 = vshrl.u32 %v2564, 7
    %v2566 = vsub.s32 3, %v2565
    %v2567 = vrot.slane %v95, %v2566
    %v2568 = vmul.f32 %v2247, %v2567
    %v2569 = vmul.f32 %v2252, %v2567
    %v2570 = vmul.f32 %v2257, %v2567
    %v2571 = vmul.f32 %v2262, %v2567
    %v2572 = vmul.f32 %v2267, %v2567
    %v2573 = vmul.f32 %v2272, %v2567
    %v2574 = vmul.f32 %v2277, %v2567
    %v2575 = vmul.f32 %v2282, %v2567
    %v2576 = vmul.f32 %v2287, %v2567
    %v2577 = vmul.f32 %v2292, %v2567
    %v2578 = vmul.f32 %v2297, %v2567
    %v2579 = vmul.f32 %v2302, %v2567
    %v2580 = vmul.f32 %v2307, %v2567
    %v2581 = vmul.f32 %v2312, %v2567
    %v2582 = vmul.f32 %v2317, %v2567
    %v2583 = vmul.f32 %v2322, %v2567
    %v2584 = vmul.f32 %v2327, %v2567
    %v2585 = vmul.f32 %v2332, %v2567
    %v2586 = vmul.f32 %v2337, %v2567
    %v2587 = vmul.f32 %v2342, %v2567
    %v2588 = vmul.f32 %v2347, %v2567
    %v2589 = vmul.f32 %v2352, %v2567
    %v2590 = vmul.f32 %v2357, %v2567
    %v2591 = vmul.f32 %v2362, %v2567
    %v2592 = vmul.f32 %v2367, %v2567
    %v2593 = vmul.f32 %v2372, %v2567
    %v2594 = vmul.f32 %v2377, %v2567
    %v2595 = vmul.f32 %v2382, %v2567
    %v2596 = vmul.f32 %v2387, %v2567
    %v2597 = vmul.f32 %v2392, %v2567
    %v2598 = vmul.f32 %v2397, %v2567
    %v2599 = vmul.f32 %v2402, %v2567
    %v2600 = vmul.f32 %v2407, %v2567
    %v2601 = vmul.f32 %v2412, %v2567
    %v2602 = vmul.f32 %v2417, %v2567
    %v2603 = vmul.f32 %v2422, %v2567
    %v2604 = vmul.f32 %v2427, %v2567
    %v2605 = vmul.f32 %v2432, %v2567
    %v2606 = vmul.f32 %v2437, %v2567
    %v2607 = vmul.f32 %v2442, %v2567
    %v2608 = vmul.f32 %v2447, %v2567
    %v2609 = vmul.f32 %v2452, %v2567
    %v2610 = vmul.f32 %v2457, %v2567
    %v2611 = vmul.f32 %v2462, %v2567
    %v2612 = vmul.f32 %v2467, %v2567
    %v2613 = vmul.f32 %v2472, %v2567
    %v2614 = vmul.f32 %v2477, %v2567
    %v2615 = vmul.f32 %v2482, %v2567
    %v2616 = vmul.f32 %v2487, %v2567
    %v2617 = vmul.f32 %v2492, %v2567
    %v2618 = vmul.f32 %v2497, %v2567
    %v2619 = vmul.f32 %v2502, %v2567
    %v2620 = vmul.f32 %v2507, %v2567
    %v2621 = vmul.f32 %v2512, %v2567
    %v2622 = vmul.f32 %v2517, %v2567
    %v2623 = vmul.f32 %v2522, %v2567
    %v2624 = vmul.f32 %v2527, %v2567
    %v2625 = vmul.f32 %v2532, %v2567
    %v2626 = vmul.f32 %v2537, %v2567
    %v2627 = vmul.f32 %v2542, %v2567
    %v2628 = vmul.f32 %v2547, %v2567
    %v2629 = vmul.f32 %v2552, %v2567
    %v2630 = vmul.f32 %v2557, %v2567
    %v2631 = vmul.f32 %v2562, %v2567
    %v2632 = vadd.f32 %v2070, %v2568
    %v2633 = vadd.f32 %v2071, %v2569
    %v2634 = vadd.f32 %v2072, %v2570
    %v2635 = vadd.f32 %v2073, %v2571
    %v2636 = vadd.f32 %v2074, %v2572
    %v2637 = vadd.f32 %v2075, %v2573
    %v2638 = vadd.f32 %v2076, %v2574
    %v2639 = vadd.f32 %v2077, %v2575
    %v2640 = vadd.f32 %v2078, %v2576
    %v2641 = vadd.f32 %v2079, %v2577
    %v2642 = vadd.f32 %v2080, %v2578
    %v2643 = vadd.f32 %v2081, %v2579
    %v2644 = vadd.f32 %v2082, %v2580
    %v2645 = vadd.f32 %v2083, %v2581
    %v2646 = vadd.f32 %v2084, %v2582
    %v2647 = vadd.f32 %v2085, %v2583
    %v2648 = vadd.f32 %v2086, %v2584
    %v2649 = vadd.f32 %v2087, %v2585
    %v2650 = vadd.f32 %v2088, %v2586
    %v2651 = vadd.f32 %v2089, %v2587
    %v2652 = vadd.f32 %v2090, %v2588
    %v2653 = vadd.f32 %v2091, %v2589
    %v2654 = vadd.f32 %v2092, %v2590
    %v2655 = vadd.f32 %v2093, %v2591
    %v2656 = vadd.f32 %v2094, %v2592
    %v2657 = vadd.f32 %v2095, %v2593
    %v2658 = vadd.f32 %v2096, %v2594
    %v2659 = vadd.f32 %v2097, %v2595
    %v2660 = vadd.f32 %v2098, %v2596
    %v2661 = vadd.f32 %v2099, %v2597
    %v2662 = vadd.f32 %v2100, %v2598
    %v2663 = vadd.f32 %v2101, %v2599
    %v2664 = vadd.f32 %v2070, %v2600
    %v2665 = vadd.f32 %v2102, %v2601
    %v2666 = vadd.f32 %v2103, %v2602
    %v2667 = vadd.f32 %v2104, %v2603
    %v2668 = vadd.f32 %v2105, %v2604
    %v2669 = vadd.f32 %v2106, %v2605
    %v2670 = vadd.f32 %v2107, %v2606
    %v2671 = vadd.f32 %v2108, %v2607
    %v2672 = vadd.f32 %v2109, %v2608
    %v2673 = vadd.f32 %v2110, %v2609
    %v2674 = vadd.f32 %v2111, %v2610
    %v2675 = vadd.f32 %v2112, %v2611
    %v2676 = vadd.f32 %v2113, %v2612
    %v2677 = vadd.f32 %v2114, %v2613
    %v2678 = vadd.f32 %v2115, %v2614
    %v2679 = vadd.f32 %v2116, %v2615
    %v2680 = vadd.f32 %v2117, %v2616
    %v2681 = vadd.f32 %v2118, %v2617
    %v2682 = vadd.f32 %v2119, %v2618
    %v2683 = vadd.f32 %v2120, %v2619
    %v2684 = vadd.f32 %v2121, %v2620
    %v2685 = vadd.f32 %v2122, %v2621
    %v2686 = vadd.f32 %v2123, %v2622
    %v2687 = vadd.f32 %v2124, %v2623
    %v2688 = vadd.f32 %v2125, %v2624
    %v2689 = vadd.f32 %v2126, %v2625
    %v2690 = vadd.f32 %v2127, %v2626
    %v2691 = vadd.f32 %v2128, %v2627
    %v2692 = vadd.f32 %v2129, %v2628
    %v2693 = vadd.f32 %v2130, %v2629
    %v2694 = vadd.f32 %v2131, %v2630
    %v2695 = vadd.f32 %v2132, %v2631
    %s2696 = scalar_lea.vmem %s1, 1024
    %v2697 = vld [vmem:[%s2696] sm:$0xff]
    %v2698 = vld [vmem:[%s2696 + $0x8] sm:$0xff]
    %v2699 = vld [vmem:[%s2696 + $0x10] sm:$0xff]
    %v2700 = vld [vmem:[%s2696 + $0x18] sm:$0xff]
    %v2701 = vld [vmem:[%s2696 + $0x20] sm:$0xff]
    %v2702 = vld [vmem:[%s2696 + $0x28] sm:$0xff]
    %v2703 = vld [vmem:[%s2696 + $0x30] sm:$0xff]
    %v2704 = vld [vmem:[%s2696 + $0x38] sm:$0xff]
    %v2705 = vld [vmem:[%s2696 + $0x40] sm:$0xff]
    %v2706 = vld [vmem:[%s2696 + $0x48] sm:$0xff]
    %v2707 = vld [vmem:[%s2696 + $0x50] sm:$0xff]
    %v2708 = vld [vmem:[%s2696 + $0x58] sm:$0xff]
    %v2709 = vld [vmem:[%s2696 + $0x60] sm:$0xff]
    %v2710 = vld [vmem:[%s2696 + $0x68] sm:$0xff]
    %v2711 = vld [vmem:[%s2696 + $0x70] sm:$0xff]
    %v2712 = vld [vmem:[%s2696 + $0x78] sm:$0xff]
    %v2713 = vld [vmem:[%s2696 + $0x80] sm:$0xff]
    %v2714 = vld [vmem:[%s2696 + $0x88] sm:$0xff]
    %v2715 = vld [vmem:[%s2696 + $0x90] sm:$0xff]
    %v2716 = vld [vmem:[%s2696 + $0x98] sm:$0xff]
    %v2717 = vld [vmem:[%s2696 + $0xa0] sm:$0xff]
    %v2718 = vld [vmem:[%s2696 + $0xa8] sm:$0xff]
    %v2719 = vld [vmem:[%s2696 + $0xb0] sm:$0xff]
    %v2720 = vld [vmem:[%s2696 + $0xb8] sm:$0xff]
    %v2721 = vld [vmem:[%s2696 + $0xc0] sm:$0xff]
    %v2722 = vld [vmem:[%s2696 + $0xc8] sm:$0xff]
    %v2723 = vld [vmem:[%s2696 + $0xd0] sm:$0xff]
    %v2724 = vld [vmem:[%s2696 + $0xd8] sm:$0xff]
    %v2725 = vld [vmem:[%s2696 + $0xe0] sm:$0xff]
    %v2726 = vld [vmem:[%s2696 + $0xe8] sm:$0xff]
    %v2727 = vld [vmem:[%s2696 + $0xf0] sm:$0xff]
    %v2728 = vld [vmem:[%s2696 + $0xf8] sm:$0xff]
    %v2729 = vmul.f32 %v31, %v2697
    %v2730 = vmul.f32 %v32, %v2698
    %v2731 = vmul.f32 %v33, %v2699
    %v2732 = vmul.f32 %v34, %v2700
    %v2733 = vmul.f32 %v35, %v2701
    %v2734 = vmul.f32 %v36, %v2702
    %v2735 = vmul.f32 %v37, %v2703
    %v2736 = vmul.f32 %v38, %v2704
    %v2737 = vmul.f32 %v39, %v2705
    %v2738 = vmul.f32 %v40, %v2706
    %v2739 = vmul.f32 %v41, %v2707
    %v2740 = vmul.f32 %v42, %v2708
    %v2741 = vmul.f32 %v43, %v2709
    %v2742 = vmul.f32 %v44, %v2710
    %v2743 = vmul.f32 %v45, %v2711
    %v2744 = vmul.f32 %v46, %v2712
    %v2745 = vmul.f32 %v47, %v2713
    %v2746 = vmul.f32 %v48, %v2714
    %v2747 = vmul.f32 %v49, %v2715
    %v2748 = vmul.f32 %v50, %v2716
    %v2749 = vmul.f32 %v51, %v2717
    %v2750 = vmul.f32 %v52, %v2718
    %v2751 = vmul.f32 %v53, %v2719
    %v2752 = vmul.f32 %v54, %v2720
    %v2753 = vmul.f32 %v55, %v2721
    %v2754 = vmul.f32 %v56, %v2722
    %v2755 = vmul.f32 %v57, %v2723
    %v2756 = vmul.f32 %v58, %v2724
    %v2757 = vmul.f32 %v59, %v2725
    %v2758 = vmul.f32 %v60, %v2726
    %v2759 = vmul.f32 %v61, %v2727
    %v2760 = vmul.f32 %v62, %v2728
    %v2761 = vmul.f32 %v63, %v2697
    %v2762 = vmul.f32 %v64, %v2698
    %v2763 = vmul.f32 %v65, %v2699
    %v2764 = vmul.f32 %v66, %v2700
    %v2765 = vmul.f32 %v67, %v2701
    %v2766 = vmul.f32 %v68, %v2702
    %v2767 = vmul.f32 %v69, %v2703
    %v2768 = vmul.f32 %v70, %v2704
    %v2769 = vmul.f32 %v71, %v2705
    %v2770 = vmul.f32 %v72, %v2706
    %v2771 = vmul.f32 %v73, %v2707
    %v2772 = vmul.f32 %v74, %v2708
    %v2773 = vmul.f32 %v75, %v2709
    %v2774 = vmul.f32 %v76, %v2710
    %v2775 = vmul.f32 %v77, %v2711
    %v2776 = vmul.f32 %v78, %v2712
    %v2777 = vmul.f32 %v79, %v2713
    %v2778 = vmul.f32 %v80, %v2714
    %v2779 = vmul.f32 %v81, %v2715
    %v2780 = vmul.f32 %v82, %v2716
    %v2781 = vmul.f32 %v83, %v2717
    %v2782 = vmul.f32 %v84, %v2718
    %v2783 = vmul.f32 %v85, %v2719
    %v2784 = vmul.f32 %v86, %v2720
    %v2785 = vmul.f32 %v87, %v2721
    %v2786 = vmul.f32 %v88, %v2722
    %v2787 = vmul.f32 %v89, %v2723
    %v2788 = vmul.f32 %v90, %v2724
    %v2789 = vmul.f32 %v91, %v2725
    %v2790 = vmul.f32 %v92, %v2726
    %v2791 = vmul.f32 %v93, %v2727
    %v2792 = vmul.f32 %v94, %v2728
    %2794 = vset.pattern.permute.xlu0 0
    %2795 = vperm.xlu0 %2794, %v2729
    %v2796 = vpop.permute.xlu0 %2795
    %2799 = vset.pattern.permute.xlu0 0
    %2800 = vperm.xlu0 %2799, %v2730
    %v2801 = vpop.permute.xlu0 %2800
    %2804 = vset.pattern.permute.xlu0 0
    %2805 = vperm.xlu0 %2804, %v2731
    %v2806 = vpop.permute.xlu0 %2805
    %2809 = vset.pattern.permute.xlu0 0
    %2810 = vperm.xlu0 %2809, %v2732
    %v2811 = vpop.permute.xlu0 %2810
    %2814 = vset.pattern.permute.xlu0 0
    %2815 = vperm.xlu0 %2814, %v2733
    %v2816 = vpop.permute.xlu0 %2815
    %2819 = vset.pattern.permute.xlu0 0
    %2820 = vperm.xlu0 %2819, %v2734
    %v2821 = vpop.permute.xlu0 %2820
    %2824 = vset.pattern.permute.xlu0 0
    %2825 = vperm.xlu0 %2824, %v2735
    %v2826 = vpop.permute.xlu0 %2825
    %2829 = vset.pattern.permute.xlu0 0
    %2830 = vperm.xlu0 %2829, %v2736
    %v2831 = vpop.permute.xlu0 %2830
    %2834 = vset.pattern.permute.xlu0 0
    %2835 = vperm.xlu0 %2834, %v2737
    %v2836 = vpop.permute.xlu0 %2835
    %2839 = vset.pattern.permute.xlu0 0
    %2840 = vperm.xlu0 %2839, %v2738
    %v2841 = vpop.permute.xlu0 %2840
    %2844 = vset.pattern.permute.xlu0 0
    %2845 = vperm.xlu0 %2844, %v2739
    %v2846 = vpop.permute.xlu0 %2845
    %2849 = vset.pattern.permute.xlu0 0
    %2850 = vperm.xlu0 %2849, %v2740
    %v2851 = vpop.permute.xlu0 %2850
    %2854 = vset.pattern.permute.xlu0 0
    %2855 = vperm.xlu0 %2854, %v2741
    %v2856 = vpop.permute.xlu0 %2855
    %2859 = vset.pattern.permute.xlu0 0
    %2860 = vperm.xlu0 %2859, %v2742
    %v2861 = vpop.permute.xlu0 %2860
    %2864 = vset.pattern.permute.xlu0 0
    %2865 = vperm.xlu0 %2864, %v2743
    %v2866 = vpop.permute.xlu0 %2865
    %2869 = vset.pattern.permute.xlu0 0
    %2870 = vperm.xlu0 %2869, %v2744
    %v2871 = vpop.permute.xlu0 %2870
    %2874 = vset.pattern.permute.xlu0 0
    %2875 = vperm.xlu0 %2874, %v2745
    %v2876 = vpop.permute.xlu0 %2875
    %2879 = vset.pattern.permute.xlu0 0
    %2880 = vperm.xlu0 %2879, %v2746
    %v2881 = vpop.permute.xlu0 %2880
    %2884 = vset.pattern.permute.xlu0 0
    %2885 = vperm.xlu0 %2884, %v2747
    %v2886 = vpop.permute.xlu0 %2885
    %2889 = vset.pattern.permute.xlu0 0
    %2890 = vperm.xlu0 %2889, %v2748
    %v2891 = vpop.permute.xlu0 %2890
    %2894 = vset.pattern.permute.xlu0 0
    %2895 = vperm.xlu0 %2894, %v2749
    %v2896 = vpop.permute.xlu0 %2895
    %2899 = vset.pattern.permute.xlu0 0
    %2900 = vperm.xlu0 %2899, %v2750
    %v2901 = vpop.permute.xlu0 %2900
    %2904 = vset.pattern.permute.xlu0 0
    %2905 = vperm.xlu0 %2904, %v2751
    %v2906 = vpop.permute.xlu0 %2905
    %2909 = vset.pattern.permute.xlu0 0
    %2910 = vperm.xlu0 %2909, %v2752
    %v2911 = vpop.permute.xlu0 %2910
    %2914 = vset.pattern.permute.xlu0 0
    %2915 = vperm.xlu0 %2914, %v2753
    %v2916 = vpop.permute.xlu0 %2915
    %2919 = vset.pattern.permute.xlu0 0
    %2920 = vperm.xlu0 %2919, %v2754
    %v2921 = vpop.permute.xlu0 %2920
    %2924 = vset.pattern.permute.xlu0 0
    %2925 = vperm.xlu0 %2924, %v2755
    %v2926 = vpop.permute.xlu0 %2925
    %2929 = vset.pattern.permute.xlu0 0
    %2930 = vperm.xlu0 %2929, %v2756
    %v2931 = vpop.permute.xlu0 %2930
    %2934 = vset.pattern.permute.xlu0 0
    %2935 = vperm.xlu0 %2934, %v2757
    %v2936 = vpop.permute.xlu0 %2935
    %2939 = vset.pattern.permute.xlu0 0
    %2940 = vperm.xlu0 %2939, %v2758
    %v2941 = vpop.permute.xlu0 %2940
    %2944 = vset.pattern.permute.xlu0 0
    %2945 = vperm.xlu0 %2944, %v2759
    %v2946 = vpop.permute.xlu0 %2945
    %2949 = vset.pattern.permute.xlu0 0
    %2950 = vperm.xlu0 %2949, %v2760
    %v2951 = vpop.permute.xlu0 %2950
    %2954 = vset.pattern.permute.xlu0 0
    %2955 = vperm.xlu0 %2954, %v2761
    %v2956 = vpop.permute.xlu0 %2955
    %2959 = vset.pattern.permute.xlu0 0
    %2960 = vperm.xlu0 %2959, %v2762
    %v2961 = vpop.permute.xlu0 %2960
    %2964 = vset.pattern.permute.xlu0 0
    %2965 = vperm.xlu0 %2964, %v2763
    %v2966 = vpop.permute.xlu0 %2965
    %2969 = vset.pattern.permute.xlu0 0
    %2970 = vperm.xlu0 %2969, %v2764
    %v2971 = vpop.permute.xlu0 %2970
    %2974 = vset.pattern.permute.xlu0 0
    %2975 = vperm.xlu0 %2974, %v2765
    %v2976 = vpop.permute.xlu0 %2975
    %2979 = vset.pattern.permute.xlu0 0
    %2980 = vperm.xlu0 %2979, %v2766
    %v2981 = vpop.permute.xlu0 %2980
    %2984 = vset.pattern.permute.xlu0 0
    %2985 = vperm.xlu0 %2984, %v2767
    %v2986 = vpop.permute.xlu0 %2985
    %2989 = vset.pattern.permute.xlu0 0
    %2990 = vperm.xlu0 %2989, %v2768
    %v2991 = vpop.permute.xlu0 %2990
    %2994 = vset.pattern.permute.xlu0 0
    %2995 = vperm.xlu0 %2994, %v2769
    %v2996 = vpop.permute.xlu0 %2995
    %2999 = vset.pattern.permute.xlu0 0
    %3000 = vperm.xlu0 %2999, %v2770
    %v3001 = vpop.permute.xlu0 %3000
    %3004 = vset.pattern.permute.xlu0 0
    %3005 = vperm.xlu0 %3004, %v2771
    %v3006 = vpop.permute.xlu0 %3005
    %3009 = vset.pattern.permute.xlu0 0
    %3010 = vperm.xlu0 %3009, %v2772
    %v3011 = vpop.permute.xlu0 %3010
    %3014 = vset.pattern.permute.xlu0 0
    %3015 = vperm.xlu0 %3014, %v2773
    %v3016 = vpop.permute.xlu0 %3015
    %3019 = vset.pattern.permute.xlu0 0
    %3020 = vperm.xlu0 %3019, %v2774
    %v3021 = vpop.permute.xlu0 %3020
    %3024 = vset.pattern.permute.xlu0 0
    %3025 = vperm.xlu0 %3024, %v2775
    %v3026 = vpop.permute.xlu0 %3025
    %3029 = vset.pattern.permute.xlu0 0
    %3030 = vperm.xlu0 %3029, %v2776
    %v3031 = vpop.permute.xlu0 %3030
    %3034 = vset.pattern.permute.xlu0 0
    %3035 = vperm.xlu0 %3034, %v2777
    %v3036 = vpop.permute.xlu0 %3035
    %3039 = vset.pattern.permute.xlu0 0
    %3040 = vperm.xlu0 %3039, %v2778
    %v3041 = vpop.permute.xlu0 %3040
    %3044 = vset.pattern.permute.xlu0 0
    %3045 = vperm.xlu0 %3044, %v2779
    %v3046 = vpop.permute.xlu0 %3045
    %3049 = vset.pattern.permute.xlu0 0
    %3050 = vperm.xlu0 %3049, %v2780
    %v3051 = vpop.permute.xlu0 %3050
    %3054 = vset.pattern.permute.xlu0 0
    %3055 = vperm.xlu0 %3054, %v2781
    %v3056 = vpop.permute.xlu0 %3055
    %3059 = vset.pattern.permute.xlu0 0
    %3060 = vperm.xlu0 %3059, %v2782
    %v3061 = vpop.permute.xlu0 %3060
    %3064 = vset.pattern.permute.xlu0 0
    %3065 = vperm.xlu0 %3064, %v2783
    %v3066 = vpop.permute.xlu0 %3065
    %3069 = vset.pattern.permute.xlu0 0
    %3070 = vperm.xlu0 %3069, %v2784
    %v3071 = vpop.permute.xlu0 %3070
    %3074 = vset.pattern.permute.xlu0 0
    %3075 = vperm.xlu0 %3074, %v2785
    %v3076 = vpop.permute.xlu0 %3075
    %3079 = vset.pattern.permute.xlu0 0
    %3080 = vperm.xlu0 %3079, %v2786
    %v3081 = vpop.permute.xlu0 %3080
    %3084 = vset.pattern.permute.xlu0 0
    %3085 = vperm.xlu0 %3084, %v2787
    %v3086 = vpop.permute.xlu0 %3085
    %3089 = vset.pattern.permute.xlu0 0
    %3090 = vperm.xlu0 %3089, %v2788
    %v3091 = vpop.permute.xlu0 %3090
    %3094 = vset.pattern.permute.xlu0 0
    %3095 = vperm.xlu0 %3094, %v2789
    %v3096 = vpop.permute.xlu0 %3095
    %3099 = vset.pattern.permute.xlu0 0
    %3100 = vperm.xlu0 %3099, %v2790
    %v3101 = vpop.permute.xlu0 %3100
    %3104 = vset.pattern.permute.xlu0 0
    %3105 = vperm.xlu0 %3104, %v2791
    %v3106 = vpop.permute.xlu0 %3105
    %3109 = vset.pattern.permute.xlu0 0
    %3110 = vperm.xlu0 %3109, %v2792
    %v3111 = vpop.permute.xlu0 %3110
    %v3113 = vlaneseq
    %v3114 = vshrl.u32 %v3113, 7
    %v3115 = vsub.s32 4, %v3114
    %v3116 = vrot.slane %v95, %v3115
    %v3117 = vmul.f32 %v2796, %v3116
    %v3118 = vmul.f32 %v2801, %v3116
    %v3119 = vmul.f32 %v2806, %v3116
    %v3120 = vmul.f32 %v2811, %v3116
    %v3121 = vmul.f32 %v2816, %v3116
    %v3122 = vmul.f32 %v2821, %v3116
    %v3123 = vmul.f32 %v2826, %v3116
    %v3124 = vmul.f32 %v2831, %v3116
    %v3125 = vmul.f32 %v2836, %v3116
    %v3126 = vmul.f32 %v2841, %v3116
    %v3127 = vmul.f32 %v2846, %v3116
    %v3128 = vmul.f32 %v2851, %v3116
    %v3129 = vmul.f32 %v2856, %v3116
    %v3130 = vmul.f32 %v2861, %v3116
    %v3131 = vmul.f32 %v2866, %v3116
    %v3132 = vmul.f32 %v2871, %v3116
    %v3133 = vmul.f32 %v2876, %v3116
    %v3134 = vmul.f32 %v2881, %v3116
    %v3135 = vmul.f32 %v2886, %v3116
    %v3136 = vmul.f32 %v2891, %v3116
    %v3137 = vmul.f32 %v2896, %v3116
    %v3138 = vmul.f32 %v2901, %v3116
    %v3139 = vmul.f32 %v2906, %v3116
    %v3140 = vmul.f32 %v2911, %v3116
    %v3141 = vmul.f32 %v2916, %v3116
    %v3142 = vmul.f32 %v2921, %v3116
    %v3143 = vmul.f32 %v2926, %v3116
    %v3144 = vmul.f32 %v2931, %v3116
    %v3145 = vmul.f32 %v2936, %v3116
    %v3146 = vmul.f32 %v2941, %v3116
    %v3147 = vmul.f32 %v2946, %v3116
    %v3148 = vmul.f32 %v2951, %v3116
    %v3149 = vmul.f32 %v2956, %v3116
    %v3150 = vmul.f32 %v2961, %v3116
    %v3151 = vmul.f32 %v2966, %v3116
    %v3152 = vmul.f32 %v2971, %v3116
    %v3153 = vmul.f32 %v2976, %v3116
    %v3154 = vmul.f32 %v2981, %v3116
    %v3155 = vmul.f32 %v2986, %v3116
    %v3156 = vmul.f32 %v2991, %v3116
    %v3157 = vmul.f32 %v2996, %v3116
    %v3158 = vmul.f32 %v3001, %v3116
    %v3159 = vmul.f32 %v3006, %v3116
    %v3160 = vmul.f32 %v3011, %v3116
    %v3161 = vmul.f32 %v3016, %v3116
    %v3162 = vmul.f32 %v3021, %v3116
    %v3163 = vmul.f32 %v3026, %v3116
    %v3164 = vmul.f32 %v3031, %v3116
    %v3165 = vmul.f32 %v3036, %v3116
    %v3166 = vmul.f32 %v3041, %v3116
    %v3167 = vmul.f32 %v3046, %v3116
    %v3168 = vmul.f32 %v3051, %v3116
    %v3169 = vmul.f32 %v3056, %v3116
    %v3170 = vmul.f32 %v3061, %v3116
    %v3171 = vmul.f32 %v3066, %v3116
    %v3172 = vmul.f32 %v3071, %v3116
    %v3173 = vmul.f32 %v3076, %v3116
    %v3174 = vmul.f32 %v3081, %v3116
    %v3175 = vmul.f32 %v3086, %v3116
    %v3176 = vmul.f32 %v3091, %v3116
    %v3177 = vmul.f32 %v3096, %v3116
    %v3178 = vmul.f32 %v3101, %v3116
    %v3179 = vmul.f32 %v3106, %v3116
    %v3180 = vmul.f32 %v3111, %v3116
    %v3181 = vadd.f32 %v2632, %v3117
    %v3182 = vadd.f32 %v2633, %v3118
    %v3183 = vadd.f32 %v2634, %v3119
    %v3184 = vadd.f32 %v2635, %v3120
    %v3185 = vadd.f32 %v2636, %v3121
    %v3186 = vadd.f32 %v2637, %v3122
    %v3187 = vadd.f32 %v2638, %v3123
    %v3188 = vadd.f32 %v2639, %v3124
    %v3189 = vadd.f32 %v2640, %v3125
    %v3190 = vadd.f32 %v2641, %v3126
    %v3191 = vadd.f32 %v2642, %v3127
    %v3192 = vadd.f32 %v2643, %v3128
    %v3193 = vadd.f32 %v2644, %v3129
    %v3194 = vadd.f32 %v2645, %v3130
    %v3195 = vadd.f32 %v2646, %v3131
    %v3196 = vadd.f32 %v2647, %v3132
    %v3197 = vadd.f32 %v2648, %v3133
    %v3198 = vadd.f32 %v2649, %v3134
    %v3199 = vadd.f32 %v2650, %v3135
    %v3200 = vadd.f32 %v2651, %v3136
    %v3201 = vadd.f32 %v2652, %v3137
    %v3202 = vadd.f32 %v2653, %v3138
    %v3203 = vadd.f32 %v2654, %v3139
    %v3204 = vadd.f32 %v2655, %v3140
    %v3205 = vadd.f32 %v2656, %v3141
    %v3206 = vadd.f32 %v2657, %v3142
    %v3207 = vadd.f32 %v2658, %v3143
    %v3208 = vadd.f32 %v2659, %v3144
    %v3209 = vadd.f32 %v2660, %v3145
    %v3210 = vadd.f32 %v2661, %v3146
    %v3211 = vadd.f32 %v2662, %v3147
    %v3212 = vadd.f32 %v2663, %v3148
    %v3213 = vadd.f32 %v2664, %v3149
    %v3214 = vadd.f32 %v2665, %v3150
    %v3215 = vadd.f32 %v2666, %v3151
    %v3216 = vadd.f32 %v2667, %v3152
    %v3217 = vadd.f32 %v2668, %v3153
    %v3218 = vadd.f32 %v2669, %v3154
    %v3219 = vadd.f32 %v2670, %v3155
    %v3220 = vadd.f32 %v2671, %v3156
    %v3221 = vadd.f32 %v2672, %v3157
    %v3222 = vadd.f32 %v2673, %v3158
    %v3223 = vadd.f32 %v2674, %v3159
    %v3224 = vadd.f32 %v2675, %v3160
    %v3225 = vadd.f32 %v2676, %v3161
    %v3226 = vadd.f32 %v2677, %v3162
    %v3227 = vadd.f32 %v2678, %v3163
    %v3228 = vadd.f32 %v2679, %v3164
    %v3229 = vadd.f32 %v2680, %v3165
    %v3230 = vadd.f32 %v2681, %v3166
    %v3231 = vadd.f32 %v2682, %v3167
    %v3232 = vadd.f32 %v2683, %v3168
    %v3233 = vadd.f32 %v2684, %v3169
    %v3234 = vadd.f32 %v2685, %v3170
    %v3235 = vadd.f32 %v2686, %v3171
    %v3236 = vadd.f32 %v2687, %v3172
    %v3237 = vadd.f32 %v2688, %v3173
    %v3238 = vadd.f32 %v2689, %v3174
    %v3239 = vadd.f32 %v2690, %v3175
    %v3240 = vadd.f32 %v2691, %v3176
    %v3241 = vadd.f32 %v2692, %v3177
    %v3242 = vadd.f32 %v2693, %v3178
    %v3243 = vadd.f32 %v2694, %v3179
    %v3244 = vadd.f32 %v2695, %v3180
    %s3245 = scalar_lea.vmem %s1, 1280
    %v3246 = vld [vmem:[%s3245] sm:$0xff]
    %v3247 = vld [vmem:[%s3245 + $0x8] sm:$0xff]
    %v3248 = vld [vmem:[%s3245 + $0x10] sm:$0xff]
    %v3249 = vld [vmem:[%s3245 + $0x18] sm:$0xff]
    %v3250 = vld [vmem:[%s3245 + $0x20] sm:$0xff]
    %v3251 = vld [vmem:[%s3245 + $0x28] sm:$0xff]
    %v3252 = vld [vmem:[%s3245 + $0x30] sm:$0xff]
    %v3253 = vld [vmem:[%s3245 + $0x38] sm:$0xff]
    %v3254 = vld [vmem:[%s3245 + $0x40] sm:$0xff]
    %v3255 = vld [vmem:[%s3245 + $0x48] sm:$0xff]
    %v3256 = vld [vmem:[%s3245 + $0x50] sm:$0xff]
    %v3257 = vld [vmem:[%s3245 + $0x58] sm:$0xff]
    %v3258 = vld [vmem:[%s3245 + $0x60] sm:$0xff]
    %v3259 = vld [vmem:[%s3245 + $0x68] sm:$0xff]
    %v3260 = vld [vmem:[%s3245 + $0x70] sm:$0xff]
    %v3261 = vld [vmem:[%s3245 + $0x78] sm:$0xff]
    %v3262 = vld [vmem:[%s3245 + $0x80] sm:$0xff]
    %v3263 = vld [vmem:[%s3245 + $0x88] sm:$0xff]
    %v3264 = vld [vmem:[%s3245 + $0x90] sm:$0xff]
    %v3265 = vld [vmem:[%s3245 + $0x98] sm:$0xff]
    %v3266 = vld [vmem:[%s3245 + $0xa0] sm:$0xff]
    %v3267 = vld [vmem:[%s3245 + $0xa8] sm:$0xff]
    %v3268 = vld [vmem:[%s3245 + $0xb0] sm:$0xff]
    %v3269 = vld [vmem:[%s3245 + $0xb8] sm:$0xff]
    %v3270 = vld [vmem:[%s3245 + $0xc0] sm:$0xff]
    %v3271 = vld [vmem:[%s3245 + $0xc8] sm:$0xff]
    %v3272 = vld [vmem:[%s3245 + $0xd0] sm:$0xff]
    %v3273 = vld [vmem:[%s3245 + $0xd8] sm:$0xff]
    %v3274 = vld [vmem:[%s3245 + $0xe0] sm:$0xff]
    %v3275 = vld [vmem:[%s3245 + $0xe8] sm:$0xff]
    %v3276 = vld [vmem:[%s3245 + $0xf0] sm:$0xff]
    %v3277 = vld [vmem:[%s3245 + $0xf8] sm:$0xff]
    %v3278 = vrot.slane %v62, 1
    %v3279 = vsel %vm1438, %v1498, %v3278
    %v3280 = vrot.slane %v94, 1
    %v3281 = vsel %vm1438, %v1559, %v3280
    %v3286 = vsel %vm1438, %v3278, 0.0
    %v3287 = vsel %vm1438, %v3280, 0.0
    %v3288 = vmul.f32 %v1441, %v3246
    %v3289 = vmul.f32 %v1443, %v3247
    %v3290 = vmul.f32 %v1445, %v3248
    %v3291 = vmul.f32 %v1447, %v3249
    %v3292 = vmul.f32 %v1449, %v3250
    %v3293 = vmul.f32 %v1451, %v3251
    %v3294 = vmul.f32 %v1453, %v3252
    %v3295 = vmul.f32 %v1455, %v3253
    %v3296 = vmul.f32 %v1457, %v3254
    %v3297 = vmul.f32 %v1459, %v3255
    %v3298 = vmul.f32 %v1461, %v3256
    %v3299 = vmul.f32 %v1463, %v3257
    %v3300 = vmul.f32 %v1465, %v3258
    %v3301 = vmul.f32 %v1467, %v3259
    %v3302 = vmul.f32 %v1469, %v3260
    %v3303 = vmul.f32 %v1471, %v3261
    %v3304 = vmul.f32 %v1473, %v3262
    %v3305 = vmul.f32 %v1475, %v3263
    %v3306 = vmul.f32 %v1477, %v3264
    %v3307 = vmul.f32 %v1479, %v3265
    %v3308 = vmul.f32 %v1481, %v3266
    %v3309 = vmul.f32 %v1483, %v3267
    %v3310 = vmul.f32 %v1485, %v3268
    %v3311 = vmul.f32 %v1487, %v3269
    %v3312 = vmul.f32 %v1489, %v3270
    %v3313 = vmul.f32 %v1491, %v3271
    %v3314 = vmul.f32 %v1493, %v3272
    %v3315 = vmul.f32 %v1495, %v3273
    %v3316 = vmul.f32 %v1497, %v3274
    %v3317 = vmul.f32 %v1499, %v3275
    %v3318 = vmul.f32 %v3279, %v3276
    %v3319 = vmul.f32 %v3286, %v3277
    %v3320 = vmul.f32 %v1502, %v3246
    %v3321 = vmul.f32 %v1504, %v3247
    %v3322 = vmul.f32 %v1506, %v3248
    %v3323 = vmul.f32 %v1508, %v3249
    %v3324 = vmul.f32 %v1510, %v3250
    %v3325 = vmul.f32 %v1512, %v3251
    %v3326 = vmul.f32 %v1514, %v3252
    %v3327 = vmul.f32 %v1516, %v3253
    %v3328 = vmul.f32 %v1518, %v3254
    %v3329 = vmul.f32 %v1520, %v3255
    %v3330 = vmul.f32 %v1522, %v3256
    %v3331 = vmul.f32 %v1524, %v3257
    %v3332 = vmul.f32 %v1526, %v3258
    %v3333 = vmul.f32 %v1528, %v3259
    %v3334 = vmul.f32 %v1530, %v3260
    %v3335 = vmul.f32 %v1532, %v3261
    %v3336 = vmul.f32 %v1534, %v3262
    %v3337 = vmul.f32 %v1536, %v3263
    %v3338 = vmul.f32 %v1538, %v3264
    %v3339 = vmul.f32 %v1540, %v3265
    %v3340 = vmul.f32 %v1542, %v3266
    %v3341 = vmul.f32 %v1544, %v3267
    %v3342 = vmul.f32 %v1546, %v3268
    %v3343 = vmul.f32 %v1548, %v3269
    %v3344 = vmul.f32 %v1550, %v3270
    %v3345 = vmul.f32 %v1552, %v3271
    %v3346 = vmul.f32 %v1554, %v3272
    %v3347 = vmul.f32 %v1556, %v3273
    %v3348 = vmul.f32 %v1558, %v3274
    %v3349 = vmul.f32 %v1560, %v3275
    %v3350 = vmul.f32 %v3281, %v3276
    %v3351 = vmul.f32 %v3287, %v3277
    %3353 = vset.pattern.permute.xlu0 0
    %3354 = vperm.xlu0 %3353, %v3288
    %v3355 = vpop.permute.xlu0 %3354
    %3358 = vset.pattern.permute.xlu0 0
    %3359 = vperm.xlu0 %3358, %v3289
    %v3360 = vpop.permute.xlu0 %3359
    %3363 = vset.pattern.permute.xlu0 0
    %3364 = vperm.xlu0 %3363, %v3290
    %v3365 = vpop.permute.xlu0 %3364
    %3368 = vset.pattern.permute.xlu0 0
    %3369 = vperm.xlu0 %3368, %v3291
    %v3370 = vpop.permute.xlu0 %3369
    %3373 = vset.pattern.permute.xlu0 0
    %3374 = vperm.xlu0 %3373, %v3292
    %v3375 = vpop.permute.xlu0 %3374
    %3378 = vset.pattern.permute.xlu0 0
    %3379 = vperm.xlu0 %3378, %v3293
    %v3380 = vpop.permute.xlu0 %3379
    %3383 = vset.pattern.permute.xlu0 0
    %3384 = vperm.xlu0 %3383, %v3294
    %v3385 = vpop.permute.xlu0 %3384
    %3388 = vset.pattern.permute.xlu0 0
    %3389 = vperm.xlu0 %3388, %v3295
    %v3390 = vpop.permute.xlu0 %3389
    %3393 = vset.pattern.permute.xlu0 0
    %3394 = vperm.xlu0 %3393, %v3296
    %v3395 = vpop.permute.xlu0 %3394
    %3398 = vset.pattern.permute.xlu0 0
    %3399 = vperm.xlu0 %3398, %v3297
    %v3400 = vpop.permute.xlu0 %3399
    %3403 = vset.pattern.permute.xlu0 0
    %3404 = vperm.xlu0 %3403, %v3298
    %v3405 = vpop.permute.xlu0 %3404
    %3408 = vset.pattern.permute.xlu0 0
    %3409 = vperm.xlu0 %3408, %v3299
    %v3410 = vpop.permute.xlu0 %3409
    %3413 = vset.pattern.permute.xlu0 0
    %3414 = vperm.xlu0 %3413, %v3300
    %v3415 = vpop.permute.xlu0 %3414
    %3418 = vset.pattern.permute.xlu0 0
    %3419 = vperm.xlu0 %3418, %v3301
    %v3420 = vpop.permute.xlu0 %3419
    %3423 = vset.pattern.permute.xlu0 0
    %3424 = vperm.xlu0 %3423, %v3302
    %v3425 = vpop.permute.xlu0 %3424
    %3428 = vset.pattern.permute.xlu0 0
    %3429 = vperm.xlu0 %3428, %v3303
    %v3430 = vpop.permute.xlu0 %3429
    %3433 = vset.pattern.permute.xlu0 0
    %3434 = vperm.xlu0 %3433, %v3304
    %v3435 = vpop.permute.xlu0 %3434
    %3438 = vset.pattern.permute.xlu0 0
    %3439 = vperm.xlu0 %3438, %v3305
    %v3440 = vpop.permute.xlu0 %3439
    %3443 = vset.pattern.permute.xlu0 0
    %3444 = vperm.xlu0 %3443, %v3306
    %v3445 = vpop.permute.xlu0 %3444
    %3448 = vset.pattern.permute.xlu0 0
    %3449 = vperm.xlu0 %3448, %v3307
    %v3450 = vpop.permute.xlu0 %3449
    %3453 = vset.pattern.permute.xlu0 0
    %3454 = vperm.xlu0 %3453, %v3308
    %v3455 = vpop.permute.xlu0 %3454
    %3458 = vset.pattern.permute.xlu0 0
    %3459 = vperm.xlu0 %3458, %v3309
    %v3460 = vpop.permute.xlu0 %3459
    %3463 = vset.pattern.permute.xlu0 0
    %3464 = vperm.xlu0 %3463, %v3310
    %v3465 = vpop.permute.xlu0 %3464
    %3468 = vset.pattern.permute.xlu0 0
    %3469 = vperm.xlu0 %3468, %v3311
    %v3470 = vpop.permute.xlu0 %3469
    %3473 = vset.pattern.permute.xlu0 0
    %3474 = vperm.xlu0 %3473, %v3312
    %v3475 = vpop.permute.xlu0 %3474
    %3478 = vset.pattern.permute.xlu0 0
    %3479 = vperm.xlu0 %3478, %v3313
    %v3480 = vpop.permute.xlu0 %3479
    %3483 = vset.pattern.permute.xlu0 0
    %3484 = vperm.xlu0 %3483, %v3314
    %v3485 = vpop.permute.xlu0 %3484
    %3488 = vset.pattern.permute.xlu0 0
    %3489 = vperm.xlu0 %3488, %v3315
    %v3490 = vpop.permute.xlu0 %3489
    %3493 = vset.pattern.permute.xlu0 0
    %3494 = vperm.xlu0 %3493, %v3316
    %v3495 = vpop.permute.xlu0 %3494
    %3498 = vset.pattern.permute.xlu0 0
    %3499 = vperm.xlu0 %3498, %v3317
    %v3500 = vpop.permute.xlu0 %3499
    %3503 = vset.pattern.permute.xlu0 0
    %3504 = vperm.xlu0 %3503, %v3318
    %v3505 = vpop.permute.xlu0 %3504
    %3508 = vset.pattern.permute.xlu0 0
    %3509 = vperm.xlu0 %3508, %v3319
    %v3510 = vpop.permute.xlu0 %3509
    %3513 = vset.pattern.permute.xlu0 0
    %3514 = vperm.xlu0 %3513, %v3320
    %v3515 = vpop.permute.xlu0 %3514
    %3518 = vset.pattern.permute.xlu0 0
    %3519 = vperm.xlu0 %3518, %v3321
    %v3520 = vpop.permute.xlu0 %3519
    %3523 = vset.pattern.permute.xlu0 0
    %3524 = vperm.xlu0 %3523, %v3322
    %v3525 = vpop.permute.xlu0 %3524
    %3528 = vset.pattern.permute.xlu0 0
    %3529 = vperm.xlu0 %3528, %v3323
    %v3530 = vpop.permute.xlu0 %3529
    %3533 = vset.pattern.permute.xlu0 0
    %3534 = vperm.xlu0 %3533, %v3324
    %v3535 = vpop.permute.xlu0 %3534
    %3538 = vset.pattern.permute.xlu0 0
    %3539 = vperm.xlu0 %3538, %v3325
    %v3540 = vpop.permute.xlu0 %3539
    %3543 = vset.pattern.permute.xlu0 0
    %3544 = vperm.xlu0 %3543, %v3326
    %v3545 = vpop.permute.xlu0 %3544
    %3548 = vset.pattern.permute.xlu0 0
    %3549 = vperm.xlu0 %3548, %v3327
    %v3550 = vpop.permute.xlu0 %3549
    %3553 = vset.pattern.permute.xlu0 0
    %3554 = vperm.xlu0 %3553, %v3328
    %v3555 = vpop.permute.xlu0 %3554
    %3558 = vset.pattern.permute.xlu0 0
    %3559 = vperm.xlu0 %3558, %v3329
    %v3560 = vpop.permute.xlu0 %3559
    %3563 = vset.pattern.permute.xlu0 0
    %3564 = vperm.xlu0 %3563, %v3330
    %v3565 = vpop.permute.xlu0 %3564
    %3568 = vset.pattern.permute.xlu0 0
    %3569 = vperm.xlu0 %3568, %v3331
    %v3570 = vpop.permute.xlu0 %3569
    %3573 = vset.pattern.permute.xlu0 0
    %3574 = vperm.xlu0 %3573, %v3332
    %v3575 = vpop.permute.xlu0 %3574
    %3578 = vset.pattern.permute.xlu0 0
    %3579 = vperm.xlu0 %3578, %v3333
    %v3580 = vpop.permute.xlu0 %3579
    %3583 = vset.pattern.permute.xlu0 0
    %3584 = vperm.xlu0 %3583, %v3334
    %v3585 = vpop.permute.xlu0 %3584
    %3588 = vset.pattern.permute.xlu0 0
    %3589 = vperm.xlu0 %3588, %v3335
    %v3590 = vpop.permute.xlu0 %3589
    %3593 = vset.pattern.permute.xlu0 0
    %3594 = vperm.xlu0 %3593, %v3336
    %v3595 = vpop.permute.xlu0 %3594
    %3598 = vset.pattern.permute.xlu0 0
    %3599 = vperm.xlu0 %3598, %v3337
    %v3600 = vpop.permute.xlu0 %3599
    %3603 = vset.pattern.permute.xlu0 0
    %3604 = vperm.xlu0 %3603, %v3338
    %v3605 = vpop.permute.xlu0 %3604
    %3608 = vset.pattern.permute.xlu0 0
    %3609 = vperm.xlu0 %3608, %v3339
    %v3610 = vpop.permute.xlu0 %3609
    %3613 = vset.pattern.permute.xlu0 0
    %3614 = vperm.xlu0 %3613, %v3340
    %v3615 = vpop.permute.xlu0 %3614
    %3618 = vset.pattern.permute.xlu0 0
    %3619 = vperm.xlu0 %3618, %v3341
    %v3620 = vpop.permute.xlu0 %3619
    %3623 = vset.pattern.permute.xlu0 0
    %3624 = vperm.xlu0 %3623, %v3342
    %v3625 = vpop.permute.xlu0 %3624
    %3628 = vset.pattern.permute.xlu0 0
    %3629 = vperm.xlu0 %3628, %v3343
    %v3630 = vpop.permute.xlu0 %3629
    %3633 = vset.pattern.permute.xlu0 0
    %3634 = vperm.xlu0 %3633, %v3344
    %v3635 = vpop.permute.xlu0 %3634
    %3638 = vset.pattern.permute.xlu0 0
    %3639 = vperm.xlu0 %3638, %v3345
    %v3640 = vpop.permute.xlu0 %3639
    %3643 = vset.pattern.permute.xlu0 0
    %3644 = vperm.xlu0 %3643, %v3346
    %v3645 = vpop.permute.xlu0 %3644
    %3648 = vset.pattern.permute.xlu0 0
    %3649 = vperm.xlu0 %3648, %v3347
    %v3650 = vpop.permute.xlu0 %3649
    %3653 = vset.pattern.permute.xlu0 0
    %3654 = vperm.xlu0 %3653, %v3348
    %v3655 = vpop.permute.xlu0 %3654
    %3658 = vset.pattern.permute.xlu0 0
    %3659 = vperm.xlu0 %3658, %v3349
    %v3660 = vpop.permute.xlu0 %3659
    %3663 = vset.pattern.permute.xlu0 0
    %3664 = vperm.xlu0 %3663, %v3350
    %v3665 = vpop.permute.xlu0 %3664
    %3668 = vset.pattern.permute.xlu0 0
    %3669 = vperm.xlu0 %3668, %v3351
    %v3670 = vpop.permute.xlu0 %3669
    %v3672 = vlaneseq
    %v3673 = vshrl.u32 %v3672, 7
    %v3674 = vsub.s32 5, %v3673
    %v3675 = vrot.slane %v95, %v3674
    %v3676 = vmul.f32 %v3355, %v3675
    %v3677 = vmul.f32 %v3360, %v3675
    %v3678 = vmul.f32 %v3365, %v3675
    %v3679 = vmul.f32 %v3370, %v3675
    %v3680 = vmul.f32 %v3375, %v3675
    %v3681 = vmul.f32 %v3380, %v3675
    %v3682 = vmul.f32 %v3385, %v3675
    %v3683 = vmul.f32 %v3390, %v3675
    %v3684 = vmul.f32 %v3395, %v3675
    %v3685 = vmul.f32 %v3400, %v3675
    %v3686 = vmul.f32 %v3405, %v3675
    %v3687 = vmul.f32 %v3410, %v3675
    %v3688 = vmul.f32 %v3415, %v3675
    %v3689 = vmul.f32 %v3420, %v3675
    %v3690 = vmul.f32 %v3425, %v3675
    %v3691 = vmul.f32 %v3430, %v3675
    %v3692 = vmul.f32 %v3435, %v3675
    %v3693 = vmul.f32 %v3440, %v3675
    %v3694 = vmul.f32 %v3445, %v3675
    %v3695 = vmul.f32 %v3450, %v3675
    %v3696 = vmul.f32 %v3455, %v3675
    %v3697 = vmul.f32 %v3460, %v3675
    %v3698 = vmul.f32 %v3465, %v3675
    %v3699 = vmul.f32 %v3470, %v3675
    %v3700 = vmul.f32 %v3475, %v3675
    %v3701 = vmul.f32 %v3480, %v3675
    %v3702 = vmul.f32 %v3485, %v3675
    %v3703 = vmul.f32 %v3490, %v3675
    %v3704 = vmul.f32 %v3495, %v3675
    %v3705 = vmul.f32 %v3500, %v3675
    %v3706 = vmul.f32 %v3505, %v3675
    %v3707 = vmul.f32 %v3510, %v3675
    %v3708 = vmul.f32 %v3515, %v3675
    %v3709 = vmul.f32 %v3520, %v3675
    %v3710 = vmul.f32 %v3525, %v3675
    %v3711 = vmul.f32 %v3530, %v3675
    %v3712 = vmul.f32 %v3535, %v3675
    %v3713 = vmul.f32 %v3540, %v3675
    %v3714 = vmul.f32 %v3545, %v3675
    %v3715 = vmul.f32 %v3550, %v3675
    %v3716 = vmul.f32 %v3555, %v3675
    %v3717 = vmul.f32 %v3560, %v3675
    %v3718 = vmul.f32 %v3565, %v3675
    %v3719 = vmul.f32 %v3570, %v3675
    %v3720 = vmul.f32 %v3575, %v3675
    %v3721 = vmul.f32 %v3580, %v3675
    %v3722 = vmul.f32 %v3585, %v3675
    %v3723 = vmul.f32 %v3590, %v3675
    %v3724 = vmul.f32 %v3595, %v3675
    %v3725 = vmul.f32 %v3600, %v3675
    %v3726 = vmul.f32 %v3605, %v3675
    %v3727 = vmul.f32 %v3610, %v3675
    %v3728 = vmul.f32 %v3615, %v3675
    %v3729 = vmul.f32 %v3620, %v3675
    %v3730 = vmul.f32 %v3625, %v3675
    %v3731 = vmul.f32 %v3630, %v3675
    %v3732 = vmul.f32 %v3635, %v3675
    %v3733 = vmul.f32 %v3640, %v3675
    %v3734 = vmul.f32 %v3645, %v3675
    %v3735 = vmul.f32 %v3650, %v3675
    %v3736 = vmul.f32 %v3655, %v3675
    %v3737 = vmul.f32 %v3660, %v3675
    %v3738 = vmul.f32 %v3665, %v3675
    %v3739 = vmul.f32 %v3670, %v3675
    %v3740 = vadd.f32 %v3181, %v3676
    %v3741 = vadd.f32 %v3182, %v3677
    %v3742 = vadd.f32 %v3183, %v3678
    %v3743 = vadd.f32 %v3184, %v3679
    %v3744 = vadd.f32 %v3185, %v3680
    %v3745 = vadd.f32 %v3186, %v3681
    %v3746 = vadd.f32 %v3187, %v3682
    %v3747 = vadd.f32 %v3188, %v3683
    %v3748 = vadd.f32 %v3189, %v3684
    %v3749 = vadd.f32 %v3190, %v3685
    %v3750 = vadd.f32 %v3191, %v3686
    %v3751 = vadd.f32 %v3192, %v3687
    %v3752 = vadd.f32 %v3193, %v3688
    %v3753 = vadd.f32 %v3194, %v3689
    %v3754 = vadd.f32 %v3195, %v3690
    %v3755 = vadd.f32 %v3196, %v3691
    %v3756 = vadd.f32 %v3197, %v3692
    %v3757 = vadd.f32 %v3198, %v3693
    %v3758 = vadd.f32 %v3199, %v3694
    %v3759 = vadd.f32 %v3200, %v3695
    %v3760 = vadd.f32 %v3201, %v3696
    %v3761 = vadd.f32 %v3202, %v3697
    %v3762 = vadd.f32 %v3203, %v3698
    %v3763 = vadd.f32 %v3204, %v3699
    %v3764 = vadd.f32 %v3205, %v3700
    %v3765 = vadd.f32 %v3206, %v3701
    %v3766 = vadd.f32 %v3207, %v3702
    %v3767 = vadd.f32 %v3208, %v3703
    %v3768 = vadd.f32 %v3209, %v3704
    %v3769 = vadd.f32 %v3210, %v3705
    %v3770 = vadd.f32 %v3211, %v3706
    %v3771 = vadd.f32 %v3212, %v3707
    %v3772 = vadd.f32 %v3213, %v3708
    %v3773 = vadd.f32 %v3214, %v3709
    %v3774 = vadd.f32 %v3215, %v3710
    %v3775 = vadd.f32 %v3216, %v3711
    %v3776 = vadd.f32 %v3217, %v3712
    %v3777 = vadd.f32 %v3218, %v3713
    %v3778 = vadd.f32 %v3219, %v3714
    %v3779 = vadd.f32 %v3220, %v3715
    %v3780 = vadd.f32 %v3221, %v3716
    %v3781 = vadd.f32 %v3222, %v3717
    %v3782 = vadd.f32 %v3223, %v3718
    %v3783 = vadd.f32 %v3224, %v3719
    %v3784 = vadd.f32 %v3225, %v3720
    %v3785 = vadd.f32 %v3226, %v3721
    %v3786 = vadd.f32 %v3227, %v3722
    %v3787 = vadd.f32 %v3228, %v3723
    %v3788 = vadd.f32 %v3229, %v3724
    %v3789 = vadd.f32 %v3230, %v3725
    %v3790 = vadd.f32 %v3231, %v3726
    %v3791 = vadd.f32 %v3232, %v3727
    %v3792 = vadd.f32 %v3233, %v3728
    %v3793 = vadd.f32 %v3234, %v3729
    %v3794 = vadd.f32 %v3235, %v3730
    %v3795 = vadd.f32 %v3236, %v3731
    %v3796 = vadd.f32 %v3237, %v3732
    %v3797 = vadd.f32 %v3238, %v3733
    %v3798 = vadd.f32 %v3239, %v3734
    %v3799 = vadd.f32 %v3240, %v3735
    %v3800 = vadd.f32 %v3241, %v3736
    %v3801 = vadd.f32 %v3242, %v3737
    %v3802 = vadd.f32 %v3243, %v3738
    %v3803 = vadd.f32 %v3244, %v3739
    %s3804 = scalar_lea.vmem %s1, 1536
    %v3805 = vld [vmem:[%s3804] sm:$0xff]
    %v3806 = vld [vmem:[%s3804 + $0x8] sm:$0xff]
    %v3807 = vld [vmem:[%s3804 + $0x10] sm:$0xff]
    %v3808 = vld [vmem:[%s3804 + $0x18] sm:$0xff]
    %v3809 = vld [vmem:[%s3804 + $0x20] sm:$0xff]
    %v3810 = vld [vmem:[%s3804 + $0x28] sm:$0xff]
    %v3811 = vld [vmem:[%s3804 + $0x30] sm:$0xff]
    %v3812 = vld [vmem:[%s3804 + $0x38] sm:$0xff]
    %v3813 = vld [vmem:[%s3804 + $0x40] sm:$0xff]
    %v3814 = vld [vmem:[%s3804 + $0x48] sm:$0xff]
    %v3815 = vld [vmem:[%s3804 + $0x50] sm:$0xff]
    %v3816 = vld [vmem:[%s3804 + $0x58] sm:$0xff]
    %v3817 = vld [vmem:[%s3804 + $0x60] sm:$0xff]
    %v3818 = vld [vmem:[%s3804 + $0x68] sm:$0xff]
    %v3819 = vld [vmem:[%s3804 + $0x70] sm:$0xff]
    %v3820 = vld [vmem:[%s3804 + $0x78] sm:$0xff]
    %v3821 = vld [vmem:[%s3804 + $0x80] sm:$0xff]
    %v3822 = vld [vmem:[%s3804 + $0x88] sm:$0xff]
    %v3823 = vld [vmem:[%s3804 + $0x90] sm:$0xff]
    %v3824 = vld [vmem:[%s3804 + $0x98] sm:$0xff]
    %v3825 = vld [vmem:[%s3804 + $0xa0] sm:$0xff]
    %v3826 = vld [vmem:[%s3804 + $0xa8] sm:$0xff]
    %v3827 = vld [vmem:[%s3804 + $0xb0] sm:$0xff]
    %v3828 = vld [vmem:[%s3804 + $0xb8] sm:$0xff]
    %v3829 = vld [vmem:[%s3804 + $0xc0] sm:$0xff]
    %v3830 = vld [vmem:[%s3804 + $0xc8] sm:$0xff]
    %v3831 = vld [vmem:[%s3804 + $0xd0] sm:$0xff]
    %v3832 = vld [vmem:[%s3804 + $0xd8] sm:$0xff]
    %v3833 = vld [vmem:[%s3804 + $0xe0] sm:$0xff]
    %v3834 = vld [vmem:[%s3804 + $0xe8] sm:$0xff]
    %v3835 = vld [vmem:[%s3804 + $0xf0] sm:$0xff]
    %v3836 = vld [vmem:[%s3804 + $0xf8] sm:$0xff]
    %v3839 = vsel %vm189, %v2170, 0.0
    %v3840 = vsel %vm189, %v2174, 0.0
    %v3841 = vmul.f32 %v194, %v3805
    %v3842 = vmul.f32 %v196, %v3806
    %v3843 = vmul.f32 %v198, %v3807
    %v3844 = vmul.f32 %v200, %v3808
    %v3845 = vmul.f32 %v202, %v3809
    %v3846 = vmul.f32 %v204, %v3810
    %v3847 = vmul.f32 %v206, %v3811
    %v3848 = vmul.f32 %v208, %v3812
    %v3849 = vmul.f32 %v210, %v3813
    %v3850 = vmul.f32 %v212, %v3814
    %v3851 = vmul.f32 %v214, %v3815
    %v3852 = vmul.f32 %v216, %v3816
    %v3853 = vmul.f32 %v218, %v3817
    %v3854 = vmul.f32 %v220, %v3818
    %v3855 = vmul.f32 %v222, %v3819
    %v3856 = vmul.f32 %v224, %v3820
    %v3857 = vmul.f32 %v226, %v3821
    %v3858 = vmul.f32 %v228, %v3822
    %v3859 = vmul.f32 %v230, %v3823
    %v3860 = vmul.f32 %v232, %v3824
    %v3861 = vmul.f32 %v234, %v3825
    %v3862 = vmul.f32 %v236, %v3826
    %v3863 = vmul.f32 %v238, %v3827
    %v3864 = vmul.f32 %v240, %v3828
    %v3865 = vmul.f32 %v242, %v3829
    %v3866 = vmul.f32 %v244, %v3830
    %v3867 = vmul.f32 %v246, %v3831
    %v3868 = vmul.f32 %v248, %v3832
    %v3869 = vmul.f32 %v2169, %v3833
    %v3870 = vmul.f32 %v2171, %v3834
    %v3871 = vmul.f32 %v3839, %v3835
    %v3872 = vmul.f32 %v3836, 0.0
    %v3873 = vmul.f32 %v253, %v3805
    %v3874 = vmul.f32 %v255, %v3806
    %v3875 = vmul.f32 %v257, %v3807
    %v3876 = vmul.f32 %v259, %v3808
    %v3877 = vmul.f32 %v261, %v3809
    %v3878 = vmul.f32 %v263, %v3810
    %v3879 = vmul.f32 %v265, %v3811
    %v3880 = vmul.f32 %v267, %v3812
    %v3881 = vmul.f32 %v269, %v3813
    %v3882 = vmul.f32 %v271, %v3814
    %v3883 = vmul.f32 %v273, %v3815
    %v3884 = vmul.f32 %v275, %v3816
    %v3885 = vmul.f32 %v277, %v3817
    %v3886 = vmul.f32 %v279, %v3818
    %v3887 = vmul.f32 %v281, %v3819
    %v3888 = vmul.f32 %v283, %v3820
    %v3889 = vmul.f32 %v285, %v3821
    %v3890 = vmul.f32 %v287, %v3822
    %v3891 = vmul.f32 %v289, %v3823
    %v3892 = vmul.f32 %v291, %v3824
    %v3893 = vmul.f32 %v293, %v3825
    %v3894 = vmul.f32 %v295, %v3826
    %v3895 = vmul.f32 %v297, %v3827
    %v3896 = vmul.f32 %v299, %v3828
    %v3897 = vmul.f32 %v301, %v3829
    %v3898 = vmul.f32 %v303, %v3830
    %v3899 = vmul.f32 %v305, %v3831
    %v3900 = vmul.f32 %v307, %v3832
    %v3901 = vmul.f32 %v2173, %v3833
    %v3902 = vmul.f32 %v2175, %v3834
    %v3903 = vmul.f32 %v3840, %v3835
    %3905 = vset.pattern.permute.xlu0 0
    %3906 = vperm.xlu0 %3905, %v3841
    %v3907 = vpop.permute.xlu0 %3906
    %3910 = vset.pattern.permute.xlu0 0
    %3911 = vperm.xlu0 %3910, %v3842
    %v3912 = vpop.permute.xlu0 %3911
    %3915 = vset.pattern.permute.xlu0 0
    %3916 = vperm.xlu0 %3915, %v3843
    %v3917 = vpop.permute.xlu0 %3916
    %3920 = vset.pattern.permute.xlu0 0
    %3921 = vperm.xlu0 %3920, %v3844
    %v3922 = vpop.permute.xlu0 %3921
    %3925 = vset.pattern.permute.xlu0 0
    %3926 = vperm.xlu0 %3925, %v3845
    %v3927 = vpop.permute.xlu0 %3926
    %3930 = vset.pattern.permute.xlu0 0
    %3931 = vperm.xlu0 %3930, %v3846
    %v3932 = vpop.permute.xlu0 %3931
    %3935 = vset.pattern.permute.xlu0 0
    %3936 = vperm.xlu0 %3935, %v3847
    %v3937 = vpop.permute.xlu0 %3936
    %3940 = vset.pattern.permute.xlu0 0
    %3941 = vperm.xlu0 %3940, %v3848
    %v3942 = vpop.permute.xlu0 %3941
    %3945 = vset.pattern.permute.xlu0 0
    %3946 = vperm.xlu0 %3945, %v3849
    %v3947 = vpop.permute.xlu0 %3946
    %3950 = vset.pattern.permute.xlu0 0
    %3951 = vperm.xlu0 %3950, %v3850
    %v3952 = vpop.permute.xlu0 %3951
    %3955 = vset.pattern.permute.xlu0 0
    %3956 = vperm.xlu0 %3955, %v3851
    %v3957 = vpop.permute.xlu0 %3956
    %3960 = vset.pattern.permute.xlu0 0
    %3961 = vperm.xlu0 %3960, %v3852
    %v3962 = vpop.permute.xlu0 %3961
    %3965 = vset.pattern.permute.xlu0 0
    %3966 = vperm.xlu0 %3965, %v3853
    %v3967 = vpop.permute.xlu0 %3966
    %3970 = vset.pattern.permute.xlu0 0
    %3971 = vperm.xlu0 %3970, %v3854
    %v3972 = vpop.permute.xlu0 %3971
    %3975 = vset.pattern.permute.xlu0 0
    %3976 = vperm.xlu0 %3975, %v3855
    %v3977 = vpop.permute.xlu0 %3976
    %3980 = vset.pattern.permute.xlu0 0
    %3981 = vperm.xlu0 %3980, %v3856
    %v3982 = vpop.permute.xlu0 %3981
    %3985 = vset.pattern.permute.xlu0 0
    %3986 = vperm.xlu0 %3985, %v3857
    %v3987 = vpop.permute.xlu0 %3986
    %3990 = vset.pattern.permute.xlu0 0
    %3991 = vperm.xlu0 %3990, %v3858
    %v3992 = vpop.permute.xlu0 %3991
    %3995 = vset.pattern.permute.xlu0 0
    %3996 = vperm.xlu0 %3995, %v3859
    %v3997 = vpop.permute.xlu0 %3996
    %4000 = vset.pattern.permute.xlu0 0
    %4001 = vperm.xlu0 %4000, %v3860
    %v4002 = vpop.permute.xlu0 %4001
    %4005 = vset.pattern.permute.xlu0 0
    %4006 = vperm.xlu0 %4005, %v3861
    %v4007 = vpop.permute.xlu0 %4006
    %4010 = vset.pattern.permute.xlu0 0
    %4011 = vperm.xlu0 %4010, %v3862
    %v4012 = vpop.permute.xlu0 %4011
    %4015 = vset.pattern.permute.xlu0 0
    %4016 = vperm.xlu0 %4015, %v3863
    %v4017 = vpop.permute.xlu0 %4016
    %4020 = vset.pattern.permute.xlu0 0
    %4021 = vperm.xlu0 %4020, %v3864
    %v4022 = vpop.permute.xlu0 %4021
    %4025 = vset.pattern.permute.xlu0 0
    %4026 = vperm.xlu0 %4025, %v3865
    %v4027 = vpop.permute.xlu0 %4026
    %4030 = vset.pattern.permute.xlu0 0
    %4031 = vperm.xlu0 %4030, %v3866
    %v4032 = vpop.permute.xlu0 %4031
    %4035 = vset.pattern.permute.xlu0 0
    %4036 = vperm.xlu0 %4035, %v3867
    %v4037 = vpop.permute.xlu0 %4036
    %4040 = vset.pattern.permute.xlu0 0
    %4041 = vperm.xlu0 %4040, %v3868
    %v4042 = vpop.permute.xlu0 %4041
    %4045 = vset.pattern.permute.xlu0 0
    %4046 = vperm.xlu0 %4045, %v3869
    %v4047 = vpop.permute.xlu0 %4046
    %4050 = vset.pattern.permute.xlu0 0
    %4051 = vperm.xlu0 %4050, %v3870
    %v4052 = vpop.permute.xlu0 %4051
    %4055 = vset.pattern.permute.xlu0 0
    %4056 = vperm.xlu0 %4055, %v3871
    %v4057 = vpop.permute.xlu0 %4056
    %4060 = vset.pattern.permute.xlu0 0
    %4061 = vperm.xlu0 %4060, %v3872
    %v4062 = vpop.permute.xlu0 %4061
    %4065 = vset.pattern.permute.xlu0 0
    %4066 = vperm.xlu0 %4065, %v3873
    %v4067 = vpop.permute.xlu0 %4066
    %4070 = vset.pattern.permute.xlu0 0
    %4071 = vperm.xlu0 %4070, %v3874
    %v4072 = vpop.permute.xlu0 %4071
    %4075 = vset.pattern.permute.xlu0 0
    %4076 = vperm.xlu0 %4075, %v3875
    %v4077 = vpop.permute.xlu0 %4076
    %4080 = vset.pattern.permute.xlu0 0
    %4081 = vperm.xlu0 %4080, %v3876
    %v4082 = vpop.permute.xlu0 %4081
    %4085 = vset.pattern.permute.xlu0 0
    %4086 = vperm.xlu0 %4085, %v3877
    %v4087 = vpop.permute.xlu0 %4086
    %4090 = vset.pattern.permute.xlu0 0
    %4091 = vperm.xlu0 %4090, %v3878
    %v4092 = vpop.permute.xlu0 %4091
    %4095 = vset.pattern.permute.xlu0 0
    %4096 = vperm.xlu0 %4095, %v3879
    %v4097 = vpop.permute.xlu0 %4096
    %4100 = vset.pattern.permute.xlu0 0
    %4101 = vperm.xlu0 %4100, %v3880
    %v4102 = vpop.permute.xlu0 %4101
    %4105 = vset.pattern.permute.xlu0 0
    %4106 = vperm.xlu0 %4105, %v3881
    %v4107 = vpop.permute.xlu0 %4106
    %4110 = vset.pattern.permute.xlu0 0
    %4111 = vperm.xlu0 %4110, %v3882
    %v4112 = vpop.permute.xlu0 %4111
    %4115 = vset.pattern.permute.xlu0 0
    %4116 = vperm.xlu0 %4115, %v3883
    %v4117 = vpop.permute.xlu0 %4116
    %4120 = vset.pattern.permute.xlu0 0
    %4121 = vperm.xlu0 %4120, %v3884
    %v4122 = vpop.permute.xlu0 %4121
    %4125 = vset.pattern.permute.xlu0 0
    %4126 = vperm.xlu0 %4125, %v3885
    %v4127 = vpop.permute.xlu0 %4126
    %4130 = vset.pattern.permute.xlu0 0
    %4131 = vperm.xlu0 %4130, %v3886
    %v4132 = vpop.permute.xlu0 %4131
    %4135 = vset.pattern.permute.xlu0 0
    %4136 = vperm.xlu0 %4135, %v3887
    %v4137 = vpop.permute.xlu0 %4136
    %4140 = vset.pattern.permute.xlu0 0
    %4141 = vperm.xlu0 %4140, %v3888
    %v4142 = vpop.permute.xlu0 %4141
    %4145 = vset.pattern.permute.xlu0 0
    %4146 = vperm.xlu0 %4145, %v3889
    %v4147 = vpop.permute.xlu0 %4146
    %4150 = vset.pattern.permute.xlu0 0
    %4151 = vperm.xlu0 %4150, %v3890
    %v4152 = vpop.permute.xlu0 %4151
    %4155 = vset.pattern.permute.xlu0 0
    %4156 = vperm.xlu0 %4155, %v3891
    %v4157 = vpop.permute.xlu0 %4156
    %4160 = vset.pattern.permute.xlu0 0
    %4161 = vperm.xlu0 %4160, %v3892
    %v4162 = vpop.permute.xlu0 %4161
    %4165 = vset.pattern.permute.xlu0 0
    %4166 = vperm.xlu0 %4165, %v3893
    %v4167 = vpop.permute.xlu0 %4166
    %4170 = vset.pattern.permute.xlu0 0
    %4171 = vperm.xlu0 %4170, %v3894
    %v4172 = vpop.permute.xlu0 %4171
    %4175 = vset.pattern.permute.xlu0 0
    %4176 = vperm.xlu0 %4175, %v3895
    %v4177 = vpop.permute.xlu0 %4176
    %4180 = vset.pattern.permute.xlu0 0
    %4181 = vperm.xlu0 %4180, %v3896
    %v4182 = vpop.permute.xlu0 %4181
    %4185 = vset.pattern.permute.xlu0 0
    %4186 = vperm.xlu0 %4185, %v3897
    %v4187 = vpop.permute.xlu0 %4186
    %4190 = vset.pattern.permute.xlu0 0
    %4191 = vperm.xlu0 %4190, %v3898
    %v4192 = vpop.permute.xlu0 %4191
    %4195 = vset.pattern.permute.xlu0 0
    %4196 = vperm.xlu0 %4195, %v3899
    %v4197 = vpop.permute.xlu0 %4196
    %4200 = vset.pattern.permute.xlu0 0
    %4201 = vperm.xlu0 %4200, %v3900
    %v4202 = vpop.permute.xlu0 %4201
    %4205 = vset.pattern.permute.xlu0 0
    %4206 = vperm.xlu0 %4205, %v3901
    %v4207 = vpop.permute.xlu0 %4206
    %4210 = vset.pattern.permute.xlu0 0
    %4211 = vperm.xlu0 %4210, %v3902
    %v4212 = vpop.permute.xlu0 %4211
    %4215 = vset.pattern.permute.xlu0 0
    %4216 = vperm.xlu0 %4215, %v3903
    %v4217 = vpop.permute.xlu0 %4216
    %v4219 = vlaneseq
    %v4220 = vshrl.u32 %v4219, 7
    %v4221 = vsub.s32 6, %v4220
    %v4222 = vrot.slane %v95, %v4221
    %v4223 = vmul.f32 %v3907, %v4222
    %v4224 = vmul.f32 %v3912, %v4222
    %v4225 = vmul.f32 %v3917, %v4222
    %v4226 = vmul.f32 %v3922, %v4222
    %v4227 = vmul.f32 %v3927, %v4222
    %v4228 = vmul.f32 %v3932, %v4222
    %v4229 = vmul.f32 %v3937, %v4222
    %v4230 = vmul.f32 %v3942, %v4222
    %v4231 = vmul.f32 %v3947, %v4222
    %v4232 = vmul.f32 %v3952, %v4222
    %v4233 = vmul.f32 %v3957, %v4222
    %v4234 = vmul.f32 %v3962, %v4222
    %v4235 = vmul.f32 %v3967, %v4222
    %v4236 = vmul.f32 %v3972, %v4222
    %v4237 = vmul.f32 %v3977, %v4222
    %v4238 = vmul.f32 %v3982, %v4222
    %v4239 = vmul.f32 %v3987, %v4222
    %v4240 = vmul.f32 %v3992, %v4222
    %v4241 = vmul.f32 %v3997, %v4222
    %v4242 = vmul.f32 %v4002, %v4222
    %v4243 = vmul.f32 %v4007, %v4222
    %v4244 = vmul.f32 %v4012, %v4222
    %v4245 = vmul.f32 %v4017, %v4222
    %v4246 = vmul.f32 %v4022, %v4222
    %v4247 = vmul.f32 %v4027, %v4222
    %v4248 = vmul.f32 %v4032, %v4222
    %v4249 = vmul.f32 %v4037, %v4222
    %v4250 = vmul.f32 %v4042, %v4222
    %v4251 = vmul.f32 %v4047, %v4222
    %v4252 = vmul.f32 %v4052, %v4222
    %v4253 = vmul.f32 %v4057, %v4222
    %v4254 = vmul.f32 %v4062, %v4222
    %v4255 = vmul.f32 %v4067, %v4222
    %v4256 = vmul.f32 %v4072, %v4222
    %v4257 = vmul.f32 %v4077, %v4222
    %v4258 = vmul.f32 %v4082, %v4222
    %v4259 = vmul.f32 %v4087, %v4222
    %v4260 = vmul.f32 %v4092, %v4222
    %v4261 = vmul.f32 %v4097, %v4222
    %v4262 = vmul.f32 %v4102, %v4222
    %v4263 = vmul.f32 %v4107, %v4222
    %v4264 = vmul.f32 %v4112, %v4222
    %v4265 = vmul.f32 %v4117, %v4222
    %v4266 = vmul.f32 %v4122, %v4222
    %v4267 = vmul.f32 %v4127, %v4222
    %v4268 = vmul.f32 %v4132, %v4222
    %v4269 = vmul.f32 %v4137, %v4222
    %v4270 = vmul.f32 %v4142, %v4222
    %v4271 = vmul.f32 %v4147, %v4222
    %v4272 = vmul.f32 %v4152, %v4222
    %v4273 = vmul.f32 %v4157, %v4222
    %v4274 = vmul.f32 %v4162, %v4222
    %v4275 = vmul.f32 %v4167, %v4222
    %v4276 = vmul.f32 %v4172, %v4222
    %v4277 = vmul.f32 %v4177, %v4222
    %v4278 = vmul.f32 %v4182, %v4222
    %v4279 = vmul.f32 %v4187, %v4222
    %v4280 = vmul.f32 %v4192, %v4222
    %v4281 = vmul.f32 %v4197, %v4222
    %v4282 = vmul.f32 %v4202, %v4222
    %v4283 = vmul.f32 %v4207, %v4222
    %v4284 = vmul.f32 %v4212, %v4222
    %v4285 = vmul.f32 %v4217, %v4222
    %v4286 = vadd.f32 %v3740, %v4223
    %v4287 = vadd.f32 %v3741, %v4224
    %v4288 = vadd.f32 %v3742, %v4225
    %v4289 = vadd.f32 %v3743, %v4226
    %v4290 = vadd.f32 %v3744, %v4227
    %v4291 = vadd.f32 %v3745, %v4228
    %v4292 = vadd.f32 %v3746, %v4229
    %v4293 = vadd.f32 %v3747, %v4230
    %v4294 = vadd.f32 %v3748, %v4231
    %v4295 = vadd.f32 %v3749, %v4232
    %v4296 = vadd.f32 %v3750, %v4233
    %v4297 = vadd.f32 %v3751, %v4234
    %v4298 = vadd.f32 %v3752, %v4235
    %v4299 = vadd.f32 %v3753, %v4236
    %v4300 = vadd.f32 %v3754, %v4237
    %v4301 = vadd.f32 %v3755, %v4238
    %v4302 = vadd.f32 %v3756, %v4239
    %v4303 = vadd.f32 %v3757, %v4240
    %v4304 = vadd.f32 %v3758, %v4241
    %v4305 = vadd.f32 %v3759, %v4242
    %v4306 = vadd.f32 %v3760, %v4243
    %v4307 = vadd.f32 %v3761, %v4244
    %v4308 = vadd.f32 %v3762, %v4245
    %v4309 = vadd.f32 %v3763, %v4246
    %v4310 = vadd.f32 %v3764, %v4247
    %v4311 = vadd.f32 %v3765, %v4248
    %v4312 = vadd.f32 %v3766, %v4249
    %v4313 = vadd.f32 %v3767, %v4250
    %v4314 = vadd.f32 %v3768, %v4251
    %v4315 = vadd.f32 %v3769, %v4252
    %v4316 = vadd.f32 %v3770, %v4253
    %v4317 = vadd.f32 %v3771, %v4254
    %v4318 = vadd.f32 %v3772, %v4255
    %v4319 = vadd.f32 %v3773, %v4256
    %v4320 = vadd.f32 %v3774, %v4257
    %v4321 = vadd.f32 %v3775, %v4258
    %v4322 = vadd.f32 %v3776, %v4259
    %v4323 = vadd.f32 %v3777, %v4260
    %v4324 = vadd.f32 %v3778, %v4261
    %v4325 = vadd.f32 %v3779, %v4262
    %v4326 = vadd.f32 %v3780, %v4263
    %v4327 = vadd.f32 %v3781, %v4264
    %v4328 = vadd.f32 %v3782, %v4265
    %v4329 = vadd.f32 %v3783, %v4266
    %v4330 = vadd.f32 %v3784, %v4267
    %v4331 = vadd.f32 %v3785, %v4268
    %v4332 = vadd.f32 %v3786, %v4269
    %v4333 = vadd.f32 %v3787, %v4270
    %v4334 = vadd.f32 %v3788, %v4271
    %v4335 = vadd.f32 %v3789, %v4272
    %v4336 = vadd.f32 %v3790, %v4273
    %v4337 = vadd.f32 %v3791, %v4274
    %v4338 = vadd.f32 %v3792, %v4275
    %v4339 = vadd.f32 %v3793, %v4276
    %v4340 = vadd.f32 %v3794, %v4277
    %v4341 = vadd.f32 %v3795, %v4278
    %v4342 = vadd.f32 %v3796, %v4279
    %v4343 = vadd.f32 %v3797, %v4280
    %v4344 = vadd.f32 %v3798, %v4281
    %v4345 = vadd.f32 %v3799, %v4282
    %v4346 = vadd.f32 %v3800, %v4283
    %v4347 = vadd.f32 %v3801, %v4284
    %v4348 = vadd.f32 %v3802, %v4285
    %v4349 = vadd.f32 %v3803, %v4254
    %s4350 = scalar_lea.vmem %s1, 1792
    %v4351 = vld [vmem:[%s4350] sm:$0xff]
    %v4352 = vld [vmem:[%s4350 + $0x8] sm:$0xff]
    %v4353 = vld [vmem:[%s4350 + $0x10] sm:$0xff]
    %v4354 = vld [vmem:[%s4350 + $0x18] sm:$0xff]
    %v4355 = vld [vmem:[%s4350 + $0x20] sm:$0xff]
    %v4356 = vld [vmem:[%s4350 + $0x28] sm:$0xff]
    %v4357 = vld [vmem:[%s4350 + $0x30] sm:$0xff]
    %v4358 = vld [vmem:[%s4350 + $0x38] sm:$0xff]
    %v4359 = vld [vmem:[%s4350 + $0x40] sm:$0xff]
    %v4360 = vld [vmem:[%s4350 + $0x48] sm:$0xff]
    %v4361 = vld [vmem:[%s4350 + $0x50] sm:$0xff]
    %v4362 = vld [vmem:[%s4350 + $0x58] sm:$0xff]
    %v4363 = vld [vmem:[%s4350 + $0x60] sm:$0xff]
    %v4364 = vld [vmem:[%s4350 + $0x68] sm:$0xff]
    %v4365 = vld [vmem:[%s4350 + $0x70] sm:$0xff]
    %v4366 = vld [vmem:[%s4350 + $0x78] sm:$0xff]
    %v4367 = vld [vmem:[%s4350 + $0x80] sm:$0xff]
    %v4368 = vld [vmem:[%s4350 + $0x88] sm:$0xff]
    %v4369 = vld [vmem:[%s4350 + $0x90] sm:$0xff]
    %v4370 = vld [vmem:[%s4350 + $0x98] sm:$0xff]
    %v4371 = vld [vmem:[%s4350 + $0xa0] sm:$0xff]
    %v4372 = vld [vmem:[%s4350 + $0xa8] sm:$0xff]
    %v4373 = vld [vmem:[%s4350 + $0xb0] sm:$0xff]
    %v4374 = vld [vmem:[%s4350 + $0xb8] sm:$0xff]
    %v4375 = vld [vmem:[%s4350 + $0xc0] sm:$0xff]
    %v4376 = vld [vmem:[%s4350 + $0xc8] sm:$0xff]
    %v4377 = vld [vmem:[%s4350 + $0xd0] sm:$0xff]
    %v4378 = vld [vmem:[%s4350 + $0xd8] sm:$0xff]
    %v4379 = vld [vmem:[%s4350 + $0xe0] sm:$0xff]
    %v4380 = vld [vmem:[%s4350 + $0xe8] sm:$0xff]
    %v4381 = vld [vmem:[%s4350 + $0xf0] sm:$0xff]
    %v4382 = vld [vmem:[%s4350 + $0xf8] sm:$0xff]
    %v4383 = vmul.f32 %v33, %v4351
    %v4384 = vmul.f32 %v34, %v4352
    %v4385 = vmul.f32 %v35, %v4353
    %v4386 = vmul.f32 %v36, %v4354
    %v4387 = vmul.f32 %v37, %v4355
    %v4388 = vmul.f32 %v38, %v4356
    %v4389 = vmul.f32 %v39, %v4357
    %v4390 = vmul.f32 %v40, %v4358
    %v4391 = vmul.f32 %v41, %v4359
    %v4392 = vmul.f32 %v42, %v4360
    %v4393 = vmul.f32 %v43, %v4361
    %v4394 = vmul.f32 %v44, %v4362
    %v4395 = vmul.f32 %v45, %v4363
    %v4396 = vmul.f32 %v46, %v4364
    %v4397 = vmul.f32 %v47, %v4365
    %v4398 = vmul.f32 %v48, %v4366
    %v4399 = vmul.f32 %v49, %v4367
    %v4400 = vmul.f32 %v50, %v4368
    %v4401 = vmul.f32 %v51, %v4369
    %v4402 = vmul.f32 %v52, %v4370
    %v4403 = vmul.f32 %v53, %v4371
    %v4404 = vmul.f32 %v54, %v4372
    %v4405 = vmul.f32 %v55, %v4373
    %v4406 = vmul.f32 %v56, %v4374
    %v4407 = vmul.f32 %v57, %v4375
    %v4408 = vmul.f32 %v58, %v4376
    %v4409 = vmul.f32 %v59, %v4377
    %v4410 = vmul.f32 %v60, %v4378
    %v4411 = vmul.f32 %v61, %v4379
    %v4412 = vmul.f32 %v62, %v4380
    %v4413 = vmul.f32 %v4381, 0.0
    %v4414 = vmul.f32 %v4382, 0.0
    %v4415 = vmul.f32 %v65, %v4351
    %v4416 = vmul.f32 %v66, %v4352
    %v4417 = vmul.f32 %v67, %v4353
    %v4418 = vmul.f32 %v68, %v4354
    %v4419 = vmul.f32 %v69, %v4355
    %v4420 = vmul.f32 %v70, %v4356
    %v4421 = vmul.f32 %v71, %v4357
    %v4422 = vmul.f32 %v72, %v4358
    %v4423 = vmul.f32 %v73, %v4359
    %v4424 = vmul.f32 %v74, %v4360
    %v4425 = vmul.f32 %v75, %v4361
    %v4426 = vmul.f32 %v76, %v4362
    %v4427 = vmul.f32 %v77, %v4363
    %v4428 = vmul.f32 %v78, %v4364
    %v4429 = vmul.f32 %v79, %v4365
    %v4430 = vmul.f32 %v80, %v4366
    %v4431 = vmul.f32 %v81, %v4367
    %v4432 = vmul.f32 %v82, %v4368
    %v4433 = vmul.f32 %v83, %v4369
    %v4434 = vmul.f32 %v84, %v4370
    %v4435 = vmul.f32 %v85, %v4371
    %v4436 = vmul.f32 %v86, %v4372
    %v4437 = vmul.f32 %v87, %v4373
    %v4438 = vmul.f32 %v88, %v4374
    %v4439 = vmul.f32 %v89, %v4375
    %v4440 = vmul.f32 %v90, %v4376
    %v4441 = vmul.f32 %v91, %v4377
    %v4442 = vmul.f32 %v92, %v4378
    %v4443 = vmul.f32 %v93, %v4379
    %v4444 = vmul.f32 %v94, %v4380
    %4446 = vset.pattern.permute.xlu0 0
    %4447 = vperm.xlu0 %4446, %v4383
    %v4448 = vpop.permute.xlu0 %4447
    %4451 = vset.pattern.permute.xlu0 0
    %4452 = vperm.xlu0 %4451, %v4384
    %v4453 = vpop.permute.xlu0 %4452
    %4456 = vset.pattern.permute.xlu0 0
    %4457 = vperm.xlu0 %4456, %v4385
    %v4458 = vpop.permute.xlu0 %4457
    %4461 = vset.pattern.permute.xlu0 0
    %4462 = vperm.xlu0 %4461, %v4386
    %v4463 = vpop.permute.xlu0 %4462
    %4466 = vset.pattern.permute.xlu0 0
    %4467 = vperm.xlu0 %4466, %v4387
    %v4468 = vpop.permute.xlu0 %4467
    %4471 = vset.pattern.permute.xlu0 0
    %4472 = vperm.xlu0 %4471, %v4388
    %v4473 = vpop.permute.xlu0 %4472
    %4476 = vset.pattern.permute.xlu0 0
    %4477 = vperm.xlu0 %4476, %v4389
    %v4478 = vpop.permute.xlu0 %4477
    %4481 = vset.pattern.permute.xlu0 0
    %4482 = vperm.xlu0 %4481, %v4390
    %v4483 = vpop.permute.xlu0 %4482
    %4486 = vset.pattern.permute.xlu0 0
    %4487 = vperm.xlu0 %4486, %v4391
    %v4488 = vpop.permute.xlu0 %4487
    %4491 = vset.pattern.permute.xlu0 0
    %4492 = vperm.xlu0 %4491, %v4392
    %v4493 = vpop.permute.xlu0 %4492
    %4496 = vset.pattern.permute.xlu0 0
    %4497 = vperm.xlu0 %4496, %v4393
    %v4498 = vpop.permute.xlu0 %4497
    %4501 = vset.pattern.permute.xlu0 0
    %4502 = vperm.xlu0 %4501, %v4394
    %v4503 = vpop.permute.xlu0 %4502
    %4506 = vset.pattern.permute.xlu0 0
    %4507 = vperm.xlu0 %4506, %v4395
    %v4508 = vpop.permute.xlu0 %4507
    %4511 = vset.pattern.permute.xlu0 0
    %4512 = vperm.xlu0 %4511, %v4396
    %v4513 = vpop.permute.xlu0 %4512
    %4516 = vset.pattern.permute.xlu0 0
    %4517 = vperm.xlu0 %4516, %v4397
    %v4518 = vpop.permute.xlu0 %4517
    %4521 = vset.pattern.permute.xlu0 0
    %4522 = vperm.xlu0 %4521, %v4398
    %v4523 = vpop.permute.xlu0 %4522
    %4526 = vset.pattern.permute.xlu0 0
    %4527 = vperm.xlu0 %4526, %v4399
    %v4528 = vpop.permute.xlu0 %4527
    %4531 = vset.pattern.permute.xlu0 0
    %4532 = vperm.xlu0 %4531, %v4400
    %v4533 = vpop.permute.xlu0 %4532
    %4536 = vset.pattern.permute.xlu0 0
    %4537 = vperm.xlu0 %4536, %v4401
    %v4538 = vpop.permute.xlu0 %4537
    %4541 = vset.pattern.permute.xlu0 0
    %4542 = vperm.xlu0 %4541, %v4402
    %v4543 = vpop.permute.xlu0 %4542
    %4546 = vset.pattern.permute.xlu0 0
    %4547 = vperm.xlu0 %4546, %v4403
    %v4548 = vpop.permute.xlu0 %4547
    %4551 = vset.pattern.permute.xlu0 0
    %4552 = vperm.xlu0 %4551, %v4404
    %v4553 = vpop.permute.xlu0 %4552
    %4556 = vset.pattern.permute.xlu0 0
    %4557 = vperm.xlu0 %4556, %v4405
    %v4558 = vpop.permute.xlu0 %4557
    %4561 = vset.pattern.permute.xlu0 0
    %4562 = vperm.xlu0 %4561, %v4406
    %v4563 = vpop.permute.xlu0 %4562
    %4566 = vset.pattern.permute.xlu0 0
    %4567 = vperm.xlu0 %4566, %v4407
    %v4568 = vpop.permute.xlu0 %4567
    %4571 = vset.pattern.permute.xlu0 0
    %4572 = vperm.xlu0 %4571, %v4408
    %v4573 = vpop.permute.xlu0 %4572
    %4576 = vset.pattern.permute.xlu0 0
    %4577 = vperm.xlu0 %4576, %v4409
    %v4578 = vpop.permute.xlu0 %4577
    %4581 = vset.pattern.permute.xlu0 0
    %4582 = vperm.xlu0 %4581, %v4410
    %v4583 = vpop.permute.xlu0 %4582
    %4586 = vset.pattern.permute.xlu0 0
    %4587 = vperm.xlu0 %4586, %v4411
    %v4588 = vpop.permute.xlu0 %4587
    %4591 = vset.pattern.permute.xlu0 0
    %4592 = vperm.xlu0 %4591, %v4412
    %v4593 = vpop.permute.xlu0 %4592
    %4596 = vset.pattern.permute.xlu0 0
    %4597 = vperm.xlu0 %4596, %v4413
    %v4598 = vpop.permute.xlu0 %4597
    %4601 = vset.pattern.permute.xlu0 0
    %4602 = vperm.xlu0 %4601, %v4414
    %v4603 = vpop.permute.xlu0 %4602
    %4606 = vset.pattern.permute.xlu0 0
    %4607 = vperm.xlu0 %4606, %v4415
    %v4608 = vpop.permute.xlu0 %4607
    %4611 = vset.pattern.permute.xlu0 0
    %4612 = vperm.xlu0 %4611, %v4416
    %v4613 = vpop.permute.xlu0 %4612
    %4616 = vset.pattern.permute.xlu0 0
    %4617 = vperm.xlu0 %4616, %v4417
    %v4618 = vpop.permute.xlu0 %4617
    %4621 = vset.pattern.permute.xlu0 0
    %4622 = vperm.xlu0 %4621, %v4418
    %v4623 = vpop.permute.xlu0 %4622
    %4626 = vset.pattern.permute.xlu0 0
    %4627 = vperm.xlu0 %4626, %v4419
    %v4628 = vpop.permute.xlu0 %4627
    %4631 = vset.pattern.permute.xlu0 0
    %4632 = vperm.xlu0 %4631, %v4420
    %v4633 = vpop.permute.xlu0 %4632
    %4636 = vset.pattern.permute.xlu0 0
    %4637 = vperm.xlu0 %4636, %v4421
    %v4638 = vpop.permute.xlu0 %4637
    %4641 = vset.pattern.permute.xlu0 0
    %4642 = vperm.xlu0 %4641, %v4422
    %v4643 = vpop.permute.xlu0 %4642
    %4646 = vset.pattern.permute.xlu0 0
    %4647 = vperm.xlu0 %4646, %v4423
    %v4648 = vpop.permute.xlu0 %4647
    %4651 = vset.pattern.permute.xlu0 0
    %4652 = vperm.xlu0 %4651, %v4424
    %v4653 = vpop.permute.xlu0 %4652
    %4656 = vset.pattern.permute.xlu0 0
    %4657 = vperm.xlu0 %4656, %v4425
    %v4658 = vpop.permute.xlu0 %4657
    %4661 = vset.pattern.permute.xlu0 0
    %4662 = vperm.xlu0 %4661, %v4426
    %v4663 = vpop.permute.xlu0 %4662
    %4666 = vset.pattern.permute.xlu0 0
    %4667 = vperm.xlu0 %4666, %v4427
    %v4668 = vpop.permute.xlu0 %4667
    %4671 = vset.pattern.permute.xlu0 0
    %4672 = vperm.xlu0 %4671, %v4428
    %v4673 = vpop.permute.xlu0 %4672
    %4676 = vset.pattern.permute.xlu0 0
    %4677 = vperm.xlu0 %4676, %v4429
    %v4678 = vpop.permute.xlu0 %4677
    %4681 = vset.pattern.permute.xlu0 0
    %4682 = vperm.xlu0 %4681, %v4430
    %v4683 = vpop.permute.xlu0 %4682
    %4686 = vset.pattern.permute.xlu0 0
    %4687 = vperm.xlu0 %4686, %v4431
    %v4688 = vpop.permute.xlu0 %4687
    %4691 = vset.pattern.permute.xlu0 0
    %4692 = vperm.xlu0 %4691, %v4432
    %v4693 = vpop.permute.xlu0 %4692
    %4696 = vset.pattern.permute.xlu0 0
    %4697 = vperm.xlu0 %4696, %v4433
    %v4698 = vpop.permute.xlu0 %4697
    %4701 = vset.pattern.permute.xlu0 0
    %4702 = vperm.xlu0 %4701, %v4434
    %v4703 = vpop.permute.xlu0 %4702
    %4706 = vset.pattern.permute.xlu0 0
    %4707 = vperm.xlu0 %4706, %v4435
    %v4708 = vpop.permute.xlu0 %4707
    %4711 = vset.pattern.permute.xlu0 0
    %4712 = vperm.xlu0 %4711, %v4436
    %v4713 = vpop.permute.xlu0 %4712
    %4716 = vset.pattern.permute.xlu0 0
    %4717 = vperm.xlu0 %4716, %v4437
    %v4718 = vpop.permute.xlu0 %4717
    %4721 = vset.pattern.permute.xlu0 0
    %4722 = vperm.xlu0 %4721, %v4438
    %v4723 = vpop.permute.xlu0 %4722
    %4726 = vset.pattern.permute.xlu0 0
    %4727 = vperm.xlu0 %4726, %v4439
    %v4728 = vpop.permute.xlu0 %4727
    %4731 = vset.pattern.permute.xlu0 0
    %4732 = vperm.xlu0 %4731, %v4440
    %v4733 = vpop.permute.xlu0 %4732
    %4736 = vset.pattern.permute.xlu0 0
    %4737 = vperm.xlu0 %4736, %v4441
    %v4738 = vpop.permute.xlu0 %4737
    %4741 = vset.pattern.permute.xlu0 0
    %4742 = vperm.xlu0 %4741, %v4442
    %v4743 = vpop.permute.xlu0 %4742
    %4746 = vset.pattern.permute.xlu0 0
    %4747 = vperm.xlu0 %4746, %v4443
    %v4748 = vpop.permute.xlu0 %4747
    %4751 = vset.pattern.permute.xlu0 0
    %4752 = vperm.xlu0 %4751, %v4444
    %v4753 = vpop.permute.xlu0 %4752
    %v4755 = vlaneseq
    %v4756 = vshrl.u32 %v4755, 7
    %v4757 = vsub.s32 7, %v4756
    %v4758 = vrot.slane %v95, %v4757
    %v4759 = vmul.f32 %v4448, %v4758
    %v4760 = vmul.f32 %v4453, %v4758
    %v4761 = vmul.f32 %v4458, %v4758
    %v4762 = vmul.f32 %v4463, %v4758
    %v4763 = vmul.f32 %v4468, %v4758
    %v4764 = vmul.f32 %v4473, %v4758
    %v4765 = vmul.f32 %v4478, %v4758
    %v4766 = vmul.f32 %v4483, %v4758
    %v4767 = vmul.f32 %v4488, %v4758
    %v4768 = vmul.f32 %v4493, %v4758
    %v4769 = vmul.f32 %v4498, %v4758
    %v4770 = vmul.f32 %v4503, %v4758
    %v4771 = vmul.f32 %v4508, %v4758
    %v4772 = vmul.f32 %v4513, %v4758
    %v4773 = vmul.f32 %v4518, %v4758
    %v4774 = vmul.f32 %v4523, %v4758
    %v4775 = vmul.f32 %v4528, %v4758
    %v4776 = vmul.f32 %v4533, %v4758
    %v4777 = vmul.f32 %v4538, %v4758
    %v4778 = vmul.f32 %v4543, %v4758
    %v4779 = vmul.f32 %v4548, %v4758
    %v4780 = vmul.f32 %v4553, %v4758
    %v4781 = vmul.f32 %v4558, %v4758
    %v4782 = vmul.f32 %v4563, %v4758
    %v4783 = vmul.f32 %v4568, %v4758
    %v4784 = vmul.f32 %v4573, %v4758
    %v4785 = vmul.f32 %v4578, %v4758
    %v4786 = vmul.f32 %v4583, %v4758
    %v4787 = vmul.f32 %v4588, %v4758
    %v4788 = vmul.f32 %v4593, %v4758
    %v4789 = vmul.f32 %v4598, %v4758
    %v4790 = vmul.f32 %v4603, %v4758
    %v4791 = vmul.f32 %v4608, %v4758
    %v4792 = vmul.f32 %v4613, %v4758
    %v4793 = vmul.f32 %v4618, %v4758
    %v4794 = vmul.f32 %v4623, %v4758
    %v4795 = vmul.f32 %v4628, %v4758
    %v4796 = vmul.f32 %v4633, %v4758
    %v4797 = vmul.f32 %v4638, %v4758
    %v4798 = vmul.f32 %v4643, %v4758
    %v4799 = vmul.f32 %v4648, %v4758
    %v4800 = vmul.f32 %v4653, %v4758
    %v4801 = vmul.f32 %v4658, %v4758
    %v4802 = vmul.f32 %v4663, %v4758
    %v4803 = vmul.f32 %v4668, %v4758
    %v4804 = vmul.f32 %v4673, %v4758
    %v4805 = vmul.f32 %v4678, %v4758
    %v4806 = vmul.f32 %v4683, %v4758
    %v4807 = vmul.f32 %v4688, %v4758
    %v4808 = vmul.f32 %v4693, %v4758
    %v4809 = vmul.f32 %v4698, %v4758
    %v4810 = vmul.f32 %v4703, %v4758
    %v4811 = vmul.f32 %v4708, %v4758
    %v4812 = vmul.f32 %v4713, %v4758
    %v4813 = vmul.f32 %v4718, %v4758
    %v4814 = vmul.f32 %v4723, %v4758
    %v4815 = vmul.f32 %v4728, %v4758
    %v4816 = vmul.f32 %v4733, %v4758
    %v4817 = vmul.f32 %v4738, %v4758
    %v4818 = vmul.f32 %v4743, %v4758
    %v4819 = vmul.f32 %v4748, %v4758
    %v4820 = vmul.f32 %v4753, %v4758
    %v4821 = vadd.f32 %v4286, %v4759
    %v4822 = vadd.f32 %v4287, %v4760
    %v4823 = vadd.f32 %v4288, %v4761
    %v4824 = vadd.f32 %v4289, %v4762
    %v4825 = vadd.f32 %v4290, %v4763
    %v4826 = vadd.f32 %v4291, %v4764
    %v4827 = vadd.f32 %v4292, %v4765
    %v4828 = vadd.f32 %v4293, %v4766
    %v4829 = vadd.f32 %v4294, %v4767
    %v4830 = vadd.f32 %v4295, %v4768
    %v4831 = vadd.f32 %v4296, %v4769
    %v4832 = vadd.f32 %v4297, %v4770
    %v4833 = vadd.f32 %v4298, %v4771
    %v4834 = vadd.f32 %v4299, %v4772
    %v4835 = vadd.f32 %v4300, %v4773
    %v4836 = vadd.f32 %v4301, %v4774
    %v4837 = vadd.f32 %v4302, %v4775
    %v4838 = vadd.f32 %v4303, %v4776
    %v4839 = vadd.f32 %v4304, %v4777
    %v4840 = vadd.f32 %v4305, %v4778
    %v4841 = vadd.f32 %v4306, %v4779
    %v4842 = vadd.f32 %v4307, %v4780
    %v4843 = vadd.f32 %v4308, %v4781
    %v4844 = vadd.f32 %v4309, %v4782
    %v4845 = vadd.f32 %v4310, %v4783
    %v4846 = vadd.f32 %v4311, %v4784
    %v4847 = vadd.f32 %v4312, %v4785
    %v4848 = vadd.f32 %v4313, %v4786
    %v4849 = vadd.f32 %v4314, %v4787
    %v4850 = vadd.f32 %v4315, %v4788
    %v4851 = vadd.f32 %v4316, %v4789
    %v4852 = vadd.f32 %v4317, %v4790
    %v4853 = vadd.f32 %v4318, %v4791
    %v4854 = vadd.f32 %v4319, %v4792
    %v4855 = vadd.f32 %v4320, %v4793
    %v4856 = vadd.f32 %v4321, %v4794
    %v4857 = vadd.f32 %v4322, %v4795
    %v4858 = vadd.f32 %v4323, %v4796
    %v4859 = vadd.f32 %v4324, %v4797
    %v4860 = vadd.f32 %v4325, %v4798
    %v4861 = vadd.f32 %v4326, %v4799
    %v4862 = vadd.f32 %v4327, %v4800
    %v4863 = vadd.f32 %v4328, %v4801
    %v4864 = vadd.f32 %v4329, %v4802
    %v4865 = vadd.f32 %v4330, %v4803
    %v4866 = vadd.f32 %v4331, %v4804
    %v4867 = vadd.f32 %v4332, %v4805
    %v4868 = vadd.f32 %v4333, %v4806
    %v4869 = vadd.f32 %v4334, %v4807
    %v4870 = vadd.f32 %v4335, %v4808
    %v4871 = vadd.f32 %v4336, %v4809
    %v4872 = vadd.f32 %v4337, %v4810
    %v4873 = vadd.f32 %v4338, %v4811
    %v4874 = vadd.f32 %v4339, %v4812
    %v4875 = vadd.f32 %v4340, %v4813
    %v4876 = vadd.f32 %v4341, %v4814
    %v4877 = vadd.f32 %v4342, %v4815
    %v4878 = vadd.f32 %v4343, %v4816
    %v4879 = vadd.f32 %v4344, %v4817
    %v4880 = vadd.f32 %v4345, %v4818
    %v4881 = vadd.f32 %v4346, %v4819
    %v4882 = vadd.f32 %v4347, %v4820
    %v4883 = vadd.f32 %v4348, %v4789
    %v4884 = vadd.f32 %v4349, %v4790
    %s4885 = scalar_lea.vmem %s1, 2048
    %v4886 = vld [vmem:[%s4885] sm:$0xff]
    %v4887 = vld [vmem:[%s4885 + $0x8] sm:$0xff]
    %v4888 = vld [vmem:[%s4885 + $0x10] sm:$0xff]
    %v4889 = vld [vmem:[%s4885 + $0x18] sm:$0xff]
    %v4890 = vld [vmem:[%s4885 + $0x20] sm:$0xff]
    %v4891 = vld [vmem:[%s4885 + $0x28] sm:$0xff]
    %v4892 = vld [vmem:[%s4885 + $0x30] sm:$0xff]
    %v4893 = vld [vmem:[%s4885 + $0x38] sm:$0xff]
    %v4894 = vld [vmem:[%s4885 + $0x40] sm:$0xff]
    %v4895 = vld [vmem:[%s4885 + $0x48] sm:$0xff]
    %v4896 = vld [vmem:[%s4885 + $0x50] sm:$0xff]
    %v4897 = vld [vmem:[%s4885 + $0x58] sm:$0xff]
    %v4898 = vld [vmem:[%s4885 + $0x60] sm:$0xff]
    %v4899 = vld [vmem:[%s4885 + $0x68] sm:$0xff]
    %v4900 = vld [vmem:[%s4885 + $0x70] sm:$0xff]
    %v4901 = vld [vmem:[%s4885 + $0x78] sm:$0xff]
    %v4902 = vld [vmem:[%s4885 + $0x80] sm:$0xff]
    %v4903 = vld [vmem:[%s4885 + $0x88] sm:$0xff]
    %v4904 = vld [vmem:[%s4885 + $0x90] sm:$0xff]
    %v4905 = vld [vmem:[%s4885 + $0x98] sm:$0xff]
    %v4906 = vld [vmem:[%s4885 + $0xa0] sm:$0xff]
    %v4907 = vld [vmem:[%s4885 + $0xa8] sm:$0xff]
    %v4908 = vld [vmem:[%s4885 + $0xb0] sm:$0xff]
    %v4909 = vld [vmem:[%s4885 + $0xb8] sm:$0xff]
    %v4910 = vld [vmem:[%s4885 + $0xc0] sm:$0xff]
    %v4911 = vld [vmem:[%s4885 + $0xc8] sm:$0xff]
    %v4912 = vld [vmem:[%s4885 + $0xd0] sm:$0xff]
    %v4913 = vld [vmem:[%s4885 + $0xd8] sm:$0xff]
    %v4914 = vld [vmem:[%s4885 + $0xe0] sm:$0xff]
    %v4915 = vld [vmem:[%s4885 + $0xe8] sm:$0xff]
    %v4916 = vld [vmem:[%s4885 + $0xf0] sm:$0xff]
    %v4917 = vld [vmem:[%s4885 + $0xf8] sm:$0xff]
    %v4918 = vmul.f32 %v1445, %v4886
    %v4919 = vmul.f32 %v1447, %v4887
    %v4920 = vmul.f32 %v1449, %v4888
    %v4921 = vmul.f32 %v1451, %v4889
    %v4922 = vmul.f32 %v1453, %v4890
    %v4923 = vmul.f32 %v1455, %v4891
    %v4924 = vmul.f32 %v1457, %v4892
    %v4925 = vmul.f32 %v1459, %v4893
    %v4926 = vmul.f32 %v1461, %v4894
    %v4927 = vmul.f32 %v1463, %v4895
    %v4928 = vmul.f32 %v1465, %v4896
    %v4929 = vmul.f32 %v1467, %v4897
    %v4930 = vmul.f32 %v1469, %v4898
    %v4931 = vmul.f32 %v1471, %v4899
    %v4932 = vmul.f32 %v1473, %v4900
    %v4933 = vmul.f32 %v1475, %v4901
    %v4934 = vmul.f32 %v1477, %v4902
    %v4935 = vmul.f32 %v1479, %v4903
    %v4936 = vmul.f32 %v1481, %v4904
    %v4937 = vmul.f32 %v1483, %v4905
    %v4938 = vmul.f32 %v1485, %v4906
    %v4939 = vmul.f32 %v1487, %v4907
    %v4940 = vmul.f32 %v1489, %v4908
    %v4941 = vmul.f32 %v1491, %v4909
    %v4942 = vmul.f32 %v1493, %v4910
    %v4943 = vmul.f32 %v1495, %v4911
    %v4944 = vmul.f32 %v1497, %v4912
    %v4945 = vmul.f32 %v1499, %v4913
    %v4946 = vmul.f32 %v3279, %v4914
    %v4947 = vmul.f32 %v3286, %v4915
    %v4948 = vmul.f32 %v4916, 0.0
    %v4949 = vmul.f32 %v4917, 0.0
    %v4950 = vmul.f32 %v1506, %v4886
    %v4951 = vmul.f32 %v1508, %v4887
    %v4952 = vmul.f32 %v1510, %v4888
    %v4953 = vmul.f32 %v1512, %v4889
    %v4954 = vmul.f32 %v1514, %v4890
    %v4955 = vmul.f32 %v1516, %v4891
    %v4956 = vmul.f32 %v1518, %v4892
    %v4957 = vmul.f32 %v1520, %v4893
    %v4958 = vmul.f32 %v1522, %v4894
    %v4959 = vmul.f32 %v1524, %v4895
    %v4960 = vmul.f32 %v1526, %v4896
    %v4961 = vmul.f32 %v1528, %v4897
    %v4962 = vmul.f32 %v1530, %v4898
    %v4963 = vmul.f32 %v1532, %v4899
    %v4964 = vmul.f32 %v1534, %v4900
    %v4965 = vmul.f32 %v1536, %v4901
    %v4966 = vmul.f32 %v1538, %v4902
    %v4967 = vmul.f32 %v1540, %v4903
    %v4968 = vmul.f32 %v1542, %v4904
    %v4969 = vmul.f32 %v1544, %v4905
    %v4970 = vmul.f32 %v1546, %v4906
    %v4971 = vmul.f32 %v1548, %v4907
    %v4972 = vmul.f32 %v1550, %v4908
    %v4973 = vmul.f32 %v1552, %v4909
    %v4974 = vmul.f32 %v1554, %v4910
    %v4975 = vmul.f32 %v1556, %v4911
    %v4976 = vmul.f32 %v1558, %v4912
    %v4977 = vmul.f32 %v1560, %v4913
    %v4978 = vmul.f32 %v3281, %v4914
    %v4979 = vmul.f32 %v3287, %v4915
    %4981 = vset.pattern.permute.xlu0 0
    %4982 = vperm.xlu0 %4981, %v4918
    %v4983 = vpop.permute.xlu0 %4982
    %4986 = vset.pattern.permute.xlu0 0
    %4987 = vperm.xlu0 %4986, %v4919
    %v4988 = vpop.permute.xlu0 %4987
    %4991 = vset.pattern.permute.xlu0 0
    %4992 = vperm.xlu0 %4991, %v4920
    %v4993 = vpop.permute.xlu0 %4992
    %4996 = vset.pattern.permute.xlu0 0
    %4997 = vperm.xlu0 %4996, %v4921
    %v4998 = vpop.permute.xlu0 %4997
    %5001 = vset.pattern.permute.xlu0 0
    %5002 = vperm.xlu0 %5001, %v4922
    %v5003 = vpop.permute.xlu0 %5002
    %5006 = vset.pattern.permute.xlu0 0
    %5007 = vperm.xlu0 %5006, %v4923
    %v5008 = vpop.permute.xlu0 %5007
    %5011 = vset.pattern.permute.xlu0 0
    %5012 = vperm.xlu0 %5011, %v4924
    %v5013 = vpop.permute.xlu0 %5012
    %5016 = vset.pattern.permute.xlu0 0
    %5017 = vperm.xlu0 %5016, %v4925
    %v5018 = vpop.permute.xlu0 %5017
    %5021 = vset.pattern.permute.xlu0 0
    %5022 = vperm.xlu0 %5021, %v4926
    %v5023 = vpop.permute.xlu0 %5022
    %5026 = vset.pattern.permute.xlu0 0
    %5027 = vperm.xlu0 %5026, %v4927
    %v5028 = vpop.permute.xlu0 %5027
    %5031 = vset.pattern.permute.xlu0 0
    %5032 = vperm.xlu0 %5031, %v4928
    %v5033 = vpop.permute.xlu0 %5032
    %5036 = vset.pattern.permute.xlu0 0
    %5037 = vperm.xlu0 %5036, %v4929
    %v5038 = vpop.permute.xlu0 %5037
    %5041 = vset.pattern.permute.xlu0 0
    %5042 = vperm.xlu0 %5041, %v4930
    %v5043 = vpop.permute.xlu0 %5042
    %5046 = vset.pattern.permute.xlu0 0
    %5047 = vperm.xlu0 %5046, %v4931
    %v5048 = vpop.permute.xlu0 %5047
    %5051 = vset.pattern.permute.xlu0 0
    %5052 = vperm.xlu0 %5051, %v4932
    %v5053 = vpop.permute.xlu0 %5052
    %5056 = vset.pattern.permute.xlu0 0
    %5057 = vperm.xlu0 %5056, %v4933
    %v5058 = vpop.permute.xlu0 %5057
    %5061 = vset.pattern.permute.xlu0 0
    %5062 = vperm.xlu0 %5061, %v4934
    %v5063 = vpop.permute.xlu0 %5062
    %5066 = vset.pattern.permute.xlu0 0
    %5067 = vperm.xlu0 %5066, %v4935
    %v5068 = vpop.permute.xlu0 %5067
    %5071 = vset.pattern.permute.xlu0 0
    %5072 = vperm.xlu0 %5071, %v4936
    %v5073 = vpop.permute.xlu0 %5072
    %5076 = vset.pattern.permute.xlu0 0
    %5077 = vperm.xlu0 %5076, %v4937
    %v5078 = vpop.permute.xlu0 %5077
    %5081 = vset.pattern.permute.xlu0 0
    %5082 = vperm.xlu0 %5081, %v4938
    %v5083 = vpop.permute.xlu0 %5082
    %5086 = vset.pattern.permute.xlu0 0
    %5087 = vperm.xlu0 %5086, %v4939
    %v5088 = vpop.permute.xlu0 %5087
    %5091 = vset.pattern.permute.xlu0 0
    %5092 = vperm.xlu0 %5091, %v4940
    %v5093 = vpop.permute.xlu0 %5092
    %5096 = vset.pattern.permute.xlu0 0
    %5097 = vperm.xlu0 %5096, %v4941
    %v5098 = vpop.permute.xlu0 %5097
    %5101 = vset.pattern.permute.xlu0 0
    %5102 = vperm.xlu0 %5101, %v4942
    %v5103 = vpop.permute.xlu0 %5102
    %5106 = vset.pattern.permute.xlu0 0
    %5107 = vperm.xlu0 %5106, %v4943
    %v5108 = vpop.permute.xlu0 %5107
    %5111 = vset.pattern.permute.xlu0 0
    %5112 = vperm.xlu0 %5111, %v4944
    %v5113 = vpop.permute.xlu0 %5112
    %5116 = vset.pattern.permute.xlu0 0
    %5117 = vperm.xlu0 %5116, %v4945
    %v5118 = vpop.permute.xlu0 %5117
    %5121 = vset.pattern.permute.xlu0 0
    %5122 = vperm.xlu0 %5121, %v4946
    %v5123 = vpop.permute.xlu0 %5122
    %5126 = vset.pattern.permute.xlu0 0
    %5127 = vperm.xlu0 %5126, %v4947
    %v5128 = vpop.permute.xlu0 %5127
    %5131 = vset.pattern.permute.xlu0 0
    %5132 = vperm.xlu0 %5131, %v4948
    %v5133 = vpop.permute.xlu0 %5132
    %5136 = vset.pattern.permute.xlu0 0
    %5137 = vperm.xlu0 %5136, %v4949
    %v5138 = vpop.permute.xlu0 %5137
    %5141 = vset.pattern.permute.xlu0 0
    %5142 = vperm.xlu0 %5141, %v4950
    %v5143 = vpop.permute.xlu0 %5142
    %5146 = vset.pattern.permute.xlu0 0
    %5147 = vperm.xlu0 %5146, %v4951
    %v5148 = vpop.permute.xlu0 %5147
    %5151 = vset.pattern.permute.xlu0 0
    %5152 = vperm.xlu0 %5151, %v4952
    %v5153 = vpop.permute.xlu0 %5152
    %5156 = vset.pattern.permute.xlu0 0
    %5157 = vperm.xlu0 %5156, %v4953
    %v5158 = vpop.permute.xlu0 %5157
    %5161 = vset.pattern.permute.xlu0 0
    %5162 = vperm.xlu0 %5161, %v4954
    %v5163 = vpop.permute.xlu0 %5162
    %5166 = vset.pattern.permute.xlu0 0
    %5167 = vperm.xlu0 %5166, %v4955
    %v5168 = vpop.permute.xlu0 %5167
    %5171 = vset.pattern.permute.xlu0 0
    %5172 = vperm.xlu0 %5171, %v4956
    %v5173 = vpop.permute.xlu0 %5172
    %5176 = vset.pattern.permute.xlu0 0
    %5177 = vperm.xlu0 %5176, %v4957
    %v5178 = vpop.permute.xlu0 %5177
    %5181 = vset.pattern.permute.xlu0 0
    %5182 = vperm.xlu0 %5181, %v4958
    %v5183 = vpop.permute.xlu0 %5182
    %5186 = vset.pattern.permute.xlu0 0
    %5187 = vperm.xlu0 %5186, %v4959
    %v5188 = vpop.permute.xlu0 %5187
    %5191 = vset.pattern.permute.xlu0 0
    %5192 = vperm.xlu0 %5191, %v4960
    %v5193 = vpop.permute.xlu0 %5192
    %5196 = vset.pattern.permute.xlu0 0
    %5197 = vperm.xlu0 %5196, %v4961
    %v5198 = vpop.permute.xlu0 %5197
    %5201 = vset.pattern.permute.xlu0 0
    %5202 = vperm.xlu0 %5201, %v4962
    %v5203 = vpop.permute.xlu0 %5202
    %5206 = vset.pattern.permute.xlu0 0
    %5207 = vperm.xlu0 %5206, %v4963
    %v5208 = vpop.permute.xlu0 %5207
    %5211 = vset.pattern.permute.xlu0 0
    %5212 = vperm.xlu0 %5211, %v4964
    %v5213 = vpop.permute.xlu0 %5212
    %5216 = vset.pattern.permute.xlu0 0
    %5217 = vperm.xlu0 %5216, %v4965
    %v5218 = vpop.permute.xlu0 %5217
    %5221 = vset.pattern.permute.xlu0 0
    %5222 = vperm.xlu0 %5221, %v4966
    %v5223 = vpop.permute.xlu0 %5222
    %5226 = vset.pattern.permute.xlu0 0
    %5227 = vperm.xlu0 %5226, %v4967
    %v5228 = vpop.permute.xlu0 %5227
    %5231 = vset.pattern.permute.xlu0 0
    %5232 = vperm.xlu0 %5231, %v4968
    %v5233 = vpop.permute.xlu0 %5232
    %5236 = vset.pattern.permute.xlu0 0
    %5237 = vperm.xlu0 %5236, %v4969
    %v5238 = vpop.permute.xlu0 %5237
    %5241 = vset.pattern.permute.xlu0 0
    %5242 = vperm.xlu0 %5241, %v4970
    %v5243 = vpop.permute.xlu0 %5242
    %5246 = vset.pattern.permute.xlu0 0
    %5247 = vperm.xlu0 %5246, %v4971
    %v5248 = vpop.permute.xlu0 %5247
    %5251 = vset.pattern.permute.xlu0 0
    %5252 = vperm.xlu0 %5251, %v4972
    %v5253 = vpop.permute.xlu0 %5252
    %5256 = vset.pattern.permute.xlu0 0
    %5257 = vperm.xlu0 %5256, %v4973
    %v5258 = vpop.permute.xlu0 %5257
    %5261 = vset.pattern.permute.xlu0 0
    %5262 = vperm.xlu0 %5261, %v4974
    %v5263 = vpop.permute.xlu0 %5262
    %5266 = vset.pattern.permute.xlu0 0
    %5267 = vperm.xlu0 %5266, %v4975
    %v5268 = vpop.permute.xlu0 %5267
    %5271 = vset.pattern.permute.xlu0 0
    %5272 = vperm.xlu0 %5271, %v4976
    %v5273 = vpop.permute.xlu0 %5272
    %5276 = vset.pattern.permute.xlu0 0
    %5277 = vperm.xlu0 %5276, %v4977
    %v5278 = vpop.permute.xlu0 %5277
    %5281 = vset.pattern.permute.xlu0 0
    %5282 = vperm.xlu0 %5281, %v4978
    %v5283 = vpop.permute.xlu0 %5282
    %5286 = vset.pattern.permute.xlu0 0
    %5287 = vperm.xlu0 %5286, %v4979
    %v5288 = vpop.permute.xlu0 %5287
    %v5290 = vlaneseq
    %v5291 = vshrl.u32 %v5290, 7
    %v5292 = vsub.s32 0, %v5291
    %v5293 = vrot.slane %v96, %v5292
    %v5294 = vmul.f32 %v4983, %v5293
    %v5295 = vmul.f32 %v4988, %v5293
    %v5296 = vmul.f32 %v4993, %v5293
    %v5297 = vmul.f32 %v4998, %v5293
    %v5298 = vmul.f32 %v5003, %v5293
    %v5299 = vmul.f32 %v5008, %v5293
    %v5300 = vmul.f32 %v5013, %v5293
    %v5301 = vmul.f32 %v5018, %v5293
    %v5302 = vmul.f32 %v5023, %v5293
    %v5303 = vmul.f32 %v5028, %v5293
    %v5304 = vmul.f32 %v5033, %v5293
    %v5305 = vmul.f32 %v5038, %v5293
    %v5306 = vmul.f32 %v5043, %v5293
    %v5307 = vmul.f32 %v5048, %v5293
    %v5308 = vmul.f32 %v5053, %v5293
    %v5309 = vmul.f32 %v5058, %v5293
    %v5310 = vmul.f32 %v5063, %v5293
    %v5311 = vmul.f32 %v5068, %v5293
    %v5312 = vmul.f32 %v5073, %v5293
    %v5313 = vmul.f32 %v5078, %v5293
    %v5314 = vmul.f32 %v5083, %v5293
    %v5315 = vmul.f32 %v5088, %v5293
    %v5316 = vmul.f32 %v5093, %v5293
    %v5317 = vmul.f32 %v5098, %v5293
    %v5318 = vmul.f32 %v5103, %v5293
    %v5319 = vmul.f32 %v5108, %v5293
    %v5320 = vmul.f32 %v5113, %v5293
    %v5321 = vmul.f32 %v5118, %v5293
    %v5322 = vmul.f32 %v5123, %v5293
    %v5323 = vmul.f32 %v5128, %v5293
    %v5324 = vmul.f32 %v5133, %v5293
    %v5325 = vmul.f32 %v5138, %v5293
    %v5326 = vmul.f32 %v5143, %v5293
    %v5327 = vmul.f32 %v5148, %v5293
    %v5328 = vmul.f32 %v5153, %v5293
    %v5329 = vmul.f32 %v5158, %v5293
    %v5330 = vmul.f32 %v5163, %v5293
    %v5331 = vmul.f32 %v5168, %v5293
    %v5332 = vmul.f32 %v5173, %v5293
    %v5333 = vmul.f32 %v5178, %v5293
    %v5334 = vmul.f32 %v5183, %v5293
    %v5335 = vmul.f32 %v5188, %v5293
    %v5336 = vmul.f32 %v5193, %v5293
    %v5337 = vmul.f32 %v5198, %v5293
    %v5338 = vmul.f32 %v5203, %v5293
    %v5339 = vmul.f32 %v5208, %v5293
    %v5340 = vmul.f32 %v5213, %v5293
    %v5341 = vmul.f32 %v5218, %v5293
    %v5342 = vmul.f32 %v5223, %v5293
    %v5343 = vmul.f32 %v5228, %v5293
    %v5344 = vmul.f32 %v5233, %v5293
    %v5345 = vmul.f32 %v5238, %v5293
    %v5346 = vmul.f32 %v5243, %v5293
    %v5347 = vmul.f32 %v5248, %v5293
    %v5348 = vmul.f32 %v5253, %v5293
    %v5349 = vmul.f32 %v5258, %v5293
    %v5350 = vmul.f32 %v5263, %v5293
    %v5351 = vmul.f32 %v5268, %v5293
    %v5352 = vmul.f32 %v5273, %v5293
    %v5353 = vmul.f32 %v5278, %v5293
    %v5354 = vmul.f32 %v5283, %v5293
    %v5355 = vmul.f32 %v5288, %v5293
    %v5356 = vadd.f32 %v4821, %v5294
    %v5357 = vadd.f32 %v4822, %v5295
    %v5358 = vadd.f32 %v4823, %v5296
    %v5359 = vadd.f32 %v4824, %v5297
    %v5360 = vadd.f32 %v4825, %v5298
    %v5361 = vadd.f32 %v4826, %v5299
    %v5362 = vadd.f32 %v4827, %v5300
    %v5363 = vadd.f32 %v4828, %v5301
    %v5364 = vadd.f32 %v4829, %v5302
    %v5365 = vadd.f32 %v4830, %v5303
    %v5366 = vadd.f32 %v4831, %v5304
    %v5367 = vadd.f32 %v4832, %v5305
    %v5368 = vadd.f32 %v4833, %v5306
    %v5369 = vadd.f32 %v4834, %v5307
    %v5370 = vadd.f32 %v4835, %v5308
    %v5371 = vadd.f32 %v4836, %v5309
    %v5372 = vadd.f32 %v4837, %v5310
    %v5373 = vadd.f32 %v4838, %v5311
    %v5374 = vadd.f32 %v4839, %v5312
    %v5375 = vadd.f32 %v4840, %v5313
    %v5376 = vadd.f32 %v4841, %v5314
    %v5377 = vadd.f32 %v4842, %v5315
    %v5378 = vadd.f32 %v4843, %v5316
    %v5379 = vadd.f32 %v4844, %v5317
    %v5380 = vadd.f32 %v4845, %v5318
    %v5381 = vadd.f32 %v4846, %v5319
    %v5382 = vadd.f32 %v4847, %v5320
    %v5383 = vadd.f32 %v4848, %v5321
    %v5384 = vadd.f32 %v4849, %v5322
    %v5385 = vadd.f32 %v4850, %v5323
    %v5386 = vadd.f32 %v4851, %v5324
    %v5387 = vadd.f32 %v4852, %v5325
    %v5388 = vadd.f32 %v4853, %v5326
    %v5389 = vadd.f32 %v4854, %v5327
    %v5390 = vadd.f32 %v4855, %v5328
    %v5391 = vadd.f32 %v4856, %v5329
    %v5392 = vadd.f32 %v4857, %v5330
    %v5393 = vadd.f32 %v4858, %v5331
    %v5394 = vadd.f32 %v4859, %v5332
    %v5395 = vadd.f32 %v4860, %v5333
    %v5396 = vadd.f32 %v4861, %v5334
    %v5397 = vadd.f32 %v4862, %v5335
    %v5398 = vadd.f32 %v4863, %v5336
    %v5399 = vadd.f32 %v4864, %v5337
    %v5400 = vadd.f32 %v4865, %v5338
    %v5401 = vadd.f32 %v4866, %v5339
    %v5402 = vadd.f32 %v4867, %v5340
    %v5403 = vadd.f32 %v4868, %v5341
    %v5404 = vadd.f32 %v4869, %v5342
    %v5405 = vadd.f32 %v4870, %v5343
    %v5406 = vadd.f32 %v4871, %v5344
    %v5407 = vadd.f32 %v4872, %v5345
    %v5408 = vadd.f32 %v4873, %v5346
    %v5409 = vadd.f32 %v4874, %v5347
    %v5410 = vadd.f32 %v4875, %v5348
    %v5411 = vadd.f32 %v4876, %v5349
    %v5412 = vadd.f32 %v4877, %v5350
    %v5413 = vadd.f32 %v4878, %v5351
    %v5414 = vadd.f32 %v4879, %v5352
    %v5415 = vadd.f32 %v4880, %v5353
    %v5416 = vadd.f32 %v4881, %v5354
    %v5417 = vadd.f32 %v4882, %v5355
    %v5418 = vadd.f32 %v4883, %v5324
    %v5419 = vadd.f32 %v4884, %v5325
    %v5420 = vld [vmem:[%s3] sm:$0x1]
    %v5422 = vlaneseq
    %v5423 = vshrl.u32 %v5422, 7
    %v5424 = vsub.s32 0, %v5423
    %v5425 = vrot.slane %v5420, %v5424
    %v5427 = vadd.f32 %v5356, %v5425
    %v5428 = vadd.f32 %v5357, %v5425
    %v5429 = vadd.f32 %v5358, %v5425
    %v5430 = vadd.f32 %v5359, %v5425
    %v5431 = vadd.f32 %v5360, %v5425
    %v5432 = vadd.f32 %v5361, %v5425
    %v5433 = vadd.f32 %v5362, %v5425
    %v5434 = vadd.f32 %v5363, %v5425
    %v5435 = vadd.f32 %v5364, %v5425
    %v5436 = vadd.f32 %v5365, %v5425
    %v5437 = vadd.f32 %v5366, %v5425
    %v5438 = vadd.f32 %v5367, %v5425
    %v5439 = vadd.f32 %v5368, %v5425
    %v5440 = vadd.f32 %v5369, %v5425
    %v5441 = vadd.f32 %v5370, %v5425
    %v5442 = vadd.f32 %v5371, %v5425
    %v5443 = vadd.f32 %v5372, %v5425
    %v5444 = vadd.f32 %v5373, %v5425
    %v5445 = vadd.f32 %v5374, %v5425
    %v5446 = vadd.f32 %v5375, %v5425
    %v5447 = vadd.f32 %v5376, %v5425
    %v5448 = vadd.f32 %v5377, %v5425
    %v5449 = vadd.f32 %v5378, %v5425
    %v5450 = vadd.f32 %v5379, %v5425
    %v5451 = vadd.f32 %v5380, %v5425
    %v5452 = vadd.f32 %v5381, %v5425
    %v5453 = vadd.f32 %v5382, %v5425
    %v5454 = vadd.f32 %v5383, %v5425
    %v5455 = vadd.f32 %v5384, %v5425
    %v5456 = vadd.f32 %v5385, %v5425
    %v5457 = vadd.f32 %v5386, %v5425
    %v5458 = vadd.f32 %v5387, %v5425
    %v5459 = vadd.f32 %v5388, %v5425
    %v5460 = vadd.f32 %v5389, %v5425
    %v5461 = vadd.f32 %v5390, %v5425
    %v5462 = vadd.f32 %v5391, %v5425
    %v5463 = vadd.f32 %v5392, %v5425
    %v5464 = vadd.f32 %v5393, %v5425
    %v5465 = vadd.f32 %v5394, %v5425
    %v5466 = vadd.f32 %v5395, %v5425
    %v5467 = vadd.f32 %v5396, %v5425
    %v5468 = vadd.f32 %v5397, %v5425
    %v5469 = vadd.f32 %v5398, %v5425
    %v5470 = vadd.f32 %v5399, %v5425
    %v5471 = vadd.f32 %v5400, %v5425
    %v5472 = vadd.f32 %v5401, %v5425
    %v5473 = vadd.f32 %v5402, %v5425
    %v5474 = vadd.f32 %v5403, %v5425
    %v5475 = vadd.f32 %v5404, %v5425
    %v5476 = vadd.f32 %v5405, %v5425
    %v5477 = vadd.f32 %v5406, %v5425
    %v5478 = vadd.f32 %v5407, %v5425
    %v5479 = vadd.f32 %v5408, %v5425
    %v5480 = vadd.f32 %v5409, %v5425
    %v5481 = vadd.f32 %v5410, %v5425
    %v5482 = vadd.f32 %v5411, %v5425
    %v5483 = vadd.f32 %v5412, %v5425
    %v5484 = vadd.f32 %v5413, %v5425
    %v5485 = vadd.f32 %v5414, %v5425
    %v5486 = vadd.f32 %v5415, %v5425
    %v5487 = vadd.f32 %v5416, %v5425
    %v5488 = vadd.f32 %v5417, %v5425
    %v5489 = vadd.f32 %v5418, %v5425
    %v5490 = vadd.f32 %v5419, %v5425
    %v5491 = vmax.f32 %v5427, 0.0
    %v5492 = vmax.f32 %v5428, 0.0
    %v5493 = vmax.f32 %v5429, 0.0
    %v5494 = vmax.f32 %v5430, 0.0
    %v5495 = vmax.f32 %v5431, 0.0
    %v5496 = vmax.f32 %v5432, 0.0
    %v5497 = vmax.f32 %v5433, 0.0
    %v5498 = vmax.f32 %v5434, 0.0
    %v5499 = vmax.f32 %v5435, 0.0
    %v5500 = vmax.f32 %v5436, 0.0
    %v5501 = vmax.f32 %v5437, 0.0
    %v5502 = vmax.f32 %v5438, 0.0
    %v5503 = vmax.f32 %v5439, 0.0
    %v5504 = vmax.f32 %v5440, 0.0
    %v5505 = vmax.f32 %v5441, 0.0
    %v5506 = vmax.f32 %v5442, 0.0
    %v5507 = vmax.f32 %v5443, 0.0
    %v5508 = vmax.f32 %v5444, 0.0
    %v5509 = vmax.f32 %v5445, 0.0
    %v5510 = vmax.f32 %v5446, 0.0
    %v5511 = vmax.f32 %v5447, 0.0
    %v5512 = vmax.f32 %v5448, 0.0
    %v5513 = vmax.f32 %v5449, 0.0
    %v5514 = vmax.f32 %v5450, 0.0
    %v5515 = vmax.f32 %v5451, 0.0
    %v5516 = vmax.f32 %v5452, 0.0
    %v5517 = vmax.f32 %v5453, 0.0
    %v5518 = vmax.f32 %v5454, 0.0
    %v5519 = vmax.f32 %v5455, 0.0
    %v5520 = vmax.f32 %v5456, 0.0
    %v5521 = vmax.f32 %v5457, 0.0
    %v5522 = vmax.f32 %v5458, 0.0
    %v5523 = vmax.f32 %v5459, 0.0
    %v5524 = vmax.f32 %v5460, 0.0
    %v5525 = vmax.f32 %v5461, 0.0
    %v5526 = vmax.f32 %v5462, 0.0
    %v5527 = vmax.f32 %v5463, 0.0
    %v5528 = vmax.f32 %v5464, 0.0
    %v5529 = vmax.f32 %v5465, 0.0
    %v5530 = vmax.f32 %v5466, 0.0
    %v5531 = vmax.f32 %v5467, 0.0
    %v5532 = vmax.f32 %v5468, 0.0
    %v5533 = vmax.f32 %v5469, 0.0
    %v5534 = vmax.f32 %v5470, 0.0
    %v5535 = vmax.f32 %v5471, 0.0
    %v5536 = vmax.f32 %v5472, 0.0
    %v5537 = vmax.f32 %v5473, 0.0
    %v5538 = vmax.f32 %v5474, 0.0
    %v5539 = vmax.f32 %v5475, 0.0
    %v5540 = vmax.f32 %v5476, 0.0
    %v5541 = vmax.f32 %v5477, 0.0
    %v5542 = vmax.f32 %v5478, 0.0
    %v5543 = vmax.f32 %v5479, 0.0
    %v5544 = vmax.f32 %v5480, 0.0
    %v5545 = vmax.f32 %v5481, 0.0
    %v5546 = vmax.f32 %v5482, 0.0
    %v5547 = vmax.f32 %v5483, 0.0
    %v5548 = vmax.f32 %v5484, 0.0
    %v5549 = vmax.f32 %v5485, 0.0
    %v5550 = vmax.f32 %v5486, 0.0
    %v5551 = vmax.f32 %v5487, 0.0
    %v5552 = vmax.f32 %v5488, 0.0
    %v5553 = vmax.f32 %v5489, 0.0
    %v5554 = vmax.f32 %v5490, 0.0
    %v5615 = vrot.slane %v5491, 7
    %v5616 = vrot.slane %v5492, 7
    %v5617 = vsel %vm189, %v5615, %v5616
    %v5618 = vrot.slane %v5493, 7
    %v5619 = vsel %vm189, %v5616, %v5618
    %v5620 = vrot.slane %v5494, 7
    %v5621 = vsel %vm189, %v5618, %v5620
    %v5622 = vrot.slane %v5495, 7
    %v5623 = vsel %vm189, %v5620, %v5622
    %v5624 = vrot.slane %v5496, 7
    %v5625 = vsel %vm189, %v5622, %v5624
    %v5626 = vrot.slane %v5497, 7
    %v5627 = vsel %vm189, %v5624, %v5626
    %v5628 = vrot.slane %v5498, 7
    %v5629 = vsel %vm189, %v5626, %v5628
    %v5630 = vrot.slane %v5499, 7
    %v5631 = vsel %vm189, %v5628, %v5630
    %v5632 = vrot.slane %v5500, 7
    %v5633 = vsel %vm189, %v5630, %v5632
    %v5634 = vrot.slane %v5501, 7
    %v5635 = vsel %vm189, %v5632, %v5634
    %v5636 = vrot.slane %v5502, 7
    %v5637 = vsel %vm189, %v5634, %v5636
    %v5638 = vrot.slane %v5503, 7
    %v5639 = vsel %vm189, %v5636, %v5638
    %v5640 = vrot.slane %v5504, 7
    %v5641 = vsel %vm189, %v5638, %v5640
    %v5642 = vrot.slane %v5505, 7
    %v5643 = vsel %vm189, %v5640, %v5642
    %v5644 = vrot.slane %v5506, 7
    %v5645 = vsel %vm189, %v5642, %v5644
    %v5646 = vrot.slane %v5507, 7
    %v5647 = vsel %vm189, %v5644, %v5646
    %v5648 = vrot.slane %v5508, 7
    %v5649 = vsel %vm189, %v5646, %v5648
    %v5650 = vrot.slane %v5509, 7
    %v5651 = vsel %vm189, %v5648, %v5650
    %v5652 = vrot.slane %v5510, 7
    %v5653 = vsel %vm189, %v5650, %v5652
    %v5654 = vrot.slane %v5511, 7
    %v5655 = vsel %vm189, %v5652, %v5654
    %v5656 = vrot.slane %v5512, 7
    %v5657 = vsel %vm189, %v5654, %v5656
    %v5658 = vrot.slane %v5513, 7
    %v5659 = vsel %vm189, %v5656, %v5658
    %v5660 = vrot.slane %v5514, 7
    %v5661 = vsel %vm189, %v5658, %v5660
    %v5662 = vrot.slane %v5515, 7
    %v5663 = vsel %vm189, %v5660, %v5662
    %v5664 = vrot.slane %v5516, 7
    %v5665 = vsel %vm189, %v5662, %v5664
    %v5666 = vrot.slane %v5517, 7
    %v5667 = vsel %vm189, %v5664, %v5666
    %v5668 = vrot.slane %v5518, 7
    %v5669 = vsel %vm189, %v5666, %v5668
    %v5670 = vrot.slane %v5519, 7
    %v5671 = vsel %vm189, %v5668, %v5670
    %v5672 = vrot.slane %v5520, 7
    %v5673 = vsel %vm189, %v5670, %v5672
    %v5674 = vrot.slane %v5523, 7
    %v5675 = vrot.slane %v5524, 7
    %v5676 = vsel %vm189, %v5674, %v5675
    %v5677 = vrot.slane %v5525, 7
    %v5678 = vsel %vm189, %v5675, %v5677
    %v5679 = vrot.slane %v5526, 7
    %v5680 = vsel %vm189, %v5677, %v5679
    %v5681 = vrot.slane %v5527, 7
    %v5682 = vsel %vm189, %v5679, %v5681
    %v5683 = vrot.slane %v5528, 7
    %v5684 = vsel %vm189, %v5681, %v5683
    %v5685 = vrot.slane %v5529, 7
    %v5686 = vsel %vm189, %v5683, %v5685
    %v5687 = vrot.slane %v5530, 7
    %v5688 = vsel %vm189, %v5685, %v5687
    %v5689 = vrot.slane %v5531, 7
    %v5690 = vsel %vm189, %v5687, %v5689
    %v5691 = vrot.slane %v5532, 7
    %v5692 = vsel %vm189, %v5689, %v5691
    %v5693 = vrot.slane %v5533, 7
    %v5694 = vsel %vm189, %v5691, %v5693
    %v5695 = vrot.slane %v5534, 7
    %v5696 = vsel %vm189, %v5693, %v5695
    %v5697 = vrot.slane %v5535, 7
    %v5698 = vsel %vm189, %v5695, %v5697
    %v5699 = vrot.slane %v5536, 7
    %v5700 = vsel %vm189, %v5697, %v5699
    %v5701 = vrot.slane %v5537, 7
    %v5702 = vsel %vm189, %v5699, %v5701
    %v5703 = vrot.slane %v5538, 7
    %v5704 = vsel %vm189, %v5701, %v5703
    %v5705 = vrot.slane %v5539, 7
    %v5706 = vsel %vm189, %v5703, %v5705
    %v5707 = vrot.slane %v5540, 7
    %v5708 = vsel %vm189, %v5705, %v5707
    %v5709 = vrot.slane %v5541, 7
    %v5710 = vsel %vm189, %v5707, %v5709
    %v5711 = vrot.slane %v5542, 7
    %v5712 = vsel %vm189, %v5709, %v5711
    %v5713 = vrot.slane %v5543, 7
    %v5714 = vsel %vm189, %v5711, %v5713
    %v5715 = vrot.slane %v5544, 7
    %v5716 = vsel %vm189, %v5713, %v5715
    %v5717 = vrot.slane %v5545, 7
    %v5718 = vsel %vm189, %v5715, %v5717
    %v5719 = vrot.slane %v5546, 7
    %v5720 = vsel %vm189, %v5717, %v5719
    %v5721 = vrot.slane %v5547, 7
    %v5722 = vsel %vm189, %v5719, %v5721
    %v5723 = vrot.slane %v5548, 7
    %v5724 = vsel %vm189, %v5721, %v5723
    %v5725 = vrot.slane %v5549, 7
    %v5726 = vsel %vm189, %v5723, %v5725
    %v5727 = vrot.slane %v5550, 7
    %v5728 = vsel %vm189, %v5725, %v5727
    %v5729 = vrot.slane %v5551, 7
    %v5730 = vsel %vm189, %v5727, %v5729
    %v5731 = vrot.slane %v5552, 7
    %v5732 = vsel %vm189, %v5729, %v5731
    %v5793 = vsel %vm189, 0.0, %v5615
    %v5794 = vsel %vm189, 0.0, %v5674
    %5796 = vset.pattern.permute.xlu0 0
    %5797 = vperm.xlu0 %5796, %v97
    %v5798 = vpop.permute.xlu0 %5797
    %5801 = vset.pattern.permute.xlu0 0
    %5802 = vperm.xlu0 %5801, %v98
    %v5803 = vpop.permute.xlu0 %5802
    %5806 = vset.pattern.permute.xlu0 0
    %5807 = vperm.xlu0 %5806, %v99
    %v5808 = vpop.permute.xlu0 %5807
    %5811 = vset.pattern.permute.xlu0 0
    %5812 = vperm.xlu0 %5811, %v100
    %v5813 = vpop.permute.xlu0 %5812
    %5816 = vset.pattern.permute.xlu0 0
    %5817 = vperm.xlu0 %5816, %v101
    %v5818 = vpop.permute.xlu0 %5817
    %5821 = vset.pattern.permute.xlu0 0
    %5822 = vperm.xlu0 %5821, %v102
    %v5823 = vpop.permute.xlu0 %5822
    %5826 = vset.pattern.permute.xlu0 0
    %5827 = vperm.xlu0 %5826, %v103
    %v5828 = vpop.permute.xlu0 %5827
    %5831 = vset.pattern.permute.xlu0 0
    %5832 = vperm.xlu0 %5831, %v104
    %v5833 = vpop.permute.xlu0 %5832
    %5836 = vset.pattern.permute.xlu0 0
    %5837 = vperm.xlu0 %5836, %v105
    %v5838 = vpop.permute.xlu0 %5837
    %5841 = vset.pattern.permute.xlu0 0
    %5842 = vperm.xlu0 %5841, %v106
    %v5843 = vpop.permute.xlu0 %5842
    %5846 = vset.pattern.permute.xlu0 0
    %5847 = vperm.xlu0 %5846, %v107
    %v5848 = vpop.permute.xlu0 %5847
    %5851 = vset.pattern.permute.xlu0 0
    %5852 = vperm.xlu0 %5851, %v108
    %v5853 = vpop.permute.xlu0 %5852
    %5856 = vset.pattern.permute.xlu0 0
    %5857 = vperm.xlu0 %5856, %v109
    %v5858 = vpop.permute.xlu0 %5857
    %5861 = vset.pattern.permute.xlu0 0
    %5862 = vperm.xlu0 %5861, %v110
    %v5863 = vpop.permute.xlu0 %5862
    %5866 = vset.pattern.permute.xlu0 0
    %5867 = vperm.xlu0 %5866, %v111
    %v5868 = vpop.permute.xlu0 %5867
    %5871 = vset.pattern.permute.xlu0 0
    %5872 = vperm.xlu0 %5871, %v112
    %v5873 = vpop.permute.xlu0 %5872
    %5876 = vset.pattern.permute.xlu0 0
    %5877 = vperm.xlu0 %5876, %v113
    %v5878 = vpop.permute.xlu0 %5877
    %5881 = vset.pattern.permute.xlu0 0
    %5882 = vperm.xlu0 %5881, %v114
    %v5883 = vpop.permute.xlu0 %5882
    %5886 = vset.pattern.permute.xlu0 0
    %5887 = vperm.xlu0 %5886, %v115
    %v5888 = vpop.permute.xlu0 %5887
    %5891 = vset.pattern.permute.xlu0 0
    %5892 = vperm.xlu0 %5891, %v116
    %v5893 = vpop.permute.xlu0 %5892
    %5896 = vset.pattern.permute.xlu0 0
    %5897 = vperm.xlu0 %5896, %v117
    %v5898 = vpop.permute.xlu0 %5897
    %5901 = vset.pattern.permute.xlu0 0
    %5902 = vperm.xlu0 %5901, %v118
    %v5903 = vpop.permute.xlu0 %5902
    %5906 = vset.pattern.permute.xlu0 0
    %5907 = vperm.xlu0 %5906, %v119
    %v5908 = vpop.permute.xlu0 %5907
    %5911 = vset.pattern.permute.xlu0 0
    %5912 = vperm.xlu0 %5911, %v120
    %v5913 = vpop.permute.xlu0 %5912
    %5916 = vset.pattern.permute.xlu0 0
    %5917 = vperm.xlu0 %5916, %v121
    %v5918 = vpop.permute.xlu0 %5917
    %5921 = vset.pattern.permute.xlu0 0
    %5922 = vperm.xlu0 %5921, %v122
    %v5923 = vpop.permute.xlu0 %5922
    %5926 = vset.pattern.permute.xlu0 0
    %5927 = vperm.xlu0 %5926, %v123
    %v5928 = vpop.permute.xlu0 %5927
    %5931 = vset.pattern.permute.xlu0 0
    %5932 = vperm.xlu0 %5931, %v124
    %v5933 = vpop.permute.xlu0 %5932
    %5936 = vset.pattern.permute.xlu0 0
    %5937 = vperm.xlu0 %5936, %v125
    %v5938 = vpop.permute.xlu0 %5937
    %5941 = vset.pattern.permute.xlu0 0
    %5942 = vperm.xlu0 %5941, %v126
    %v5943 = vpop.permute.xlu0 %5942
    %5946 = vset.pattern.permute.xlu0 0
    %5947 = vperm.xlu0 %5946, %v127
    %v5948 = vpop.permute.xlu0 %5947
    %5951 = vset.pattern.permute.xlu0 0
    %5952 = vperm.xlu0 %5951, %v128
    %v5953 = vpop.permute.xlu0 %5952
    %v5955 = vmul.f32 %v5798, 0.0
    %v5956 = vmul.f32 %v5803, 0.0
    %v5957 = vmul.f32 %v5793, %v5808
    %v5958 = vmul.f32 %v5617, %v5813
    %v5959 = vmul.f32 %v5619, %v5818
    %v5960 = vmul.f32 %v5621, %v5823
    %v5961 = vmul.f32 %v5623, %v5828
    %v5962 = vmul.f32 %v5625, %v5833
    %v5963 = vmul.f32 %v5627, %v5838
    %v5964 = vmul.f32 %v5629, %v5843
    %v5965 = vmul.f32 %v5631, %v5848
    %v5966 = vmul.f32 %v5633, %v5853
    %v5967 = vmul.f32 %v5635, %v5858
    %v5968 = vmul.f32 %v5637, %v5863
    %v5969 = vmul.f32 %v5639, %v5868
    %v5970 = vmul.f32 %v5641, %v5873
    %v5971 = vmul.f32 %v5643, %v5878
    %v5972 = vmul.f32 %v5645, %v5883
    %v5973 = vmul.f32 %v5647, %v5888
    %v5974 = vmul.f32 %v5649, %v5893
    %v5975 = vmul.f32 %v5651, %v5898
    %v5976 = vmul.f32 %v5653, %v5903
    %v5977 = vmul.f32 %v5655, %v5908
    %v5978 = vmul.f32 %v5657, %v5913
    %v5979 = vmul.f32 %v5659, %v5918
    %v5980 = vmul.f32 %v5661, %v5923
    %v5981 = vmul.f32 %v5663, %v5928
    %v5982 = vmul.f32 %v5665, %v5933
    %v5983 = vmul.f32 %v5667, %v5938
    %v5984 = vmul.f32 %v5669, %v5943
    %v5985 = vmul.f32 %v5671, %v5948
    %v5986 = vmul.f32 %v5673, %v5953
    %v5987 = vmul.f32 %v5794, %v5808
    %v5988 = vmul.f32 %v5676, %v5813
    %v5989 = vmul.f32 %v5678, %v5818
    %v5990 = vmul.f32 %v5680, %v5823
    %v5991 = vmul.f32 %v5682, %v5828
    %v5992 = vmul.f32 %v5684, %v5833
    %v5993 = vmul.f32 %v5686, %v5838
    %v5994 = vmul.f32 %v5688, %v5843
    %v5995 = vmul.f32 %v5690, %v5848
    %v5996 = vmul.f32 %v5692, %v5853
    %v5997 = vmul.f32 %v5694, %v5858
    %v5998 = vmul.f32 %v5696, %v5863
    %v5999 = vmul.f32 %v5698, %v5868
    %v6000 = vmul.f32 %v5700, %v5873
    %v6001 = vmul.f32 %v5702, %v5878
    %v6002 = vmul.f32 %v5704, %v5883
    %v6003 = vmul.f32 %v5706, %v5888
    %v6004 = vmul.f32 %v5708, %v5893
    %v6005 = vmul.f32 %v5710, %v5898
    %v6006 = vmul.f32 %v5712, %v5903
    %v6007 = vmul.f32 %v5714, %v5908
    %v6008 = vmul.f32 %v5716, %v5913
    %v6009 = vmul.f32 %v5718, %v5918
    %v6010 = vmul.f32 %v5720, %v5923
    %v6011 = vmul.f32 %v5722, %v5928
    %v6012 = vmul.f32 %v5724, %v5933
    %v6013 = vmul.f32 %v5726, %v5938
    %v6014 = vmul.f32 %v5728, %v5943
    %v6015 = vmul.f32 %v5730, %v5948
    %v6016 = vmul.f32 %v5732, %v5953
    %v6017 = vpack.c.bf16 %v5956, %v5955
    %v6018 = vpack.c.bf16 %v5958, %v5957
    %v6019 = vpack.c.bf16 %v5960, %v5959
    %v6020 = vpack.c.bf16 %v5962, %v5961
    %v6021 = vpack.c.bf16 %v5964, %v5963
    %v6022 = vpack.c.bf16 %v5966, %v5965
    %v6023 = vpack.c.bf16 %v5968, %v5967
    %v6024 = vpack.c.bf16 %v5970, %v5969
    %v6025 = vpack.c.bf16 %v5972, %v5971
    %v6026 = vpack.c.bf16 %v5974, %v5973
    %v6027 = vpack.c.bf16 %v5976, %v5975
    %v6028 = vpack.c.bf16 %v5978, %v5977
    %v6029 = vpack.c.bf16 %v5980, %v5979
    %v6030 = vpack.c.bf16 %v5982, %v5981
    %v6031 = vpack.c.bf16 %v5984, %v5983
    %v6032 = vpack.c.bf16 %v5986, %v5985
    %v6033 = vpack.c.bf16 %v5988, %v5987
    %v6034 = vpack.c.bf16 %v5990, %v5989
    %v6035 = vpack.c.bf16 %v5992, %v5991
    %v6036 = vpack.c.bf16 %v5994, %v5993
    %v6037 = vpack.c.bf16 %v5996, %v5995
    %v6038 = vpack.c.bf16 %v5998, %v5997
    %v6039 = vpack.c.bf16 %v6000, %v5999
    %v6040 = vpack.c.bf16 %v6002, %v6001
    %v6041 = vpack.c.bf16 %v6004, %v6003
    %v6042 = vpack.c.bf16 %v6006, %v6005
    %v6043 = vpack.c.bf16 %v6008, %v6007
    %v6044 = vpack.c.bf16 %v6010, %v6009
    %v6045 = vpack.c.bf16 %v6012, %v6011
    %v6046 = vpack.c.bf16 %v6014, %v6013
    %v6047 = vpack.c.bf16 %v6016, %v6015
    %vm6048 = vcmask 261120
    %6049 = vst.msk [vmem:[#allocation2] sm:$0xff] %vm6048, %v6017
    %6050 = vst.msk [vmem:[#allocation2 + $0x18] sm:$0xff] %vm6048, %v6018
    %6051 = vst.msk [vmem:[#allocation2 + $0x30] sm:$0xff] %vm6048, %v6019
    %6052 = vst.msk [vmem:[#allocation2 + $0x48] sm:$0xff] %vm6048, %v6020
    %6053 = vst.msk [vmem:[#allocation2 + $0x60] sm:$0xff] %vm6048, %v6021
    %6054 = vst.msk [vmem:[#allocation2 + $0x78] sm:$0xff] %vm6048, %v6022
    %6055 = vst.msk [vmem:[#allocation2 + $0x90] sm:$0xff] %vm6048, %v6023
    %6056 = vst.msk [vmem:[#allocation2 + $0xa8] sm:$0xff] %vm6048, %v6024
    %6057 = vst.msk [vmem:[#allocation2 + $0xc0] sm:$0xff] %vm6048, %v6025
    %6058 = vst.msk [vmem:[#allocation2 + $0xd8] sm:$0xff] %vm6048, %v6026
    %6059 = vst.msk [vmem:[#allocation2 + $0xf0] sm:$0xff] %vm6048, %v6027
    %6060 = vst.msk [vmem:[#allocation2 + $0x108] sm:$0xff] %vm6048, %v6028
    %6061 = vst.msk [vmem:[#allocation2 + $0x120] sm:$0xff] %vm6048, %v6029
    %6062 = vst.msk [vmem:[#allocation2 + $0x138] sm:$0xff] %vm6048, %v6030
    %6063 = vst.msk [vmem:[#allocation2 + $0x150] sm:$0xff] %vm6048, %v6031
    %6064 = vst.msk [vmem:[#allocation2 + $0x168] sm:$0xff] %vm6048, %v6032
    %6065 = vst.msk [vmem:[#allocation2 + $0x180] sm:$0xff] %vm6048, %v6017
    %6066 = vst.msk [vmem:[#allocation2 + $0x198] sm:$0xff] %vm6048, %v6033
    %6067 = vst.msk [vmem:[#allocation2 + $0x1b0] sm:$0xff] %vm6048, %v6034
    %6068 = vst.msk [vmem:[#allocation2 + $0x1c8] sm:$0xff] %vm6048, %v6035
    %6069 = vst.msk [vmem:[#allocation2 + $0x1e0] sm:$0xff] %vm6048, %v6036
    %6070 = vst.msk [vmem:[#allocation2 + $0x1f8] sm:$0xff] %vm6048, %v6037
    %6071 = vst.msk [vmem:[#allocation2 + $0x210] sm:$0xff] %vm6048, %v6038
    %6072 = vst.msk [vmem:[#allocation2 + $0x228] sm:$0xff] %vm6048, %v6039
    %6073 = vst.msk [vmem:[#allocation2 + $0x240] sm:$0xff] %vm6048, %v6040
    %6074 = vst.msk [vmem:[#allocation2 + $0x258] sm:$0xff] %vm6048, %v6041
    %6075 = vst.msk [vmem:[#allocation2 + $0x270] sm:$0xff] %vm6048, %v6042
    %6076 = vst.msk [vmem:[#allocation2 + $0x288] sm:$0xff] %vm6048, %v6043
    %6077 = vst.msk [vmem:[#allocation2 + $0x2a0] sm:$0xff] %vm6048, %v6044
    %6078 = vst.msk [vmem:[#allocation2 + $0x2b8] sm:$0xff] %vm6048, %v6045
    %6079 = vst.msk [vmem:[#allocation2 + $0x2d0] sm:$0xff] %vm6048, %v6046
    %6080 = vst.msk [vmem:[#allocation2 + $0x2e8] sm:$0xff] %vm6048, %v6047
    %v6081 = vld [vmem:[%s870] sm:$0xff]
    %v6082 = vld [vmem:[%s870 + $0x8] sm:$0xff]
    %v6083 = vld [vmem:[%s870 + $0x10] sm:$0xff]
    %v6084 = vld [vmem:[%s870 + $0x18] sm:$0xff]
    %v6085 = vld [vmem:[%s870 + $0x20] sm:$0xff]
    %v6086 = vld [vmem:[%s870 + $0x28] sm:$0xff]
    %v6087 = vld [vmem:[%s870 + $0x30] sm:$0xff]
    %v6088 = vld [vmem:[%s870 + $0x38] sm:$0xff]
    %v6089 = vld [vmem:[%s870 + $0x40] sm:$0xff]
    %v6090 = vld [vmem:[%s870 + $0x48] sm:$0xff]
    %v6091 = vld [vmem:[%s870 + $0x50] sm:$0xff]
    %v6092 = vld [vmem:[%s870 + $0x58] sm:$0xff]
    %v6093 = vld [vmem:[%s870 + $0x60] sm:$0xff]
    %v6094 = vld [vmem:[%s870 + $0x68] sm:$0xff]
    %v6095 = vld [vmem:[%s870 + $0x70] sm:$0xff]
    %v6096 = vld [vmem:[%s870 + $0x78] sm:$0xff]
    %v6097 = vld [vmem:[%s870 + $0x80] sm:$0xff]
    %v6098 = vld [vmem:[%s870 + $0x88] sm:$0xff]
    %v6099 = vld [vmem:[%s870 + $0x90] sm:$0xff]
    %v6100 = vld [vmem:[%s870 + $0x98] sm:$0xff]
    %v6101 = vld [vmem:[%s870 + $0xa0] sm:$0xff]
    %v6102 = vld [vmem:[%s870 + $0xa8] sm:$0xff]
    %v6103 = vld [vmem:[%s870 + $0xb0] sm:$0xff]
    %v6104 = vld [vmem:[%s870 + $0xb8] sm:$0xff]
    %v6105 = vld [vmem:[%s870 + $0xc0] sm:$0xff]
    %v6106 = vld [vmem:[%s870 + $0xc8] sm:$0xff]
    %v6107 = vld [vmem:[%s870 + $0xd0] sm:$0xff]
    %v6108 = vld [vmem:[%s870 + $0xd8] sm:$0xff]
    %v6109 = vld [vmem:[%s870 + $0xe0] sm:$0xff]
    %v6110 = vld [vmem:[%s870 + $0xe8] sm:$0xff]
    %v6111 = vld [vmem:[%s870 + $0xf0] sm:$0xff]
    %v6112 = vld [vmem:[%s870 + $0xf8] sm:$0xff]
    %6114 = vset.pattern.permute.xlu0 0
    %6115 = vperm.xlu0 %6114, %v6081
    %v6116 = vpop.permute.xlu0 %6115
    %6119 = vset.pattern.permute.xlu0 0
    %6120 = vperm.xlu0 %6119, %v6082
    %v6121 = vpop.permute.xlu0 %6120
    %6124 = vset.pattern.permute.xlu0 0
    %6125 = vperm.xlu0 %6124, %v6083
    %v6126 = vpop.permute.xlu0 %6125
    %6129 = vset.pattern.permute.xlu0 0
    %6130 = vperm.xlu0 %6129, %v6084
    %v6131 = vpop.permute.xlu0 %6130
    %6134 = vset.pattern.permute.xlu0 0
    %6135 = vperm.xlu0 %6134, %v6085
    %v6136 = vpop.permute.xlu0 %6135
    %6139 = vset.pattern.permute.xlu0 0
    %6140 = vperm.xlu0 %6139, %v6086
    %v6141 = vpop.permute.xlu0 %6140
    %6144 = vset.pattern.permute.xlu0 0
    %6145 = vperm.xlu0 %6144, %v6087
    %v6146 = vpop.permute.xlu0 %6145
    %6149 = vset.pattern.permute.xlu0 0
    %6150 = vperm.xlu0 %6149, %v6088
    %v6151 = vpop.permute.xlu0 %6150
    %6154 = vset.pattern.permute.xlu0 0
    %6155 = vperm.xlu0 %6154, %v6089
    %v6156 = vpop.permute.xlu0 %6155
    %6159 = vset.pattern.permute.xlu0 0
    %6160 = vperm.xlu0 %6159, %v6090
    %v6161 = vpop.permute.xlu0 %6160
    %6164 = vset.pattern.permute.xlu0 0
    %6165 = vperm.xlu0 %6164, %v6091
    %v6166 = vpop.permute.xlu0 %6165
    %6169 = vset.pattern.permute.xlu0 0
    %6170 = vperm.xlu0 %6169, %v6092
    %v6171 = vpop.permute.xlu0 %6170
    %6174 = vset.pattern.permute.xlu0 0
    %6175 = vperm.xlu0 %6174, %v6093
    %v6176 = vpop.permute.xlu0 %6175
    %6179 = vset.pattern.permute.xlu0 0
    %6180 = vperm.xlu0 %6179, %v6094
    %v6181 = vpop.permute.xlu0 %6180
    %6184 = vset.pattern.permute.xlu0 0
    %6185 = vperm.xlu0 %6184, %v6095
    %v6186 = vpop.permute.xlu0 %6185
    %6189 = vset.pattern.permute.xlu0 0
    %6190 = vperm.xlu0 %6189, %v6096
    %v6191 = vpop.permute.xlu0 %6190
    %6194 = vset.pattern.permute.xlu0 0
    %6195 = vperm.xlu0 %6194, %v6097
    %v6196 = vpop.permute.xlu0 %6195
    %6199 = vset.pattern.permute.xlu0 0
    %6200 = vperm.xlu0 %6199, %v6098
    %v6201 = vpop.permute.xlu0 %6200
    %6204 = vset.pattern.permute.xlu0 0
    %6205 = vperm.xlu0 %6204, %v6099
    %v6206 = vpop.permute.xlu0 %6205
    %6209 = vset.pattern.permute.xlu0 0
    %6210 = vperm.xlu0 %6209, %v6100
    %v6211 = vpop.permute.xlu0 %6210
    %6214 = vset.pattern.permute.xlu0 0
    %6215 = vperm.xlu0 %6214, %v6101
    %v6216 = vpop.permute.xlu0 %6215
    %6219 = vset.pattern.permute.xlu0 0
    %6220 = vperm.xlu0 %6219, %v6102
    %v6221 = vpop.permute.xlu0 %6220
    %6224 = vset.pattern.permute.xlu0 0
    %6225 = vperm.xlu0 %6224, %v6103
    %v6226 = vpop.permute.xlu0 %6225
    %6229 = vset.pattern.permute.xlu0 0
    %6230 = vperm.xlu0 %6229, %v6104
    %v6231 = vpop.permute.xlu0 %6230
    %6234 = vset.pattern.permute.xlu0 0
    %6235 = vperm.xlu0 %6234, %v6105
    %v6236 = vpop.permute.xlu0 %6235
    %6239 = vset.pattern.permute.xlu0 0
    %6240 = vperm.xlu0 %6239, %v6106
    %v6241 = vpop.permute.xlu0 %6240
    %6244 = vset.pattern.permute.xlu0 0
    %6245 = vperm.xlu0 %6244, %v6107
    %v6246 = vpop.permute.xlu0 %6245
    %6249 = vset.pattern.permute.xlu0 0
    %6250 = vperm.xlu0 %6249, %v6108
    %v6251 = vpop.permute.xlu0 %6250
    %6254 = vset.pattern.permute.xlu0 0
    %6255 = vperm.xlu0 %6254, %v6109
    %v6256 = vpop.permute.xlu0 %6255
    %6259 = vset.pattern.permute.xlu0 0
    %6260 = vperm.xlu0 %6259, %v6110
    %v6261 = vpop.permute.xlu0 %6260
    %6264 = vset.pattern.permute.xlu0 0
    %6265 = vperm.xlu0 %6264, %v6111
    %v6266 = vpop.permute.xlu0 %6265
    %6269 = vset.pattern.permute.xlu0 0
    %6270 = vperm.xlu0 %6269, %v6112
    %v6271 = vpop.permute.xlu0 %6270
    %v6273 = vmul.f32 %v6116, 0.0
    %v6274 = vmul.f32 %v6121, 0.0
    %v6275 = vmul.f32 %v5491, %v6126
    %v6276 = vmul.f32 %v5492, %v6131
    %v6277 = vmul.f32 %v5493, %v6136
    %v6278 = vmul.f32 %v5494, %v6141
    %v6279 = vmul.f32 %v5495, %v6146
    %v6280 = vmul.f32 %v5496, %v6151
    %v6281 = vmul.f32 %v5497, %v6156
    %v6282 = vmul.f32 %v5498, %v6161
    %v6283 = vmul.f32 %v5499, %v6166
    %v6284 = vmul.f32 %v5500, %v6171
    %v6285 = vmul.f32 %v5501, %v6176
    %v6286 = vmul.f32 %v5502, %v6181
    %v6287 = vmul.f32 %v5503, %v6186
    %v6288 = vmul.f32 %v5504, %v6191
    %v6289 = vmul.f32 %v5505, %v6196
    %v6290 = vmul.f32 %v5506, %v6201
    %v6291 = vmul.f32 %v5507, %v6206
    %v6292 = vmul.f32 %v5508, %v6211
    %v6293 = vmul.f32 %v5509, %v6216
    %v6294 = vmul.f32 %v5510, %v6221
    %v6295 = vmul.f32 %v5511, %v6226
    %v6296 = vmul.f32 %v5512, %v6231
    %v6297 = vmul.f32 %v5513, %v6236
    %v6298 = vmul.f32 %v5514, %v6241
    %v6299 = vmul.f32 %v5515, %v6246
    %v6300 = vmul.f32 %v5516, %v6251
    %v6301 = vmul.f32 %v5517, %v6256
    %v6302 = vmul.f32 %v5518, %v6261
    %v6303 = vmul.f32 %v5519, %v6266
    %v6304 = vmul.f32 %v5520, %v6271
    %v6305 = vmul.f32 %v5523, %v6126
    %v6306 = vmul.f32 %v5524, %v6131
    %v6307 = vmul.f32 %v5525, %v6136
    %v6308 = vmul.f32 %v5526, %v6141
    %v6309 = vmul.f32 %v5527, %v6146
    %v6310 = vmul.f32 %v5528, %v6151
    %v6311 = vmul.f32 %v5529, %v6156
    %v6312 = vmul.f32 %v5530, %v6161
    %v6313 = vmul.f32 %v5531, %v6166
    %v6314 = vmul.f32 %v5532, %v6171
    %v6315 = vmul.f32 %v5533, %v6176
    %v6316 = vmul.f32 %v5534, %v6181
    %v6317 = vmul.f32 %v5535, %v6186
    %v6318 = vmul.f32 %v5536, %v6191
    %v6319 = vmul.f32 %v5537, %v6196
    %v6320 = vmul.f32 %v5538, %v6201
    %v6321 = vmul.f32 %v5539, %v6206
    %v6322 = vmul.f32 %v5540, %v6211
    %v6323 = vmul.f32 %v5541, %v6216
    %v6324 = vmul.f32 %v5542, %v6221
    %v6325 = vmul.f32 %v5543, %v6226
    %v6326 = vmul.f32 %v5544, %v6231
    %v6327 = vmul.f32 %v5545, %v6236
    %v6328 = vmul.f32 %v5546, %v6241
    %v6329 = vmul.f32 %v5547, %v6246
    %v6330 = vmul.f32 %v5548, %v6251
    %v6331 = vmul.f32 %v5549, %v6256
    %v6332 = vmul.f32 %v5550, %v6261
    %v6333 = vmul.f32 %v5551, %v6266
    %v6334 = vmul.f32 %v5552, %v6271
    %v6335 = vpack.c.bf16 %v6274, %v6273
    %v6336 = vpack.c.bf16 %v6276, %v6275
    %v6337 = vpack.c.bf16 %v6278, %v6277
    %v6338 = vpack.c.bf16 %v6280, %v6279
    %v6339 = vpack.c.bf16 %v6282, %v6281
    %v6340 = vpack.c.bf16 %v6284, %v6283
    %v6341 = vpack.c.bf16 %v6286, %v6285
    %v6342 = vpack.c.bf16 %v6288, %v6287
    %v6343 = vpack.c.bf16 %v6290, %v6289
    %v6344 = vpack.c.bf16 %v6292, %v6291
    %v6345 = vpack.c.bf16 %v6294, %v6293
    %v6346 = vpack.c.bf16 %v6296, %v6295
    %v6347 = vpack.c.bf16 %v6298, %v6297
    %v6348 = vpack.c.bf16 %v6300, %v6299
    %v6349 = vpack.c.bf16 %v6302, %v6301
    %v6350 = vpack.c.bf16 %v6304, %v6303
    %v6351 = vpack.c.bf16 %v6306, %v6305
    %v6352 = vpack.c.bf16 %v6308, %v6307
    %v6353 = vpack.c.bf16 %v6310, %v6309
    %v6354 = vpack.c.bf16 %v6312, %v6311
    %v6355 = vpack.c.bf16 %v6314, %v6313
    %v6356 = vpack.c.bf16 %v6316, %v6315
    %v6357 = vpack.c.bf16 %v6318, %v6317
    %v6358 = vpack.c.bf16 %v6320, %v6319
    %v6359 = vpack.c.bf16 %v6322, %v6321
    %v6360 = vpack.c.bf16 %v6324, %v6323
    %v6361 = vpack.c.bf16 %v6326, %v6325
    %v6362 = vpack.c.bf16 %v6328, %v6327
    %v6363 = vpack.c.bf16 %v6330, %v6329
    %v6364 = vpack.c.bf16 %v6332, %v6331
    %v6365 = vpack.c.bf16 %v6334, %v6333
    %6397 = vrot.lane.b32.xlu0 %v6335, 32
    %v6398 = vpop.permute.xlu0 %6397
    %6399 = vrot.lane.b32.xlu0 %v6336, 32
    %v6400 = vpop.permute.xlu0 %6399
    %6401 = vrot.lane.b32.xlu0 %v6337, 32
    %v6402 = vpop.permute.xlu0 %6401
    %6403 = vrot.lane.b32.xlu0 %v6338, 32
    %v6404 = vpop.permute.xlu0 %6403
    %6405 = vrot.lane.b32.xlu0 %v6339, 32
    %v6406 = vpop.permute.xlu0 %6405
    %6407 = vrot.lane.b32.xlu0 %v6340, 32
    %v6408 = vpop.permute.xlu0 %6407
    %6409 = vrot.lane.b32.xlu0 %v6341, 32
    %v6410 = vpop.permute.xlu0 %6409
    %6411 = vrot.lane.b32.xlu0 %v6342, 32
    %v6412 = vpop.permute.xlu0 %6411
    %6413 = vrot.lane.b32.xlu0 %v6343, 32
    %v6414 = vpop.permute.xlu0 %6413
    %6415 = vrot.lane.b32.xlu0 %v6344, 32
    %v6416 = vpop.permute.xlu0 %6415
    %6417 = vrot.lane.b32.xlu0 %v6345, 32
    %v6418 = vpop.permute.xlu0 %6417
    %6419 = vrot.lane.b32.xlu0 %v6346, 32
    %v6420 = vpop.permute.xlu0 %6419
    %6421 = vrot.lane.b32.xlu0 %v6347, 32
    %v6422 = vpop.permute.xlu0 %6421
    %6423 = vrot.lane.b32.xlu0 %v6348, 32
    %v6424 = vpop.permute.xlu0 %6423
    %6425 = vrot.lane.b32.xlu0 %v6349, 32
    %v6426 = vpop.permute.xlu0 %6425
    %6427 = vrot.lane.b32.xlu0 %v6350, 32
    %v6428 = vpop.permute.xlu0 %6427
    %6429 = vrot.lane.b32.xlu0 %v6351, 32
    %v6430 = vpop.permute.xlu0 %6429
    %6431 = vrot.lane.b32.xlu0 %v6352, 32
    %v6432 = vpop.permute.xlu0 %6431
    %6433 = vrot.lane.b32.xlu0 %v6353, 32
    %v6434 = vpop.permute.xlu0 %6433
    %6435 = vrot.lane.b32.xlu0 %v6354, 32
    %v6436 = vpop.permute.xlu0 %6435
    %6437 = vrot.lane.b32.xlu0 %v6355, 32
    %v6438 = vpop.permute.xlu0 %6437
    %6439 = vrot.lane.b32.xlu0 %v6356, 32
    %v6440 = vpop.permute.xlu0 %6439
    %6441 = vrot.lane.b32.xlu0 %v6357, 32
    %v6442 = vpop.permute.xlu0 %6441
    %6443 = vrot.lane.b32.xlu0 %v6358, 32
    %v6444 = vpop.permute.xlu0 %6443
    %6445 = vrot.lane.b32.xlu0 %v6359, 32
    %v6446 = vpop.permute.xlu0 %6445
    %6447 = vrot.lane.b32.xlu0 %v6360, 32
    %v6448 = vpop.permute.xlu0 %6447
    %6449 = vrot.lane.b32.xlu0 %v6361, 32
    %v6450 = vpop.permute.xlu0 %6449
    %6451 = vrot.lane.b32.xlu0 %v6362, 32
    %v6452 = vpop.permute.xlu0 %6451
    %6453 = vrot.lane.b32.xlu0 %v6363, 32
    %v6454 = vpop.permute.xlu0 %6453
    %6455 = vrot.lane.b32.xlu0 %v6364, 32
    %v6456 = vpop.permute.xlu0 %6455
    %6457 = vrot.lane.b32.xlu0 %v6365, 32
    %v6458 = vpop.permute.xlu0 %6457
    %vm6490 = vcmask 523520
    %6491 = vst.msk [vmem:[#allocation2] sm:$0xff] %vm6490, %v6398
    %6492 = vst.msk [vmem:[#allocation2 + $0x18] sm:$0xff] %vm6490, %v6400
    %6493 = vst.msk [vmem:[#allocation2 + $0x30] sm:$0xff] %vm6490, %v6402
    %6494 = vst.msk [vmem:[#allocation2 + $0x48] sm:$0xff] %vm6490, %v6404
    %6495 = vst.msk [vmem:[#allocation2 + $0x60] sm:$0xff] %vm6490, %v6406
    %6496 = vst.msk [vmem:[#allocation2 + $0x78] sm:$0xff] %vm6490, %v6408
    %6497 = vst.msk [vmem:[#allocation2 + $0x90] sm:$0xff] %vm6490, %v6410
    %6498 = vst.msk [vmem:[#allocation2 + $0xa8] sm:$0xff] %vm6490, %v6412
    %6499 = vst.msk [vmem:[#allocation2 + $0xc0] sm:$0xff] %vm6490, %v6414
    %6500 = vst.msk [vmem:[#allocation2 + $0xd8] sm:$0xff] %vm6490, %v6416
    %6501 = vst.msk [vmem:[#allocation2 + $0xf0] sm:$0xff] %vm6490, %v6418
    %6502 = vst.msk [vmem:[#allocation2 + $0x108] sm:$0xff] %vm6490, %v6420
    %6503 = vst.msk [vmem:[#allocation2 + $0x120] sm:$0xff] %vm6490, %v6422
    %6504 = vst.msk [vmem:[#allocation2 + $0x138] sm:$0xff] %vm6490, %v6424
    %6505 = vst.msk [vmem:[#allocation2 + $0x150] sm:$0xff] %vm6490, %v6426
    %6506 = vst.msk [vmem:[#allocation2 + $0x168] sm:$0xff] %vm6490, %v6428
    %6507 = vst.msk [vmem:[#allocation2 + $0x180] sm:$0xff] %vm6490, %v6398
    %6508 = vst.msk [vmem:[#allocation2 + $0x198] sm:$0xff] %vm6490, %v6430
    %6509 = vst.msk [vmem:[#allocation2 + $0x1b0] sm:$0xff] %vm6490, %v6432
    %6510 = vst.msk [vmem:[#allocation2 + $0x1c8] sm:$0xff] %vm6490, %v6434
    %6511 = vst.msk [vmem:[#allocation2 + $0x1e0] sm:$0xff] %vm6490, %v6436
    %6512 = vst.msk [vmem:[#allocation2 + $0x1f8] sm:$0xff] %vm6490, %v6438
    %6513 = vst.msk [vmem:[#allocation2 + $0x210] sm:$0xff] %vm6490, %v6440
    %6514 = vst.msk [vmem:[#allocation2 + $0x228] sm:$0xff] %vm6490, %v6442
    %6515 = vst.msk [vmem:[#allocation2 + $0x240] sm:$0xff] %vm6490, %v6444
    %6516 = vst.msk [vmem:[#allocation2 + $0x258] sm:$0xff] %vm6490, %v6446
    %6517 = vst.msk [vmem:[#allocation2 + $0x270] sm:$0xff] %vm6490, %v6448
    %6518 = vst.msk [vmem:[#allocation2 + $0x288] sm:$0xff] %vm6490, %v6450
    %6519 = vst.msk [vmem:[#allocation2 + $0x2a0] sm:$0xff] %vm6490, %v6452
    %6520 = vst.msk [vmem:[#allocation2 + $0x2b8] sm:$0xff] %vm6490, %v6454
    %6521 = vst.msk [vmem:[#allocation2 + $0x2d0] sm:$0xff] %vm6490, %v6456
    %6522 = vst.msk [vmem:[#allocation2 + $0x2e8] sm:$0xff] %vm6490, %v6458
    %v6523 = vld [vmem:[%s1403] sm:$0xff]
    %v6524 = vld [vmem:[%s1403 + $0x8] sm:$0xff]
    %v6525 = vld [vmem:[%s1403 + $0x10] sm:$0xff]
    %v6526 = vld [vmem:[%s1403 + $0x18] sm:$0xff]
    %v6527 = vld [vmem:[%s1403 + $0x20] sm:$0xff]
    %v6528 = vld [vmem:[%s1403 + $0x28] sm:$0xff]
    %v6529 = vld [vmem:[%s1403 + $0x30] sm:$0xff]
    %v6530 = vld [vmem:[%s1403 + $0x38] sm:$0xff]
    %v6531 = vld [vmem:[%s1403 + $0x40] sm:$0xff]
    %v6532 = vld [vmem:[%s1403 + $0x48] sm:$0xff]
    %v6533 = vld [vmem:[%s1403 + $0x50] sm:$0xff]
    %v6534 = vld [vmem:[%s1403 + $0x58] sm:$0xff]
    %v6535 = vld [vmem:[%s1403 + $0x60] sm:$0xff]
    %v6536 = vld [vmem:[%s1403 + $0x68] sm:$0xff]
    %v6537 = vld [vmem:[%s1403 + $0x70] sm:$0xff]
    %v6538 = vld [vmem:[%s1403 + $0x78] sm:$0xff]
    %v6539 = vld [vmem:[%s1403 + $0x80] sm:$0xff]
    %v6540 = vld [vmem:[%s1403 + $0x88] sm:$0xff]
    %v6541 = vld [vmem:[%s1403 + $0x90] sm:$0xff]
    %v6542 = vld [vmem:[%s1403 + $0x98] sm:$0xff]
    %v6543 = vld [vmem:[%s1403 + $0xa0] sm:$0xff]
    %v6544 = vld [vmem:[%s1403 + $0xa8] sm:$0xff]
    %v6545 = vld [vmem:[%s1403 + $0xb0] sm:$0xff]
    %v6546 = vld [vmem:[%s1403 + $0xb8] sm:$0xff]
    %v6547 = vld [vmem:[%s1403 + $0xc0] sm:$0xff]
    %v6548 = vld [vmem:[%s1403 + $0xc8] sm:$0xff]
    %v6549 = vld [vmem:[%s1403 + $0xd0] sm:$0xff]
    %v6550 = vld [vmem:[%s1403 + $0xd8] sm:$0xff]
    %v6551 = vld [vmem:[%s1403 + $0xe0] sm:$0xff]
    %v6552 = vld [vmem:[%s1403 + $0xe8] sm:$0xff]
    %v6553 = vld [vmem:[%s1403 + $0xf0] sm:$0xff]
    %v6554 = vld [vmem:[%s1403 + $0xf8] sm:$0xff]
    %v6557 = vrot.slane %v5491, 1
    %v6558 = vrot.slane %v5492, 1
    %v6559 = vsel %vm1438, %v6557, %v6558
    %v6560 = vrot.slane %v5493, 1
    %v6561 = vsel %vm1438, %v6558, %v6560
    %v6562 = vrot.slane %v5494, 1
    %v6563 = vsel %vm1438, %v6560, %v6562
    %v6564 = vrot.slane %v5495, 1
    %v6565 = vsel %vm1438, %v6562, %v6564
    %v6566 = vrot.slane %v5496, 1
    %v6567 = vsel %vm1438, %v6564, %v6566
    %v6568 = vrot.slane %v5497, 1
    %v6569 = vsel %vm1438, %v6566, %v6568
    %v6570 = vrot.slane %v5498, 1
    %v6571 = vsel %vm1438, %v6568, %v6570
    %v6572 = vrot.slane %v5499, 1
    %v6573 = vsel %vm1438, %v6570, %v6572
    %v6574 = vrot.slane %v5500, 1
    %v6575 = vsel %vm1438, %v6572, %v6574
    %v6576 = vrot.slane %v5501, 1
    %v6577 = vsel %vm1438, %v6574, %v6576
    %v6578 = vrot.slane %v5502, 1
    %v6579 = vsel %vm1438, %v6576, %v6578
    %v6580 = vrot.slane %v5503, 1
    %v6581 = vsel %vm1438, %v6578, %v6580
    %v6582 = vrot.slane %v5504, 1
    %v6583 = vsel %vm1438, %v6580, %v6582
    %v6584 = vrot.slane %v5505, 1
    %v6585 = vsel %vm1438, %v6582, %v6584
    %v6586 = vrot.slane %v5506, 1
    %v6587 = vsel %vm1438, %v6584, %v6586
    %v6588 = vrot.slane %v5507, 1
    %v6589 = vsel %vm1438, %v6586, %v6588
    %v6590 = vrot.slane %v5508, 1
    %v6591 = vsel %vm1438, %v6588, %v6590
    %v6592 = vrot.slane %v5509, 1
    %v6593 = vsel %vm1438, %v6590, %v6592
    %v6594 = vrot.slane %v5510, 1
    %v6595 = vsel %vm1438, %v6592, %v6594
    %v6596 = vrot.slane %v5511, 1
    %v6597 = vsel %vm1438, %v6594, %v6596
    %v6598 = vrot.slane %v5512, 1
    %v6599 = vsel %vm1438, %v6596, %v6598
    %v6600 = vrot.slane %v5513, 1
    %v6601 = vsel %vm1438, %v6598, %v6600
    %v6602 = vrot.slane %v5514, 1
    %v6603 = vsel %vm1438, %v6600, %v6602
    %v6604 = vrot.slane %v5515, 1
    %v6605 = vsel %vm1438, %v6602, %v6604
    %v6606 = vrot.slane %v5516, 1
    %v6607 = vsel %vm1438, %v6604, %v6606
    %v6608 = vrot.slane %v5517, 1
    %v6609 = vsel %vm1438, %v6606, %v6608
    %v6610 = vrot.slane %v5518, 1
    %v6611 = vsel %vm1438, %v6608, %v6610
    %v6612 = vrot.slane %v5519, 1
    %v6613 = vsel %vm1438, %v6610, %v6612
    %v6614 = vrot.slane %v5520, 1
    %v6615 = vsel %vm1438, %v6612, %v6614
    %v6616 = vrot.slane %v5521, 1
    %v6617 = vsel %vm1438, %v6614, %v6616
    %v6618 = vrot.slane %v5523, 1
    %v6619 = vrot.slane %v5524, 1
    %v6620 = vsel %vm1438, %v6618, %v6619
    %v6621 = vrot.slane %v5525, 1
    %v6622 = vsel %vm1438, %v6619, %v6621
    %v6623 = vrot.slane %v5526, 1
    %v6624 = vsel %vm1438, %v6621, %v6623
    %v6625 = vrot.slane %v5527, 1
    %v6626 = vsel %vm1438, %v6623, %v6625
    %v6627 = vrot.slane %v5528, 1
    %v6628 = vsel %vm1438, %v6625, %v6627
    %v6629 = vrot.slane %v5529, 1
    %v6630 = vsel %vm1438, %v6627, %v6629
    %v6631 = vrot.slane %v5530, 1
    %v6632 = vsel %vm1438, %v6629, %v6631
    %v6633 = vrot.slane %v5531, 1
    %v6634 = vsel %vm1438, %v6631, %v6633
    %v6635 = vrot.slane %v5532, 1
    %v6636 = vsel %vm1438, %v6633, %v6635
    %v6637 = vrot.slane %v5533, 1
    %v6638 = vsel %vm1438, %v6635, %v6637
    %v6639 = vrot.slane %v5534, 1
    %v6640 = vsel %vm1438, %v6637, %v6639
    %v6641 = vrot.slane %v5535, 1
    %v6642 = vsel %vm1438, %v6639, %v6641
    %v6643 = vrot.slane %v5536, 1
    %v6644 = vsel %vm1438, %v6641, %v6643
    %v6645 = vrot.slane %v5537, 1
    %v6646 = vsel %vm1438, %v6643, %v6645
    %v6647 = vrot.slane %v5538, 1
    %v6648 = vsel %vm1438, %v6645, %v6647
    %v6649 = vrot.slane %v5539, 1
    %v6650 = vsel %vm1438, %v6647, %v6649
    %v6651 = vrot.slane %v5540, 1
    %v6652 = vsel %vm1438, %v6649, %v6651
    %v6653 = vrot.slane %v5541, 1
    %v6654 = vsel %vm1438, %v6651, %v6653
    %v6655 = vrot.slane %v5542, 1
    %v6656 = vsel %vm1438, %v6653, %v6655
    %v6657 = vrot.slane %v5543, 1
    %v6658 = vsel %vm1438, %v6655, %v6657
    %v6659 = vrot.slane %v5544, 1
    %v6660 = vsel %vm1438, %v6657, %v6659
    %v6661 = vrot.slane %v5545, 1
    %v6662 = vsel %vm1438, %v6659, %v6661
    %v6663 = vrot.slane %v5546, 1
    %v6664 = vsel %vm1438, %v6661, %v6663
    %v6665 = vrot.slane %v5547, 1
    %v6666 = vsel %vm1438, %v6663, %v6665
    %v6667 = vrot.slane %v5548, 1
    %v6668 = vsel %vm1438, %v6665, %v6667
    %v6669 = vrot.slane %v5549, 1
    %v6670 = vsel %vm1438, %v6667, %v6669
    %v6671 = vrot.slane %v5550, 1
    %v6672 = vsel %vm1438, %v6669, %v6671
    %v6673 = vrot.slane %v5551, 1
    %v6674 = vsel %vm1438, %v6671, %v6673
    %v6675 = vrot.slane %v5552, 1
    %v6676 = vsel %vm1438, %v6673, %v6675
    %v6677 = vrot.slane %v5553, 1
    %v6678 = vsel %vm1438, %v6675, %v6677
    %v6741 = vsel %vm1438, 0.0, %v6557
    %v6742 = vsel %vm1438, 0.0, %v6618
    %6744 = vset.pattern.permute.xlu0 0
    %6745 = vperm.xlu0 %6744, %v6523
    %v6746 = vpop.permute.xlu0 %6745
    %6749 = vset.pattern.permute.xlu0 0
    %6750 = vperm.xlu0 %6749, %v6524
    %v6751 = vpop.permute.xlu0 %6750
    %6754 = vset.pattern.permute.xlu0 0
    %6755 = vperm.xlu0 %6754, %v6525
    %v6756 = vpop.permute.xlu0 %6755
    %6759 = vset.pattern.permute.xlu0 0
    %6760 = vperm.xlu0 %6759, %v6526
    %v6761 = vpop.permute.xlu0 %6760
    %6764 = vset.pattern.permute.xlu0 0
    %6765 = vperm.xlu0 %6764, %v6527
    %v6766 = vpop.permute.xlu0 %6765
    %6769 = vset.pattern.permute.xlu0 0
    %6770 = vperm.xlu0 %6769, %v6528
    %v6771 = vpop.permute.xlu0 %6770
    %6774 = vset.pattern.permute.xlu0 0
    %6775 = vperm.xlu0 %6774, %v6529
    %v6776 = vpop.permute.xlu0 %6775
    %6779 = vset.pattern.permute.xlu0 0
    %6780 = vperm.xlu0 %6779, %v6530
    %v6781 = vpop.permute.xlu0 %6780
    %6784 = vset.pattern.permute.xlu0 0
    %6785 = vperm.xlu0 %6784, %v6531
    %v6786 = vpop.permute.xlu0 %6785
    %6789 = vset.pattern.permute.xlu0 0
    %6790 = vperm.xlu0 %6789, %v6532
    %v6791 = vpop.permute.xlu0 %6790
    %6794 = vset.pattern.permute.xlu0 0
    %6795 = vperm.xlu0 %6794, %v6533
    %v6796 = vpop.permute.xlu0 %6795
    %6799 = vset.pattern.permute.xlu0 0
    %6800 = vperm.xlu0 %6799, %v6534
    %v6801 = vpop.permute.xlu0 %6800
    %6804 = vset.pattern.permute.xlu0 0
    %6805 = vperm.xlu0 %6804, %v6535
    %v6806 = vpop.permute.xlu0 %6805
    %6809 = vset.pattern.permute.xlu0 0
    %6810 = vperm.xlu0 %6809, %v6536
    %v6811 = vpop.permute.xlu0 %6810
    %6814 = vset.pattern.permute.xlu0 0
    %6815 = vperm.xlu0 %6814, %v6537
    %v6816 = vpop.permute.xlu0 %6815
    %6819 = vset.pattern.permute.xlu0 0
    %6820 = vperm.xlu0 %6819, %v6538
    %v6821 = vpop.permute.xlu0 %6820
    %6824 = vset.pattern.permute.xlu0 0
    %6825 = vperm.xlu0 %6824, %v6539
    %v6826 = vpop.permute.xlu0 %6825
    %6829 = vset.pattern.permute.xlu0 0
    %6830 = vperm.xlu0 %6829, %v6540
    %v6831 = vpop.permute.xlu0 %6830
    %6834 = vset.pattern.permute.xlu0 0
    %6835 = vperm.xlu0 %6834, %v6541
    %v6836 = vpop.permute.xlu0 %6835
    %6839 = vset.pattern.permute.xlu0 0
    %6840 = vperm.xlu0 %6839, %v6542
    %v6841 = vpop.permute.xlu0 %6840
    %6844 = vset.pattern.permute.xlu0 0
    %6845 = vperm.xlu0 %6844, %v6543
    %v6846 = vpop.permute.xlu0 %6845
    %6849 = vset.pattern.permute.xlu0 0
    %6850 = vperm.xlu0 %6849, %v6544
    %v6851 = vpop.permute.xlu0 %6850
    %6854 = vset.pattern.permute.xlu0 0
    %6855 = vperm.xlu0 %6854, %v6545
    %v6856 = vpop.permute.xlu0 %6855
    %6859 = vset.pattern.permute.xlu0 0
    %6860 = vperm.xlu0 %6859, %v6546
    %v6861 = vpop.permute.xlu0 %6860
    %6864 = vset.pattern.permute.xlu0 0
    %6865 = vperm.xlu0 %6864, %v6547
    %v6866 = vpop.permute.xlu0 %6865
    %6869 = vset.pattern.permute.xlu0 0
    %6870 = vperm.xlu0 %6869, %v6548
    %v6871 = vpop.permute.xlu0 %6870
    %6874 = vset.pattern.permute.xlu0 0
    %6875 = vperm.xlu0 %6874, %v6549
    %v6876 = vpop.permute.xlu0 %6875
    %6879 = vset.pattern.permute.xlu0 0
    %6880 = vperm.xlu0 %6879, %v6550
    %v6881 = vpop.permute.xlu0 %6880
    %6884 = vset.pattern.permute.xlu0 0
    %6885 = vperm.xlu0 %6884, %v6551
    %v6886 = vpop.permute.xlu0 %6885
    %6889 = vset.pattern.permute.xlu0 0
    %6890 = vperm.xlu0 %6889, %v6552
    %v6891 = vpop.permute.xlu0 %6890
    %6894 = vset.pattern.permute.xlu0 0
    %6895 = vperm.xlu0 %6894, %v6553
    %v6896 = vpop.permute.xlu0 %6895
    %6899 = vset.pattern.permute.xlu0 0
    %6900 = vperm.xlu0 %6899, %v6554
    %v6901 = vpop.permute.xlu0 %6900
    %v6903 = vmul.f32 %v6746, 0.0
    %v6904 = vmul.f32 %v6741, %v6751
    %v6905 = vmul.f32 %v6559, %v6756
    %v6906 = vmul.f32 %v6561, %v6761
    %v6907 = vmul.f32 %v6563, %v6766
    %v6908 = vmul.f32 %v6565, %v6771
    %v6909 = vmul.f32 %v6567, %v6776
    %v6910 = vmul.f32 %v6569, %v6781
    %v6911 = vmul.f32 %v6571, %v6786
    %v6912 = vmul.f32 %v6573, %v6791
    %v6913 = vmul.f32 %v6575, %v6796
    %v6914 = vmul.f32 %v6577, %v6801
    %v6915 = vmul.f32 %v6579, %v6806
    %v6916 = vmul.f32 %v6581, %v6811
    %v6917 = vmul.f32 %v6583, %v6816
    %v6918 = vmul.f32 %v6585, %v6821
    %v6919 = vmul.f32 %v6587, %v6826
    %v6920 = vmul.f32 %v6589, %v6831
    %v6921 = vmul.f32 %v6591, %v6836
    %v6922 = vmul.f32 %v6593, %v6841
    %v6923 = vmul.f32 %v6595, %v6846
    %v6924 = vmul.f32 %v6597, %v6851
    %v6925 = vmul.f32 %v6599, %v6856
    %v6926 = vmul.f32 %v6601, %v6861
    %v6927 = vmul.f32 %v6603, %v6866
    %v6928 = vmul.f32 %v6605, %v6871
    %v6929 = vmul.f32 %v6607, %v6876
    %v6930 = vmul.f32 %v6609, %v6881
    %v6931 = vmul.f32 %v6611, %v6886
    %v6932 = vmul.f32 %v6613, %v6891
    %v6933 = vmul.f32 %v6615, %v6896
    %v6934 = vmul.f32 %v6617, %v6901
    %v6935 = vmul.f32 %v6742, %v6751
    %v6936 = vmul.f32 %v6620, %v6756
    %v6937 = vmul.f32 %v6622, %v6761
    %v6938 = vmul.f32 %v6624, %v6766
    %v6939 = vmul.f32 %v6626, %v6771
    %v6940 = vmul.f32 %v6628, %v6776
    %v6941 = vmul.f32 %v6630, %v6781
    %v6942 = vmul.f32 %v6632, %v6786
    %v6943 = vmul.f32 %v6634, %v6791
    %v6944 = vmul.f32 %v6636, %v6796
    %v6945 = vmul.f32 %v6638, %v6801
    %v6946 = vmul.f32 %v6640, %v6806
    %v6947 = vmul.f32 %v6642, %v6811
    %v6948 = vmul.f32 %v6644, %v6816
    %v6949 = vmul.f32 %v6646, %v6821
    %v6950 = vmul.f32 %v6648, %v6826
    %v6951 = vmul.f32 %v6650, %v6831
    %v6952 = vmul.f32 %v6652, %v6836
    %v6953 = vmul.f32 %v6654, %v6841
    %v6954 = vmul.f32 %v6656, %v6846
    %v6955 = vmul.f32 %v6658, %v6851
    %v6956 = vmul.f32 %v6660, %v6856
    %v6957 = vmul.f32 %v6662, %v6861
    %v6958 = vmul.f32 %v6664, %v6866
    %v6959 = vmul.f32 %v6666, %v6871
    %v6960 = vmul.f32 %v6668, %v6876
    %v6961 = vmul.f32 %v6670, %v6881
    %v6962 = vmul.f32 %v6672, %v6886
    %v6963 = vmul.f32 %v6674, %v6891
    %v6964 = vmul.f32 %v6676, %v6896
    %v6965 = vmul.f32 %v6678, %v6901
    %v6966 = vpack.c.bf16 %v6904, %v6903
    %v6967 = vpack.c.bf16 %v6906, %v6905
    %v6968 = vpack.c.bf16 %v6908, %v6907
    %v6969 = vpack.c.bf16 %v6910, %v6909
    %v6970 = vpack.c.bf16 %v6912, %v6911
    %v6971 = vpack.c.bf16 %v6914, %v6913
    %v6972 = vpack.c.bf16 %v6916, %v6915
    %v6973 = vpack.c.bf16 %v6918, %v6917
    %v6974 = vpack.c.bf16 %v6920, %v6919
    %v6975 = vpack.c.bf16 %v6922, %v6921
    %v6976 = vpack.c.bf16 %v6924, %v6923
    %v6977 = vpack.c.bf16 %v6926, %v6925
    %v6978 = vpack.c.bf16 %v6928, %v6927
    %v6979 = vpack.c.bf16 %v6930, %v6929
    %v6980 = vpack.c.bf16 %v6932, %v6931
    %v6981 = vpack.c.bf16 %v6934, %v6933
    %v6982 = vpack.c.bf16 %v6935, %v6903
    %v6983 = vpack.c.bf16 %v6937, %v6936
    %v6984 = vpack.c.bf16 %v6939, %v6938
    %v6985 = vpack.c.bf16 %v6941, %v6940
    %v6986 = vpack.c.bf16 %v6943, %v6942
    %v6987 = vpack.c.bf16 %v6945, %v6944
    %v6988 = vpack.c.bf16 %v6947, %v6946
    %v6989 = vpack.c.bf16 %v6949, %v6948
    %v6990 = vpack.c.bf16 %v6951, %v6950
    %v6991 = vpack.c.bf16 %v6953, %v6952
    %v6992 = vpack.c.bf16 %v6955, %v6954
    %v6993 = vpack.c.bf16 %v6957, %v6956
    %v6994 = vpack.c.bf16 %v6959, %v6958
    %v6995 = vpack.c.bf16 %v6961, %v6960
    %v6996 = vpack.c.bf16 %v6963, %v6962
    %v6997 = vpack.c.bf16 %v6965, %v6964
    %7030 = vrot.lane.b32.xlu0 %v6966, 64
    %v7031 = vpop.permute.xlu0 %7030
    %7032 = vrot.lane.b32.xlu0 %v6967, 64
    %v7033 = vpop.permute.xlu0 %7032
    %7034 = vrot.lane.b32.xlu0 %v6968, 64
    %v7035 = vpop.permute.xlu0 %7034
    %7036 = vrot.lane.b32.xlu0 %v6969, 64
    %v7037 = vpop.permute.xlu0 %7036
    %7038 = vrot.lane.b32.xlu0 %v6970, 64
    %v7039 = vpop.permute.xlu0 %7038
    %7040 = vrot.lane.b32.xlu0 %v6971, 64
    %v7041 = vpop.permute.xlu0 %7040
    %7042 = vrot.lane.b32.xlu0 %v6972, 64
    %v7043 = vpop.permute.xlu0 %7042
    %7044 = vrot.lane.b32.xlu0 %v6973, 64
    %v7045 = vpop.permute.xlu0 %7044
    %7046 = vrot.lane.b32.xlu0 %v6974, 64
    %v7047 = vpop.permute.xlu0 %7046
    %7048 = vrot.lane.b32.xlu0 %v6975, 64
    %v7049 = vpop.permute.xlu0 %7048
    %7050 = vrot.lane.b32.xlu0 %v6976, 64
    %v7051 = vpop.permute.xlu0 %7050
    %7052 = vrot.lane.b32.xlu0 %v6977, 64
    %v7053 = vpop.permute.xlu0 %7052
    %7054 = vrot.lane.b32.xlu0 %v6978, 64
    %v7055 = vpop.permute.xlu0 %7054
    %7056 = vrot.lane.b32.xlu0 %v6979, 64
    %v7057 = vpop.permute.xlu0 %7056
    %7058 = vrot.lane.b32.xlu0 %v6980, 64
    %v7059 = vpop.permute.xlu0 %7058
    %7060 = vrot.lane.b32.xlu0 %v6981, 64
    %v7061 = vpop.permute.xlu0 %7060
    %7062 = vrot.lane.b32.xlu0 %v6982, 64
    %v7063 = vpop.permute.xlu0 %7062
    %7064 = vrot.lane.b32.xlu0 %v6983, 64
    %v7065 = vpop.permute.xlu0 %7064
    %7066 = vrot.lane.b32.xlu0 %v6984, 64
    %v7067 = vpop.permute.xlu0 %7066
    %7068 = vrot.lane.b32.xlu0 %v6985, 64
    %v7069 = vpop.permute.xlu0 %7068
    %7070 = vrot.lane.b32.xlu0 %v6986, 64
    %v7071 = vpop.permute.xlu0 %7070
    %7072 = vrot.lane.b32.xlu0 %v6987, 64
    %v7073 = vpop.permute.xlu0 %7072
    %7074 = vrot.lane.b32.xlu0 %v6988, 64
    %v7075 = vpop.permute.xlu0 %7074
    %7076 = vrot.lane.b32.xlu0 %v6989, 64
    %v7077 = vpop.permute.xlu0 %7076
    %7078 = vrot.lane.b32.xlu0 %v6990, 64
    %v7079 = vpop.permute.xlu0 %7078
    %7080 = vrot.lane.b32.xlu0 %v6991, 64
    %v7081 = vpop.permute.xlu0 %7080
    %7082 = vrot.lane.b32.xlu0 %v6992, 64
    %v7083 = vpop.permute.xlu0 %7082
    %7084 = vrot.lane.b32.xlu0 %v6993, 64
    %v7085 = vpop.permute.xlu0 %7084
    %7086 = vrot.lane.b32.xlu0 %v6994, 64
    %v7087 = vpop.permute.xlu0 %7086
    %7088 = vrot.lane.b32.xlu0 %v6995, 64
    %v7089 = vpop.permute.xlu0 %7088
    %7090 = vrot.lane.b32.xlu0 %v6996, 64
    %v7091 = vpop.permute.xlu0 %7090
    %7092 = vrot.lane.b32.xlu0 %v6997, 64
    %v7093 = vpop.permute.xlu0 %7092
    %vm7126 = vcmask 785920
    %7127 = vst.msk [vmem:[#allocation2] sm:$0xff] %vm7126, %v7031
    %7128 = vst.msk [vmem:[#allocation2 + $0x18] sm:$0xff] %vm7126, %v7033
    %7129 = vst.msk [vmem:[#allocation2 + $0x30] sm:$0xff] %vm7126, %v7035
    %7130 = vst.msk [vmem:[#allocation2 + $0x48] sm:$0xff] %vm7126, %v7037
    %7131 = vst.msk [vmem:[#allocation2 + $0x60] sm:$0xff] %vm7126, %v7039
    %7132 = vst.msk [vmem:[#allocation2 + $0x78] sm:$0xff] %vm7126, %v7041
    %7133 = vst.msk [vmem:[#allocation2 + $0x90] sm:$0xff] %vm7126, %v7043
    %7134 = vst.msk [vmem:[#allocation2 + $0xa8] sm:$0xff] %vm7126, %v7045
    %7135 = vst.msk [vmem:[#allocation2 + $0xc0] sm:$0xff] %vm7126, %v7047
    %7136 = vst.msk [vmem:[#allocation2 + $0xd8] sm:$0xff] %vm7126, %v7049
    %7137 = vst.msk [vmem:[#allocation2 + $0xf0] sm:$0xff] %vm7126, %v7051
    %7138 = vst.msk [vmem:[#allocation2 + $0x108] sm:$0xff] %vm7126, %v7053
    %7139 = vst.msk [vmem:[#allocation2 + $0x120] sm:$0xff] %vm7126, %v7055
    %7140 = vst.msk [vmem:[#allocation2 + $0x138] sm:$0xff] %vm7126, %v7057
    %7141 = vst.msk [vmem:[#allocation2 + $0x150] sm:$0xff] %vm7126, %v7059
    %7142 = vst.msk [vmem:[#allocation2 + $0x168] sm:$0xff] %vm7126, %v7061
    %7143 = vst.msk [vmem:[#allocation2 + $0x180] sm:$0xff] %vm7126, %v7063
    %7144 = vst.msk [vmem:[#allocation2 + $0x198] sm:$0xff] %vm7126, %v7065
    %7145 = vst.msk [vmem:[#allocation2 + $0x1b0] sm:$0xff] %vm7126, %v7067
    %7146 = vst.msk [vmem:[#allocation2 + $0x1c8] sm:$0xff] %vm7126, %v7069
    %7147 = vst.msk [vmem:[#allocation2 + $0x1e0] sm:$0xff] %vm7126, %v7071
    %7148 = vst.msk [vmem:[#allocation2 + $0x1f8] sm:$0xff] %vm7126, %v7073
    %7149 = vst.msk [vmem:[#allocation2 + $0x210] sm:$0xff] %vm7126, %v7075
    %7150 = vst.msk [vmem:[#allocation2 + $0x228] sm:$0xff] %vm7126, %v7077
    %7151 = vst.msk [vmem:[#allocation2 + $0x240] sm:$0xff] %vm7126, %v7079
    %7152 = vst.msk [vmem:[#allocation2 + $0x258] sm:$0xff] %vm7126, %v7081
    %7153 = vst.msk [vmem:[#allocation2 + $0x270] sm:$0xff] %vm7126, %v7083
    %7154 = vst.msk [vmem:[#allocation2 + $0x288] sm:$0xff] %vm7126, %v7085
    %7155 = vst.msk [vmem:[#allocation2 + $0x2a0] sm:$0xff] %vm7126, %v7087
    %7156 = vst.msk [vmem:[#allocation2 + $0x2b8] sm:$0xff] %vm7126, %v7089
    %7157 = vst.msk [vmem:[#allocation2 + $0x2d0] sm:$0xff] %vm7126, %v7091
    %7158 = vst.msk [vmem:[#allocation2 + $0x2e8] sm:$0xff] %vm7126, %v7093
    %v7159 = vld [vmem:[%s2133] sm:$0xff]
    %v7160 = vld [vmem:[%s2133 + $0x8] sm:$0xff]
    %v7161 = vld [vmem:[%s2133 + $0x10] sm:$0xff]
    %v7162 = vld [vmem:[%s2133 + $0x18] sm:$0xff]
    %v7163 = vld [vmem:[%s2133 + $0x20] sm:$0xff]
    %v7164 = vld [vmem:[%s2133 + $0x28] sm:$0xff]
    %v7165 = vld [vmem:[%s2133 + $0x30] sm:$0xff]
    %v7166 = vld [vmem:[%s2133 + $0x38] sm:$0xff]
    %v7167 = vld [vmem:[%s2133 + $0x40] sm:$0xff]
    %v7168 = vld [vmem:[%s2133 + $0x48] sm:$0xff]
    %v7169 = vld [vmem:[%s2133 + $0x50] sm:$0xff]
    %v7170 = vld [vmem:[%s2133 + $0x58] sm:$0xff]
    %v7171 = vld [vmem:[%s2133 + $0x60] sm:$0xff]
    %v7172 = vld [vmem:[%s2133 + $0x68] sm:$0xff]
    %v7173 = vld [vmem:[%s2133 + $0x70] sm:$0xff]
    %v7174 = vld [vmem:[%s2133 + $0x78] sm:$0xff]
    %v7175 = vld [vmem:[%s2133 + $0x80] sm:$0xff]
    %v7176 = vld [vmem:[%s2133 + $0x88] sm:$0xff]
    %v7177 = vld [vmem:[%s2133 + $0x90] sm:$0xff]
    %v7178 = vld [vmem:[%s2133 + $0x98] sm:$0xff]
    %v7179 = vld [vmem:[%s2133 + $0xa0] sm:$0xff]
    %v7180 = vld [vmem:[%s2133 + $0xa8] sm:$0xff]
    %v7181 = vld [vmem:[%s2133 + $0xb0] sm:$0xff]
    %v7182 = vld [vmem:[%s2133 + $0xb8] sm:$0xff]
    %v7183 = vld [vmem:[%s2133 + $0xc0] sm:$0xff]
    %v7184 = vld [vmem:[%s2133 + $0xc8] sm:$0xff]
    %v7185 = vld [vmem:[%s2133 + $0xd0] sm:$0xff]
    %v7186 = vld [vmem:[%s2133 + $0xd8] sm:$0xff]
    %v7187 = vld [vmem:[%s2133 + $0xe0] sm:$0xff]
    %v7188 = vld [vmem:[%s2133 + $0xe8] sm:$0xff]
    %v7189 = vld [vmem:[%s2133 + $0xf0] sm:$0xff]
    %v7190 = vld [vmem:[%s2133 + $0xf8] sm:$0xff]
    %v7193 = vrot.slane %v5521, 7
    %v7194 = vsel %vm189, %v5672, %v7193
    %v7195 = vrot.slane %v5522, 7
    %v7196 = vsel %vm189, %v7193, %v7195
    %v7197 = vrot.slane %v5553, 7
    %v7198 = vsel %vm189, %v5731, %v7197
    %v7199 = vrot.slane %v5554, 7
    %v7200 = vsel %vm189, %v7197, %v7199
    %7206 = vset.pattern.permute.xlu0 0
    %7207 = vperm.xlu0 %7206, %v7159
    %v7208 = vpop.permute.xlu0 %7207
    %7211 = vset.pattern.permute.xlu0 0
    %7212 = vperm.xlu0 %7211, %v7160
    %v7213 = vpop.permute.xlu0 %7212
    %7216 = vset.pattern.permute.xlu0 0
    %7217 = vperm.xlu0 %7216, %v7161
    %v7218 = vpop.permute.xlu0 %7217
    %7221 = vset.pattern.permute.xlu0 0
    %7222 = vperm.xlu0 %7221, %v7162
    %v7223 = vpop.permute.xlu0 %7222
    %7226 = vset.pattern.permute.xlu0 0
    %7227 = vperm.xlu0 %7226, %v7163
    %v7228 = vpop.permute.xlu0 %7227
    %7231 = vset.pattern.permute.xlu0 0
    %7232 = vperm.xlu0 %7231, %v7164
    %v7233 = vpop.permute.xlu0 %7232
    %7236 = vset.pattern.permute.xlu0 0
    %7237 = vperm.xlu0 %7236, %v7165
    %v7238 = vpop.permute.xlu0 %7237
    %7241 = vset.pattern.permute.xlu0 0
    %7242 = vperm.xlu0 %7241, %v7166
    %v7243 = vpop.permute.xlu0 %7242
    %7246 = vset.pattern.permute.xlu0 0
    %7247 = vperm.xlu0 %7246, %v7167
    %v7248 = vpop.permute.xlu0 %7247
    %7251 = vset.pattern.permute.xlu0 0
    %7252 = vperm.xlu0 %7251, %v7168
    %v7253 = vpop.permute.xlu0 %7252
    %7256 = vset.pattern.permute.xlu0 0
    %7257 = vperm.xlu0 %7256, %v7169
    %v7258 = vpop.permute.xlu0 %7257
    %7261 = vset.pattern.permute.xlu0 0
    %7262 = vperm.xlu0 %7261, %v7170
    %v7263 = vpop.permute.xlu0 %7262
    %7266 = vset.pattern.permute.xlu0 0
    %7267 = vperm.xlu0 %7266, %v7171
    %v7268 = vpop.permute.xlu0 %7267
    %7271 = vset.pattern.permute.xlu0 0
    %7272 = vperm.xlu0 %7271, %v7172
    %v7273 = vpop.permute.xlu0 %7272
    %7276 = vset.pattern.permute.xlu0 0
    %7277 = vperm.xlu0 %7276, %v7173
    %v7278 = vpop.permute.xlu0 %7277
    %7281 = vset.pattern.permute.xlu0 0
    %7282 = vperm.xlu0 %7281, %v7174
    %v7283 = vpop.permute.xlu0 %7282
    %7286 = vset.pattern.permute.xlu0 0
    %7287 = vperm.xlu0 %7286, %v7175
    %v7288 = vpop.permute.xlu0 %7287
    %7291 = vset.pattern.permute.xlu0 0
    %7292 = vperm.xlu0 %7291, %v7176
    %v7293 = vpop.permute.xlu0 %7292
    %7296 = vset.pattern.permute.xlu0 0
    %7297 = vperm.xlu0 %7296, %v7177
    %v7298 = vpop.permute.xlu0 %7297
    %7301 = vset.pattern.permute.xlu0 0
    %7302 = vperm.xlu0 %7301, %v7178
    %v7303 = vpop.permute.xlu0 %7302
    %7306 = vset.pattern.permute.xlu0 0
    %7307 = vperm.xlu0 %7306, %v7179
    %v7308 = vpop.permute.xlu0 %7307
    %7311 = vset.pattern.permute.xlu0 0
    %7312 = vperm.xlu0 %7311, %v7180
    %v7313 = vpop.permute.xlu0 %7312
    %7316 = vset.pattern.permute.xlu0 0
    %7317 = vperm.xlu0 %7316, %v7181
    %v7318 = vpop.permute.xlu0 %7317
    %7321 = vset.pattern.permute.xlu0 0
    %7322 = vperm.xlu0 %7321, %v7182
    %v7323 = vpop.permute.xlu0 %7322
    %7326 = vset.pattern.permute.xlu0 0
    %7327 = vperm.xlu0 %7326, %v7183
    %v7328 = vpop.permute.xlu0 %7327
    %7331 = vset.pattern.permute.xlu0 0
    %7332 = vperm.xlu0 %7331, %v7184
    %v7333 = vpop.permute.xlu0 %7332
    %7336 = vset.pattern.permute.xlu0 0
    %7337 = vperm.xlu0 %7336, %v7185
    %v7338 = vpop.permute.xlu0 %7337
    %7341 = vset.pattern.permute.xlu0 0
    %7342 = vperm.xlu0 %7341, %v7186
    %v7343 = vpop.permute.xlu0 %7342
    %7346 = vset.pattern.permute.xlu0 0
    %7347 = vperm.xlu0 %7346, %v7187
    %v7348 = vpop.permute.xlu0 %7347
    %7351 = vset.pattern.permute.xlu0 0
    %7352 = vperm.xlu0 %7351, %v7188
    %v7353 = vpop.permute.xlu0 %7352
    %7356 = vset.pattern.permute.xlu0 0
    %7357 = vperm.xlu0 %7356, %v7189
    %v7358 = vpop.permute.xlu0 %7357
    %7361 = vset.pattern.permute.xlu0 0
    %7362 = vperm.xlu0 %7361, %v7190
    %v7363 = vpop.permute.xlu0 %7362
    %v7365 = vmul.f32 %v5793, %v7208
    %v7366 = vmul.f32 %v5617, %v7213
    %v7367 = vmul.f32 %v5619, %v7218
    %v7368 = vmul.f32 %v5621, %v7223
    %v7369 = vmul.f32 %v5623, %v7228
    %v7370 = vmul.f32 %v5625, %v7233
    %v7371 = vmul.f32 %v5627, %v7238
    %v7372 = vmul.f32 %v5629, %v7243
    %v7373 = vmul.f32 %v5631, %v7248
    %v7374 = vmul.f32 %v5633, %v7253
    %v7375 = vmul.f32 %v5635, %v7258
    %v7376 = vmul.f32 %v5637, %v7263
    %v7377 = vmul.f32 %v5639, %v7268
    %v7378 = vmul.f32 %v5641, %v7273
    %v7379 = vmul.f32 %v5643, %v7278
    %v7380 = vmul.f32 %v5645, %v7283
    %v7381 = vmul.f32 %v5647, %v7288
    %v7382 = vmul.f32 %v5649, %v7293
    %v7383 = vmul.f32 %v5651, %v7298
    %v7384 = vmul.f32 %v5653, %v7303
    %v7385 = vmul.f32 %v5655, %v7308
    %v7386 = vmul.f32 %v5657, %v7313
    %v7387 = vmul.f32 %v5659, %v7318
    %v7388 = vmul.f32 %v5661, %v7323
    %v7389 = vmul.f32 %v5663, %v7328
    %v7390 = vmul.f32 %v5665, %v7333
    %v7391 = vmul.f32 %v5667, %v7338
    %v7392 = vmul.f32 %v5669, %v7343
    %v7393 = vmul.f32 %v5671, %v7348
    %v7394 = vmul.f32 %v5673, %v7353
    %v7395 = vmul.f32 %v7194, %v7358
    %v7396 = vmul.f32 %v7196, %v7363
    %v7397 = vmul.f32 %v5794, %v7208
    %v7398 = vmul.f32 %v5676, %v7213
    %v7399 = vmul.f32 %v5678, %v7218
    %v7400 = vmul.f32 %v5680, %v7223
    %v7401 = vmul.f32 %v5682, %v7228
    %v7402 = vmul.f32 %v5684, %v7233
    %v7403 = vmul.f32 %v5686, %v7238
    %v7404 = vmul.f32 %v5688, %v7243
    %v7405 = vmul.f32 %v5690, %v7248
    %v7406 = vmul.f32 %v5692, %v7253
    %v7407 = vmul.f32 %v5694, %v7258
    %v7408 = vmul.f32 %v5696, %v7263
    %v7409 = vmul.f32 %v5698, %v7268
    %v7410 = vmul.f32 %v5700, %v7273
    %v7411 = vmul.f32 %v5702, %v7278
    %v7412 = vmul.f32 %v5704, %v7283
    %v7413 = vmul.f32 %v5706, %v7288
    %v7414 = vmul.f32 %v5708, %v7293
    %v7415 = vmul.f32 %v5710, %v7298
    %v7416 = vmul.f32 %v5712, %v7303
    %v7417 = vmul.f32 %v5714, %v7308
    %v7418 = vmul.f32 %v5716, %v7313
    %v7419 = vmul.f32 %v5718, %v7318
    %v7420 = vmul.f32 %v5720, %v7323
    %v7421 = vmul.f32 %v5722, %v7328
    %v7422 = vmul.f32 %v5724, %v7333
    %v7423 = vmul.f32 %v5726, %v7338
    %v7424 = vmul.f32 %v5728, %v7343
    %v7425 = vmul.f32 %v5730, %v7348
    %v7426 = vmul.f32 %v5732, %v7353
    %v7427 = vmul.f32 %v7198, %v7358
    %v7428 = vmul.f32 %v7200, %v7363
    %v7429 = vpack.c.bf16 %v7366, %v7365
    %v7430 = vpack.c.bf16 %v7368, %v7367
    %v7431 = vpack.c.bf16 %v7370, %v7369
    %v7432 = vpack.c.bf16 %v7372, %v7371
    %v7433 = vpack.c.bf16 %v7374, %v7373
    %v7434 = vpack.c.bf16 %v7376, %v7375
    %v7435 = vpack.c.bf16 %v7378, %v7377
    %v7436 = vpack.c.bf16 %v7380, %v7379
    %v7437 = vpack.c.bf16 %v7382, %v7381
    %v7438 = vpack.c.bf16 %v7384, %v7383
    %v7439 = vpack.c.bf16 %v7386, %v7385
    %v7440 = vpack.c.bf16 %v7388, %v7387
    %v7441 = vpack.c.bf16 %v7390, %v7389
    %v7442 = vpack.c.bf16 %v7392, %v7391
    %v7443 = vpack.c.bf16 %v7394, %v7393
    %v7444 = vpack.c.bf16 %v7396, %v7395
    %v7445 = vpack.c.bf16 %v7398, %v7397
    %v7446 = vpack.c.bf16 %v7400, %v7399
    %v7447 = vpack.c.bf16 %v7402, %v7401
    %v7448 = vpack.c.bf16 %v7404, %v7403
    %v7449 = vpack.c.bf16 %v7406, %v7405
    %v7450 = vpack.c.bf16 %v7408, %v7407
    %v7451 = vpack.c.bf16 %v7410, %v7409
    %v7452 = vpack.c.bf16 %v7412, %v7411
    %v7453 = vpack.c.bf16 %v7414, %v7413
    %v7454 = vpack.c.bf16 %v7416, %v7415
    %v7455 = vpack.c.bf16 %v7418, %v7417
    %v7456 = vpack.c.bf16 %v7420, %v7419
    %v7457 = vpack.c.bf16 %v7422, %v7421
    %v7458 = vpack.c.bf16 %v7424, %v7423
    %v7459 = vpack.c.bf16 %v7426, %v7425
    %v7460 = vpack.c.bf16 %v7428, %v7427
    %7493 = vrot.lane.b32.xlu0 %v7429, 96
    %v7494 = vpop.permute.xlu0 %7493
    %7495 = vrot.lane.b32.xlu0 %v7430, 96
    %v7496 = vpop.permute.xlu0 %7495
    %7497 = vrot.lane.b32.xlu0 %v7431, 96
    %v7498 = vpop.permute.xlu0 %7497
    %7499 = vrot.lane.b32.xlu0 %v7432, 96
    %v7500 = vpop.permute.xlu0 %7499
    %7501 = vrot.lane.b32.xlu0 %v7433, 96
    %v7502 = vpop.permute.xlu0 %7501
    %7503 = vrot.lane.b32.xlu0 %v7434, 96
    %v7504 = vpop.permute.xlu0 %7503
    %7505 = vrot.lane.b32.xlu0 %v7435, 96
    %v7506 = vpop.permute.xlu0 %7505
    %7507 = vrot.lane.b32.xlu0 %v7436, 96
    %v7508 = vpop.permute.xlu0 %7507
    %7509 = vrot.lane.b32.xlu0 %v7437, 96
    %v7510 = vpop.permute.xlu0 %7509
    %7511 = vrot.lane.b32.xlu0 %v7438, 96
    %v7512 = vpop.permute.xlu0 %7511
    %7513 = vrot.lane.b32.xlu0 %v7439, 96
    %v7514 = vpop.permute.xlu0 %7513
    %7515 = vrot.lane.b32.xlu0 %v7440, 96
    %v7516 = vpop.permute.xlu0 %7515
    %7517 = vrot.lane.b32.xlu0 %v7441, 96
    %v7518 = vpop.permute.xlu0 %7517
    %7519 = vrot.lane.b32.xlu0 %v7442, 96
    %v7520 = vpop.permute.xlu0 %7519
    %7521 = vrot.lane.b32.xlu0 %v7443, 96
    %v7522 = vpop.permute.xlu0 %7521
    %7523 = vrot.lane.b32.xlu0 %v7444, 96
    %v7524 = vpop.permute.xlu0 %7523
    %7525 = vrot.lane.b32.xlu0 %v7445, 96
    %v7526 = vpop.permute.xlu0 %7525
    %7527 = vrot.lane.b32.xlu0 %v7446, 96
    %v7528 = vpop.permute.xlu0 %7527
    %7529 = vrot.lane.b32.xlu0 %v7447, 96
    %v7530 = vpop.permute.xlu0 %7529
    %7531 = vrot.lane.b32.xlu0 %v7448, 96
    %v7532 = vpop.permute.xlu0 %7531
    %7533 = vrot.lane.b32.xlu0 %v7449, 96
    %v7534 = vpop.permute.xlu0 %7533
    %7535 = vrot.lane.b32.xlu0 %v7450, 96
    %v7536 = vpop.permute.xlu0 %7535
    %7537 = vrot.lane.b32.xlu0 %v7451, 96
    %v7538 = vpop.permute.xlu0 %7537
    %7539 = vrot.lane.b32.xlu0 %v7452, 96
    %v7540 = vpop.permute.xlu0 %7539
    %7541 = vrot.lane.b32.xlu0 %v7453, 96
    %v7542 = vpop.permute.xlu0 %7541
    %7543 = vrot.lane.b32.xlu0 %v7454, 96
    %v7544 = vpop.permute.xlu0 %7543
    %7545 = vrot.lane.b32.xlu0 %v7455, 96
    %v7546 = vpop.permute.xlu0 %7545
    %7547 = vrot.lane.b32.xlu0 %v7456, 96
    %v7548 = vpop.permute.xlu0 %7547
    %7549 = vrot.lane.b32.xlu0 %v7457, 96
    %v7550 = vpop.permute.xlu0 %7549
    %7551 = vrot.lane.b32.xlu0 %v7458, 96
    %v7552 = vpop.permute.xlu0 %7551
    %7553 = vrot.lane.b32.xlu0 %v7459, 96
    %v7554 = vpop.permute.xlu0 %7553
    %7555 = vrot.lane.b32.xlu0 %v7460, 96
    %v7556 = vpop.permute.xlu0 %7555
    %vm7589 = vcmask 1048320
    %7590 = vst.msk [vmem:[#allocation2] sm:$0xff] %vm7589, %v7494
    %7591 = vst.msk [vmem:[#allocation2 + $0x18] sm:$0xff] %vm7589, %v7496
    %7592 = vst.msk [vmem:[#allocation2 + $0x30] sm:$0xff] %vm7589, %v7498
    %7593 = vst.msk [vmem:[#allocation2 + $0x48] sm:$0xff] %vm7589, %v7500
    %7594 = vst.msk [vmem:[#allocation2 + $0x60] sm:$0xff] %vm7589, %v7502
    %7595 = vst.msk [vmem:[#allocation2 + $0x78] sm:$0xff] %vm7589, %v7504
    %7596 = vst.msk [vmem:[#allocation2 + $0x90] sm:$0xff] %vm7589, %v7506
    %7597 = vst.msk [vmem:[#allocation2 + $0xa8] sm:$0xff] %vm7589, %v7508
    %7598 = vst.msk [vmem:[#allocation2 + $0xc0] sm:$0xff] %vm7589, %v7510
    %7599 = vst.msk [vmem:[#allocation2 + $0xd8] sm:$0xff] %vm7589, %v7512
    %7600 = vst.msk [vmem:[#allocation2 + $0xf0] sm:$0xff] %vm7589, %v7514
    %7601 = vst.msk [vmem:[#allocation2 + $0x108] sm:$0xff] %vm7589, %v7516
    %7602 = vst.msk [vmem:[#allocation2 + $0x120] sm:$0xff] %vm7589, %v7518
    %7603 = vst.msk [vmem:[#allocation2 + $0x138] sm:$0xff] %vm7589, %v7520
    %7604 = vst.msk [vmem:[#allocation2 + $0x150] sm:$0xff] %vm7589, %v7522
    %7605 = vst.msk [vmem:[#allocation2 + $0x168] sm:$0xff] %vm7589, %v7524
    %7606 = vst.msk [vmem:[#allocation2 + $0x180] sm:$0xff] %vm7589, %v7526
    %7607 = vst.msk [vmem:[#allocation2 + $0x198] sm:$0xff] %vm7589, %v7528
    %7608 = vst.msk [vmem:[#allocation2 + $0x1b0] sm:$0xff] %vm7589, %v7530
    %7609 = vst.msk [vmem:[#allocation2 + $0x1c8] sm:$0xff] %vm7589, %v7532
    %7610 = vst.msk [vmem:[#allocation2 + $0x1e0] sm:$0xff] %vm7589, %v7534
    %7611 = vst.msk [vmem:[#allocation2 + $0x1f8] sm:$0xff] %vm7589, %v7536
    %7612 = vst.msk [vmem:[#allocation2 + $0x210] sm:$0xff] %vm7589, %v7538
    %7613 = vst.msk [vmem:[#allocation2 + $0x228] sm:$0xff] %vm7589, %v7540
    %7614 = vst.msk [vmem:[#allocation2 + $0x240] sm:$0xff] %vm7589, %v7542
    %7615 = vst.msk [vmem:[#allocation2 + $0x258] sm:$0xff] %vm7589, %v7544
    %7616 = vst.msk [vmem:[#allocation2 + $0x270] sm:$0xff] %vm7589, %v7546
    %7617 = vst.msk [vmem:[#allocation2 + $0x288] sm:$0xff] %vm7589, %v7548
    %7618 = vst.msk [vmem:[#allocation2 + $0x2a0] sm:$0xff] %vm7589, %v7550
    %7619 = vst.msk [vmem:[#allocation2 + $0x2b8] sm:$0xff] %vm7589, %v7552
    %7620 = vst.msk [vmem:[#allocation2 + $0x2d0] sm:$0xff] %vm7589, %v7554
    %7621 = vst.msk [vmem:[#allocation2 + $0x2e8] sm:$0xff] %vm7589, %v7556
    %v7622 = vld [vmem:[%s2696] sm:$0xff]
    %v7623 = vld [vmem:[%s2696 + $0x8] sm:$0xff]
    %v7624 = vld [vmem:[%s2696 + $0x10] sm:$0xff]
    %v7625 = vld [vmem:[%s2696 + $0x18] sm:$0xff]
    %v7626 = vld [vmem:[%s2696 + $0x20] sm:$0xff]
    %v7627 = vld [vmem:[%s2696 + $0x28] sm:$0xff]
    %v7628 = vld [vmem:[%s2696 + $0x30] sm:$0xff]
    %v7629 = vld [vmem:[%s2696 + $0x38] sm:$0xff]
    %v7630 = vld [vmem:[%s2696 + $0x40] sm:$0xff]
    %v7631 = vld [vmem:[%s2696 + $0x48] sm:$0xff]
    %v7632 = vld [vmem:[%s2696 + $0x50] sm:$0xff]
    %v7633 = vld [vmem:[%s2696 + $0x58] sm:$0xff]
    %v7634 = vld [vmem:[%s2696 + $0x60] sm:$0xff]
    %v7635 = vld [vmem:[%s2696 + $0x68] sm:$0xff]
    %v7636 = vld [vmem:[%s2696 + $0x70] sm:$0xff]
    %v7637 = vld [vmem:[%s2696 + $0x78] sm:$0xff]
    %v7638 = vld [vmem:[%s2696 + $0x80] sm:$0xff]
    %v7639 = vld [vmem:[%s2696 + $0x88] sm:$0xff]
    %v7640 = vld [vmem:[%s2696 + $0x90] sm:$0xff]
    %v7641 = vld [vmem:[%s2696 + $0x98] sm:$0xff]
    %v7642 = vld [vmem:[%s2696 + $0xa0] sm:$0xff]
    %v7643 = vld [vmem:[%s2696 + $0xa8] sm:$0xff]
    %v7644 = vld [vmem:[%s2696 + $0xb0] sm:$0xff]
    %v7645 = vld [vmem:[%s2696 + $0xb8] sm:$0xff]
    %v7646 = vld [vmem:[%s2696 + $0xc0] sm:$0xff]
    %v7647 = vld [vmem:[%s2696 + $0xc8] sm:$0xff]
    %v7648 = vld [vmem:[%s2696 + $0xd0] sm:$0xff]
    %v7649 = vld [vmem:[%s2696 + $0xd8] sm:$0xff]
    %v7650 = vld [vmem:[%s2696 + $0xe0] sm:$0xff]
    %v7651 = vld [vmem:[%s2696 + $0xe8] sm:$0xff]
    %v7652 = vld [vmem:[%s2696 + $0xf0] sm:$0xff]
    %v7653 = vld [vmem:[%s2696 + $0xf8] sm:$0xff]
    %7655 = vset.pattern.permute.xlu0 0
    %7656 = vperm.xlu0 %7655, %v7622
    %v7657 = vpop.permute.xlu0 %7656
    %7660 = vset.pattern.permute.xlu0 0
    %7661 = vperm.xlu0 %7660, %v7623
    %v7662 = vpop.permute.xlu0 %7661
    %7665 = vset.pattern.permute.xlu0 0
    %7666 = vperm.xlu0 %7665, %v7624
    %v7667 = vpop.permute.xlu0 %7666
    %7670 = vset.pattern.permute.xlu0 0
    %7671 = vperm.xlu0 %7670, %v7625
    %v7672 = vpop.permute.xlu0 %7671
    %7675 = vset.pattern.permute.xlu0 0
    %7676 = vperm.xlu0 %7675, %v7626
    %v7677 = vpop.permute.xlu0 %7676
    %7680 = vset.pattern.permute.xlu0 0
    %7681 = vperm.xlu0 %7680, %v7627
    %v7682 = vpop.permute.xlu0 %7681
    %7685 = vset.pattern.permute.xlu0 0
    %7686 = vperm.xlu0 %7685, %v7628
    %v7687 = vpop.permute.xlu0 %7686
    %7690 = vset.pattern.permute.xlu0 0
    %7691 = vperm.xlu0 %7690, %v7629
    %v7692 = vpop.permute.xlu0 %7691
    %7695 = vset.pattern.permute.xlu0 0
    %7696 = vperm.xlu0 %7695, %v7630
    %v7697 = vpop.permute.xlu0 %7696
    %7700 = vset.pattern.permute.xlu0 0
    %7701 = vperm.xlu0 %7700, %v7631
    %v7702 = vpop.permute.xlu0 %7701
    %7705 = vset.pattern.permute.xlu0 0
    %7706 = vperm.xlu0 %7705, %v7632
    %v7707 = vpop.permute.xlu0 %7706
    %7710 = vset.pattern.permute.xlu0 0
    %7711 = vperm.xlu0 %7710, %v7633
    %v7712 = vpop.permute.xlu0 %7711
    %7715 = vset.pattern.permute.xlu0 0
    %7716 = vperm.xlu0 %7715, %v7634
    %v7717 = vpop.permute.xlu0 %7716
    %7720 = vset.pattern.permute.xlu0 0
    %7721 = vperm.xlu0 %7720, %v7635
    %v7722 = vpop.permute.xlu0 %7721
    %7725 = vset.pattern.permute.xlu0 0
    %7726 = vperm.xlu0 %7725, %v7636
    %v7727 = vpop.permute.xlu0 %7726
    %7730 = vset.pattern.permute.xlu0 0
    %7731 = vperm.xlu0 %7730, %v7637
    %v7732 = vpop.permute.xlu0 %7731
    %7735 = vset.pattern.permute.xlu0 0
    %7736 = vperm.xlu0 %7735, %v7638
    %v7737 = vpop.permute.xlu0 %7736
    %7740 = vset.pattern.permute.xlu0 0
    %7741 = vperm.xlu0 %7740, %v7639
    %v7742 = vpop.permute.xlu0 %7741
    %7745 = vset.pattern.permute.xlu0 0
    %7746 = vperm.xlu0 %7745, %v7640
    %v7747 = vpop.permute.xlu0 %7746
    %7750 = vset.pattern.permute.xlu0 0
    %7751 = vperm.xlu0 %7750, %v7641
    %v7752 = vpop.permute.xlu0 %7751
    %7755 = vset.pattern.permute.xlu0 0
    %7756 = vperm.xlu0 %7755, %v7642
    %v7757 = vpop.permute.xlu0 %7756
    %7760 = vset.pattern.permute.xlu0 0
    %7761 = vperm.xlu0 %7760, %v7643
    %v7762 = vpop.permute.xlu0 %7761
    %7765 = vset.pattern.permute.xlu0 0
    %7766 = vperm.xlu0 %7765, %v7644
    %v7767 = vpop.permute.xlu0 %7766
    %7770 = vset.pattern.permute.xlu0 0
    %7771 = vperm.xlu0 %7770, %v7645
    %v7772 = vpop.permute.xlu0 %7771
    %7775 = vset.pattern.permute.xlu0 0
    %7776 = vperm.xlu0 %7775, %v7646
    %v7777 = vpop.permute.xlu0 %7776
    %7780 = vset.pattern.permute.xlu0 0
    %7781 = vperm.xlu0 %7780, %v7647
    %v7782 = vpop.permute.xlu0 %7781
    %7785 = vset.pattern.permute.xlu0 0
    %7786 = vperm.xlu0 %7785, %v7648
    %v7787 = vpop.permute.xlu0 %7786
    %7790 = vset.pattern.permute.xlu0 0
    %7791 = vperm.xlu0 %7790, %v7649
    %v7792 = vpop.permute.xlu0 %7791
    %7795 = vset.pattern.permute.xlu0 0
    %7796 = vperm.xlu0 %7795, %v7650
    %v7797 = vpop.permute.xlu0 %7796
    %7800 = vset.pattern.permute.xlu0 0
    %7801 = vperm.xlu0 %7800, %v7651
    %v7802 = vpop.permute.xlu0 %7801
    %7805 = vset.pattern.permute.xlu0 0
    %7806 = vperm.xlu0 %7805, %v7652
    %v7807 = vpop.permute.xlu0 %7806
    %7810 = vset.pattern.permute.xlu0 0
    %7811 = vperm.xlu0 %7810, %v7653
    %v7812 = vpop.permute.xlu0 %7811
    %v7814 = vmul.f32 %v5491, %v7657
    %v7815 = vmul.f32 %v5492, %v7662
    %v7816 = vmul.f32 %v5493, %v7667
    %v7817 = vmul.f32 %v5494, %v7672
    %v7818 = vmul.f32 %v5495, %v7677
    %v7819 = vmul.f32 %v5496, %v7682
    %v7820 = vmul.f32 %v5497, %v7687
    %v7821 = vmul.f32 %v5498, %v7692
    %v7822 = vmul.f32 %v5499, %v7697
    %v7823 = vmul.f32 %v5500, %v7702
    %v7824 = vmul.f32 %v5501, %v7707
    %v7825 = vmul.f32 %v5502, %v7712
    %v7826 = vmul.f32 %v5503, %v7717
    %v7827 = vmul.f32 %v5504, %v7722
    %v7828 = vmul.f32 %v5505, %v7727
    %v7829 = vmul.f32 %v5506, %v7732
    %v7830 = vmul.f32 %v5507, %v7737
    %v7831 = vmul.f32 %v5508, %v7742
    %v7832 = vmul.f32 %v5509, %v7747
    %v7833 = vmul.f32 %v5510, %v7752
    %v7834 = vmul.f32 %v5511, %v7757
    %v7835 = vmul.f32 %v5512, %v7762
    %v7836 = vmul.f32 %v5513, %v7767
    %v7837 = vmul.f32 %v5514, %v7772
    %v7838 = vmul.f32 %v5515, %v7777
    %v7839 = vmul.f32 %v5516, %v7782
    %v7840 = vmul.f32 %v5517, %v7787
    %v7841 = vmul.f32 %v5518, %v7792
    %v7842 = vmul.f32 %v5519, %v7797
    %v7843 = vmul.f32 %v5520, %v7802
    %v7844 = vmul.f32 %v5521, %v7807
    %v7845 = vmul.f32 %v5522, %v7812
    %v7846 = vmul.f32 %v5523, %v7657
    %v7847 = vmul.f32 %v5524, %v7662
    %v7848 = vmul.f32 %v5525, %v7667
    %v7849 = vmul.f32 %v5526, %v7672
    %v7850 = vmul.f32 %v5527, %v7677
    %v7851 = vmul.f32 %v5528, %v7682
    %v7852 = vmul.f32 %v5529, %v7687
    %v7853 = vmul.f32 %v5530, %v7692
    %v7854 = vmul.f32 %v5531, %v7697
    %v7855 = vmul.f32 %v5532, %v7702
    %v7856 = vmul.f32 %v5533, %v7707
    %v7857 = vmul.f32 %v5534, %v7712
    %v7858 = vmul.f32 %v5535, %v7717
    %v7859 = vmul.f32 %v5536, %v7722
    %v7860 = vmul.f32 %v5537, %v7727
    %v7861 = vmul.f32 %v5538, %v7732
    %v7862 = vmul.f32 %v5539, %v7737
    %v7863 = vmul.f32 %v5540, %v7742
    %v7864 = vmul.f32 %v5541, %v7747
    %v7865 = vmul.f32 %v5542, %v7752
    %v7866 = vmul.f32 %v5543, %v7757
    %v7867 = vmul.f32 %v5544, %v7762
    %v7868 = vmul.f32 %v5545, %v7767
    %v7869 = vmul.f32 %v5546, %v7772
    %v7870 = vmul.f32 %v5547, %v7777
    %v7871 = vmul.f32 %v5548, %v7782
    %v7872 = vmul.f32 %v5549, %v7787
    %v7873 = vmul.f32 %v5550, %v7792
    %v7874 = vmul.f32 %v5551, %v7797
    %v7875 = vmul.f32 %v5552, %v7802
    %v7876 = vmul.f32 %v5553, %v7807
    %v7877 = vmul.f32 %v5554, %v7812
    %v7878 = vpack.c.bf16 %v7815, %v7814
    %v7879 = vpack.c.bf16 %v7817, %v7816
    %v7880 = vpack.c.bf16 %v7819, %v7818
    %v7881 = vpack.c.bf16 %v7821, %v7820
    %v7882 = vpack.c.bf16 %v7823, %v7822
    %v7883 = vpack.c.bf16 %v7825, %v7824
    %v7884 = vpack.c.bf16 %v7827, %v7826
    %v7885 = vpack.c.bf16 %v7829, %v7828
    %v7886 = vpack.c.bf16 %v7831, %v7830
    %v7887 = vpack.c.bf16 %v7833, %v7832
    %v7888 = vpack.c.bf16 %v7835, %v7834
    %v7889 = vpack.c.bf16 %v7837, %v7836
    %v7890 = vpack.c.bf16 %v7839, %v7838
    %v7891 = vpack.c.bf16 %v7841, %v7840
    %v7892 = vpack.c.bf16 %v7843, %v7842
    %v7893 = vpack.c.bf16 %v7845, %v7844
    %v7894 = vpack.c.bf16 %v7847, %v7846
    %v7895 = vpack.c.bf16 %v7849, %v7848
    %v7896 = vpack.c.bf16 %v7851, %v7850
    %v7897 = vpack.c.bf16 %v7853, %v7852
    %v7898 = vpack.c.bf16 %v7855, %v7854
    %v7899 = vpack.c.bf16 %v7857, %v7856
    %v7900 = vpack.c.bf16 %v7859, %v7858
    %v7901 = vpack.c.bf16 %v7861, %v7860
    %v7902 = vpack.c.bf16 %v7863, %v7862
    %v7903 = vpack.c.bf16 %v7865, %v7864
    %v7904 = vpack.c.bf16 %v7867, %v7866
    %v7905 = vpack.c.bf16 %v7869, %v7868
    %v7906 = vpack.c.bf16 %v7871, %v7870
    %v7907 = vpack.c.bf16 %v7873, %v7872
    %v7908 = vpack.c.bf16 %v7875, %v7874
    %v7909 = vpack.c.bf16 %v7877, %v7876
    %7910 = vst.msk [vmem:[#allocation2 + $0x8] sm:$0xff] %vm6048, %v7878
    %7911 = vst.msk [vmem:[#allocation2 + $0x20] sm:$0xff] %vm6048, %v7879
    %7912 = vst.msk [vmem:[#allocation2 + $0x38] sm:$0xff] %vm6048, %v7880
    %7913 = vst.msk [vmem:[#allocation2 + $0x50] sm:$0xff] %vm6048, %v7881
    %7914 = vst.msk [vmem:[#allocation2 + $0x68] sm:$0xff] %vm6048, %v7882
    %7915 = vst.msk [vmem:[#allocation2 + $0x80] sm:$0xff] %vm6048, %v7883
    %7916 = vst.msk [vmem:[#allocation2 + $0x98] sm:$0xff] %vm6048, %v7884
    %7917 = vst.msk [vmem:[#allocation2 + $0xb0] sm:$0xff] %vm6048, %v7885
    %7918 = vst.msk [vmem:[#allocation2 + $0xc8] sm:$0xff] %vm6048, %v7886
    %7919 = vst.msk [vmem:[#allocation2 + $0xe0] sm:$0xff] %vm6048, %v7887
    %7920 = vst.msk [vmem:[#allocation2 + $0xf8] sm:$0xff] %vm6048, %v7888
    %7921 = vst.msk [vmem:[#allocation2 + $0x110] sm:$0xff] %vm6048, %v7889
    %7922 = vst.msk [vmem:[#allocation2 + $0x128] sm:$0xff] %vm6048, %v7890
    %7923 = vst.msk [vmem:[#allocation2 + $0x140] sm:$0xff] %vm6048, %v7891
    %7924 = vst.msk [vmem:[#allocation2 + $0x158] sm:$0xff] %vm6048, %v7892
    %7925 = vst.msk [vmem:[#allocation2 + $0x170] sm:$0xff] %vm6048, %v7893
    %7926 = vst.msk [vmem:[#allocation2 + $0x188] sm:$0xff] %vm6048, %v7894
    %7927 = vst.msk [vmem:[#allocation2 + $0x1a0] sm:$0xff] %vm6048, %v7895
    %7928 = vst.msk [vmem:[#allocation2 + $0x1b8] sm:$0xff] %vm6048, %v7896
    %7929 = vst.msk [vmem:[#allocation2 + $0x1d0] sm:$0xff] %vm6048, %v7897
    %7930 = vst.msk [vmem:[#allocation2 + $0x1e8] sm:$0xff] %vm6048, %v7898
    %7931 = vst.msk [vmem:[#allocation2 + $0x200] sm:$0xff] %vm6048, %v7899
    %7932 = vst.msk [vmem:[#allocation2 + $0x218] sm:$0xff] %vm6048, %v7900
    %7933 = vst.msk [vmem:[#allocation2 + $0x230] sm:$0xff] %vm6048, %v7901
    %7934 = vst.msk [vmem:[#allocation2 + $0x248] sm:$0xff] %vm6048, %v7902
    %7935 = vst.msk [vmem:[#allocation2 + $0x260] sm:$0xff] %vm6048, %v7903
    %7936 = vst.msk [vmem:[#allocation2 + $0x278] sm:$0xff] %vm6048, %v7904
    %7937 = vst.msk [vmem:[#allocation2 + $0x290] sm:$0xff] %vm6048, %v7905
    %7938 = vst.msk [vmem:[#allocation2 + $0x2a8] sm:$0xff] %vm6048, %v7906
    %7939 = vst.msk [vmem:[#allocation2 + $0x2c0] sm:$0xff] %vm6048, %v7907
    %7940 = vst.msk [vmem:[#allocation2 + $0x2d8] sm:$0xff] %vm6048, %v7908
    %7941 = vst.msk [vmem:[#allocation2 + $0x2f0] sm:$0xff] %vm6048, %v7909
    %v7942 = vld [vmem:[%s3245] sm:$0xff]
    %v7943 = vld [vmem:[%s3245 + $0x8] sm:$0xff]
    %v7944 = vld [vmem:[%s3245 + $0x10] sm:$0xff]
    %v7945 = vld [vmem:[%s3245 + $0x18] sm:$0xff]
    %v7946 = vld [vmem:[%s3245 + $0x20] sm:$0xff]
    %v7947 = vld [vmem:[%s3245 + $0x28] sm:$0xff]
    %v7948 = vld [vmem:[%s3245 + $0x30] sm:$0xff]
    %v7949 = vld [vmem:[%s3245 + $0x38] sm:$0xff]
    %v7950 = vld [vmem:[%s3245 + $0x40] sm:$0xff]
    %v7951 = vld [vmem:[%s3245 + $0x48] sm:$0xff]
    %v7952 = vld [vmem:[%s3245 + $0x50] sm:$0xff]
    %v7953 = vld [vmem:[%s3245 + $0x58] sm:$0xff]
    %v7954 = vld [vmem:[%s3245 + $0x60] sm:$0xff]
    %v7955 = vld [vmem:[%s3245 + $0x68] sm:$0xff]
    %v7956 = vld [vmem:[%s3245 + $0x70] sm:$0xff]
    %v7957 = vld [vmem:[%s3245 + $0x78] sm:$0xff]
    %v7958 = vld [vmem:[%s3245 + $0x80] sm:$0xff]
    %v7959 = vld [vmem:[%s3245 + $0x88] sm:$0xff]
    %v7960 = vld [vmem:[%s3245 + $0x90] sm:$0xff]
    %v7961 = vld [vmem:[%s3245 + $0x98] sm:$0xff]
    %v7962 = vld [vmem:[%s3245 + $0xa0] sm:$0xff]
    %v7963 = vld [vmem:[%s3245 + $0xa8] sm:$0xff]
    %v7964 = vld [vmem:[%s3245 + $0xb0] sm:$0xff]
    %v7965 = vld [vmem:[%s3245 + $0xb8] sm:$0xff]
    %v7966 = vld [vmem:[%s3245 + $0xc0] sm:$0xff]
    %v7967 = vld [vmem:[%s3245 + $0xc8] sm:$0xff]
    %v7968 = vld [vmem:[%s3245 + $0xd0] sm:$0xff]
    %v7969 = vld [vmem:[%s3245 + $0xd8] sm:$0xff]
    %v7970 = vld [vmem:[%s3245 + $0xe0] sm:$0xff]
    %v7971 = vld [vmem:[%s3245 + $0xe8] sm:$0xff]
    %v7972 = vld [vmem:[%s3245 + $0xf0] sm:$0xff]
    %v7973 = vld [vmem:[%s3245 + $0xf8] sm:$0xff]
    %v7974 = vrot.slane %v5522, 1
    %v7975 = vsel %vm1438, %v6616, %v7974
    %v7976 = vrot.slane %v5554, 1
    %v7977 = vsel %vm1438, %v6677, %v7976
    %v7982 = vsel %vm1438, %v7974, 0.0
    %v7983 = vsel %vm1438, %v7976, 0.0
    %7985 = vset.pattern.permute.xlu0 0
    %7986 = vperm.xlu0 %7985, %v7942
    %v7987 = vpop.permute.xlu0 %7986
    %7990 = vset.pattern.permute.xlu0 0
    %7991 = vperm.xlu0 %7990, %v7943
    %v7992 = vpop.permute.xlu0 %7991
    %7995 = vset.pattern.permute.xlu0 0
    %7996 = vperm.xlu0 %7995, %v7944
    %v7997 = vpop.permute.xlu0 %7996
    %8000 = vset.pattern.permute.xlu0 0
    %8001 = vperm.xlu0 %8000, %v7945
    %v8002 = vpop.permute.xlu0 %8001
    %8005 = vset.pattern.permute.xlu0 0
    %8006 = vperm.xlu0 %8005, %v7946
    %v8007 = vpop.permute.xlu0 %8006
    %8010 = vset.pattern.permute.xlu0 0
    %8011 = vperm.xlu0 %8010, %v7947
    %v8012 = vpop.permute.xlu0 %8011
    %8015 = vset.pattern.permute.xlu0 0
    %8016 = vperm.xlu0 %8015, %v7948
    %v8017 = vpop.permute.xlu0 %8016
    %8020 = vset.pattern.permute.xlu0 0
    %8021 = vperm.xlu0 %8020, %v7949
    %v8022 = vpop.permute.xlu0 %8021
    %8025 = vset.pattern.permute.xlu0 0
    %8026 = vperm.xlu0 %8025, %v7950
    %v8027 = vpop.permute.xlu0 %8026
    %8030 = vset.pattern.permute.xlu0 0
    %8031 = vperm.xlu0 %8030, %v7951
    %v8032 = vpop.permute.xlu0 %8031
    %8035 = vset.pattern.permute.xlu0 0
    %8036 = vperm.xlu0 %8035, %v7952
    %v8037 = vpop.permute.xlu0 %8036
    %8040 = vset.pattern.permute.xlu0 0
    %8041 = vperm.xlu0 %8040, %v7953
    %v8042 = vpop.permute.xlu0 %8041
    %8045 = vset.pattern.permute.xlu0 0
    %8046 = vperm.xlu0 %8045, %v7954
    %v8047 = vpop.permute.xlu0 %8046
    %8050 = vset.pattern.permute.xlu0 0
    %8051 = vperm.xlu0 %8050, %v7955
    %v8052 = vpop.permute.xlu0 %8051
    %8055 = vset.pattern.permute.xlu0 0
    %8056 = vperm.xlu0 %8055, %v7956
    %v8057 = vpop.permute.xlu0 %8056
    %8060 = vset.pattern.permute.xlu0 0
    %8061 = vperm.xlu0 %8060, %v7957
    %v8062 = vpop.permute.xlu0 %8061
    %8065 = vset.pattern.permute.xlu0 0
    %8066 = vperm.xlu0 %8065, %v7958
    %v8067 = vpop.permute.xlu0 %8066
    %8070 = vset.pattern.permute.xlu0 0
    %8071 = vperm.xlu0 %8070, %v7959
    %v8072 = vpop.permute.xlu0 %8071
    %8075 = vset.pattern.permute.xlu0 0
    %8076 = vperm.xlu0 %8075, %v7960
    %v8077 = vpop.permute.xlu0 %8076
    %8080 = vset.pattern.permute.xlu0 0
    %8081 = vperm.xlu0 %8080, %v7961
    %v8082 = vpop.permute.xlu0 %8081
    %8085 = vset.pattern.permute.xlu0 0
    %8086 = vperm.xlu0 %8085, %v7962
    %v8087 = vpop.permute.xlu0 %8086
    %8090 = vset.pattern.permute.xlu0 0
    %8091 = vperm.xlu0 %8090, %v7963
    %v8092 = vpop.permute.xlu0 %8091
    %8095 = vset.pattern.permute.xlu0 0
    %8096 = vperm.xlu0 %8095, %v7964
    %v8097 = vpop.permute.xlu0 %8096
    %8100 = vset.pattern.permute.xlu0 0
    %8101 = vperm.xlu0 %8100, %v7965
    %v8102 = vpop.permute.xlu0 %8101
    %8105 = vset.pattern.permute.xlu0 0
    %8106 = vperm.xlu0 %8105, %v7966
    %v8107 = vpop.permute.xlu0 %8106
    %8110 = vset.pattern.permute.xlu0 0
    %8111 = vperm.xlu0 %8110, %v7967
    %v8112 = vpop.permute.xlu0 %8111
    %8115 = vset.pattern.permute.xlu0 0
    %8116 = vperm.xlu0 %8115, %v7968
    %v8117 = vpop.permute.xlu0 %8116
    %8120 = vset.pattern.permute.xlu0 0
    %8121 = vperm.xlu0 %8120, %v7969
    %v8122 = vpop.permute.xlu0 %8121
    %8125 = vset.pattern.permute.xlu0 0
    %8126 = vperm.xlu0 %8125, %v7970
    %v8127 = vpop.permute.xlu0 %8126
    %8130 = vset.pattern.permute.xlu0 0
    %8131 = vperm.xlu0 %8130, %v7971
    %v8132 = vpop.permute.xlu0 %8131
    %8135 = vset.pattern.permute.xlu0 0
    %8136 = vperm.xlu0 %8135, %v7972
    %v8137 = vpop.permute.xlu0 %8136
    %8140 = vset.pattern.permute.xlu0 0
    %8141 = vperm.xlu0 %8140, %v7973
    %v8142 = vpop.permute.xlu0 %8141
    %v8144 = vmul.f32 %v6559, %v7987
    %v8145 = vmul.f32 %v6561, %v7992
    %v8146 = vmul.f32 %v6563, %v7997
    %v8147 = vmul.f32 %v6565, %v8002
    %v8148 = vmul.f32 %v6567, %v8007
    %v8149 = vmul.f32 %v6569, %v8012
    %v8150 = vmul.f32 %v6571, %v8017
    %v8151 = vmul.f32 %v6573, %v8022
    %v8152 = vmul.f32 %v6575, %v8027
    %v8153 = vmul.f32 %v6577, %v8032
    %v8154 = vmul.f32 %v6579, %v8037
    %v8155 = vmul.f32 %v6581, %v8042
    %v8156 = vmul.f32 %v6583, %v8047
    %v8157 = vmul.f32 %v6585, %v8052
    %v8158 = vmul.f32 %v6587, %v8057
    %v8159 = vmul.f32 %v6589, %v8062
    %v8160 = vmul.f32 %v6591, %v8067
    %v8161 = vmul.f32 %v6593, %v8072
    %v8162 = vmul.f32 %v6595, %v8077
    %v8163 = vmul.f32 %v6597, %v8082
    %v8164 = vmul.f32 %v6599, %v8087
    %v8165 = vmul.f32 %v6601, %v8092
    %v8166 = vmul.f32 %v6603, %v8097
    %v8167 = vmul.f32 %v6605, %v8102
    %v8168 = vmul.f32 %v6607, %v8107
    %v8169 = vmul.f32 %v6609, %v8112
    %v8170 = vmul.f32 %v6611, %v8117
    %v8171 = vmul.f32 %v6613, %v8122
    %v8172 = vmul.f32 %v6615, %v8127
    %v8173 = vmul.f32 %v6617, %v8132
    %v8174 = vmul.f32 %v7975, %v8137
    %v8175 = vmul.f32 %v7982, %v8142
    %v8176 = vmul.f32 %v6620, %v7987
    %v8177 = vmul.f32 %v6622, %v7992
    %v8178 = vmul.f32 %v6624, %v7997
    %v8179 = vmul.f32 %v6626, %v8002
    %v8180 = vmul.f32 %v6628, %v8007
    %v8181 = vmul.f32 %v6630, %v8012
    %v8182 = vmul.f32 %v6632, %v8017
    %v8183 = vmul.f32 %v6634, %v8022
    %v8184 = vmul.f32 %v6636, %v8027
    %v8185 = vmul.f32 %v6638, %v8032
    %v8186 = vmul.f32 %v6640, %v8037
    %v8187 = vmul.f32 %v6642, %v8042
    %v8188 = vmul.f32 %v6644, %v8047
    %v8189 = vmul.f32 %v6646, %v8052
    %v8190 = vmul.f32 %v6648, %v8057
    %v8191 = vmul.f32 %v6650, %v8062
    %v8192 = vmul.f32 %v6652, %v8067
    %v8193 = vmul.f32 %v6654, %v8072
    %v8194 = vmul.f32 %v6656, %v8077
    %v8195 = vmul.f32 %v6658, %v8082
    %v8196 = vmul.f32 %v6660, %v8087
    %v8197 = vmul.f32 %v6662, %v8092
    %v8198 = vmul.f32 %v6664, %v8097
    %v8199 = vmul.f32 %v6666, %v8102
    %v8200 = vmul.f32 %v6668, %v8107
    %v8201 = vmul.f32 %v6670, %v8112
    %v8202 = vmul.f32 %v6672, %v8117
    %v8203 = vmul.f32 %v6674, %v8122
    %v8204 = vmul.f32 %v6676, %v8127
    %v8205 = vmul.f32 %v6678, %v8132
    %v8206 = vmul.f32 %v7977, %v8137
    %v8207 = vmul.f32 %v7983, %v8142
    %v8208 = vpack.c.bf16 %v8145, %v8144
    %v8209 = vpack.c.bf16 %v8147, %v8146
    %v8210 = vpack.c.bf16 %v8149, %v8148
    %v8211 = vpack.c.bf16 %v8151, %v8150
    %v8212 = vpack.c.bf16 %v8153, %v8152
    %v8213 = vpack.c.bf16 %v8155, %v8154
    %v8214 = vpack.c.bf16 %v8157, %v8156
    %v8215 = vpack.c.bf16 %v8159, %v8158
    %v8216 = vpack.c.bf16 %v8161, %v8160
    %v8217 = vpack.c.bf16 %v8163, %v8162
    %v8218 = vpack.c.bf16 %v8165, %v8164
    %v8219 = vpack.c.bf16 %v8167, %v8166
    %v8220 = vpack.c.bf16 %v8169, %v8168
    %v8221 = vpack.c.bf16 %v8171, %v8170
    %v8222 = vpack.c.bf16 %v8173, %v8172
    %v8223 = vpack.c.bf16 %v8175, %v8174
    %v8224 = vpack.c.bf16 %v8177, %v8176
    %v8225 = vpack.c.bf16 %v8179, %v8178
    %v8226 = vpack.c.bf16 %v8181, %v8180
    %v8227 = vpack.c.bf16 %v8183, %v8182
    %v8228 = vpack.c.bf16 %v8185, %v8184
    %v8229 = vpack.c.bf16 %v8187, %v8186
    %v8230 = vpack.c.bf16 %v8189, %v8188
    %v8231 = vpack.c.bf16 %v8191, %v8190
    %v8232 = vpack.c.bf16 %v8193, %v8192
    %v8233 = vpack.c.bf16 %v8195, %v8194
    %v8234 = vpack.c.bf16 %v8197, %v8196
    %v8235 = vpack.c.bf16 %v8199, %v8198
    %v8236 = vpack.c.bf16 %v8201, %v8200
    %v8237 = vpack.c.bf16 %v8203, %v8202
    %v8238 = vpack.c.bf16 %v8205, %v8204
    %v8239 = vpack.c.bf16 %v8207, %v8206
    %8272 = vrot.lane.b32.xlu0 %v8208, 32
    %v8273 = vpop.permute.xlu0 %8272
    %8274 = vrot.lane.b32.xlu0 %v8209, 32
    %v8275 = vpop.permute.xlu0 %8274
    %8276 = vrot.lane.b32.xlu0 %v8210, 32
    %v8277 = vpop.permute.xlu0 %8276
    %8278 = vrot.lane.b32.xlu0 %v8211, 32
    %v8279 = vpop.permute.xlu0 %8278
    %8280 = vrot.lane.b32.xlu0 %v8212, 32
    %v8281 = vpop.permute.xlu0 %8280
    %8282 = vrot.lane.b32.xlu0 %v8213, 32
    %v8283 = vpop.permute.xlu0 %8282
    %8284 = vrot.lane.b32.xlu0 %v8214, 32
    %v8285 = vpop.permute.xlu0 %8284
    %8286 = vrot.lane.b32.xlu0 %v8215, 32
    %v8287 = vpop.permute.xlu0 %8286
    %8288 = vrot.lane.b32.xlu0 %v8216, 32
    %v8289 = vpop.permute.xlu0 %8288
    %8290 = vrot.lane.b32.xlu0 %v8217, 32
    %v8291 = vpop.permute.xlu0 %8290
    %8292 = vrot.lane.b32.xlu0 %v8218, 32
    %v8293 = vpop.permute.xlu0 %8292
    %8294 = vrot.lane.b32.xlu0 %v8219, 32
    %v8295 = vpop.permute.xlu0 %8294
    %8296 = vrot.lane.b32.xlu0 %v8220, 32
    %v8297 = vpop.permute.xlu0 %8296
    %8298 = vrot.lane.b32.xlu0 %v8221, 32
    %v8299 = vpop.permute.xlu0 %8298
    %8300 = vrot.lane.b32.xlu0 %v8222, 32
    %v8301 = vpop.permute.xlu0 %8300
    %8302 = vrot.lane.b32.xlu0 %v8223, 32
    %v8303 = vpop.permute.xlu0 %8302
    %8304 = vrot.lane.b32.xlu0 %v8224, 32
    %v8305 = vpop.permute.xlu0 %8304
    %8306 = vrot.lane.b32.xlu0 %v8225, 32
    %v8307 = vpop.permute.xlu0 %8306
    %8308 = vrot.lane.b32.xlu0 %v8226, 32
    %v8309 = vpop.permute.xlu0 %8308
    %8310 = vrot.lane.b32.xlu0 %v8227, 32
    %v8311 = vpop.permute.xlu0 %8310
    %8312 = vrot.lane.b32.xlu0 %v8228, 32
    %v8313 = vpop.permute.xlu0 %8312
    %8314 = vrot.lane.b32.xlu0 %v8229, 32
    %v8315 = vpop.permute.xlu0 %8314
    %8316 = vrot.lane.b32.xlu0 %v8230, 32
    %v8317 = vpop.permute.xlu0 %8316
    %8318 = vrot.lane.b32.xlu0 %v8231, 32
    %v8319 = vpop.permute.xlu0 %8318
    %8320 = vrot.lane.b32.xlu0 %v8232, 32
    %v8321 = vpop.permute.xlu0 %8320
    %8322 = vrot.lane.b32.xlu0 %v8233, 32
    %v8323 = vpop.permute.xlu0 %8322
    %8324 = vrot.lane.b32.xlu0 %v8234, 32
    %v8325 = vpop.permute.xlu0 %8324
    %8326 = vrot.lane.b32.xlu0 %v8235, 32
    %v8327 = vpop.permute.xlu0 %8326
    %8328 = vrot.lane.b32.xlu0 %v8236, 32
    %v8329 = vpop.permute.xlu0 %8328
    %8330 = vrot.lane.b32.xlu0 %v8237, 32
    %v8331 = vpop.permute.xlu0 %8330
    %8332 = vrot.lane.b32.xlu0 %v8238, 32
    %v8333 = vpop.permute.xlu0 %8332
    %8334 = vrot.lane.b32.xlu0 %v8239, 32
    %v8335 = vpop.permute.xlu0 %8334
    %8368 = vst.msk [vmem:[#allocation2 + $0x8] sm:$0xff] %vm6490, %v8273
    %8369 = vst.msk [vmem:[#allocation2 + $0x20] sm:$0xff] %vm6490, %v8275
    %8370 = vst.msk [vmem:[#allocation2 + $0x38] sm:$0xff] %vm6490, %v8277
    %8371 = vst.msk [vmem:[#allocation2 + $0x50] sm:$0xff] %vm6490, %v8279
    %8372 = vst.msk [vmem:[#allocation2 + $0x68] sm:$0xff] %vm6490, %v8281
    %8373 = vst.msk [vmem:[#allocation2 + $0x80] sm:$0xff] %vm6490, %v8283
    %8374 = vst.msk [vmem:[#allocation2 + $0x98] sm:$0xff] %vm6490, %v8285
    %8375 = vst.msk [vmem:[#allocation2 + $0xb0] sm:$0xff] %vm6490, %v8287
    %8376 = vst.msk [vmem:[#allocation2 + $0xc8] sm:$0xff] %vm6490, %v8289
    %8377 = vst.msk [vmem:[#allocation2 + $0xe0] sm:$0xff] %vm6490, %v8291
    %8378 = vst.msk [vmem:[#allocation2 + $0xf8] sm:$0xff] %vm6490, %v8293
    %8379 = vst.msk [vmem:[#allocation2 + $0x110] sm:$0xff] %vm6490, %v8295
    %8380 = vst.msk [vmem:[#allocation2 + $0x128] sm:$0xff] %vm6490, %v8297
    %8381 = vst.msk [vmem:[#allocation2 + $0x140] sm:$0xff] %vm6490, %v8299
    %8382 = vst.msk [vmem:[#allocation2 + $0x158] sm:$0xff] %vm6490, %v8301
    %8383 = vst.msk [vmem:[#allocation2 + $0x170] sm:$0xff] %vm6490, %v8303
    %8384 = vst.msk [vmem:[#allocation2 + $0x188] sm:$0xff] %vm6490, %v8305
    %8385 = vst.msk [vmem:[#allocation2 + $0x1a0] sm:$0xff] %vm6490, %v8307
    %8386 = vst.msk [vmem:[#allocation2 + $0x1b8] sm:$0xff] %vm6490, %v8309
    %8387 = vst.msk [vmem:[#allocation2 + $0x1d0] sm:$0xff] %vm6490, %v8311
    %8388 = vst.msk [vmem:[#allocation2 + $0x1e8] sm:$0xff] %vm6490, %v8313
    %8389 = vst.msk [vmem:[#allocation2 + $0x200] sm:$0xff] %vm6490, %v8315
    %8390 = vst.msk [vmem:[#allocation2 + $0x218] sm:$0xff] %vm6490, %v8317
    %8391 = vst.msk [vmem:[#allocation2 + $0x230] sm:$0xff] %vm6490, %v8319
    %8392 = vst.msk [vmem:[#allocation2 + $0x248] sm:$0xff] %vm6490, %v8321
    %8393 = vst.msk [vmem:[#allocation2 + $0x260] sm:$0xff] %vm6490, %v8323
    %8394 = vst.msk [vmem:[#allocation2 + $0x278] sm:$0xff] %vm6490, %v8325
    %8395 = vst.msk [vmem:[#allocation2 + $0x290] sm:$0xff] %vm6490, %v8327
    %8396 = vst.msk [vmem:[#allocation2 + $0x2a8] sm:$0xff] %vm6490, %v8329
    %8397 = vst.msk [vmem:[#allocation2 + $0x2c0] sm:$0xff] %vm6490, %v8331
    %8398 = vst.msk [vmem:[#allocation2 + $0x2d8] sm:$0xff] %vm6490, %v8333
    %8399 = vst.msk [vmem:[#allocation2 + $0x2f0] sm:$0xff] %vm6490, %v8335
    %v8400 = vld [vmem:[%s3804] sm:$0xff]
    %v8401 = vld [vmem:[%s3804 + $0x8] sm:$0xff]
    %v8402 = vld [vmem:[%s3804 + $0x10] sm:$0xff]
    %v8403 = vld [vmem:[%s3804 + $0x18] sm:$0xff]
    %v8404 = vld [vmem:[%s3804 + $0x20] sm:$0xff]
    %v8405 = vld [vmem:[%s3804 + $0x28] sm:$0xff]
    %v8406 = vld [vmem:[%s3804 + $0x30] sm:$0xff]
    %v8407 = vld [vmem:[%s3804 + $0x38] sm:$0xff]
    %v8408 = vld [vmem:[%s3804 + $0x40] sm:$0xff]
    %v8409 = vld [vmem:[%s3804 + $0x48] sm:$0xff]
    %v8410 = vld [vmem:[%s3804 + $0x50] sm:$0xff]
    %v8411 = vld [vmem:[%s3804 + $0x58] sm:$0xff]
    %v8412 = vld [vmem:[%s3804 + $0x60] sm:$0xff]
    %v8413 = vld [vmem:[%s3804 + $0x68] sm:$0xff]
    %v8414 = vld [vmem:[%s3804 + $0x70] sm:$0xff]
    %v8415 = vld [vmem:[%s3804 + $0x78] sm:$0xff]
    %v8416 = vld [vmem:[%s3804 + $0x80] sm:$0xff]
    %v8417 = vld [vmem:[%s3804 + $0x88] sm:$0xff]
    %v8418 = vld [vmem:[%s3804 + $0x90] sm:$0xff]
    %v8419 = vld [vmem:[%s3804 + $0x98] sm:$0xff]
    %v8420 = vld [vmem:[%s3804 + $0xa0] sm:$0xff]
    %v8421 = vld [vmem:[%s3804 + $0xa8] sm:$0xff]
    %v8422 = vld [vmem:[%s3804 + $0xb0] sm:$0xff]
    %v8423 = vld [vmem:[%s3804 + $0xb8] sm:$0xff]
    %v8424 = vld [vmem:[%s3804 + $0xc0] sm:$0xff]
    %v8425 = vld [vmem:[%s3804 + $0xc8] sm:$0xff]
    %v8426 = vld [vmem:[%s3804 + $0xd0] sm:$0xff]
    %v8427 = vld [vmem:[%s3804 + $0xd8] sm:$0xff]
    %v8428 = vld [vmem:[%s3804 + $0xe0] sm:$0xff]
    %v8429 = vld [vmem:[%s3804 + $0xe8] sm:$0xff]
    %v8430 = vld [vmem:[%s3804 + $0xf0] sm:$0xff]
    %v8431 = vld [vmem:[%s3804 + $0xf8] sm:$0xff]
    %v8434 = vsel %vm189, %v7195, 0.0
    %v8435 = vsel %vm189, %v7199, 0.0
    %8437 = vset.pattern.permute.xlu0 0
    %8438 = vperm.xlu0 %8437, %v8400
    %v8439 = vpop.permute.xlu0 %8438
    %8442 = vset.pattern.permute.xlu0 0
    %8443 = vperm.xlu0 %8442, %v8401
    %v8444 = vpop.permute.xlu0 %8443
    %8447 = vset.pattern.permute.xlu0 0
    %8448 = vperm.xlu0 %8447, %v8402
    %v8449 = vpop.permute.xlu0 %8448
    %8452 = vset.pattern.permute.xlu0 0
    %8453 = vperm.xlu0 %8452, %v8403
    %v8454 = vpop.permute.xlu0 %8453
    %8457 = vset.pattern.permute.xlu0 0
    %8458 = vperm.xlu0 %8457, %v8404
    %v8459 = vpop.permute.xlu0 %8458
    %8462 = vset.pattern.permute.xlu0 0
    %8463 = vperm.xlu0 %8462, %v8405
    %v8464 = vpop.permute.xlu0 %8463
    %8467 = vset.pattern.permute.xlu0 0
    %8468 = vperm.xlu0 %8467, %v8406
    %v8469 = vpop.permute.xlu0 %8468
    %8472 = vset.pattern.permute.xlu0 0
    %8473 = vperm.xlu0 %8472, %v8407
    %v8474 = vpop.permute.xlu0 %8473
    %8477 = vset.pattern.permute.xlu0 0
    %8478 = vperm.xlu0 %8477, %v8408
    %v8479 = vpop.permute.xlu0 %8478
    %8482 = vset.pattern.permute.xlu0 0
    %8483 = vperm.xlu0 %8482, %v8409
    %v8484 = vpop.permute.xlu0 %8483
    %8487 = vset.pattern.permute.xlu0 0
    %8488 = vperm.xlu0 %8487, %v8410
    %v8489 = vpop.permute.xlu0 %8488
    %8492 = vset.pattern.permute.xlu0 0
    %8493 = vperm.xlu0 %8492, %v8411
    %v8494 = vpop.permute.xlu0 %8493
    %8497 = vset.pattern.permute.xlu0 0
    %8498 = vperm.xlu0 %8497, %v8412
    %v8499 = vpop.permute.xlu0 %8498
    %8502 = vset.pattern.permute.xlu0 0
    %8503 = vperm.xlu0 %8502, %v8413
    %v8504 = vpop.permute.xlu0 %8503
    %8507 = vset.pattern.permute.xlu0 0
    %8508 = vperm.xlu0 %8507, %v8414
    %v8509 = vpop.permute.xlu0 %8508
    %8512 = vset.pattern.permute.xlu0 0
    %8513 = vperm.xlu0 %8512, %v8415
    %v8514 = vpop.permute.xlu0 %8513
    %8517 = vset.pattern.permute.xlu0 0
    %8518 = vperm.xlu0 %8517, %v8416
    %v8519 = vpop.permute.xlu0 %8518
    %8522 = vset.pattern.permute.xlu0 0
    %8523 = vperm.xlu0 %8522, %v8417
    %v8524 = vpop.permute.xlu0 %8523
    %8527 = vset.pattern.permute.xlu0 0
    %8528 = vperm.xlu0 %8527, %v8418
    %v8529 = vpop.permute.xlu0 %8528
    %8532 = vset.pattern.permute.xlu0 0
    %8533 = vperm.xlu0 %8532, %v8419
    %v8534 = vpop.permute.xlu0 %8533
    %8537 = vset.pattern.permute.xlu0 0
    %8538 = vperm.xlu0 %8537, %v8420
    %v8539 = vpop.permute.xlu0 %8538
    %8542 = vset.pattern.permute.xlu0 0
    %8543 = vperm.xlu0 %8542, %v8421
    %v8544 = vpop.permute.xlu0 %8543
    %8547 = vset.pattern.permute.xlu0 0
    %8548 = vperm.xlu0 %8547, %v8422
    %v8549 = vpop.permute.xlu0 %8548
    %8552 = vset.pattern.permute.xlu0 0
    %8553 = vperm.xlu0 %8552, %v8423
    %v8554 = vpop.permute.xlu0 %8553
    %8557 = vset.pattern.permute.xlu0 0
    %8558 = vperm.xlu0 %8557, %v8424
    %v8559 = vpop.permute.xlu0 %8558
    %8562 = vset.pattern.permute.xlu0 0
    %8563 = vperm.xlu0 %8562, %v8425
    %v8564 = vpop.permute.xlu0 %8563
    %8567 = vset.pattern.permute.xlu0 0
    %8568 = vperm.xlu0 %8567, %v8426
    %v8569 = vpop.permute.xlu0 %8568
    %8572 = vset.pattern.permute.xlu0 0
    %8573 = vperm.xlu0 %8572, %v8427
    %v8574 = vpop.permute.xlu0 %8573
    %8577 = vset.pattern.permute.xlu0 0
    %8578 = vperm.xlu0 %8577, %v8428
    %v8579 = vpop.permute.xlu0 %8578
    %8582 = vset.pattern.permute.xlu0 0
    %8583 = vperm.xlu0 %8582, %v8429
    %v8584 = vpop.permute.xlu0 %8583
    %8587 = vset.pattern.permute.xlu0 0
    %8588 = vperm.xlu0 %8587, %v8430
    %v8589 = vpop.permute.xlu0 %8588
    %8592 = vset.pattern.permute.xlu0 0
    %8593 = vperm.xlu0 %8592, %v8431
    %v8594 = vpop.permute.xlu0 %8593
    %v8596 = vmul.f32 %v5619, %v8439
    %v8597 = vmul.f32 %v5621, %v8444
    %v8598 = vmul.f32 %v5623, %v8449
    %v8599 = vmul.f32 %v5625, %v8454
    %v8600 = vmul.f32 %v5627, %v8459
    %v8601 = vmul.f32 %v5629, %v8464
    %v8602 = vmul.f32 %v5631, %v8469
    %v8603 = vmul.f32 %v5633, %v8474
    %v8604 = vmul.f32 %v5635, %v8479
    %v8605 = vmul.f32 %v5637, %v8484
    %v8606 = vmul.f32 %v5639, %v8489
    %v8607 = vmul.f32 %v5641, %v8494
    %v8608 = vmul.f32 %v5643, %v8499
    %v8609 = vmul.f32 %v5645, %v8504
    %v8610 = vmul.f32 %v5647, %v8509
    %v8611 = vmul.f32 %v5649, %v8514
    %v8612 = vmul.f32 %v5651, %v8519
    %v8613 = vmul.f32 %v5653, %v8524
    %v8614 = vmul.f32 %v5655, %v8529
    %v8615 = vmul.f32 %v5657, %v8534
    %v8616 = vmul.f32 %v5659, %v8539
    %v8617 = vmul.f32 %v5661, %v8544
    %v8618 = vmul.f32 %v5663, %v8549
    %v8619 = vmul.f32 %v5665, %v8554
    %v8620 = vmul.f32 %v5667, %v8559
    %v8621 = vmul.f32 %v5669, %v8564
    %v8622 = vmul.f32 %v5671, %v8569
    %v8623 = vmul.f32 %v5673, %v8574
    %v8624 = vmul.f32 %v7194, %v8579
    %v8625 = vmul.f32 %v7196, %v8584
    %v8626 = vmul.f32 %v8434, %v8589
    %v8627 = vmul.f32 %v8594, 0.0
    %v8628 = vmul.f32 %v5678, %v8439
    %v8629 = vmul.f32 %v5680, %v8444
    %v8630 = vmul.f32 %v5682, %v8449
    %v8631 = vmul.f32 %v5684, %v8454
    %v8632 = vmul.f32 %v5686, %v8459
    %v8633 = vmul.f32 %v5688, %v8464
    %v8634 = vmul.f32 %v5690, %v8469
    %v8635 = vmul.f32 %v5692, %v8474
    %v8636 = vmul.f32 %v5694, %v8479
    %v8637 = vmul.f32 %v5696, %v8484
    %v8638 = vmul.f32 %v5698, %v8489
    %v8639 = vmul.f32 %v5700, %v8494
    %v8640 = vmul.f32 %v5702, %v8499
    %v8641 = vmul.f32 %v5704, %v8504
    %v8642 = vmul.f32 %v5706, %v8509
    %v8643 = vmul.f32 %v5708, %v8514
    %v8644 = vmul.f32 %v5710, %v8519
    %v8645 = vmul.f32 %v5712, %v8524
    %v8646 = vmul.f32 %v5714, %v8529
    %v8647 = vmul.f32 %v5716, %v8534
    %v8648 = vmul.f32 %v5718, %v8539
    %v8649 = vmul.f32 %v5720, %v8544
    %v8650 = vmul.f32 %v5722, %v8549
    %v8651 = vmul.f32 %v5724, %v8554
    %v8652 = vmul.f32 %v5726, %v8559
    %v8653 = vmul.f32 %v5728, %v8564
    %v8654 = vmul.f32 %v5730, %v8569
    %v8655 = vmul.f32 %v5732, %v8574
    %v8656 = vmul.f32 %v7198, %v8579
    %v8657 = vmul.f32 %v7200, %v8584
    %v8658 = vmul.f32 %v8435, %v8589
    %v8659 = vpack.c.bf16 %v8597, %v8596
    %v8660 = vpack.c.bf16 %v8599, %v8598
    %v8661 = vpack.c.bf16 %v8601, %v8600
    %v8662 = vpack.c.bf16 %v8603, %v8602
    %v8663 = vpack.c.bf16 %v8605, %v8604
    %v8664 = vpack.c.bf16 %v8607, %v8606
    %v8665 = vpack.c.bf16 %v8609, %v8608
    %v8666 = vpack.c.bf16 %v8611, %v8610
    %v8667 = vpack.c.bf16 %v8613, %v8612
    %v8668 = vpack.c.bf16 %v8615, %v8614
    %v8669 = vpack.c.bf16 %v8617, %v8616
    %v8670 = vpack.c.bf16 %v8619, %v8618
    %v8671 = vpack.c.bf16 %v8621, %v8620
    %v8672 = vpack.c.bf16 %v8623, %v8622
    %v8673 = vpack.c.bf16 %v8625, %v8624
    %v8674 = vpack.c.bf16 %v8627, %v8626
    %v8675 = vpack.c.bf16 %v8629, %v8628
    %v8676 = vpack.c.bf16 %v8631, %v8630
    %v8677 = vpack.c.bf16 %v8633, %v8632
    %v8678 = vpack.c.bf16 %v8635, %v8634
    %v8679 = vpack.c.bf16 %v8637, %v8636
    %v8680 = vpack.c.bf16 %v8639, %v8638
    %v8681 = vpack.c.bf16 %v8641, %v8640
    %v8682 = vpack.c.bf16 %v8643, %v8642
    %v8683 = vpack.c.bf16 %v8645, %v8644
    %v8684 = vpack.c.bf16 %v8647, %v8646
    %v8685 = vpack.c.bf16 %v8649, %v8648
    %v8686 = vpack.c.bf16 %v8651, %v8650
    %v8687 = vpack.c.bf16 %v8653, %v8652
    %v8688 = vpack.c.bf16 %v8655, %v8654
    %v8689 = vpack.c.bf16 %v8657, %v8656
    %v8690 = vpack.c.bf16 %v8627, %v8658
    %8723 = vrot.lane.b32.xlu0 %v8659, 64
    %v8724 = vpop.permute.xlu0 %8723
    %8725 = vrot.lane.b32.xlu0 %v8660, 64
    %v8726 = vpop.permute.xlu0 %8725
    %8727 = vrot.lane.b32.xlu0 %v8661, 64
    %v8728 = vpop.permute.xlu0 %8727
    %8729 = vrot.lane.b32.xlu0 %v8662, 64
    %v8730 = vpop.permute.xlu0 %8729
    %8731 = vrot.lane.b32.xlu0 %v8663, 64
    %v8732 = vpop.permute.xlu0 %8731
    %8733 = vrot.lane.b32.xlu0 %v8664, 64
    %v8734 = vpop.permute.xlu0 %8733
    %8735 = vrot.lane.b32.xlu0 %v8665, 64
    %v8736 = vpop.permute.xlu0 %8735
    %8737 = vrot.lane.b32.xlu0 %v8666, 64
    %v8738 = vpop.permute.xlu0 %8737
    %8739 = vrot.lane.b32.xlu0 %v8667, 64
    %v8740 = vpop.permute.xlu0 %8739
    %8741 = vrot.lane.b32.xlu0 %v8668, 64
    %v8742 = vpop.permute.xlu0 %8741
    %8743 = vrot.lane.b32.xlu0 %v8669, 64
    %v8744 = vpop.permute.xlu0 %8743
    %8745 = vrot.lane.b32.xlu0 %v8670, 64
    %v8746 = vpop.permute.xlu0 %8745
    %8747 = vrot.lane.b32.xlu0 %v8671, 64
    %v8748 = vpop.permute.xlu0 %8747
    %8749 = vrot.lane.b32.xlu0 %v8672, 64
    %v8750 = vpop.permute.xlu0 %8749
    %8751 = vrot.lane.b32.xlu0 %v8673, 64
    %v8752 = vpop.permute.xlu0 %8751
    %8753 = vrot.lane.b32.xlu0 %v8674, 64
    %v8754 = vpop.permute.xlu0 %8753
    %8755 = vrot.lane.b32.xlu0 %v8675, 64
    %v8756 = vpop.permute.xlu0 %8755
    %8757 = vrot.lane.b32.xlu0 %v8676, 64
    %v8758 = vpop.permute.xlu0 %8757
    %8759 = vrot.lane.b32.xlu0 %v8677, 64
    %v8760 = vpop.permute.xlu0 %8759
    %8761 = vrot.lane.b32.xlu0 %v8678, 64
    %v8762 = vpop.permute.xlu0 %8761
    %8763 = vrot.lane.b32.xlu0 %v8679, 64
    %v8764 = vpop.permute.xlu0 %8763
    %8765 = vrot.lane.b32.xlu0 %v8680, 64
    %v8766 = vpop.permute.xlu0 %8765
    %8767 = vrot.lane.b32.xlu0 %v8681, 64
    %v8768 = vpop.permute.xlu0 %8767
    %8769 = vrot.lane.b32.xlu0 %v8682, 64
    %v8770 = vpop.permute.xlu0 %8769
    %8771 = vrot.lane.b32.xlu0 %v8683, 64
    %v8772 = vpop.permute.xlu0 %8771
    %8773 = vrot.lane.b32.xlu0 %v8684, 64
    %v8774 = vpop.permute.xlu0 %8773
    %8775 = vrot.lane.b32.xlu0 %v8685, 64
    %v8776 = vpop.permute.xlu0 %8775
    %8777 = vrot.lane.b32.xlu0 %v8686, 64
    %v8778 = vpop.permute.xlu0 %8777
    %8779 = vrot.lane.b32.xlu0 %v8687, 64
    %v8780 = vpop.permute.xlu0 %8779
    %8781 = vrot.lane.b32.xlu0 %v8688, 64
    %v8782 = vpop.permute.xlu0 %8781
    %8783 = vrot.lane.b32.xlu0 %v8689, 64
    %v8784 = vpop.permute.xlu0 %8783
    %8785 = vrot.lane.b32.xlu0 %v8690, 64
    %v8786 = vpop.permute.xlu0 %8785
    %8819 = vst.msk [vmem:[#allocation2 + $0x8] sm:$0xff] %vm7126, %v8724
    %8820 = vst.msk [vmem:[#allocation2 + $0x20] sm:$0xff] %vm7126, %v8726
    %8821 = vst.msk [vmem:[#allocation2 + $0x38] sm:$0xff] %vm7126, %v8728
    %8822 = vst.msk [vmem:[#allocation2 + $0x50] sm:$0xff] %vm7126, %v8730
    %8823 = vst.msk [vmem:[#allocation2 + $0x68] sm:$0xff] %vm7126, %v8732
    %8824 = vst.msk [vmem:[#allocation2 + $0x80] sm:$0xff] %vm7126, %v8734
    %8825 = vst.msk [vmem:[#allocation2 + $0x98] sm:$0xff] %vm7126, %v8736
    %8826 = vst.msk [vmem:[#allocation2 + $0xb0] sm:$0xff] %vm7126, %v8738
    %8827 = vst.msk [vmem:[#allocation2 + $0xc8] sm:$0xff] %vm7126, %v8740
    %8828 = vst.msk [vmem:[#allocation2 + $0xe0] sm:$0xff] %vm7126, %v8742
    %8829 = vst.msk [vmem:[#allocation2 + $0xf8] sm:$0xff] %vm7126, %v8744
    %8830 = vst.msk [vmem:[#allocation2 + $0x110] sm:$0xff] %vm7126, %v8746
    %8831 = vst.msk [vmem:[#allocation2 + $0x128] sm:$0xff] %vm7126, %v8748
    %8832 = vst.msk [vmem:[#allocation2 + $0x140] sm:$0xff] %vm7126, %v8750
    %8833 = vst.msk [vmem:[#allocation2 + $0x158] sm:$0xff] %vm7126, %v8752
    %8834 = vst.msk [vmem:[#allocation2 + $0x170] sm:$0xff] %vm7126, %v8754
    %8835 = vst.msk [vmem:[#allocation2 + $0x188] sm:$0xff] %vm7126, %v8756
    %8836 = vst.msk [vmem:[#allocation2 + $0x1a0] sm:$0xff] %vm7126, %v8758
    %8837 = vst.msk [vmem:[#allocation2 + $0x1b8] sm:$0xff] %vm7126, %v8760
    %8838 = vst.msk [vmem:[#allocation2 + $0x1d0] sm:$0xff] %vm7126, %v8762
    %8839 = vst.msk [vmem:[#allocation2 + $0x1e8] sm:$0xff] %vm7126, %v8764
    %8840 = vst.msk [vmem:[#allocation2 + $0x200] sm:$0xff] %vm7126, %v8766
    %8841 = vst.msk [vmem:[#allocation2 + $0x218] sm:$0xff] %vm7126, %v8768
    %8842 = vst.msk [vmem:[#allocation2 + $0x230] sm:$0xff] %vm7126, %v8770
    %8843 = vst.msk [vmem:[#allocation2 + $0x248] sm:$0xff] %vm7126, %v8772
    %8844 = vst.msk [vmem:[#allocation2 + $0x260] sm:$0xff] %vm7126, %v8774
    %8845 = vst.msk [vmem:[#allocation2 + $0x278] sm:$0xff] %vm7126, %v8776
    %8846 = vst.msk [vmem:[#allocation2 + $0x290] sm:$0xff] %vm7126, %v8778
    %8847 = vst.msk [vmem:[#allocation2 + $0x2a8] sm:$0xff] %vm7126, %v8780
    %8848 = vst.msk [vmem:[#allocation2 + $0x2c0] sm:$0xff] %vm7126, %v8782
    %8849 = vst.msk [vmem:[#allocation2 + $0x2d8] sm:$0xff] %vm7126, %v8784
    %8850 = vst.msk [vmem:[#allocation2 + $0x2f0] sm:$0xff] %vm7126, %v8786
    %v8851 = vld [vmem:[%s4350] sm:$0xff]
    %v8852 = vld [vmem:[%s4350 + $0x8] sm:$0xff]
    %v8853 = vld [vmem:[%s4350 + $0x10] sm:$0xff]
    %v8854 = vld [vmem:[%s4350 + $0x18] sm:$0xff]
    %v8855 = vld [vmem:[%s4350 + $0x20] sm:$0xff]
    %v8856 = vld [vmem:[%s4350 + $0x28] sm:$0xff]
    %v8857 = vld [vmem:[%s4350 + $0x30] sm:$0xff]
    %v8858 = vld [vmem:[%s4350 + $0x38] sm:$0xff]
    %v8859 = vld [vmem:[%s4350 + $0x40] sm:$0xff]
    %v8860 = vld [vmem:[%s4350 + $0x48] sm:$0xff]
    %v8861 = vld [vmem:[%s4350 + $0x50] sm:$0xff]
    %v8862 = vld [vmem:[%s4350 + $0x58] sm:$0xff]
    %v8863 = vld [vmem:[%s4350 + $0x60] sm:$0xff]
    %v8864 = vld [vmem:[%s4350 + $0x68] sm:$0xff]
    %v8865 = vld [vmem:[%s4350 + $0x70] sm:$0xff]
    %v8866 = vld [vmem:[%s4350 + $0x78] sm:$0xff]
    %v8867 = vld [vmem:[%s4350 + $0x80] sm:$0xff]
    %v8868 = vld [vmem:[%s4350 + $0x88] sm:$0xff]
    %v8869 = vld [vmem:[%s4350 + $0x90] sm:$0xff]
    %v8870 = vld [vmem:[%s4350 + $0x98] sm:$0xff]
    %v8871 = vld [vmem:[%s4350 + $0xa0] sm:$0xff]
    %v8872 = vld [vmem:[%s4350 + $0xa8] sm:$0xff]
    %v8873 = vld [vmem:[%s4350 + $0xb0] sm:$0xff]
    %v8874 = vld [vmem:[%s4350 + $0xb8] sm:$0xff]
    %v8875 = vld [vmem:[%s4350 + $0xc0] sm:$0xff]
    %v8876 = vld [vmem:[%s4350 + $0xc8] sm:$0xff]
    %v8877 = vld [vmem:[%s4350 + $0xd0] sm:$0xff]
    %v8878 = vld [vmem:[%s4350 + $0xd8] sm:$0xff]
    %v8879 = vld [vmem:[%s4350 + $0xe0] sm:$0xff]
    %v8880 = vld [vmem:[%s4350 + $0xe8] sm:$0xff]
    %v8881 = vld [vmem:[%s4350 + $0xf0] sm:$0xff]
    %v8882 = vld [vmem:[%s4350 + $0xf8] sm:$0xff]
    %8884 = vset.pattern.permute.xlu0 0
    %8885 = vperm.xlu0 %8884, %v8851
    %v8886 = vpop.permute.xlu0 %8885
    %8889 = vset.pattern.permute.xlu0 0
    %8890 = vperm.xlu0 %8889, %v8852
    %v8891 = vpop.permute.xlu0 %8890
    %8894 = vset.pattern.permute.xlu0 0
    %8895 = vperm.xlu0 %8894, %v8853
    %v8896 = vpop.permute.xlu0 %8895
    %8899 = vset.pattern.permute.xlu0 0
    %8900 = vperm.xlu0 %8899, %v8854
    %v8901 = vpop.permute.xlu0 %8900
    %8904 = vset.pattern.permute.xlu0 0
    %8905 = vperm.xlu0 %8904, %v8855
    %v8906 = vpop.permute.xlu0 %8905
    %8909 = vset.pattern.permute.xlu0 0
    %8910 = vperm.xlu0 %8909, %v8856
    %v8911 = vpop.permute.xlu0 %8910
    %8914 = vset.pattern.permute.xlu0 0
    %8915 = vperm.xlu0 %8914, %v8857
    %v8916 = vpop.permute.xlu0 %8915
    %8919 = vset.pattern.permute.xlu0 0
    %8920 = vperm.xlu0 %8919, %v8858
    %v8921 = vpop.permute.xlu0 %8920
    %8924 = vset.pattern.permute.xlu0 0
    %8925 = vperm.xlu0 %8924, %v8859
    %v8926 = vpop.permute.xlu0 %8925
    %8929 = vset.pattern.permute.xlu0 0
    %8930 = vperm.xlu0 %8929, %v8860
    %v8931 = vpop.permute.xlu0 %8930
    %8934 = vset.pattern.permute.xlu0 0
    %8935 = vperm.xlu0 %8934, %v8861
    %v8936 = vpop.permute.xlu0 %8935
    %8939 = vset.pattern.permute.xlu0 0
    %8940 = vperm.xlu0 %8939, %v8862
    %v8941 = vpop.permute.xlu0 %8940
    %8944 = vset.pattern.permute.xlu0 0
    %8945 = vperm.xlu0 %8944, %v8863
    %v8946 = vpop.permute.xlu0 %8945
    %8949 = vset.pattern.permute.xlu0 0
    %8950 = vperm.xlu0 %8949, %v8864
    %v8951 = vpop.permute.xlu0 %8950
    %8954 = vset.pattern.permute.xlu0 0
    %8955 = vperm.xlu0 %8954, %v8865
    %v8956 = vpop.permute.xlu0 %8955
    %8959 = vset.pattern.permute.xlu0 0
    %8960 = vperm.xlu0 %8959, %v8866
    %v8961 = vpop.permute.xlu0 %8960
    %8964 = vset.pattern.permute.xlu0 0
    %8965 = vperm.xlu0 %8964, %v8867
    %v8966 = vpop.permute.xlu0 %8965
    %8969 = vset.pattern.permute.xlu0 0
    %8970 = vperm.xlu0 %8969, %v8868
    %v8971 = vpop.permute.xlu0 %8970
    %8974 = vset.pattern.permute.xlu0 0
    %8975 = vperm.xlu0 %8974, %v8869
    %v8976 = vpop.permute.xlu0 %8975
    %8979 = vset.pattern.permute.xlu0 0
    %8980 = vperm.xlu0 %8979, %v8870
    %v8981 = vpop.permute.xlu0 %8980
    %8984 = vset.pattern.permute.xlu0 0
    %8985 = vperm.xlu0 %8984, %v8871
    %v8986 = vpop.permute.xlu0 %8985
    %8989 = vset.pattern.permute.xlu0 0
    %8990 = vperm.xlu0 %8989, %v8872
    %v8991 = vpop.permute.xlu0 %8990
    %8994 = vset.pattern.permute.xlu0 0
    %8995 = vperm.xlu0 %8994, %v8873
    %v8996 = vpop.permute.xlu0 %8995
    %8999 = vset.pattern.permute.xlu0 0
    %9000 = vperm.xlu0 %8999, %v8874
    %v9001 = vpop.permute.xlu0 %9000
    %9004 = vset.pattern.permute.xlu0 0
    %9005 = vperm.xlu0 %9004, %v8875
    %v9006 = vpop.permute.xlu0 %9005
    %9009 = vset.pattern.permute.xlu0 0
    %9010 = vperm.xlu0 %9009, %v8876
    %v9011 = vpop.permute.xlu0 %9010
    %9014 = vset.pattern.permute.xlu0 0
    %9015 = vperm.xlu0 %9014, %v8877
    %v9016 = vpop.permute.xlu0 %9015
    %9019 = vset.pattern.permute.xlu0 0
    %9020 = vperm.xlu0 %9019, %v8878
    %v9021 = vpop.permute.xlu0 %9020
    %9024 = vset.pattern.permute.xlu0 0
    %9025 = vperm.xlu0 %9024, %v8879
    %v9026 = vpop.permute.xlu0 %9025
    %9029 = vset.pattern.permute.xlu0 0
    %9030 = vperm.xlu0 %9029, %v8880
    %v9031 = vpop.permute.xlu0 %9030
    %9034 = vset.pattern.permute.xlu0 0
    %9035 = vperm.xlu0 %9034, %v8881
    %v9036 = vpop.permute.xlu0 %9035
    %9039 = vset.pattern.permute.xlu0 0
    %9040 = vperm.xlu0 %9039, %v8882
    %v9041 = vpop.permute.xlu0 %9040
    %v9043 = vmul.f32 %v5493, %v8886
    %v9044 = vmul.f32 %v5494, %v8891
    %v9045 = vmul.f32 %v5495, %v8896
    %v9046 = vmul.f32 %v5496, %v8901
    %v9047 = vmul.f32 %v5497, %v8906
    %v9048 = vmul.f32 %v5498, %v8911
    %v9049 = vmul.f32 %v5499, %v8916
    %v9050 = vmul.f32 %v5500, %v8921
    %v9051 = vmul.f32 %v5501, %v8926
    %v9052 = vmul.f32 %v5502, %v8931
    %v9053 = vmul.f32 %v5503, %v8936
    %v9054 = vmul.f32 %v5504, %v8941
    %v9055 = vmul.f32 %v5505, %v8946
    %v9056 = vmul.f32 %v5506, %v8951
    %v9057 = vmul.f32 %v5507, %v8956
    %v9058 = vmul.f32 %v5508, %v8961
    %v9059 = vmul.f32 %v5509, %v8966
    %v9060 = vmul.f32 %v5510, %v8971
    %v9061 = vmul.f32 %v5511, %v8976
    %v9062 = vmul.f32 %v5512, %v8981
    %v9063 = vmul.f32 %v5513, %v8986
    %v9064 = vmul.f32 %v5514, %v8991
    %v9065 = vmul.f32 %v5515, %v8996
    %v9066 = vmul.f32 %v5516, %v9001
    %v9067 = vmul.f32 %v5517, %v9006
    %v9068 = vmul.f32 %v5518, %v9011
    %v9069 = vmul.f32 %v5519, %v9016
    %v9070 = vmul.f32 %v5520, %v9021
    %v9071 = vmul.f32 %v5521, %v9026
    %v9072 = vmul.f32 %v5522, %v9031
    %v9073 = vmul.f32 %v9036, 0.0
    %v9074 = vmul.f32 %v9041, 0.0
    %v9075 = vmul.f32 %v5525, %v8886
    %v9076 = vmul.f32 %v5526, %v8891
    %v9077 = vmul.f32 %v5527, %v8896
    %v9078 = vmul.f32 %v5528, %v8901
    %v9079 = vmul.f32 %v5529, %v8906
    %v9080 = vmul.f32 %v5530, %v8911
    %v9081 = vmul.f32 %v5531, %v8916
    %v9082 = vmul.f32 %v5532, %v8921
    %v9083 = vmul.f32 %v5533, %v8926
    %v9084 = vmul.f32 %v5534, %v8931
    %v9085 = vmul.f32 %v5535, %v8936
    %v9086 = vmul.f32 %v5536, %v8941
    %v9087 = vmul.f32 %v5537, %v8946
    %v9088 = vmul.f32 %v5538, %v8951
    %v9089 = vmul.f32 %v5539, %v8956
    %v9090 = vmul.f32 %v5540, %v8961
    %v9091 = vmul.f32 %v5541, %v8966
    %v9092 = vmul.f32 %v5542, %v8971
    %v9093 = vmul.f32 %v5543, %v8976
    %v9094 = vmul.f32 %v5544, %v8981
    %v9095 = vmul.f32 %v5545, %v8986
    %v9096 = vmul.f32 %v5546, %v8991
    %v9097 = vmul.f32 %v5547, %v8996
    %v9098 = vmul.f32 %v5548, %v9001
    %v9099 = vmul.f32 %v5549, %v9006
    %v9100 = vmul.f32 %v5550, %v9011
    %v9101 = vmul.f32 %v5551, %v9016
    %v9102 = vmul.f32 %v5552, %v9021
    %v9103 = vmul.f32 %v5553, %v9026
    %v9104 = vmul.f32 %v5554, %v9031
    %v9105 = vpack.c.bf16 %v9044, %v9043
    %v9106 = vpack.c.bf16 %v9046, %v9045
    %v9107 = vpack.c.bf16 %v9048, %v9047
    %v9108 = vpack.c.bf16 %v9050, %v9049
    %v9109 = vpack.c.bf16 %v9052, %v9051
    %v9110 = vpack.c.bf16 %v9054, %v9053
    %v9111 = vpack.c.bf16 %v9056, %v9055
    %v9112 = vpack.c.bf16 %v9058, %v9057
    %v9113 = vpack.c.bf16 %v9060, %v9059
    %v9114 = vpack.c.bf16 %v9062, %v9061
    %v9115 = vpack.c.bf16 %v9064, %v9063
    %v9116 = vpack.c.bf16 %v9066, %v9065
    %v9117 = vpack.c.bf16 %v9068, %v9067
    %v9118 = vpack.c.bf16 %v9070, %v9069
    %v9119 = vpack.c.bf16 %v9072, %v9071
    %v9120 = vpack.c.bf16 %v9074, %v9073
    %v9121 = vpack.c.bf16 %v9076, %v9075
    %v9122 = vpack.c.bf16 %v9078, %v9077
    %v9123 = vpack.c.bf16 %v9080, %v9079
    %v9124 = vpack.c.bf16 %v9082, %v9081
    %v9125 = vpack.c.bf16 %v9084, %v9083
    %v9126 = vpack.c.bf16 %v9086, %v9085
    %v9127 = vpack.c.bf16 %v9088, %v9087
    %v9128 = vpack.c.bf16 %v9090, %v9089
    %v9129 = vpack.c.bf16 %v9092, %v9091
    %v9130 = vpack.c.bf16 %v9094, %v9093
    %v9131 = vpack.c.bf16 %v9096, %v9095
    %v9132 = vpack.c.bf16 %v9098, %v9097
    %v9133 = vpack.c.bf16 %v9100, %v9099
    %v9134 = vpack.c.bf16 %v9102, %v9101
    %v9135 = vpack.c.bf16 %v9104, %v9103
    %9167 = vrot.lane.b32.xlu0 %v9105, 96
    %v9168 = vpop.permute.xlu0 %9167
    %9169 = vrot.lane.b32.xlu0 %v9106, 96
    %v9170 = vpop.permute.xlu0 %9169
    %9171 = vrot.lane.b32.xlu0 %v9107, 96
    %v9172 = vpop.permute.xlu0 %9171
    %9173 = vrot.lane.b32.xlu0 %v9108, 96
    %v9174 = vpop.permute.xlu0 %9173
    %9175 = vrot.lane.b32.xlu0 %v9109, 96
    %v9176 = vpop.permute.xlu0 %9175
    %9177 = vrot.lane.b32.xlu0 %v9110, 96
    %v9178 = vpop.permute.xlu0 %9177
    %9179 = vrot.lane.b32.xlu0 %v9111, 96
    %v9180 = vpop.permute.xlu0 %9179
    %9181 = vrot.lane.b32.xlu0 %v9112, 96
    %v9182 = vpop.permute.xlu0 %9181
    %9183 = vrot.lane.b32.xlu0 %v9113, 96
    %v9184 = vpop.permute.xlu0 %9183
    %9185 = vrot.lane.b32.xlu0 %v9114, 96
    %v9186 = vpop.permute.xlu0 %9185
    %9187 = vrot.lane.b32.xlu0 %v9115, 96
    %v9188 = vpop.permute.xlu0 %9187
    %9189 = vrot.lane.b32.xlu0 %v9116, 96
    %v9190 = vpop.permute.xlu0 %9189
    %9191 = vrot.lane.b32.xlu0 %v9117, 96
    %v9192 = vpop.permute.xlu0 %9191
    %9193 = vrot.lane.b32.xlu0 %v9118, 96
    %v9194 = vpop.permute.xlu0 %9193
    %9195 = vrot.lane.b32.xlu0 %v9119, 96
    %v9196 = vpop.permute.xlu0 %9195
    %9197 = vrot.lane.b32.xlu0 %v9120, 96
    %v9198 = vpop.permute.xlu0 %9197
    %9199 = vrot.lane.b32.xlu0 %v9121, 96
    %v9200 = vpop.permute.xlu0 %9199
    %9201 = vrot.lane.b32.xlu0 %v9122, 96
    %v9202 = vpop.permute.xlu0 %9201
    %9203 = vrot.lane.b32.xlu0 %v9123, 96
    %v9204 = vpop.permute.xlu0 %9203
    %9205 = vrot.lane.b32.xlu0 %v9124, 96
    %v9206 = vpop.permute.xlu0 %9205
    %9207 = vrot.lane.b32.xlu0 %v9125, 96
    %v9208 = vpop.permute.xlu0 %9207
    %9209 = vrot.lane.b32.xlu0 %v9126, 96
    %v9210 = vpop.permute.xlu0 %9209
    %9211 = vrot.lane.b32.xlu0 %v9127, 96
    %v9212 = vpop.permute.xlu0 %9211
    %9213 = vrot.lane.b32.xlu0 %v9128, 96
    %v9214 = vpop.permute.xlu0 %9213
    %9215 = vrot.lane.b32.xlu0 %v9129, 96
    %v9216 = vpop.permute.xlu0 %9215
    %9217 = vrot.lane.b32.xlu0 %v9130, 96
    %v9218 = vpop.permute.xlu0 %9217
    %9219 = vrot.lane.b32.xlu0 %v9131, 96
    %v9220 = vpop.permute.xlu0 %9219
    %9221 = vrot.lane.b32.xlu0 %v9132, 96
    %v9222 = vpop.permute.xlu0 %9221
    %9223 = vrot.lane.b32.xlu0 %v9133, 96
    %v9224 = vpop.permute.xlu0 %9223
    %9225 = vrot.lane.b32.xlu0 %v9134, 96
    %v9226 = vpop.permute.xlu0 %9225
    %9227 = vrot.lane.b32.xlu0 %v9135, 96
    %v9228 = vpop.permute.xlu0 %9227
    %9260 = vst.msk [vmem:[#allocation2 + $0x8] sm:$0xff] %vm7589, %v9168
    %9261 = vst.msk [vmem:[#allocation2 + $0x20] sm:$0xff] %vm7589, %v9170
    %9262 = vst.msk [vmem:[#allocation2 + $0x38] sm:$0xff] %vm7589, %v9172
    %9263 = vst.msk [vmem:[#allocation2 + $0x50] sm:$0xff] %vm7589, %v9174
    %9264 = vst.msk [vmem:[#allocation2 + $0x68] sm:$0xff] %vm7589, %v9176
    %9265 = vst.msk [vmem:[#allocation2 + $0x80] sm:$0xff] %vm7589, %v9178
    %9266 = vst.msk [vmem:[#allocation2 + $0x98] sm:$0xff] %vm7589, %v9180
    %9267 = vst.msk [vmem:[#allocation2 + $0xb0] sm:$0xff] %vm7589, %v9182
    %9268 = vst.msk [vmem:[#allocation2 + $0xc8] sm:$0xff] %vm7589, %v9184
    %9269 = vst.msk [vmem:[#allocation2 + $0xe0] sm:$0xff] %vm7589, %v9186
    %9270 = vst.msk [vmem:[#allocation2 + $0xf8] sm:$0xff] %vm7589, %v9188
    %9271 = vst.msk [vmem:[#allocation2 + $0x110] sm:$0xff] %vm7589, %v9190
    %9272 = vst.msk [vmem:[#allocation2 + $0x128] sm:$0xff] %vm7589, %v9192
    %9273 = vst.msk [vmem:[#allocation2 + $0x140] sm:$0xff] %vm7589, %v9194
    %9274 = vst.msk [vmem:[#allocation2 + $0x158] sm:$0xff] %vm7589, %v9196
    %9275 = vst.msk [vmem:[#allocation2 + $0x170] sm:$0xff] %vm7589, %v9198
    %9276 = vst.msk [vmem:[#allocation2 + $0x188] sm:$0xff] %vm7589, %v9200
    %9277 = vst.msk [vmem:[#allocation2 + $0x1a0] sm:$0xff] %vm7589, %v9202
    %9278 = vst.msk [vmem:[#allocation2 + $0x1b8] sm:$0xff] %vm7589, %v9204
    %9279 = vst.msk [vmem:[#allocation2 + $0x1d0] sm:$0xff] %vm7589, %v9206
    %9280 = vst.msk [vmem:[#allocation2 + $0x1e8] sm:$0xff] %vm7589, %v9208
    %9281 = vst.msk [vmem:[#allocation2 + $0x200] sm:$0xff] %vm7589, %v9210
    %9282 = vst.msk [vmem:[#allocation2 + $0x218] sm:$0xff] %vm7589, %v9212
    %9283 = vst.msk [vmem:[#allocation2 + $0x230] sm:$0xff] %vm7589, %v9214
    %9284 = vst.msk [vmem:[#allocation2 + $0x248] sm:$0xff] %vm7589, %v9216
    %9285 = vst.msk [vmem:[#allocation2 + $0x260] sm:$0xff] %vm7589, %v9218
    %9286 = vst.msk [vmem:[#allocation2 + $0x278] sm:$0xff] %vm7589, %v9220
    %9287 = vst.msk [vmem:[#allocation2 + $0x290] sm:$0xff] %vm7589, %v9222
    %9288 = vst.msk [vmem:[#allocation2 + $0x2a8] sm:$0xff] %vm7589, %v9224
    %9289 = vst.msk [vmem:[#allocation2 + $0x2c0] sm:$0xff] %vm7589, %v9226
    %9290 = vst.msk [vmem:[#allocation2 + $0x2d8] sm:$0xff] %vm7589, %v9228
    %9291 = vst.msk [vmem:[#allocation2 + $0x2f0] sm:$0xff] %vm7589, %v9198
    %v9292 = vld [vmem:[%s4885] sm:$0xff]
    %v9293 = vld [vmem:[%s4885 + $0x8] sm:$0xff]
    %v9294 = vld [vmem:[%s4885 + $0x10] sm:$0xff]
    %v9295 = vld [vmem:[%s4885 + $0x18] sm:$0xff]
    %v9296 = vld [vmem:[%s4885 + $0x20] sm:$0xff]
    %v9297 = vld [vmem:[%s4885 + $0x28] sm:$0xff]
    %v9298 = vld [vmem:[%s4885 + $0x30] sm:$0xff]
    %v9299 = vld [vmem:[%s4885 + $0x38] sm:$0xff]
    %v9300 = vld [vmem:[%s4885 + $0x40] sm:$0xff]
    %v9301 = vld [vmem:[%s4885 + $0x48] sm:$0xff]
    %v9302 = vld [vmem:[%s4885 + $0x50] sm:$0xff]
    %v9303 = vld [vmem:[%s4885 + $0x58] sm:$0xff]
    %v9304 = vld [vmem:[%s4885 + $0x60] sm:$0xff]
    %v9305 = vld [vmem:[%s4885 + $0x68] sm:$0xff]
    %v9306 = vld [vmem:[%s4885 + $0x70] sm:$0xff]
    %v9307 = vld [vmem:[%s4885 + $0x78] sm:$0xff]
    %v9308 = vld [vmem:[%s4885 + $0x80] sm:$0xff]
    %v9309 = vld [vmem:[%s4885 + $0x88] sm:$0xff]
    %v9310 = vld [vmem:[%s4885 + $0x90] sm:$0xff]
    %v9311 = vld [vmem:[%s4885 + $0x98] sm:$0xff]
    %v9312 = vld [vmem:[%s4885 + $0xa0] sm:$0xff]
    %v9313 = vld [vmem:[%s4885 + $0xa8] sm:$0xff]
    %v9314 = vld [vmem:[%s4885 + $0xb0] sm:$0xff]
    %v9315 = vld [vmem:[%s4885 + $0xb8] sm:$0xff]
    %v9316 = vld [vmem:[%s4885 + $0xc0] sm:$0xff]
    %v9317 = vld [vmem:[%s4885 + $0xc8] sm:$0xff]
    %v9318 = vld [vmem:[%s4885 + $0xd0] sm:$0xff]
    %v9319 = vld [vmem:[%s4885 + $0xd8] sm:$0xff]
    %v9320 = vld [vmem:[%s4885 + $0xe0] sm:$0xff]
    %v9321 = vld [vmem:[%s4885 + $0xe8] sm:$0xff]
    %v9322 = vld [vmem:[%s4885 + $0xf0] sm:$0xff]
    %v9323 = vld [vmem:[%s4885 + $0xf8] sm:$0xff]
    %9325 = vset.pattern.permute.xlu0 0
    %9326 = vperm.xlu0 %9325, %v9292
    %v9327 = vpop.permute.xlu0 %9326
    %9330 = vset.pattern.permute.xlu0 0
    %9331 = vperm.xlu0 %9330, %v9293
    %v9332 = vpop.permute.xlu0 %9331
    %9335 = vset.pattern.permute.xlu0 0
    %9336 = vperm.xlu0 %9335, %v9294
    %v9337 = vpop.permute.xlu0 %9336
    %9340 = vset.pattern.permute.xlu0 0
    %9341 = vperm.xlu0 %9340, %v9295
    %v9342 = vpop.permute.xlu0 %9341
    %9345 = vset.pattern.permute.xlu0 0
    %9346 = vperm.xlu0 %9345, %v9296
    %v9347 = vpop.permute.xlu0 %9346
    %9350 = vset.pattern.permute.xlu0 0
    %9351 = vperm.xlu0 %9350, %v9297
    %v9352 = vpop.permute.xlu0 %9351
    %9355 = vset.pattern.permute.xlu0 0
    %9356 = vperm.xlu0 %9355, %v9298
    %v9357 = vpop.permute.xlu0 %9356
    %9360 = vset.pattern.permute.xlu0 0
    %9361 = vperm.xlu0 %9360, %v9299
    %v9362 = vpop.permute.xlu0 %9361
    %9365 = vset.pattern.permute.xlu0 0
    %9366 = vperm.xlu0 %9365, %v9300
    %v9367 = vpop.permute.xlu0 %9366
    %9370 = vset.pattern.permute.xlu0 0
    %9371 = vperm.xlu0 %9370, %v9301
    %v9372 = vpop.permute.xlu0 %9371
    %9375 = vset.pattern.permute.xlu0 0
    %9376 = vperm.xlu0 %9375, %v9302
    %v9377 = vpop.permute.xlu0 %9376
    %9380 = vset.pattern.permute.xlu0 0
    %9381 = vperm.xlu0 %9380, %v9303
    %v9382 = vpop.permute.xlu0 %9381
    %9385 = vset.pattern.permute.xlu0 0
    %9386 = vperm.xlu0 %9385, %v9304
    %v9387 = vpop.permute.xlu0 %9386
    %9390 = vset.pattern.permute.xlu0 0
    %9391 = vperm.xlu0 %9390, %v9305
    %v9392 = vpop.permute.xlu0 %9391
    %9395 = vset.pattern.permute.xlu0 0
    %9396 = vperm.xlu0 %9395, %v9306
    %v9397 = vpop.permute.xlu0 %9396
    %9400 = vset.pattern.permute.xlu0 0
    %9401 = vperm.xlu0 %9400, %v9307
    %v9402 = vpop.permute.xlu0 %9401
    %9405 = vset.pattern.permute.xlu0 0
    %9406 = vperm.xlu0 %9405, %v9308
    %v9407 = vpop.permute.xlu0 %9406
    %9410 = vset.pattern.permute.xlu0 0
    %9411 = vperm.xlu0 %9410, %v9309
    %v9412 = vpop.permute.xlu0 %9411
    %9415 = vset.pattern.permute.xlu0 0
    %9416 = vperm.xlu0 %9415, %v9310
    %v9417 = vpop.permute.xlu0 %9416
    %9420 = vset.pattern.permute.xlu0 0
    %9421 = vperm.xlu0 %9420, %v9311
    %v9422 = vpop.permute.xlu0 %9421
    %9425 = vset.pattern.permute.xlu0 0
    %9426 = vperm.xlu0 %9425, %v9312
    %v9427 = vpop.permute.xlu0 %9426
    %9430 = vset.pattern.permute.xlu0 0
    %9431 = vperm.xlu0 %9430, %v9313
    %v9432 = vpop.permute.xlu0 %9431
    %9435 = vset.pattern.permute.xlu0 0
    %9436 = vperm.xlu0 %9435, %v9314
    %v9437 = vpop.permute.xlu0 %9436
    %9440 = vset.pattern.permute.xlu0 0
    %9441 = vperm.xlu0 %9440, %v9315
    %v9442 = vpop.permute.xlu0 %9441
    %9445 = vset.pattern.permute.xlu0 0
    %9446 = vperm.xlu0 %9445, %v9316
    %v9447 = vpop.permute.xlu0 %9446
    %9450 = vset.pattern.permute.xlu0 0
    %9451 = vperm.xlu0 %9450, %v9317
    %v9452 = vpop.permute.xlu0 %9451
    %9455 = vset.pattern.permute.xlu0 0
    %9456 = vperm.xlu0 %9455, %v9318
    %v9457 = vpop.permute.xlu0 %9456
    %9460 = vset.pattern.permute.xlu0 0
    %9461 = vperm.xlu0 %9460, %v9319
    %v9462 = vpop.permute.xlu0 %9461
    %9465 = vset.pattern.permute.xlu0 0
    %9466 = vperm.xlu0 %9465, %v9320
    %v9467 = vpop.permute.xlu0 %9466
    %9470 = vset.pattern.permute.xlu0 0
    %9471 = vperm.xlu0 %9470, %v9321
    %v9472 = vpop.permute.xlu0 %9471
    %9475 = vset.pattern.permute.xlu0 0
    %9476 = vperm.xlu0 %9475, %v9322
    %v9477 = vpop.permute.xlu0 %9476
    %9480 = vset.pattern.permute.xlu0 0
    %9481 = vperm.xlu0 %9480, %v9323
    %v9482 = vpop.permute.xlu0 %9481
    %v9484 = vmul.f32 %v6563, %v9327
    %v9485 = vmul.f32 %v6565, %v9332
    %v9486 = vmul.f32 %v6567, %v9337
    %v9487 = vmul.f32 %v6569, %v9342
    %v9488 = vmul.f32 %v6571, %v9347
    %v9489 = vmul.f32 %v6573, %v9352
    %v9490 = vmul.f32 %v6575, %v9357
    %v9491 = vmul.f32 %v6577, %v9362
    %v9492 = vmul.f32 %v6579, %v9367
    %v9493 = vmul.f32 %v6581, %v9372
    %v9494 = vmul.f32 %v6583, %v9377
    %v9495 = vmul.f32 %v6585, %v9382
    %v9496 = vmul.f32 %v6587, %v9387
    %v9497 = vmul.f32 %v6589, %v9392
    %v9498 = vmul.f32 %v6591, %v9397
    %v9499 = vmul.f32 %v6593, %v9402
    %v9500 = vmul.f32 %v6595, %v9407
    %v9501 = vmul.f32 %v6597, %v9412
    %v9502 = vmul.f32 %v6599, %v9417
    %v9503 = vmul.f32 %v6601, %v9422
    %v9504 = vmul.f32 %v6603, %v9427
    %v9505 = vmul.f32 %v6605, %v9432
    %v9506 = vmul.f32 %v6607, %v9437
    %v9507 = vmul.f32 %v6609, %v9442
    %v9508 = vmul.f32 %v6611, %v9447
    %v9509 = vmul.f32 %v6613, %v9452
    %v9510 = vmul.f32 %v6615, %v9457
    %v9511 = vmul.f32 %v6617, %v9462
    %v9512 = vmul.f32 %v7975, %v9467
    %v9513 = vmul.f32 %v7982, %v9472
    %v9514 = vmul.f32 %v9477, 0.0
    %v9515 = vmul.f32 %v9482, 0.0
    %v9516 = vmul.f32 %v6624, %v9327
    %v9517 = vmul.f32 %v6626, %v9332
    %v9518 = vmul.f32 %v6628, %v9337
    %v9519 = vmul.f32 %v6630, %v9342
    %v9520 = vmul.f32 %v6632, %v9347
    %v9521 = vmul.f32 %v6634, %v9352
    %v9522 = vmul.f32 %v6636, %v9357
    %v9523 = vmul.f32 %v6638, %v9362
    %v9524 = vmul.f32 %v6640, %v9367
    %v9525 = vmul.f32 %v6642, %v9372
    %v9526 = vmul.f32 %v6644, %v9377
    %v9527 = vmul.f32 %v6646, %v9382
    %v9528 = vmul.f32 %v6648, %v9387
    %v9529 = vmul.f32 %v6650, %v9392
    %v9530 = vmul.f32 %v6652, %v9397
    %v9531 = vmul.f32 %v6654, %v9402
    %v9532 = vmul.f32 %v6656, %v9407
    %v9533 = vmul.f32 %v6658, %v9412
    %v9534 = vmul.f32 %v6660, %v9417
    %v9535 = vmul.f32 %v6662, %v9422
    %v9536 = vmul.f32 %v6664, %v9427
    %v9537 = vmul.f32 %v6666, %v9432
    %v9538 = vmul.f32 %v6668, %v9437
    %v9539 = vmul.f32 %v6670, %v9442
    %v9540 = vmul.f32 %v6672, %v9447
    %v9541 = vmul.f32 %v6674, %v9452
    %v9542 = vmul.f32 %v6676, %v9457
    %v9543 = vmul.f32 %v6678, %v9462
    %v9544 = vmul.f32 %v7977, %v9467
    %v9545 = vmul.f32 %v7983, %v9472
    %v9546 = vpack.c.bf16 %v9485, %v9484
    %v9547 = vpack.c.bf16 %v9487, %v9486
    %v9548 = vpack.c.bf16 %v9489, %v9488
    %v9549 = vpack.c.bf16 %v9491, %v9490
    %v9550 = vpack.c.bf16 %v9493, %v9492
    %v9551 = vpack.c.bf16 %v9495, %v9494
    %v9552 = vpack.c.bf16 %v9497, %v9496
    %v9553 = vpack.c.bf16 %v9499, %v9498
    %v9554 = vpack.c.bf16 %v9501, %v9500
    %v9555 = vpack.c.bf16 %v9503, %v9502
    %v9556 = vpack.c.bf16 %v9505, %v9504
    %v9557 = vpack.c.bf16 %v9507, %v9506
    %v9558 = vpack.c.bf16 %v9509, %v9508
    %v9559 = vpack.c.bf16 %v9511, %v9510
    %v9560 = vpack.c.bf16 %v9513, %v9512
    %v9561 = vpack.c.bf16 %v9515, %v9514
    %v9562 = vpack.c.bf16 %v9517, %v9516
    %v9563 = vpack.c.bf16 %v9519, %v9518
    %v9564 = vpack.c.bf16 %v9521, %v9520
    %v9565 = vpack.c.bf16 %v9523, %v9522
    %v9566 = vpack.c.bf16 %v9525, %v9524
    %v9567 = vpack.c.bf16 %v9527, %v9526
    %v9568 = vpack.c.bf16 %v9529, %v9528
    %v9569 = vpack.c.bf16 %v9531, %v9530
    %v9570 = vpack.c.bf16 %v9533, %v9532
    %v9571 = vpack.c.bf16 %v9535, %v9534
    %v9572 = vpack.c.bf16 %v9537, %v9536
    %v9573 = vpack.c.bf16 %v9539, %v9538
    %v9574 = vpack.c.bf16 %v9541, %v9540
    %v9575 = vpack.c.bf16 %v9543, %v9542
    %v9576 = vpack.c.bf16 %v9545, %v9544
    %9577 = vst.msk [vmem:[#allocation2 + $0x10] sm:$0xff] %vm6048, %v9546
    %9578 = vst.msk [vmem:[#allocation2 + $0x28] sm:$0xff] %vm6048, %v9547
    %9579 = vst.msk [vmem:[#allocation2 + $0x40] sm:$0xff] %vm6048, %v9548
    %9580 = vst.msk [vmem:[#allocation2 + $0x58] sm:$0xff] %vm6048, %v9549
    %9581 = vst.msk [vmem:[#allocation2 + $0x70] sm:$0xff] %vm6048, %v9550
    %9582 = vst.msk [vmem:[#allocation2 + $0x88] sm:$0xff] %vm6048, %v9551
    %9583 = vst.msk [vmem:[#allocation2 + $0xa0] sm:$0xff] %vm6048, %v9552
    %9584 = vst.msk [vmem:[#allocation2 + $0xb8] sm:$0xff] %vm6048, %v9553
    %9585 = vst.msk [vmem:[#allocation2 + $0xd0] sm:$0xff] %vm6048, %v9554
    %9586 = vst.msk [vmem:[#allocation2 + $0xe8] sm:$0xff] %vm6048, %v9555
    %9587 = vst.msk [vmem:[#allocation2 + $0x100] sm:$0xff] %vm6048, %v9556
    %9588 = vst.msk [vmem:[#allocation2 + $0x118] sm:$0xff] %vm6048, %v9557
    %9589 = vst.msk [vmem:[#allocation2 + $0x130] sm:$0xff] %vm6048, %v9558
    %9590 = vst.msk [vmem:[#allocation2 + $0x148] sm:$0xff] %vm6048, %v9559
    %9591 = vst.msk [vmem:[#allocation2 + $0x160] sm:$0xff] %vm6048, %v9560
    %9592 = vst.msk [vmem:[#allocation2 + $0x178] sm:$0xff] %vm6048, %v9561
    %9593 = vst.msk [vmem:[#allocation2 + $0x190] sm:$0xff] %vm6048, %v9562
    %9594 = vst.msk [vmem:[#allocation2 + $0x1a8] sm:$0xff] %vm6048, %v9563
    %9595 = vst.msk [vmem:[#allocation2 + $0x1c0] sm:$0xff] %vm6048, %v9564
    %9596 = vst.msk [vmem:[#allocation2 + $0x1d8] sm:$0xff] %vm6048, %v9565
    %9597 = vst.msk [vmem:[#allocation2 + $0x1f0] sm:$0xff] %vm6048, %v9566
    %9598 = vst.msk [vmem:[#allocation2 + $0x208] sm:$0xff] %vm6048, %v9567
    %9599 = vst.msk [vmem:[#allocation2 + $0x220] sm:$0xff] %vm6048, %v9568
    %9600 = vst.msk [vmem:[#allocation2 + $0x238] sm:$0xff] %vm6048, %v9569
    %9601 = vst.msk [vmem:[#allocation2 + $0x250] sm:$0xff] %vm6048, %v9570
    %9602 = vst.msk [vmem:[#allocation2 + $0x268] sm:$0xff] %vm6048, %v9571
    %9603 = vst.msk [vmem:[#allocation2 + $0x280] sm:$0xff] %vm6048, %v9572
    %9604 = vst.msk [vmem:[#allocation2 + $0x298] sm:$0xff] %vm6048, %v9573
    %9605 = vst.msk [vmem:[#allocation2 + $0x2b0] sm:$0xff] %vm6048, %v9574
    %9606 = vst.msk [vmem:[#allocation2 + $0x2c8] sm:$0xff] %vm6048, %v9575
    %9607 = vst.msk [vmem:[#allocation2 + $0x2e0] sm:$0xff] %vm6048, %v9576
    %9608 = vst.msk [vmem:[#allocation2 + $0x2f8] sm:$0xff] %vm6048, %v9561
    %v9609 = vld [vmem:[#allocation2] sm:$0xff]
    %v9610 = vld [vmem:[#allocation2 + $0x8] sm:$0xff]
    %v9611 = vld [vmem:[#allocation2 + $0x10] sm:$0xff]
    %v9612 = vld [vmem:[#allocation2 + $0x18] sm:$0xff]
    %v9613 = vld [vmem:[#allocation2 + $0x20] sm:$0xff]
    %v9614 = vld [vmem:[#allocation2 + $0x28] sm:$0xff]
    %v9615 = vld [vmem:[#allocation2 + $0x30] sm:$0xff]
    %v9616 = vld [vmem:[#allocation2 + $0x38] sm:$0xff]
    %v9617 = vld [vmem:[#allocation2 + $0x40] sm:$0xff]
    %v9618 = vld [vmem:[#allocation2 + $0x48] sm:$0xff]
    %v9619 = vld [vmem:[#allocation2 + $0x50] sm:$0xff]
    %v9620 = vld [vmem:[#allocation2 + $0x58] sm:$0xff]
    %v9621 = vld [vmem:[#allocation2 + $0x60] sm:$0xff]
    %v9622 = vld [vmem:[#allocation2 + $0x68] sm:$0xff]
    %v9623 = vld [vmem:[#allocation2 + $0x70] sm:$0xff]
    %v9624 = vld [vmem:[#allocation2 + $0x78] sm:$0xff]
    %v9625 = vld [vmem:[#allocation2 + $0x80] sm:$0xff]
    %v9626 = vld [vmem:[#allocation2 + $0x88] sm:$0xff]
    %v9627 = vld [vmem:[#allocation2 + $0x90] sm:$0xff]
    %v9628 = vld [vmem:[#allocation2 + $0x98] sm:$0xff]
    %v9629 = vld [vmem:[#allocation2 + $0xa0] sm:$0xff]
    %v9630 = vld [vmem:[#allocation2 + $0xa8] sm:$0xff]
    %v9631 = vld [vmem:[#allocation2 + $0xb0] sm:$0xff]
    %v9632 = vld [vmem:[#allocation2 + $0xb8] sm:$0xff]
    %v9633 = vld [vmem:[#allocation2 + $0xc0] sm:$0xff]
    %v9634 = vld [vmem:[#allocation2 + $0xc8] sm:$0xff]
    %v9635 = vld [vmem:[#allocation2 + $0xd0] sm:$0xff]
    %v9636 = vld [vmem:[#allocation2 + $0xd8] sm:$0xff]
    %v9637 = vld [vmem:[#allocation2 + $0xe0] sm:$0xff]
    %v9638 = vld [vmem:[#allocation2 + $0xe8] sm:$0xff]
    %v9639 = vld [vmem:[#allocation2 + $0xf0] sm:$0xff]
    %v9640 = vld [vmem:[#allocation2 + $0xf8] sm:$0xff]
    %v9641 = vld [vmem:[#allocation2 + $0x100] sm:$0xff]
    %v9642 = vld [vmem:[#allocation2 + $0x108] sm:$0xff]
    %v9643 = vld [vmem:[#allocation2 + $0x110] sm:$0xff]
    %v9644 = vld [vmem:[#allocation2 + $0x118] sm:$0xff]
    %v9645 = vld [vmem:[#allocation2 + $0x120] sm:$0xff]
    %v9646 = vld [vmem:[#allocation2 + $0x128] sm:$0xff]
    %v9647 = vld [vmem:[#allocation2 + $0x130] sm:$0xff]
    %v9648 = vld [vmem:[#allocation2 + $0x138] sm:$0xff]
    %v9649 = vld [vmem:[#allocation2 + $0x140] sm:$0xff]
    %v9650 = vld [vmem:[#allocation2 + $0x148] sm:$0xff]
    %v9651 = vld [vmem:[#allocation2 + $0x150] sm:$0xff]
    %v9652 = vld [vmem:[#allocation2 + $0x158] sm:$0xff]
    %v9653 = vld [vmem:[#allocation2 + $0x160] sm:$0xff]
    %v9654 = vld [vmem:[#allocation2 + $0x168] sm:$0xff]
    %v9655 = vld [vmem:[#allocation2 + $0x170] sm:$0xff]
    %v9656 = vld [vmem:[#allocation2 + $0x178] sm:$0xff]
    %v9657 = vld [vmem:[#allocation2 + $0x180] sm:$0xff]
    %v9658 = vld [vmem:[#allocation2 + $0x188] sm:$0xff]
    %v9659 = vld [vmem:[#allocation2 + $0x190] sm:$0xff]
    %v9660 = vld [vmem:[#allocation2 + $0x198] sm:$0xff]
    %v9661 = vld [vmem:[#allocation2 + $0x1a0] sm:$0xff]
    %v9662 = vld [vmem:[#allocation2 + $0x1a8] sm:$0xff]
    %v9663 = vld [vmem:[#allocation2 + $0x1b0] sm:$0xff]
    %v9664 = vld [vmem:[#allocation2 + $0x1b8] sm:$0xff]
    %v9665 = vld [vmem:[#allocation2 + $0x1c0] sm:$0xff]
    %v9666 = vld [vmem:[#allocation2 + $0x1c8] sm:$0xff]
    %v9667 = vld [vmem:[#allocation2 + $0x1d0] sm:$0xff]
    %v9668 = vld [vmem:[#allocation2 + $0x1d8] sm:$0xff]
    %v9669 = vld [vmem:[#allocation2 + $0x1e0] sm:$0xff]
    %v9670 = vld [vmem:[#allocation2 + $0x1e8] sm:$0xff]
    %v9671 = vld [vmem:[#allocation2 + $0x1f0] sm:$0xff]
    %v9672 = vld [vmem:[#allocation2 + $0x1f8] sm:$0xff]
    %v9673 = vld [vmem:[#allocation2 + $0x200] sm:$0xff]
    %v9674 = vld [vmem:[#allocation2 + $0x208] sm:$0xff]
    %v9675 = vld [vmem:[#allocation2 + $0x210] sm:$0xff]
    %v9676 = vld [vmem:[#allocation2 + $0x218] sm:$0xff]
    %v9677 = vld [vmem:[#allocation2 + $0x220] sm:$0xff]
    %v9678 = vld [vmem:[#allocation2 + $0x228] sm:$0xff]
    %v9679 = vld [vmem:[#allocation2 + $0x230] sm:$0xff]
    %v9680 = vld [vmem:[#allocation2 + $0x238] sm:$0xff]
    %v9681 = vld [vmem:[#allocation2 + $0x240] sm:$0xff]
    %v9682 = vld [vmem:[#allocation2 + $0x248] sm:$0xff]
    %v9683 = vld [vmem:[#allocation2 + $0x250] sm:$0xff]
    %v9684 = vld [vmem:[#allocation2 + $0x258] sm:$0xff]
    %v9685 = vld [vmem:[#allocation2 + $0x260] sm:$0xff]
    %v9686 = vld [vmem:[#allocation2 + $0x268] sm:$0xff]
    %v9687 = vld [vmem:[#allocation2 + $0x270] sm:$0xff]
    %v9688 = vld [vmem:[#allocation2 + $0x278] sm:$0xff]
    %v9689 = vld [vmem:[#allocation2 + $0x280] sm:$0xff]
    %v9690 = vld [vmem:[#allocation2 + $0x288] sm:$0xff]
    %v9691 = vld [vmem:[#allocation2 + $0x290] sm:$0xff]
    %v9692 = vld [vmem:[#allocation2 + $0x298] sm:$0xff]
    %v9693 = vld [vmem:[#allocation2 + $0x2a0] sm:$0xff]
    %v9694 = vld [vmem:[#allocation2 + $0x2a8] sm:$0xff]
    %v9695 = vld [vmem:[#allocation2 + $0x2b0] sm:$0xff]
    %v9696 = vld [vmem:[#allocation2 + $0x2b8] sm:$0xff]
    %v9697 = vld [vmem:[#allocation2 + $0x2c0] sm:$0xff]
    %v9698 = vld [vmem:[#allocation2 + $0x2c8] sm:$0xff]
    %v9699 = vld [vmem:[#allocation2 + $0x2d0] sm:$0xff]
    %v9700 = vld [vmem:[#allocation2 + $0x2d8] sm:$0xff]
    %v9701 = vld [vmem:[#allocation2 + $0x2e0] sm:$0xff]
    %v9702 = vld [vmem:[#allocation2 + $0x2e8] sm:$0xff]
    %v9703 = vld [vmem:[#allocation2 + $0x2f0] sm:$0xff]
    %v9704 = vld [vmem:[#allocation2 + $0x2f8] sm:$0xff]
    %v9705 = vld [vmem:[%s4] sm:$0xf]
    %v9706 = vld [vmem:[%s4 + $0x4] sm:$0xf]
    %v9707 = vld [vmem:[%s4 + $0x8] sm:$0xf]
    %v9708 = vld [vmem:[%s4 + $0xc] sm:$0xf]
    %v9709 = vld [vmem:[%s4 + $0x10] sm:$0xf]
    %v9710 = vld [vmem:[%s4 + $0x14] sm:$0xf]
    %v9711 = vld [vmem:[%s4 + $0x18] sm:$0xf]
    %v9712 = vld [vmem:[%s4 + $0x1c] sm:$0xf]
    %v9713 = vld [vmem:[%s4 + $0x20] sm:$0xf]
    %v9714 = vld [vmem:[%s4 + $0x24] sm:$0xf]
    %v9715 = vld [vmem:[%s4 + $0x28] sm:$0xf]
    %v9716 = vld [vmem:[%s4 + $0x2c] sm:$0xf]
    %v9717 = vld [vmem:[%s4 + $0x30] sm:$0xf]
    %v9718 = vld [vmem:[%s4 + $0x34] sm:$0xf]
    %v9719 = vld [vmem:[%s4 + $0x38] sm:$0xf]
    %v9720 = vld [vmem:[%s4 + $0x3c] sm:$0xf]
    %v9721 = vld [vmem:[%s4 + $0x40] sm:$0xf]
    %v9722 = vld [vmem:[%s4 + $0x44] sm:$0xf]
    %v9723 = vld [vmem:[%s4 + $0x48] sm:$0xf]
    %v9724 = vld [vmem:[%s4 + $0x4c] sm:$0xf]
    %v9725 = vld [vmem:[%s4 + $0x50] sm:$0xf]
    %v9726 = vld [vmem:[%s4 + $0x54] sm:$0xf]
    %v9727 = vld [vmem:[%s4 + $0x58] sm:$0xf]
    %v9728 = vld [vmem:[%s4 + $0x5c] sm:$0xf]
    %v9729 = vld [vmem:[%s4 + $0x60] sm:$0xf]
    %v9730 = vld [vmem:[%s4 + $0x64] sm:$0xf]
    %v9731 = vld [vmem:[%s4 + $0x68] sm:$0xf]
    %v9732 = vld [vmem:[%s4 + $0x6c] sm:$0xf]
    %v9733 = vld [vmem:[%s4 + $0x70] sm:$0xf]
    %v9734 = vld [vmem:[%s4 + $0x74] sm:$0xf]
    %v9735 = vld [vmem:[%s4 + $0x78] sm:$0xf]
    %v9736 = vld [vmem:[%s4 + $0x7c] sm:$0xf]
    %v9737 = vld [vmem:[%s4 + $0x80] sm:$0xf]
    %v9738 = vld [vmem:[%s4 + $0x84] sm:$0xf]
    %v9739 = vld [vmem:[%s4 + $0x88] sm:$0xf]
    %v9740 = vld [vmem:[%s4 + $0x8c] sm:$0xf]
    %v9741 = vld [vmem:[%s5] sm:$0x1]
    %v9743 = vlaneseq
    %v9744 = vshrl.u32 %v9743, 7
    %v9745 = vsub.s32 0, %v9744
    %v9746 = vrot.slane %v9741, %v9745
    %v9784 = vunpack.c.l.b16 %v9705
    %v9785 = vunpack.c.l.b16 %v9706
    %v9786 = vunpack.c.l.b16 %v9707
    %v9787 = vunpack.c.l.b16 %v9708
    %v9788 = vunpack.c.l.b16 %v9709
    %v9789 = vunpack.c.l.b16 %v9710
    %v9790 = vunpack.c.l.b16 %v9711
    %v9791 = vunpack.c.l.b16 %v9712
    %v9792 = vunpack.c.l.b16 %v9713
    %v9793 = vunpack.c.l.b16 %v9714
    %v9794 = vunpack.c.l.b16 %v9715
    %v9795 = vunpack.c.l.b16 %v9716
    %v9796 = vunpack.c.l.b16 %v9717
    %v9797 = vunpack.c.l.b16 %v9718
    %v9798 = vunpack.c.l.b16 %v9719
    %v9799 = vunpack.c.l.b16 %v9720
    %v9800 = vunpack.c.l.b16 %v9721
    %v9801 = vunpack.c.l.b16 %v9722
    %v9802 = vunpack.c.l.b16 %v9723
    %v9803 = vunpack.c.l.b16 %v9724
    %v9804 = vunpack.c.l.b16 %v9725
    %v9805 = vunpack.c.l.b16 %v9726
    %v9806 = vunpack.c.l.b16 %v9727
    %v9807 = vunpack.c.l.b16 %v9728
    %v9808 = vunpack.c.l.b16 %v9729
    %v9809 = vunpack.c.l.b16 %v9730
    %v9810 = vunpack.c.l.b16 %v9731
    %v9811 = vunpack.c.l.b16 %v9732
    %v9812 = vunpack.c.l.b16 %v9733
    %v9813 = vunpack.c.l.b16 %v9734
    %v9814 = vunpack.c.l.b16 %v9735
    %v9815 = vunpack.c.l.b16 %v9736
    %v9816 = vunpack.c.l.b16 %v9737
    %v9817 = vunpack.c.l.b16 %v9738
    %v9818 = vunpack.c.l.b16 %v9739
    %v9819 = vunpack.c.l.b16 %v9740
    %v9820 = vpack.c.b16 %v9785, %v9784
    %v9821 = vpack.c.b16 %v9787, %v9786
    %v9822 = vpack.c.b16 %v9789, %v9788
    %v9823 = vpack.c.b16 %v9791, %v9790
    %v9824 = vpack.c.b16 %v9793, %v9792
    %v9825 = vpack.c.b16 %v9795, %v9794
    %v9826 = vpack.c.b16 %v9797, %v9796
    %v9827 = vpack.c.b16 %v9799, %v9798
    %v9828 = vpack.c.b16 %v9801, %v9800
    %v9829 = vpack.c.b16 %v9803, %v9802
    %v9830 = vpack.c.b16 %v9805, %v9804
    %v9831 = vpack.c.b16 %v9807, %v9806
    %v9832 = vpack.c.b16 %v9809, %v9808
    %v9833 = vpack.c.b16 %v9811, %v9810
    %v9834 = vpack.c.b16 %v9813, %v9812
    %v9835 = vpack.c.b16 %v9815, %v9814
    %v9836 = vpack.c.b16 %v9817, %v9816
    %v9837 = vpack.c.b16 %v9819, %v9818
    %v9857 = vsel %vm6048, %v9611, 0
    %v9860 = vsel %vm6048, %v9614, 0
    %v9863 = vsel %vm6048, %v9617, 0
    %v9866 = vsel %vm6048, %v9620, 0
    %v9869 = vsel %vm6048, %v9623, 0
    %v9872 = vsel %vm6048, %v9626, 0
    %v9875 = vsel %vm6048, %v9629, 0
    %v9878 = vsel %vm6048, %v9632, 0
    %v9881 = vsel %vm6048, %v9635, 0
    %v9884 = vsel %vm6048, %v9638, 0
    %v9887 = vsel %vm6048, %v9641, 0
    %v9890 = vsel %vm6048, %v9644, 0
    %v9893 = vsel %vm6048, %v9647, 0
    %v9896 = vsel %vm6048, %v9650, 0
    %v9899 = vsel %vm6048, %v9653, 0
    %v9902 = vsel %vm6048, %v9656, 0
    %v9905 = vsel %vm6048, %v9659, 0
    %v9908 = vsel %vm6048, %v9662, 0
    %v9911 = vsel %vm6048, %v9665, 0
    %v9914 = vsel %vm6048, %v9668, 0
    %v9917 = vsel %vm6048, %v9671, 0
    %v9920 = vsel %vm6048, %v9674, 0
    %v9923 = vsel %vm6048, %v9677, 0
    %v9926 = vsel %vm6048, %v9680, 0
    %v9929 = vsel %vm6048, %v9683, 0
    %v9932 = vsel %vm6048, %v9686, 0
    %v9935 = vsel %vm6048, %v9689, 0
    %v9938 = vsel %vm6048, %v9692, 0
    %v9941 = vsel %vm6048, %v9695, 0
    %v9944 = vsel %vm6048, %v9698, 0
    %v9947 = vsel %vm6048, %v9701, 0
    %v9950 = vsel %vm6048, %v9704, 0
    %9952 = vmatprep.subr.bf16.mxu0 0
    %9953 = vmatpush1.bf16.msra.mxu0 %v9820
    %9954 = vmatprep.subr.bf16.mxu0 0
    %9955 = vmatpush1.bf16.msra.mxu0 %v9821
    %9956 = vmatprep.subr.bf16.mxu0 0
    %9957 = vmatpush1.bf16.msra.mxu0 %v9822
    %9958 = vmatprep.subr.bf16.mxu0 0
    %9959 = vmatpush1.bf16.msra.mxu0 %v9823
    %9960 = vmatprep.subr.bf16.mxu0 0
    %9961 = vmatpush1.bf16.msra.mxu0 %v9824
    %9962 = vmatprep.subr.bf16.mxu0 0
    %9963 = vmatpush1.bf16.msra.mxu0 %v9825
    %9964 = vmatprep.subr.bf16.mxu0 0
    %9965 = vmatpush1.bf16.msra.mxu0 %v9826
    %9966 = vmatprep.subr.bf16.mxu0 0
    %9967 = vmatpush1.bf16.msra.mxu0 %v9827
    %9968 = vmatprep.subr.bf16.mxu0 0
    %9969 = vmatpush1.bf16.msra.mxu0 %v9828
    %9970 = vmatprep.subr.bf16.mxu0 0
    %9971 = vmatpush1.bf16.msra.mxu0 %v9829
    %9972 = vmatprep.subr.bf16.mxu0 0
    %9973 = vmatpush1.bf16.msra.mxu0 %v9830
    %9974 = vmatprep.subr.bf16.mxu0 0
    %9975 = vmatpush1.bf16.msra.mxu0 %v9831
    %9976 = vmatprep.subr.bf16.mxu0 0
    %9977 = vmatpush1.bf16.msra.mxu0 %v9832
    %9978 = vmatprep.subr.bf16.mxu0 0
    %9979 = vmatpush1.bf16.msra.mxu0 %v9833
    %9980 = vmatprep.subr.bf16.mxu0 0
    %9981 = vmatpush1.bf16.msra.mxu0 %v9834
    %9982 = vmatprep.subr.bf16.mxu0 0
    %9983 = vmatpush1.bf16.msra.mxu0 %v9835
    %9984 = vmatprep.mubr.bf16.mxu0 %v9610
    %9985 = vmatmul.mubr.bf16.gmra.mrb[0].mxu0 %v9609
    %v9986 = vpop.f32.mrb[0].mxu0
    %v9987 = vadd.f32 %v9746, %v9986
    %v9988 = vpop.f32.mrb[0].mxu0
    %v9989 = vpop.f32.mrb[0].mxu0
    %v9990 = vadd.f32 %v9746, %v9989
    %v9991 = vpop.f32.mrb[0].mxu0
    %9992 = vmatprep.mubr.bf16.mxu0 %v9613
    %9993 = vmatmul.mubr.bf16.gmra.mrb[0].mxu0 %v9612
    %v9994 = vpop.f32.mrb[0].mxu0
    %v9995 = vadd.f32 %v9746, %v9994
    %v9996 = vpop.f32.mrb[0].mxu0
    %v9997 = vpop.f32.mrb[0].mxu0
    %v9998 = vadd.f32 %v9746, %v9997
    %v9999 = vpop.f32.mrb[0].mxu0
    %10000 = vmatprep.mubr.bf16.mxu0 %v9616
    %10001 = vmatmul.mubr.bf16.gmra.mrb[0].mxu0 %v9615
    %v10002 = vpop.f32.mrb[0].mxu0
    %v10003 = vadd.f32 %v9746, %v10002
    %v10004 = vpop.f32.mrb[0].mxu0
    %v10005 = vpop.f32.mrb[0].mxu0
    %v10006 = vadd.f32 %v9746, %v10005
    %v10007 = vpop.f32.mrb[0].mxu0
    %10008 = vmatprep.mubr.bf16.mxu0 %v9619
    %10009 = vmatmul.mubr.bf16.gmra.mrb[0].mxu0 %v9618
    %v10010 = vpop.f32.mrb[0].mxu0
    %v10011 = vadd.f32 %v9746, %v10010
    %v10012 = vpop.f32.mrb[0].mxu0
    %v10013 = vpop.f32.mrb[0].mxu0
    %v10014 = vadd.f32 %v9746, %v10013
    %v10015 = vpop.f32.mrb[0].mxu0
    %10016 = vmatprep.mubr.bf16.mxu0 %v9622
    %10017 = vmatmul.mubr.bf16.gmra.mrb[0].mxu0 %v9621
    %v10018 = vpop.f32.mrb[0].mxu0
    %v10019 = vadd.f32 %v9746, %v10018
    %v10020 = vpop.f32.mrb[0].mxu0
    %v10021 = vpop.f32.mrb[0].mxu0
    %v10022 = vadd.f32 %v9746, %v10021
    %v10023 = vpop.f32.mrb[0].mxu0
    %10024 = vmatprep.mubr.bf16.mxu0 %v9625
    %10025 = vmatmul.mubr.bf16.gmra.mrb[0].mxu0 %v9624
    %v10026 = vpop.f32.mrb[0].mxu0
    %v10027 = vadd.f32 %v9746, %v10026
    %v10028 = vpop.f32.mrb[0].mxu0
    %v10029 = vpop.f32.mrb[0].mxu0
    %v10030 = vadd.f32 %v9746, %v10029
    %v10031 = vpop.f32.mrb[0].mxu0
    %10032 = vmatprep.mubr.bf16.mxu0 %v9628
    %10033 = vmatmul.mubr.bf16.gmra.mrb[0].mxu0 %v9627
    %v10034 = vpop.f32.mrb[0].mxu0
    %v10035 = vadd.f32 %v9746, %v10034
    %v10036 = vpop.f32.mrb[0].mxu0
    %v10037 = vpop.f32.mrb[0].mxu0
    %v10038 = vadd.f32 %v9746, %v10037
    %v10039 = vpop.f32.mrb[0].mxu0
    %10040 = vmatprep.mubr.bf16.mxu0 %v9631
    %10041 = vmatmul.mubr.bf16.gmra.mrb[0].mxu0 %v9630
    %v10042 = vpop.f32.mrb[0].mxu0
    %v10043 = vadd.f32 %v9746, %v10042
    %v10044 = vpop.f32.mrb[0].mxu0
    %v10045 = vpop.f32.mrb[0].mxu0
    %v10046 = vadd.f32 %v9746, %v10045
    %v10047 = vpop.f32.mrb[0].mxu0
    %10048 = vmatprep.mubr.bf16.mxu0 %v9634
    %10049 = vmatmul.mubr.bf16.gmra.mrb[0].mxu0 %v9633
    %v10050 = vpop.f32.mrb[0].mxu0
    %v10051 = vadd.f32 %v9746, %v10050
    %v10052 = vpop.f32.mrb[0].mxu0
    %v10053 = vpop.f32.mrb[0].mxu0
    %v10054 = vadd.f32 %v9746, %v10053
    %v10055 = vpop.f32.mrb[0].mxu0
    %10056 = vmatprep.mubr.bf16.mxu0 %v9637
    %10057 = vmatmul.mubr.bf16.gmra.mrb[0].mxu0 %v9636
    %v10058 = vpop.f32.mrb[0].mxu0
    %v10059 = vadd.f32 %v9746, %v10058
    %v10060 = vpop.f32.mrb[0].mxu0
    %v10061 = vpop.f32.mrb[0].mxu0
    %v10062 = vadd.f32 %v9746, %v10061
    %v10063 = vpop.f32.mrb[0].mxu0
    %10064 = vmatprep.mubr.bf16.mxu0 %v9640
    %10065 = vmatmul.mubr.bf16.gmra.mrb[0].mxu0 %v9639
    %v10066 = vpop.f32.mrb[0].mxu0
    %v10067 = vadd.f32 %v9746, %v10066
    %v10068 = vpop.f32.mrb[0].mxu0
    %v10069 = vpop.f32.mrb[0].mxu0
    %v10070 = vadd.f32 %v9746, %v10069
    %v10071 = vpop.f32.mrb[0].mxu0
    %10072 = vmatprep.mubr.bf16.mxu0 %v9643
    %10073 = vmatmul.mubr.bf16.gmra.mrb[0].mxu0 %v9642
    %v10074 = vpop.f32.mrb[0].mxu0
    %v10075 = vadd.f32 %v9746, %v10074
    %v10076 = vpop.f32.mrb[0].mxu0
    %v10077 = vpop.f32.mrb[0].mxu0
    %v10078 = vadd.f32 %v9746, %v10077
    %v10079 = vpop.f32.mrb[0].mxu0
    %10080 = vmatprep.mubr.bf16.mxu0 %v9646
    %10081 = vmatmul.mubr.bf16.gmra.mrb[0].mxu0 %v9645
    %v10082 = vpop.f32.mrb[0].mxu0
    %v10083 = vadd.f32 %v9746, %v10082
    %v10084 = vpop.f32.mrb[0].mxu0
    %v10085 = vpop.f32.mrb[0].mxu0
    %v10086 = vadd.f32 %v9746, %v10085
    %v10087 = vpop.f32.mrb[0].mxu0
    %10088 = vmatprep.mubr.bf16.mxu0 %v9649
    %10089 = vmatmul.mubr.bf16.gmra.mrb[0].mxu0 %v9648
    %v10090 = vpop.f32.mrb[0].mxu0
    %v10091 = vadd.f32 %v9746, %v10090
    %v10092 = vpop.f32.mrb[0].mxu0
    %v10093 = vpop.f32.mrb[0].mxu0
    %v10094 = vadd.f32 %v9746, %v10093
    %v10095 = vpop.f32.mrb[0].mxu0
    %10096 = vmatprep.mubr.bf16.mxu0 %v9652
    %10097 = vmatmul.mubr.bf16.gmra.mrb[0].mxu0 %v9651
    %v10098 = vpop.f32.mrb[0].mxu0
    %v10099 = vadd.f32 %v9746, %v10098
    %v10100 = vpop.f32.mrb[0].mxu0
    %v10101 = vpop.f32.mrb[0].mxu0
    %v10102 = vadd.f32 %v9746, %v10101
    %v10103 = vpop.f32.mrb[0].mxu0
    %10104 = vmatprep.mubr.bf16.mxu0 %v9655
    %10105 = vmatmul.mubr.bf16.gmra.mrb[0].mxu0 %v9654
    %v10106 = vpop.f32.mrb[0].mxu0
    %v10107 = vadd.f32 %v9746, %v10106
    %v10108 = vpop.f32.mrb[0].mxu0
    %v10109 = vpop.f32.mrb[0].mxu0
    %v10110 = vadd.f32 %v9746, %v10109
    %v10111 = vpop.f32.mrb[0].mxu0
    %10112 = vmatprep.mubr.bf16.mxu0 %v9658
    %10113 = vmatmul.mubr.bf16.gmra.mrb[0].mxu0 %v9657
    %v10114 = vpop.f32.mrb[0].mxu0
    %v10115 = vadd.f32 %v9746, %v10114
    %v10116 = vpop.f32.mrb[0].mxu0
    %v10117 = vpop.f32.mrb[0].mxu0
    %v10118 = vadd.f32 %v9746, %v10117
    %v10119 = vpop.f32.mrb[0].mxu0
    %10120 = vmatprep.mubr.bf16.mxu0 %v9661
    %10121 = vmatmul.mubr.bf16.gmra.mrb[0].mxu0 %v9660
    %v10122 = vpop.f32.mrb[0].mxu0
    %v10123 = vadd.f32 %v9746, %v10122
    %v10124 = vpop.f32.mrb[0].mxu0
    %v10125 = vpop.f32.mrb[0].mxu0
    %v10126 = vadd.f32 %v9746, %v10125
    %v10127 = vpop.f32.mrb[0].mxu0
    %10128 = vmatprep.mubr.bf16.mxu0 %v9664
    %10129 = vmatmul.mubr.bf16.gmra.mrb[0].mxu0 %v9663
    %v10130 = vpop.f32.mrb[0].mxu0
    %v10131 = vadd.f32 %v9746, %v10130
    %v10132 = vpop.f32.mrb[0].mxu0
    %v10133 = vpop.f32.mrb[0].mxu0
    %v10134 = vadd.f32 %v9746, %v10133
    %v10135 = vpop.f32.mrb[0].mxu0
    %10136 = vmatprep.mubr.bf16.mxu0 %v9667
    %10137 = vmatmul.mubr.bf16.gmra.mrb[0].mxu0 %v9666
    %v10138 = vpop.f32.mrb[0].mxu0
    %v10139 = vadd.f32 %v9746, %v10138
    %v10140 = vpop.f32.mrb[0].mxu0
    %v10141 = vpop.f32.mrb[0].mxu0
    %v10142 = vadd.f32 %v9746, %v10141
    %v10143 = vpop.f32.mrb[0].mxu0
    %10144 = vmatprep.mubr.bf16.mxu0 %v9670
    %10145 = vmatmul.mubr.bf16.gmra.mrb[0].mxu0 %v9669
    %v10146 = vpop.f32.mrb[0].mxu0
    %v10147 = vadd.f32 %v9746, %v10146
    %v10148 = vpop.f32.mrb[0].mxu0
    %v10149 = vpop.f32.mrb[0].mxu0
    %v10150 = vadd.f32 %v9746, %v10149
    %v10151 = vpop.f32.mrb[0].mxu0
    %10152 = vmatprep.mubr.bf16.mxu0 %v9673
    %10153 = vmatmul.mubr.bf16.gmra.mrb[0].mxu0 %v9672
    %v10154 = vpop.f32.mrb[0].mxu0
    %v10155 = vadd.f32 %v9746, %v10154
    %v10156 = vpop.f32.mrb[0].mxu0
    %v10157 = vpop.f32.mrb[0].mxu0
    %v10158 = vadd.f32 %v9746, %v10157
    %v10159 = vpop.f32.mrb[0].mxu0
    %10160 = vmatprep.mubr.bf16.mxu0 %v9676
    %10161 = vmatmul.mubr.bf16.gmra.mrb[0].mxu0 %v9675
    %v10162 = vpop.f32.mrb[0].mxu0
    %v10163 = vadd.f32 %v9746, %v10162
    %v10164 = vpop.f32.mrb[0].mxu0
    %v10165 = vpop.f32.mrb[0].mxu0
    %v10166 = vadd.f32 %v9746, %v10165
    %v10167 = vpop.f32.mrb[0].mxu0
    %10168 = vmatprep.mubr.bf16.mxu0 %v9679
    %10169 = vmatmul.mubr.bf16.gmra.mrb[0].mxu0 %v9678
    %v10170 = vpop.f32.mrb[0].mxu0
    %v10171 = vadd.f32 %v9746, %v10170
    %v10172 = vpop.f32.mrb[0].mxu0
    %v10173 = vpop.f32.mrb[0].mxu0
    %v10174 = vadd.f32 %v9746, %v10173
    %v10175 = vpop.f32.mrb[0].mxu0
    %10176 = vmatprep.mubr.bf16.mxu0 %v9682
    %10177 = vmatmul.mubr.bf16.gmra.mrb[0].mxu0 %v9681
    %v10178 = vpop.f32.mrb[0].mxu0
    %v10179 = vadd.f32 %v9746, %v10178
    %v10180 = vpop.f32.mrb[0].mxu0
    %v10181 = vpop.f32.mrb[0].mxu0
    %v10182 = vadd.f32 %v9746, %v10181
    %v10183 = vpop.f32.mrb[0].mxu0
    %10184 = vmatprep.mubr.bf16.mxu0 %v9685
    %10185 = vmatmul.mubr.bf16.gmra.mrb[0].mxu0 %v9684
    %v10186 = vpop.f32.mrb[0].mxu0
    %v10187 = vadd.f32 %v9746, %v10186
    %v10188 = vpop.f32.mrb[0].mxu0
    %v10189 = vpop.f32.mrb[0].mxu0
    %v10190 = vadd.f32 %v9746, %v10189
    %v10191 = vpop.f32.mrb[0].mxu0
    %10192 = vmatprep.mubr.bf16.mxu0 %v9688
    %10193 = vmatmul.mubr.bf16.gmra.mrb[0].mxu0 %v9687
    %v10194 = vpop.f32.mrb[0].mxu0
    %v10195 = vadd.f32 %v9746, %v10194
    %v10196 = vpop.f32.mrb[0].mxu0
    %v10197 = vpop.f32.mrb[0].mxu0
    %v10198 = vadd.f32 %v9746, %v10197
    %v10199 = vpop.f32.mrb[0].mxu0
    %10200 = vmatprep.mubr.bf16.mxu0 %v9691
    %10201 = vmatmul.mubr.bf16.gmra.mrb[0].mxu0 %v9690
    %v10202 = vpop.f32.mrb[0].mxu0
    %v10203 = vadd.f32 %v9746, %v10202
    %v10204 = vpop.f32.mrb[0].mxu0
    %v10205 = vpop.f32.mrb[0].mxu0
    %v10206 = vadd.f32 %v9746, %v10205
    %v10207 = vpop.f32.mrb[0].mxu0
    %10208 = vmatprep.mubr.bf16.mxu0 %v9694
    %10209 = vmatmul.mubr.bf16.gmra.mrb[0].mxu0 %v9693
    %v10210 = vpop.f32.mrb[0].mxu0
    %v10211 = vadd.f32 %v9746, %v10210
    %v10212 = vpop.f32.mrb[0].mxu0
    %v10213 = vpop.f32.mrb[0].mxu0
    %v10214 = vadd.f32 %v9746, %v10213
    %v10215 = vpop.f32.mrb[0].mxu0
    %10216 = vmatprep.mubr.bf16.mxu0 %v9697
    %10217 = vmatmul.mubr.bf16.gmra.mrb[0].mxu0 %v9696
    %v10218 = vpop.f32.mrb[0].mxu0
    %v10219 = vadd.f32 %v9746, %v10218
    %v10220 = vpop.f32.mrb[0].mxu0
    %v10221 = vpop.f32.mrb[0].mxu0
    %v10222 = vadd.f32 %v9746, %v10221
    %v10223 = vpop.f32.mrb[0].mxu0
    %10224 = vmatprep.mubr.bf16.mxu0 %v9700
    %10225 = vmatmul.mubr.bf16.gmra.mrb[0].mxu0 %v9699
    %v10226 = vpop.f32.mrb[0].mxu0
    %v10227 = vadd.f32 %v9746, %v10226
    %v10228 = vpop.f32.mrb[0].mxu0
    %v10229 = vpop.f32.mrb[0].mxu0
    %v10230 = vadd.f32 %v9746, %v10229
    %v10231 = vpop.f32.mrb[0].mxu0
    %10232 = vmatprep.mubr.bf16.mxu0 %v9703
    %10233 = vmatmul.mubr.bf16.gmra.mrb[0].mxu0 %v9702
    %v10234 = vpop.f32.mrb[0].mxu0
    %v10235 = vadd.f32 %v9746, %v10234
    %v10236 = vpop.f32.mrb[0].mxu0
    %v10237 = vpop.f32.mrb[0].mxu0
    %v10238 = vadd.f32 %v9746, %v10237
    %v10239 = vpop.f32.mrb[0].mxu0
    %10240 = vdwg.mxu0
    %10241 = vmatprep.subr.bf16.mxu0 0
    %10242 = vmatpush1.bf16.msra.mxu0 %v9836
    %10243 = vmatprep.subr.bf16.mxu0 0
    %10244 = vmatpush1.bf16.msra.mxu0 %v9837
    %10245 = vmatprep.subr.bf16.mxu0 0
    %10246 = vmatpush1.bf16.msra.mxu0 0
    %10247 = vmatprep.subr.bf16.mxu0 0
    %10248 = vmatpush1.bf16.msra.mxu0 0
    %10249 = vmatprep.subr.bf16.mxu0 0
    %10250 = vmatpush1.bf16.msra.mxu0 0
    %10251 = vmatprep.subr.bf16.mxu0 0
    %10252 = vmatpush1.bf16.msra.mxu0 0
    %10253 = vmatprep.subr.bf16.mxu0 0
    %10254 = vmatpush1.bf16.msra.mxu0 0
    %10255 = vmatprep.subr.bf16.mxu0 0
    %10256 = vmatpush1.bf16.msra.mxu0 0
    %10257 = vmatprep.subr.bf16.mxu0 0
    %10258 = vmatpush1.bf16.msra.mxu0 0
    %10259 = vmatprep.subr.bf16.mxu0 0
    %10260 = vmatpush1.bf16.msra.mxu0 0
    %10261 = vmatprep.subr.bf16.mxu0 0
    %10262 = vmatpush1.bf16.msra.mxu0 0
    %10263 = vmatprep.subr.bf16.mxu0 0
    %10264 = vmatpush1.bf16.msra.mxu0 0
    %10265 = vmatprep.subr.bf16.mxu0 0
    %10266 = vmatpush1.bf16.msra.mxu0 0
    %10267 = vmatprep.subr.bf16.mxu0 0
    %10268 = vmatpush1.bf16.msra.mxu0 0
    %10269 = vmatprep.subr.bf16.mxu0 0
    %10270 = vmatpush1.bf16.msra.mxu0 0
    %10271 = vmatprep.subr.bf16.mxu0 0
    %10272 = vmatpush1.bf16.msra.mxu0 0
    %10273 = vmatprep.mubr.bf16.mxu0 0
    %10274 = vmatmul.mubr.bf16.gmra.mrb[0].mxu0 %v9857
    %v10275 = vpop.f32.mrb[0].mxu0
    %v10276 = vadd.f32 %v9987, %v10275
    %v10277 = vpop.f32.mrb[0].mxu0
    %v10278 = vpop.f32.mrb[0].mxu0
    %v10279 = vadd.f32 %v9990, %v10278
    %v10280 = vpop.f32.mrb[0].mxu0
    %10281 = vmatprep.mubr.bf16.mxu0 0
    %10282 = vmatmul.mubr.bf16.gmra.mrb[0].mxu0 %v9860
    %v10283 = vpop.f32.mrb[0].mxu0
    %v10284 = vadd.f32 %v9995, %v10283
    %v10285 = vpop.f32.mrb[0].mxu0
    %v10286 = vpop.f32.mrb[0].mxu0
    %v10287 = vadd.f32 %v9998, %v10286
    %v10288 = vpop.f32.mrb[0].mxu0
    %10289 = vmatprep.mubr.bf16.mxu0 0
    %10290 = vmatmul.mubr.bf16.gmra.mrb[0].mxu0 %v9863
    %v10291 = vpop.f32.mrb[0].mxu0
    %v10292 = vadd.f32 %v10003, %v10291
    %v10293 = vpop.f32.mrb[0].mxu0
    %v10294 = vpop.f32.mrb[0].mxu0
    %v10295 = vadd.f32 %v10006, %v10294
    %v10296 = vpop.f32.mrb[0].mxu0
    %10297 = vmatprep.mubr.bf16.mxu0 0
    %10298 = vmatmul.mubr.bf16.gmra.mrb[0].mxu0 %v9866
    %v10299 = vpop.f32.mrb[0].mxu0
    %v10300 = vadd.f32 %v10011, %v10299
    %v10301 = vpop.f32.mrb[0].mxu0
    %v10302 = vpop.f32.mrb[0].mxu0
    %v10303 = vadd.f32 %v10014, %v10302
    %v10304 = vpop.f32.mrb[0].mxu0
    %10305 = vmatprep.mubr.bf16.mxu0 0
    %10306 = vmatmul.mubr.bf16.gmra.mrb[0].mxu0 %v9869
    %v10307 = vpop.f32.mrb[0].mxu0
    %v10308 = vadd.f32 %v10019, %v10307
    %v10309 = vpop.f32.mrb[0].mxu0
    %v10310 = vpop.f32.mrb[0].mxu0
    %v10311 = vadd.f32 %v10022, %v10310
    %v10312 = vpop.f32.mrb[0].mxu0
    %10313 = vmatprep.mubr.bf16.mxu0 0
    %10314 = vmatmul.mubr.bf16.gmra.mrb[0].mxu0 %v9872
    %v10315 = vpop.f32.mrb[0].mxu0
    %v10316 = vadd.f32 %v10027, %v10315
    %v10317 = vpop.f32.mrb[0].mxu0
    %v10318 = vpop.f32.mrb[0].mxu0
    %v10319 = vadd.f32 %v10030, %v10318
    %v10320 = vpop.f32.mrb[0].mxu0
    %10321 = vmatprep.mubr.bf16.mxu0 0
    %10322 = vmatmul.mubr.bf16.gmra.mrb[0].mxu0 %v9875
    %v10323 = vpop.f32.mrb[0].mxu0
    %v10324 = vadd.f32 %v10035, %v10323
    %v10325 = vpop.f32.mrb[0].mxu0
    %v10326 = vpop.f32.mrb[0].mxu0
    %v10327 = vadd.f32 %v10038, %v10326
    %v10328 = vpop.f32.mrb[0].mxu0
    %10329 = vmatprep.mubr.bf16.mxu0 0
    %10330 = vmatmul.mubr.bf16.gmra.mrb[0].mxu0 %v9878
    %v10331 = vpop.f32.mrb[0].mxu0
    %v10332 = vadd.f32 %v10043, %v10331
    %v10333 = vpop.f32.mrb[0].mxu0
    %v10334 = vpop.f32.mrb[0].mxu0
    %v10335 = vadd.f32 %v10046, %v10334
    %v10336 = vpop.f32.mrb[0].mxu0
    %10337 = vmatprep.mubr.bf16.mxu0 0
    %10338 = vmatmul.mubr.bf16.gmra.mrb[0].mxu0 %v9881
    %v10339 = vpop.f32.mrb[0].mxu0
    %v10340 = vadd.f32 %v10051, %v10339
    %v10341 = vpop.f32.mrb[0].mxu0
    %v10342 = vpop.f32.mrb[0].mxu0
    %v10343 = vadd.f32 %v10054, %v10342
    %v10344 = vpop.f32.mrb[0].mxu0
    %10345 = vmatprep.mubr.bf16.mxu0 0
    %10346 = vmatmul.mubr.bf16.gmra.mrb[0].mxu0 %v9884
    %v10347 = vpop.f32.mrb[0].mxu0
    %v10348 = vadd.f32 %v10059, %v10347
    %v10349 = vpop.f32.mrb[0].mxu0
    %v10350 = vpop.f32.mrb[0].mxu0
    %v10351 = vadd.f32 %v10062, %v10350
    %v10352 = vpop.f32.mrb[0].mxu0
    %10353 = vmatprep.mubr.bf16.mxu0 0
    %10354 = vmatmul.mubr.bf16.gmra.mrb[0].mxu0 %v9887
    %v10355 = vpop.f32.mrb[0].mxu0
    %v10356 = vadd.f32 %v10067, %v10355
    %v10357 = vpop.f32.mrb[0].mxu0
    %v10358 = vpop.f32.mrb[0].mxu0
    %v10359 = vadd.f32 %v10070, %v10358
    %v10360 = vpop.f32.mrb[0].mxu0
    %10361 = vmatprep.mubr.bf16.mxu0 0
    %10362 = vmatmul.mubr.bf16.gmra.mrb[0].mxu0 %v9890
    %v10363 = vpop.f32.mrb[0].mxu0
    %v10364 = vadd.f32 %v10075, %v10363
    %v10365 = vpop.f32.mrb[0].mxu0
    %v10366 = vpop.f32.mrb[0].mxu0
    %v10367 = vadd.f32 %v10078, %v10366
    %v10368 = vpop.f32.mrb[0].mxu0
    %10369 = vmatprep.mubr.bf16.mxu0 0
    %10370 = vmatmul.mubr.bf16.gmra.mrb[0].mxu0 %v9893
    %v10371 = vpop.f32.mrb[0].mxu0
    %v10372 = vadd.f32 %v10083, %v10371
    %v10373 = vpop.f32.mrb[0].mxu0
    %v10374 = vpop.f32.mrb[0].mxu0
    %v10375 = vadd.f32 %v10086, %v10374
    %v10376 = vpop.f32.mrb[0].mxu0
    %10377 = vmatprep.mubr.bf16.mxu0 0
    %10378 = vmatmul.mubr.bf16.gmra.mrb[0].mxu0 %v9896
    %v10379 = vpop.f32.mrb[0].mxu0
    %v10380 = vadd.f32 %v10091, %v10379
    %v10381 = vpop.f32.mrb[0].mxu0
    %v10382 = vpop.f32.mrb[0].mxu0
    %v10383 = vadd.f32 %v10094, %v10382
    %v10384 = vpop.f32.mrb[0].mxu0
    %10385 = vmatprep.mubr.bf16.mxu0 0
    %10386 = vmatmul.mubr.bf16.gmra.mrb[0].mxu0 %v9899
    %v10387 = vpop.f32.mrb[0].mxu0
    %v10388 = vadd.f32 %v10099, %v10387
    %v10389 = vpop.f32.mrb[0].mxu0
    %v10390 = vpop.f32.mrb[0].mxu0
    %v10391 = vadd.f32 %v10102, %v10390
    %v10392 = vpop.f32.mrb[0].mxu0
    %10393 = vmatprep.mubr.bf16.mxu0 0
    %10394 = vmatmul.mubr.bf16.gmra.mrb[0].mxu0 %v9902
    %v10395 = vpop.f32.mrb[0].mxu0
    %v10396 = vadd.f32 %v10107, %v10395
    %v10397 = vpop.f32.mrb[0].mxu0
    %v10398 = vpop.f32.mrb[0].mxu0
    %v10399 = vadd.f32 %v10110, %v10398
    %v10400 = vpop.f32.mrb[0].mxu0
    %10401 = vmatprep.mubr.bf16.mxu0 0
    %10402 = vmatmul.mubr.bf16.gmra.mrb[0].mxu0 %v9905
    %v10403 = vpop.f32.mrb[0].mxu0
    %v10404 = vadd.f32 %v10115, %v10403
    %v10405 = vpop.f32.mrb[0].mxu0
    %v10406 = vpop.f32.mrb[0].mxu0
    %v10407 = vadd.f32 %v10118, %v10406
    %v10408 = vpop.f32.mrb[0].mxu0
    %10409 = vmatprep.mubr.bf16.mxu0 0
    %10410 = vmatmul.mubr.bf16.gmra.mrb[0].mxu0 %v9908
    %v10411 = vpop.f32.mrb[0].mxu0
    %v10412 = vadd.f32 %v10123, %v10411
    %v10413 = vpop.f32.mrb[0].mxu0
    %v10414 = vpop.f32.mrb[0].mxu0
    %v10415 = vadd.f32 %v10126, %v10414
    %v10416 = vpop.f32.mrb[0].mxu0
    %10417 = vmatprep.mubr.bf16.mxu0 0
    %10418 = vmatmul.mubr.bf16.gmra.mrb[0].mxu0 %v9911
    %v10419 = vpop.f32.mrb[0].mxu0
    %v10420 = vadd.f32 %v10131, %v10419
    %v10421 = vpop.f32.mrb[0].mxu0
    %v10422 = vpop.f32.mrb[0].mxu0
    %v10423 = vadd.f32 %v10134, %v10422
    %v10424 = vpop.f32.mrb[0].mxu0
    %10425 = vmatprep.mubr.bf16.mxu0 0
    %10426 = vmatmul.mubr.bf16.gmra.mrb[0].mxu0 %v9914
    %v10427 = vpop.f32.mrb[0].mxu0
    %v10428 = vadd.f32 %v10139, %v10427
    %v10429 = vpop.f32.mrb[0].mxu0
    %v10430 = vpop.f32.mrb[0].mxu0
    %v10431 = vadd.f32 %v10142, %v10430
    %v10432 = vpop.f32.mrb[0].mxu0
    %10433 = vmatprep.mubr.bf16.mxu0 0
    %10434 = vmatmul.mubr.bf16.gmra.mrb[0].mxu0 %v9917
    %v10435 = vpop.f32.mrb[0].mxu0
    %v10436 = vadd.f32 %v10147, %v10435
    %v10437 = vpop.f32.mrb[0].mxu0
    %v10438 = vpop.f32.mrb[0].mxu0
    %v10439 = vadd.f32 %v10150, %v10438
    %v10440 = vpop.f32.mrb[0].mxu0
    %10441 = vmatprep.mubr.bf16.mxu0 0
    %10442 = vmatmul.mubr.bf16.gmra.mrb[0].mxu0 %v9920
    %v10443 = vpop.f32.mrb[0].mxu0
    %v10444 = vadd.f32 %v10155, %v10443
    %v10445 = vpop.f32.mrb[0].mxu0
    %v10446 = vpop.f32.mrb[0].mxu0
    %v10447 = vadd.f32 %v10158, %v10446
    %v10448 = vpop.f32.mrb[0].mxu0
    %10449 = vmatprep.mubr.bf16.mxu0 0
    %10450 = vmatmul.mubr.bf16.gmra.mrb[0].mxu0 %v9923
    %v10451 = vpop.f32.mrb[0].mxu0
    %v10452 = vadd.f32 %v10163, %v10451
    %v10453 = vpop.f32.mrb[0].mxu0
    %v10454 = vpop.f32.mrb[0].mxu0
    %v10455 = vadd.f32 %v10166, %v10454
    %v10456 = vpop.f32.mrb[0].mxu0
    %10457 = vmatprep.mubr.bf16.mxu0 0
    %10458 = vmatmul.mubr.bf16.gmra.mrb[0].mxu0 %v9926
    %v10459 = vpop.f32.mrb[0].mxu0
    %v10460 = vadd.f32 %v10171, %v10459
    %v10461 = vpop.f32.mrb[0].mxu0
    %v10462 = vpop.f32.mrb[0].mxu0
    %v10463 = vadd.f32 %v10174, %v10462
    %v10464 = vpop.f32.mrb[0].mxu0
    %10465 = vmatprep.mubr.bf16.mxu0 0
    %10466 = vmatmul.mubr.bf16.gmra.mrb[0].mxu0 %v9929
    %v10467 = vpop.f32.mrb[0].mxu0
    %v10468 = vadd.f32 %v10179, %v10467
    %v10469 = vpop.f32.mrb[0].mxu0
    %v10470 = vpop.f32.mrb[0].mxu0
    %v10471 = vadd.f32 %v10182, %v10470
    %v10472 = vpop.f32.mrb[0].mxu0
    %10473 = vmatprep.mubr.bf16.mxu0 0
    %10474 = vmatmul.mubr.bf16.gmra.mrb[0].mxu0 %v9932
    %v10475 = vpop.f32.mrb[0].mxu0
    %v10476 = vadd.f32 %v10187, %v10475
    %v10477 = vpop.f32.mrb[0].mxu0
    %v10478 = vpop.f32.mrb[0].mxu0
    %v10479 = vadd.f32 %v10190, %v10478
    %v10480 = vpop.f32.mrb[0].mxu0
    %10481 = vmatprep.mubr.bf16.mxu0 0
    %10482 = vmatmul.mubr.bf16.gmra.mrb[0].mxu0 %v9935
    %v10483 = vpop.f32.mrb[0].mxu0
    %v10484 = vadd.f32 %v10195, %v10483
    %v10485 = vpop.f32.mrb[0].mxu0
    %v10486 = vpop.f32.mrb[0].mxu0
    %v10487 = vadd.f32 %v10198, %v10486
    %v10488 = vpop.f32.mrb[0].mxu0
    %10489 = vmatprep.mubr.bf16.mxu0 0
    %10490 = vmatmul.mubr.bf16.gmra.mrb[0].mxu0 %v9938
    %v10491 = vpop.f32.mrb[0].mxu0
    %v10492 = vadd.f32 %v10203, %v10491
    %v10493 = vpop.f32.mrb[0].mxu0
    %v10494 = vpop.f32.mrb[0].mxu0
    %v10495 = vadd.f32 %v10206, %v10494
    %v10496 = vpop.f32.mrb[0].mxu0
    %10497 = vmatprep.mubr.bf16.mxu0 0
    %10498 = vmatmul.mubr.bf16.gmra.mrb[0].mxu0 %v9941
    %v10499 = vpop.f32.mrb[0].mxu0
    %v10500 = vadd.f32 %v10211, %v10499
    %v10501 = vpop.f32.mrb[0].mxu0
    %v10502 = vpop.f32.mrb[0].mxu0
    %v10503 = vadd.f32 %v10214, %v10502
    %v10504 = vpop.f32.mrb[0].mxu0
    %10505 = vmatprep.mubr.bf16.mxu0 0
    %10506 = vmatmul.mubr.bf16.gmra.mrb[0].mxu0 %v9944
    %v10507 = vpop.f32.mrb[0].mxu0
    %v10508 = vadd.f32 %v10219, %v10507
    %v10509 = vpop.f32.mrb[0].mxu0
    %v10510 = vpop.f32.mrb[0].mxu0
    %v10511 = vadd.f32 %v10222, %v10510
    %v10512 = vpop.f32.mrb[0].mxu0
    %10513 = vmatprep.mubr.bf16.mxu0 0
    %10514 = vmatmul.mubr.bf16.gmra.mrb[0].mxu0 %v9947
    %v10515 = vpop.f32.mrb[0].mxu0
    %v10516 = vadd.f32 %v10227, %v10515
    %v10517 = vpop.f32.mrb[0].mxu0
    %v10518 = vpop.f32.mrb[0].mxu0
    %v10519 = vadd.f32 %v10230, %v10518
    %v10520 = vpop.f32.mrb[0].mxu0
    %10521 = vmatprep.mubr.bf16.mxu0 0
    %10522 = vmatmul.mubr.bf16.gmra.mrb[0].mxu0 %v9950
    %v10523 = vpop.f32.mrb[0].mxu0
    %v10524 = vadd.f32 %v10235, %v10523
    %v10525 = vpop.f32.mrb[0].mxu0
    %v10526 = vpop.f32.mrb[0].mxu0
    %v10527 = vadd.f32 %v10238, %v10526
    %v10528 = vpop.f32.mrb[0].mxu0
    %10529 = vdwg.mxu0
    %v10530 = vmax.f32 %v10276, 0.0
    %v10531 = vmax.f32 %v10279, 0.0
    %v10532 = vmax.f32 %v10284, 0.0
    %v10533 = vmax.f32 %v10287, 0.0
    %v10534 = vmax.f32 %v10292, 0.0
    %v10535 = vmax.f32 %v10295, 0.0
    %v10536 = vmax.f32 %v10300, 0.0
    %v10537 = vmax.f32 %v10303, 0.0
    %v10538 = vmax.f32 %v10308, 0.0
    %v10539 = vmax.f32 %v10311, 0.0
    %v10540 = vmax.f32 %v10316, 0.0
    %v10541 = vmax.f32 %v10319, 0.0
    %v10542 = vmax.f32 %v10324, 0.0
    %v10543 = vmax.f32 %v10327, 0.0
    %v10544 = vmax.f32 %v10332, 0.0
    %v10545 = vmax.f32 %v10335, 0.0
    %v10546 = vmax.f32 %v10340, 0.0
    %v10547 = vmax.f32 %v10343, 0.0
    %v10548 = vmax.f32 %v10348, 0.0
    %v10549 = vmax.f32 %v10351, 0.0
    %v10550 = vmax.f32 %v10356, 0.0
    %v10551 = vmax.f32 %v10359, 0.0
    %v10552 = vmax.f32 %v10364, 0.0
    %v10553 = vmax.f32 %v10367, 0.0
    %v10554 = vmax.f32 %v10372, 0.0
    %v10555 = vmax.f32 %v10375, 0.0
    %v10556 = vmax.f32 %v10380, 0.0
    %v10557 = vmax.f32 %v10383, 0.0
    %v10558 = vmax.f32 %v10388, 0.0
    %v10559 = vmax.f32 %v10391, 0.0
    %v10560 = vmax.f32 %v10396, 0.0
    %v10561 = vmax.f32 %v10399, 0.0
    %v10562 = vmax.f32 %v10404, 0.0
    %v10563 = vmax.f32 %v10407, 0.0
    %v10564 = vmax.f32 %v10412, 0.0
    %v10565 = vmax.f32 %v10415, 0.0
    %v10566 = vmax.f32 %v10420, 0.0
    %v10567 = vmax.f32 %v10423, 0.0
    %v10568 = vmax.f32 %v10428, 0.0
    %v10569 = vmax.f32 %v10431, 0.0
    %v10570 = vmax.f32 %v10436, 0.0
    %v10571 = vmax.f32 %v10439, 0.0
    %v10572 = vmax.f32 %v10444, 0.0
    %v10573 = vmax.f32 %v10447, 0.0
    %v10574 = vmax.f32 %v10452, 0.0
    %v10575 = vmax.f32 %v10455, 0.0
    %v10576 = vmax.f32 %v10460, 0.0
    %v10577 = vmax.f32 %v10463, 0.0
    %v10578 = vmax.f32 %v10468, 0.0
    %v10579 = vmax.f32 %v10471, 0.0
    %v10580 = vmax.f32 %v10476, 0.0
    %v10581 = vmax.f32 %v10479, 0.0
    %v10582 = vmax.f32 %v10484, 0.0
    %v10583 = vmax.f32 %v10487, 0.0
    %v10584 = vmax.f32 %v10492, 0.0
    %v10585 = vmax.f32 %v10495, 0.0
    %v10586 = vmax.f32 %v10500, 0.0
    %v10587 = vmax.f32 %v10503, 0.0
    %v10588 = vmax.f32 %v10508, 0.0
    %v10589 = vmax.f32 %v10511, 0.0
    %v10590 = vmax.f32 %v10516, 0.0
    %v10591 = vmax.f32 %v10519, 0.0
    %v10592 = vmax.f32 %v10524, 0.0
    %v10593 = vmax.f32 %v10527, 0.0
    %vm10594 = vcmask 523264
    %v10595 = vsel %vm10594, %v10530, 0.0
    %v10596 = vsel %vm10594, %v10531, 0.0
    %v10597 = vadd.f32 %v10595, %v10596
    %v10598 = vsel %vm10594, %v10532, 0.0
    %v10599 = vadd.f32 %v10597, %v10598
    %v10600 = vsel %vm10594, %v10533, 0.0
    %v10601 = vadd.f32 %v10599, %v10600
    %v10602 = vsel %vm10594, %v10534, 0.0
    %v10603 = vadd.f32 %v10601, %v10602
    %v10604 = vsel %vm10594, %v10535, 0.0
    %v10605 = vadd.f32 %v10603, %v10604
    %v10606 = vsel %vm10594, %v10536, 0.0
    %v10607 = vadd.f32 %v10605, %v10606
    %v10608 = vsel %vm10594, %v10537, 0.0
    %v10609 = vadd.f32 %v10607, %v10608
    %v10610 = vsel %vm10594, %v10538, 0.0
    %v10611 = vadd.f32 %v10609, %v10610
    %v10612 = vsel %vm10594, %v10539, 0.0
    %v10613 = vadd.f32 %v10611, %v10612
    %v10614 = vsel %vm10594, %v10540, 0.0
    %v10615 = vadd.f32 %v10613, %v10614
    %v10616 = vsel %vm10594, %v10541, 0.0
    %v10617 = vadd.f32 %v10615, %v10616
    %v10618 = vsel %vm10594, %v10542, 0.0
    %v10619 = vadd.f32 %v10617, %v10618
    %v10620 = vsel %vm10594, %v10543, 0.0
    %v10621 = vadd.f32 %v10619, %v10620
    %v10622 = vsel %vm10594, %v10544, 0.0
    %v10623 = vadd.f32 %v10621, %v10622
    %v10624 = vsel %vm10594, %v10545, 0.0
    %v10625 = vadd.f32 %v10623, %v10624
    %v10626 = vsel %vm10594, %v10546, 0.0
    %v10627 = vadd.f32 %v10625, %v10626
    %v10628 = vsel %vm10594, %v10547, 0.0
    %v10629 = vadd.f32 %v10627, %v10628
    %v10630 = vsel %vm10594, %v10548, 0.0
    %v10631 = vadd.f32 %v10629, %v10630
    %v10632 = vsel %vm10594, %v10549, 0.0
    %v10633 = vadd.f32 %v10631, %v10632
    %v10634 = vsel %vm10594, %v10550, 0.0
    %v10635 = vadd.f32 %v10633, %v10634
    %v10636 = vsel %vm10594, %v10551, 0.0
    %v10637 = vadd.f32 %v10635, %v10636
    %v10638 = vsel %vm10594, %v10552, 0.0
    %v10639 = vadd.f32 %v10637, %v10638
    %v10640 = vsel %vm10594, %v10553, 0.0
    %v10641 = vadd.f32 %v10639, %v10640
    %v10642 = vsel %vm10594, %v10554, 0.0
    %v10643 = vadd.f32 %v10641, %v10642
    %v10644 = vsel %vm10594, %v10555, 0.0
    %v10645 = vadd.f32 %v10643, %v10644
    %v10646 = vsel %vm10594, %v10556, 0.0
    %v10647 = vadd.f32 %v10645, %v10646
    %v10648 = vsel %vm10594, %v10557, 0.0
    %v10649 = vadd.f32 %v10647, %v10648
    %v10650 = vsel %vm10594, %v10558, 0.0
    %v10651 = vadd.f32 %v10649, %v10650
    %v10652 = vsel %vm10594, %v10559, 0.0
    %v10653 = vadd.f32 %v10651, %v10652
    %v10654 = vsel %vm10594, %v10560, 0.0
    %v10655 = vadd.f32 %v10653, %v10654
    %v10656 = vsel %vm10594, %v10561, 0.0
    %v10657 = vadd.f32 %v10655, %v10656
    %v10658 = vrot.slane %v10657, 4
    %v10659 = vadd.f32 %v10657, %v10658
    %v10660 = vrot.slane %v10659, 2
    %v10661 = vadd.f32 %v10659, %v10660
    %v10662 = vrot.slane %v10661, 1
    %v10663 = vadd.f32 %v10661, %v10662
    %v10664 = vsel %vm10594, %v10562, 0.0
    %v10665 = vsel %vm10594, %v10563, 0.0
    %v10666 = vadd.f32 %v10664, %v10665
    %v10667 = vsel %vm10594, %v10564, 0.0
    %v10668 = vadd.f32 %v10666, %v10667
    %v10669 = vsel %vm10594, %v10565, 0.0
    %v10670 = vadd.f32 %v10668, %v10669
    %v10671 = vsel %vm10594, %v10566, 0.0
    %v10672 = vadd.f32 %v10670, %v10671
    %v10673 = vsel %vm10594, %v10567, 0.0
    %v10674 = vadd.f32 %v10672, %v10673
    %v10675 = vsel %vm10594, %v10568, 0.0
    %v10676 = vadd.f32 %v10674, %v10675
    %v10677 = vsel %vm10594, %v10569, 0.0
    %v10678 = vadd.f32 %v10676, %v10677
    %v10679 = vsel %vm10594, %v10570, 0.0
    %v10680 = vadd.f32 %v10678, %v10679
    %v10681 = vsel %vm10594, %v10571, 0.0
    %v10682 = vadd.f32 %v10680, %v10681
    %v10683 = vsel %vm10594, %v10572, 0.0
    %v10684 = vadd.f32 %v10682, %v10683
    %v10685 = vsel %vm10594, %v10573, 0.0
    %v10686 = vadd.f32 %v10684, %v10685
    %v10687 = vsel %vm10594, %v10574, 0.0
    %v10688 = vadd.f32 %v10686, %v10687
    %v10689 = vsel %vm10594, %v10575, 0.0
    %v10690 = vadd.f32 %v10688, %v10689
    %v10691 = vsel %vm10594, %v10576, 0.0
    %v10692 = vadd.f32 %v10690, %v10691
    %v10693 = vsel %vm10594, %v10577, 0.0
    %v10694 = vadd.f32 %v10692, %v10693
    %v10695 = vsel %vm10594, %v10578, 0.0
    %v10696 = vadd.f32 %v10694, %v10695
    %v10697 = vsel %vm10594, %v10579, 0.0
    %v10698 = vadd.f32 %v10696, %v10697
    %v10699 = vsel %vm10594, %v10580, 0.0
    %v10700 = vadd.f32 %v10698, %v10699
    %v10701 = vsel %vm10594, %v10581, 0.0
    %v10702 = vadd.f32 %v10700, %v10701
    %v10703 = vsel %vm10594, %v10582, 0.0
    %v10704 = vadd.f32 %v10702, %v10703
    %v10705 = vsel %vm10594, %v10583, 0.0
    %v10706 = vadd.f32 %v10704, %v10705
    %v10707 = vsel %vm10594, %v10584, 0.0
    %v10708 = vadd.f32 %v10706, %v10707
    %v10709 = vsel %vm10594, %v10585, 0.0
    %v10710 = vadd.f32 %v10708, %v10709
    %v10711 = vsel %vm10594, %v10586, 0.0
    %v10712 = vadd.f32 %v10710, %v10711
    %v10713 = vsel %vm10594, %v10587, 0.0
    %v10714 = vadd.f32 %v10712, %v10713
    %v10715 = vsel %vm10594, %v10588, 0.0
    %v10716 = vadd.f32 %v10714, %v10715
    %v10717 = vsel %vm10594, %v10589, 0.0
    %v10718 = vadd.f32 %v10716, %v10717
    %v10719 = vsel %vm10594, %v10590, 0.0
    %v10720 = vadd.f32 %v10718, %v10719
    %v10721 = vsel %vm10594, %v10591, 0.0
    %v10722 = vadd.f32 %v10720, %v10721
    %v10723 = vsel %vm10594, %v10592, 0.0
    %v10724 = vadd.f32 %v10722, %v10723
    %v10725 = vsel %vm10594, %v10593, 0.0
    %v10726 = vadd.f32 %v10724, %v10725
    %v10727 = vrot.slane %v10726, 4
    %v10728 = vadd.f32 %v10726, %v10727
    %v10729 = vrot.slane %v10728, 2
    %v10730 = vadd.f32 %v10728, %v10729
    %v10731 = vrot.slane %v10730, 1
    %v10732 = vadd.f32 %v10730, %v10731
    %v10733 = vrcp.pop 256.0
    %v10734 = vmul.f32 %v10663, %v10733
    %v10735 = vmul.f32 %v10732, %v10733
    %v10736 = vpack.c.bf16 %v10734, %v10734
    %v10737 = vpack.c.bf16 %v10735, %v10735
    %v10738 = vld [vmem:[%s6] sm:$0xf]
    %v10739 = vld [vmem:[%s6 + $0x4] sm:$0xf]
    %v10740 = vld [vmem:[%s6 + $0x8] sm:$0xf]
    %v10741 = vld [vmem:[%s6 + $0xc] sm:$0xf]
    %v10742 = vld [vmem:[%s6 + $0x10] sm:$0xf]
    %v10743 = vld [vmem:[%s6 + $0x14] sm:$0xf]
    %v10744 = vld [vmem:[%s6 + $0x18] sm:$0xf]
    %v10745 = vld [vmem:[%s6 + $0x1c] sm:$0xf]
    %v10746 = vld [vmem:[%s7] sm:$0x1]
    %v10748 = vlaneseq
    %v10749 = vshrl.u32 %v10748, 7
    %v10750 = vsub.s32 0, %v10749
    %v10751 = vrot.slane %v10746, %v10750
    %v10755 = vunpack.c.l.b16 %v10736
    %v10756 = vunpack.c.l.b16 %v10737
    %vm10757 = vcmask 1041409
    %v10758 = vsel %vm10757, %v10756, %v10755
    %v10759 = vpack.c.b16 %v10758, %v10758
    %v10768 = vunpack.c.l.b16 %v10738
    %v10769 = vunpack.c.l.b16 %v10739
    %v10770 = vunpack.c.l.b16 %v10740
    %v10771 = vunpack.c.l.b16 %v10741
    %v10772 = vunpack.c.l.b16 %v10742
    %v10773 = vunpack.c.l.b16 %v10743
    %v10774 = vunpack.c.l.b16 %v10744
    %v10775 = vunpack.c.l.b16 %v10745
    %v10776 = vpack.c.b16 %v10769, %v10768
    %v10777 = vpack.c.b16 %v10771, %v10770
    %v10778 = vpack.c.b16 %v10773, %v10772
    %v10779 = vpack.c.b16 %v10775, %v10774
    %v10785 = vsel %vm10594, %v10759, 0
    %10787 = vmatprep.subr.bf16.mxu0 0
    %10788 = vmatpush1.bf16.msra.mxu0 %v10776
    %10789 = vmatprep.subr.bf16.mxu0 0
    %10790 = vmatpush1.bf16.msra.mxu0 %v10777
    %10791 = vmatprep.subr.bf16.mxu0 0
    %10792 = vmatpush1.bf16.msra.mxu0 %v10778
    %10793 = vmatprep.subr.bf16.mxu0 0
    %10794 = vmatpush1.bf16.msra.mxu0 %v10779
    %10795 = vmatprep.subr.bf16.mxu0 0
    %10796 = vmatpush1.bf16.msra.mxu0 0
    %10797 = vmatprep.subr.bf16.mxu0 0
    %10798 = vmatpush1.bf16.msra.mxu0 0
    %10799 = vmatprep.subr.bf16.mxu0 0
    %10800 = vmatpush1.bf16.msra.mxu0 0
    %10801 = vmatprep.subr.bf16.mxu0 0
    %10802 = vmatpush1.bf16.msra.mxu0 0
    %10803 = vmatprep.subr.bf16.mxu0 0
    %10804 = vmatpush1.bf16.msra.mxu0 0
    %10805 = vmatprep.subr.bf16.mxu0 0
    %10806 = vmatpush1.bf16.msra.mxu0 0
    %10807 = vmatprep.subr.bf16.mxu0 0
    %10808 = vmatpush1.bf16.msra.mxu0 0
    %10809 = vmatprep.subr.bf16.mxu0 0
    %10810 = vmatpush1.bf16.msra.mxu0 0
    %10811 = vmatprep.subr.bf16.mxu0 0
    %10812 = vmatpush1.bf16.msra.mxu0 0
    %10813 = vmatprep.subr.bf16.mxu0 0
    %10814 = vmatpush1.bf16.msra.mxu0 0
    %10815 = vmatprep.subr.bf16.mxu0 0
    %10816 = vmatpush1.bf16.msra.mxu0 0
    %10817 = vmatprep.subr.bf16.mxu0 0
    %10818 = vmatpush1.bf16.msra.mxu0 0
    %10819 = vmatprep.mubr.bf16.mxu0 0
    %10820 = vmatmul.mubr.bf16.gmra.mrb[0].mxu0 %v10785
    %v10821 = vpop.f32.mrb[0].mxu0
    %v10822 = vadd.f32 %v10751, %v10821
    %v10823 = vpop.f32.mrb[0].mxu0
    %v10824 = vpop.f32.mrb[0].mxu0
    %v10825 = vpop.f32.mrb[0].mxu0
    %10826 = vdwg.mxu0
    %10827 = vst [vmem:[#allocation3] sm:$0x3] %v10822
    // Predicated region
    $region34: #{tpu_custom_call.1} parent=1 // pred_check
      _
    $region35: #{tpu_custom_call.1} parent=1 // pred_check_branch
      %10829 = sbr.rel (0) target = $region37
    $region36: #{tpu_custom_call.1} parent=1 // pred_region
      %s10831 = ssub.s32 32, 32
      %10832 = vsyncadd [#allocation4], %s10831
      %s10834 = sshll.u32 [#allocation3], 4
      %s10835 = int_to_ptr.vmem [resolvable:$true] %s10834
      %10837 = dma.vmem_to_hbm [thread:$0]  %s10835, 32, %s8, [#allocation4]
    $region37: #{tpu_custom_call.1} parent=1 // pred_fallthru
      _
    // Predicated region
    $region38: #{tpu_custom_call.1} parent=1 // pred_check
      _
    $region39: #{tpu_custom_call.1} parent=1 // pred_check_branch
      %10839 = sbr.rel (0) target = $region41
    $region40: #{tpu_custom_call.1} parent=1 // pred_region
      %10840 = dma.done [#allocation4], 32
    $region41: #{tpu_custom_call.1} parent=1 // pred_fallthru
      _
    %10841 = vsyncpa [#allocation4], 1

</llo_original>
